<compile_context>
chip_gen: v6e
topology: v6e:2x2x1
jax: 0.10.0
libtpu: 0.0.40
codegen_flags: <defaults>
</compile_context>

<pallas_src>
import functools

import jax
import jax.numpy as jnp
from jax import lax
from jax.experimental import pallas as pl
from jax.experimental.pallas import tpu as pltpu

KERV_BALANCE = 1.0   # nn.Kerv2d polynomial-kernel defaults
KERV_POWER = 3       # kernels below hard-code the cube (t*t*t)
# TODO(synk): nn.Kerv2d is modelled as the polynomial kervolution (x.w + balance)^power
#             with the default balance=1, power=3; learnable / non-integer powers and
#             other kernel types (gaussian, ...) have no clean in-kernel equivalent.
# TODO(synk): BatchNorm is applied in inference form (running stats folded into a
#             per-channel scale/shift); training-mode batch statistics are not computed.

# 48 MiB scoped VMEM: well under v7x's 64 MiB physical VMEM, trivially safe on the
# 128 MiB v5e/v6e parts, and far more than the tile working set chosen below needs.
_VMEM_LIMIT_BYTES = 48 * 1024 * 1024


def _pick_tile(dim, cap):
    """Largest tile <= cap dividing `dim`; prefers multiples of 128 (lane/MXU shape).

    Falls back to the full dimension, which is always a legal Pallas block size."""
    if dim <= cap:
        return dim
    t = (cap // 128) * 128
    while t >= 128:
        if dim % t == 0:
            return t
        t -= 128
    return dim


# ------------------------------ Pallas kernels --------------------------------

def _kerv_mm_kernel(*refs, relu, has_residual, balance):
    """One (TM, TN) output tile of: act(BN((X @ W + balance)^3) [+ residual]).

    Grid = (M/TM, N/TN, K/TK); K is the reduction ('arbitrary', fastest) axis; the f32
    accumulator lives in VMEM scratch and the kervolution/BN/residual/ReLU epilogue
    runs only on the last K step."""
    x_ref, w_ref, scale_ref, shift_ref = refs[:4]
    if has_residual:
        res_ref, out_ref, acc_ref = refs[4], refs[5], refs[6]
    else:
        res_ref, out_ref, acc_ref = None, refs[4], refs[5]

    kk = pl.program_id(2)

    @pl.when(kk == 0)
    def _init():
        acc_ref[...] = jnp.zeros_like(acc_ref)

    acc_ref[...] += jnp.dot(x_ref[...], w_ref[...],
                            preferred_element_type=jnp.float32)   # bf16 MXU, f32 acc

    @pl.when(kk == pl.num_programs(2) - 1)
    def _finalize():
        t = acc_ref[...] + balance                 # polynomial kervolution (x.w + c_p)^3
        y = t * t * t
        y = y * scale_ref[...] + shift_ref[...]    # folded (inference) BatchNorm
        if has_residual:
            y = y + res_ref[...]
        if relu:
            y = jnp.maximum(y, 0.0)
        out_ref[...] = y.astype(out_ref.dtype)


def _kerv3x3_kernel(xf_ref, w_ref, scale_ref, shift_ref, out_ref, *,
                    lw, tap_offsets, balance):
    """3x3 kervolution for one image as 9 accumulating MXU matmuls (no im2col).

    xf_ref : (1, Lf, Cin) f32 zero-padded activations, spatially flattened so kernel
             tap (kh, kw) is a constant row offset (kh*Wp + kw) into the same slab.
    w_ref  : (9, Cin, TCO) bf16 tap-major weights (resident across the batch grid axis).
    out_ref: (1, H*Wp, TCO) 'wide' output; the (Wp - W) wrap-around columns per row are
             garbage and are sliced off by the caller in XLA.
    """
    acc = None
    for t, d in enumerate(tap_offsets):               # static 9-tap loop (fully unrolled)
        lhs = xf_ref[0, d:d + lw, :].astype(jnp.bfloat16)
        contrib = jnp.dot(lhs, w_ref[t], preferred_element_type=jnp.float32)
        acc = contrib if acc is None else acc + contrib
    z = acc + balance                                 # polynomial kervolution
    y = z * z * z
    y = y * scale_ref[...] + shift_ref[...]           # folded BatchNorm
    y = jnp.maximum(y, 0.0)
    out_ref[0] = y.astype(out_ref.dtype)


# --------------------------- pallas_call wrappers ------------------------------

def _kerv_matmul(x2d, w, scale, shift, *, residual=None, relu=False):
    """Tiled kervolution-matmul: act(BN((x2d @ w + c)^3) [+ residual]) -> (M, N) f32."""
    m, k = x2d.shape
    n = w.shape[1]
    tm = _pick_tile(m, 256)    # 256-row tiles match the v6e/v7x MXU height and keep the
    tn = _pick_tile(n, 256)    # double-buffered working set (~a few MiB) far below the
    tk = _pick_tile(k, 512)    # 64 MiB v7x VMEM even at large batch.

    args = [x2d.astype(jnp.bfloat16), w.astype(jnp.bfloat16),
            scale.reshape(1, n).astype(jnp.float32),
            shift.reshape(1, n).astype(jnp.float32)]
    in_specs = [
        pl.BlockSpec((tm, tk), lambda i, j, kk: (i, kk)),
        pl.BlockSpec((tk, tn), lambda i, j, kk: (kk, j)),
        pl.BlockSpec((1, tn), lambda i, j, kk: (0, j)),
        pl.BlockSpec((1, tn), lambda i, j, kk: (0, j)),
    ]
    if residual is not None:
        args.append(residual.astype(jnp.float32))
        in_specs.append(pl.BlockSpec((tm, tn), lambda i, j, kk: (i, j)))

    kernel = functools.partial(_kerv_mm_kernel, relu=relu,
                               has_residual=residual is not None,
                               balance=float(KERV_BALANCE))
    return pl.pallas_call(
        kernel,
        out_shape=jax.ShapeDtypeStruct((m, n), jnp.float32),
        grid=(m // tm, n // tn, k // tk),
        in_specs=in_specs,
        out_specs=pl.BlockSpec((tm, tn), lambda i, j, kk: (i, j)),
        scratch_shapes=[pltpu.VMEM((tm, tn), jnp.float32)],
        compiler_params=pltpu.CompilerParams(
            dimension_semantics=("parallel", "parallel", "arbitrary"),
            vmem_limit_bytes=_VMEM_LIMIT_BYTES),
    )(*args)


def _kerv_conv3x3(x_nhwc, w_hwio, scale, shift, stride):
    """3x3 kervolution + BN + ReLU, padding=1 (stride=1 fast path, no im2col)."""
    if stride != 1:
        return _kerv_conv3x3_im2col(x_nhwc, w_hwio, scale, shift, stride)

    n, h, w, c = x_nhwc.shape
    cout = w_hwio.shape[-1]
    wp = w + 2                   # padded width
    lw = h * wp                  # 'wide' output rows per image (cols W..Wp-1 are junk)

    # Single zero-pad of the activations (~1.2x, instead of the 9x of im2col), flattened
    # so that kernel tap (kh, kw) is just row offset kh*Wp + kw into the same slab.
    xpad = jnp.pad(x_nhwc, ((0, 0), (1, 2), (1, 1), (0, 0)))
    xpad = xpad.reshape(n, (h + 3) * wp, c)
    extra = (-xpad.shape[1]) % 8
    if extra:                    # keep the flattened-spatial dim sublane aligned
        xpad = jnp.pad(xpad, ((0, 0), (0, extra), (0, 0)))

    w_flat = w_hwio.reshape(9, c, cout).astype(jnp.bfloat16)
    tco = _pick_tile(cout, 256)
    tap_offsets = tuple(kh * wp + kw for kh in range(3) for kw in range(3))

    kernel = functools.partial(_kerv3x3_kernel, lw=lw, tap_offsets=tap_offsets,
                               balance=float(KERV_BALANCE))
    out_wide = pl.pallas_call(
        kernel,
        out_shape=jax.ShapeDtypeStruct((n, lw, cout), jnp.bfloat16),
        grid=(n, cout // tco),
        in_specs=[
            pl.BlockSpec((1, xpad.shape[1], c), lambda b, j: (b, 0, 0)),
            pl.BlockSpec((9, c, tco), lambda b, j: (0, 0, j)),   # weights DMA'd once
            pl.BlockSpec((1, tco), lambda b, j: (0, j)),
            pl.BlockSpec((1, tco), lambda b, j: (0, j)),
        ],
        out_specs=pl.BlockSpec((1, lw, tco), lambda b, j: (b, 0, j)),
        compiler_params=pltpu.CompilerParams(
            dimension_semantics=("parallel", "parallel"),
            vmem_limit_bytes=_VMEM_LIMIT_BYTES),
    )(xpad, w_flat,
      scale.reshape(1, cout).astype(jnp.float32),
      shift.reshape(1, cout).astype(jnp.float32))

    # drop the (Wp - W) wrap-around columns of the wide output
    return out_wide.reshape(n, h, wp, cout)[:, :, :w, :]


def _kerv_conv3x3_im2col(x_nhwc, w_hwio, scale, shift, stride):
    # TODO(synk): strides > 1 still go through an XLA-side im2col; extend the in-kernel
    #             tap-accumulation path with an even/odd spatial split to cover them.
    n, h, w, c = x_nhwc.shape
    cout = w_hwio.shape[-1]
    xp = jnp.pad(x_nhwc, ((0, 0), (1, 1), (1, 1), (0, 0)))
    ho = (h - 1) // stride + 1
    wo = (w - 1) // stride + 1
    cols = [xp[:, kh:kh + stride * (ho - 1) + 1:stride,
                  kw:kw + stride * (wo - 1) + 1:stride, :]
            for kh in range(3) for kw in range(3)]
    patches = jnp.concatenate(cols, axis=-1).reshape(n * ho * wo, 9 * c)
    out = _kerv_matmul(patches, w_hwio.reshape(9 * c, cout), scale, shift, relu=True)
    return out.reshape(n, ho, wo, cout)


# -------------------------- parameters / forward -------------------------------

def _fold_bn(key, c, eps=1e-5):
    k1, k2, k3, k4 = jax.random.split(key, 4)
    gamma = 1.0 + 0.1 * jax.random.normal(k1, (c,), jnp.float32)
    beta = 0.1 * jax.random.normal(k2, (c,), jnp.float32)
    mean = 0.1 * jax.random.normal(k3, (c,), jnp.float32)
    var = 0.9 + 0.2 * jax.random.uniform(k4, (c,), jnp.float32)
    scale = gamma * jax.lax.rsqrt(var + eps)
    shift = beta - scale * mean
    return scale, shift


def _conv_w(key, *shape):
    fan_in = 1
    for s in shape[:-1]:
        fan_in *= s
    return (0.25 / fan_in ** 0.5) * jax.random.normal(key, shape, jnp.float32)


def init_params(key, in_planes, planes, stride=1, expansion=4):
    keys = jax.random.split(key, 8)
    p = {'stride': stride}
    p['w1'] = _conv_w(keys[0], in_planes, planes)                    # kerv1: 1x1
    p['scale1'], p['shift1'] = _fold_bn(keys[1], planes)
    p['w2'] = _conv_w(keys[2], 3, 3, planes, planes)                 # kerv2: 3x3 (HWIO)
    p['scale2'], p['shift2'] = _fold_bn(keys[3], planes)
    p['w3'] = _conv_w(keys[4], planes, expansion * planes)           # kerv3: 1x1
    p['scale3'], p['shift3'] = _fold_bn(keys[5], expansion * planes)
    if stride != 1 or in_planes != expansion * planes:
        p['wsc'] = _conv_w(keys[6], in_planes, expansion * planes)   # shortcut 1x1
        p['scale_sc'], p['shift_sc'] = _fold_bn(keys[7], expansion * planes)
    return p


def bottleneck_forward(x_nchw, params):
    """relu(bn3(kerv3(relu(bn2(kerv2(relu(bn1(kerv1(x)))))))) + shortcut(x)), NCHW in/out."""
    x = jnp.transpose(x_nchw, (0, 2, 3, 1)).astype(jnp.float32)      # NCHW -> NHWC
    n, h, w, cin = x.shape
    stride = params['stride']
    x2d = x.reshape(n * h * w, cin)

    # kerv1 (1x1) + bn1 + relu
    h1 = _kerv_matmul(x2d, params['w1'], params['scale1'], params['shift1'], relu=True)
    planes = h1.shape[1]
    h1 = h1.reshape(n, h, w, planes)

    # kerv2 (3x3, stride, pad=1) + bn2 + relu  -- in-kernel 9-tap accumulation
    h2 = _kerv_conv3x3(h1, params['w2'], params['scale2'], params['shift2'], stride)
    _, ho, wo, _ = h2.shape
    h2_2d = h2.reshape(n * ho * wo, planes)

    # shortcut: identity, or 1x1 kerv (stride) + BN
    if 'wsc' in params:
        xs = x if stride == 1 else x[:, ::stride, ::stride, :]
        shortcut = _kerv_matmul(xs.reshape(n * ho * wo, cin), params['wsc'],
                                params['scale_sc'], params['shift_sc'], relu=False)
    else:
        shortcut = x2d

    # kerv3 (1x1) + bn3, with residual add + final ReLU fused into the epilogue
    out = _kerv_matmul(h2_2d, params['w3'], params['scale3'], params['shift3'],
                       residual=shortcut, relu=True)
    out = out.reshape(n, ho, wo, out.shape[1])
    return jnp.transpose(out, (0, 3, 1, 2))                          # back to NCHW


def _reference_bottleneck(x_nchw, p):
    """Pure-JAX (XLA, f32) reference for numerical validation."""
    x = jnp.transpose(x_nchw, (0, 2, 3, 1)).astype(jnp.float32)

    def kerv(inp, w_hwio, scale, shift, stride, padding, relu):
        c = lax.conv_general_dilated(
            inp, w_hwio, window_strides=(stride, stride),
            padding=((padding, padding), (padding, padding)),
            dimension_numbers=('NHWC', 'HWIO', 'NHWC'))
        t = c + KERV_BALANCE
        y = (t ** KERV_POWER) * scale + shift
        return jnp.maximum(y, 0.0) if relu else y

    as4d = lambda wm: wm.reshape(1, 1, *wm.shape)
    h1 = kerv(x, as4d(p['w1']), p['scale1'], p['shift1'], 1, 0, True)
    h2 = kerv(h1, p['w2'], p['scale2'], p['shift2'], p['stride'], 1, True)
    o = kerv(h2, as4d(p['w3']), p['scale3'], p['shift3'], 1, 0, False)
    if 'wsc' in p:
        sc = kerv(x, as4d(p['wsc']), p['scale_sc'], p['shift_sc'], p['stride'], 0, False)
    else:
        sc = x
    out = jnp.maximum(o + sc, 0.0)
    return jnp.transpose(out, (0, 3, 1, 2))


if __name__ == "__main__":
    key = jax.random.PRNGKey(0)
    kp, kx = jax.random.split(key)

    # Bottleneck(in_planes=64, planes=64, stride=1): 64 -> 256 channels, 1x1-conv shortcut.
    IN_PLANES, PLANES, STRIDE = 64, 64, 1
    params = init_params(kp, IN_PLANES, PLANES, stride=STRIDE)
    x = jax.random.normal(kx, (2, IN_PLANES, 16, 16), jnp.float32)   # NCHW, like PyTorch

    fwd = jax.jit(lambda inp: bottleneck_forward(inp, params))
    out = jax.block_until_ready(fwd(x))

    assert out.shape == (2, 4 * PLANES, 16, 16), out.shape
    assert bool(jnp.all(jnp.isfinite(out)))

    ref = _reference_bottleneck(x, params)
    rel_err = float(jnp.linalg.norm(out - ref) / (jnp.linalg.norm(ref) + 1e-6))
    assert rel_err < 0.15, f"mismatch vs f32 reference: rel_err={rel_err}"
    print("KERNEL_OK")
</pallas_src>

<mosaic_0001>
module attributes {stable_mosaic.version = 11 : i64} {
  func.func @_kerv_mm_kernel(%arg0: i32, %arg1: i32, %arg2: i32, %arg3: memref<256x64xbf16, #tpu.memory_space<vmem>>, %arg4: memref<64x64xbf16, #tpu.memory_space<vmem>>, %arg5: memref<1x64xf32, #tpu.memory_space<vmem>>, %arg6: memref<1x64xf32, #tpu.memory_space<vmem>>, %arg7: memref<256x64xf32, #tpu.memory_space<vmem>>, %arg8: memref<256x64xf32, #tpu.memory_space<vmem>>) attributes {dimension_semantics = [#tpu.dimension_semantics<parallel>, #tpu.dimension_semantics<parallel>, #tpu.dimension_semantics<arbitrary>], iteration_bounds = array<i64: 2, 1, 1>, scalar_prefetch = 0 : i64, scratch_operands = 1 : i64, tpu.core_type = #tpu.core_type<tc>, window_params = [{transform_indices = @transform_0, window_bounds = array<i64: 256, 64>}, {transform_indices = @transform_1, window_bounds = array<i64: 64, 64>}, {transform_indices = @transform_2, window_bounds = array<i64: 1, 64>}, {transform_indices = @transform_3, window_bounds = array<i64: 1, 64>}, {transform_indices = @transform_4, window_bounds = array<i64: 256, 64>}]} {
    %c0_i32 = arith.constant 0 : i32
    %0 = arith.cmpi eq, %arg2, %c0_i32 : i32
    %1 = arith.extui %0 : i1 to i32
    %c0_i32_0 = arith.constant 0 : i32
    %2 = arith.cmpi ne, %1, %c0_i32_0 : i32
    scf.if %2 {
      %cst_10 = arith.constant 0.000000e+00 : f32
      %12 = vector.broadcast %cst_10 : f32 to vector<256x64xf32>
      %c0_11 = arith.constant 0 : index
      %c0_12 = arith.constant 0 : index
      %13 = vector.load %arg8[%c0_11, %c0_12] : memref<256x64xf32, #tpu.memory_space<vmem>>, vector<256x64xf32>
      tpu.vector_store %arg8[%c0_11, %c0_12], %12 {strides = array<i32>} : memref<256x64xf32, #tpu.memory_space<vmem>>, vector<256x64xf32>,
    } else {
    }
    %c0 = arith.constant 0 : index
    %c0_1 = arith.constant 0 : index
    %3 = vector.load %arg8[%c0, %c0_1] : memref<256x64xf32, #tpu.memory_space<vmem>>, vector<256x64xf32>
    %c0_2 = arith.constant 0 : index
    %c0_3 = arith.constant 0 : index
    %4 = vector.load %arg3[%c0_2, %c0_3] : memref<256x64xbf16, #tpu.memory_space<vmem>>, vector<256x64xbf16>
    %c0_4 = arith.constant 0 : index
    %c0_5 = arith.constant 0 : index
    %5 = vector.load %arg4[%c0_4, %c0_5] : memref<64x64xbf16, #tpu.memory_space<vmem>>, vector<64x64xbf16>
    %cst = arith.constant dense<0.000000e+00> : vector<256x64xf32>
    %6 = tpu.matmul %4, %5, %cst {dimension_numbers = #tpu.dot_dimension_numbers<[1], [0], [0], [1], [0, 0, 1, 1], [], []>} : vector<256x64xbf16>, vector<64x64xbf16>, vector<256x64xf32> -> vector<256x64xf32>
    %7 = arith.addf %3, %6 : vector<256x64xf32>
    %c0_6 = arith.constant 0 : index
    %c0_7 = arith.constant 0 : index
    %8 = vector.load %arg8[%c0_6, %c0_7] : memref<256x64xf32, #tpu.memory_space<vmem>>, vector<256x64xf32>
    tpu.vector_store %arg8[%c0_6, %c0_7], %7 {strides = array<i32>} : memref<256x64xf32, #tpu.memory_space<vmem>>, vector<256x64xf32>,
    %c0_i32_8 = arith.constant 0 : i32
    %9 = arith.cmpi eq, %arg2, %c0_i32_8 : i32
    %10 = arith.extui %9 : i1 to i32
    %c0_i32_9 = arith.constant 0 : i32
    %11 = arith.cmpi ne, %10, %c0_i32_9 : i32
    scf.if %11 {
      %c0_10 = arith.constant 0 : index
      %c0_11 = arith.constant 0 : index
      %12 = vector.load %arg8[%c0_10, %c0_11] : memref<256x64xf32, #tpu.memory_space<vmem>>, vector<256x64xf32>
      %cst_12 = arith.constant 1.000000e+00 : f32
      %13 = vector.broadcast %cst_12 : f32 to vector<256x64xf32>
      %14 = arith.addf %12, %13 : vector<256x64xf32>
      %15 = arith.mulf %14, %14 : vector<256x64xf32>
      %16 = arith.mulf %15, %14 : vector<256x64xf32>
      %c0_13 = arith.constant 0 : index
      %c0_14 = arith.constant 0 : index
      %17 = vector.load %arg5[%c0_13, %c0_14] : memref<1x64xf32, #tpu.memory_space<vmem>>, vector<1x64xf32>
      %18 = vector.broadcast %17 : vector<1x64xf32> to vector<256x64xf32>
      %19 = arith.mulf %16, %18 : vector<256x64xf32>
      %c0_15 = arith.constant 0 : index
      %c0_16 = arith.constant 0 : index
      %20 = vector.load %arg6[%c0_15, %c0_16] : memref<1x64xf32, #tpu.memory_space<vmem>>, vector<1x64xf32>
      %21 = vector.broadcast %20 : vector<1x64xf32> to vector<256x64xf32>
      %22 = arith.addf %19, %21 : vector<256x64xf32>
      %cst_17 = arith.constant 0.000000e+00 : f32
      %23 = vector.broadcast %cst_17 : f32 to vector<256x64xf32>
      %24 = arith.maximumf %22, %23 : vector<256x64xf32>
      %c0_18 = arith.constant 0 : index
      %c0_19 = arith.constant 0 : index
      %25 = vector.load %arg7[%c0_18, %c0_19] : memref<256x64xf32, #tpu.memory_space<vmem>>, vector<256x64xf32>
      tpu.vector_store %arg7[%c0_18, %c0_19], %24 {strides = array<i32>} : memref<256x64xf32, #tpu.memory_space<vmem>>, vector<256x64xf32>,
    } else {
    }
    return
  }
  func.func @transform_0(%arg0: i32, %arg1: i32, %arg2: i32) -> (i32, i32) {
    %c0_i32 = arith.constant 0 : i32
    return %arg0, %arg2 : i32, i32
  }
  func.func @transform_1(%arg0: i32, %arg1: i32, %arg2: i32) -> (i32, i32) {
    %c0_i32 = arith.constant 0 : i32
    return %arg2, %arg1 : i32, i32
  }
  func.func @transform_2(%arg0: i32, %arg1: i32, %arg2: i32) -> (i32, i32) {
    %c0_i32 = arith.constant 0 : i32
    %c0_i32_0 = arith.constant 0 : i32
    return %c0_i32, %arg1 : i32, i32
  }
  func.func @transform_3(%arg0: i32, %arg1: i32, %arg2: i32) -> (i32, i32) {
    %c0_i32 = arith.constant 0 : i32
    %c0_i32_0 = arith.constant 0 : i32
    return %c0_i32, %arg1 : i32, i32
  }
  func.func @transform_4(%arg0: i32, %arg1: i32, %arg2: i32) -> (i32, i32) {
    %c0_i32 = arith.constant 0 : i32
    return %arg0, %arg1 : i32, i32
  }
}

module attributes {stable_mosaic.version = 11 : i64} {
  func.func @_kerv3x3_kernel(%arg0: i32, %arg1: i32, %arg2: memref<1x344x64xf32, #tpu.memory_space<vmem>>, %arg3: memref<9x64x64xbf16, #tpu.memory_space<vmem>>, %arg4: memref<1x64xf32, #tpu.memory_space<vmem>>, %arg5: memref<1x64xf32, #tpu.memory_space<vmem>>, %arg6: memref<1x288x64xbf16, #tpu.memory_space<vmem>>) attributes {dimension_semantics = [#tpu.dimension_semantics<parallel>, #tpu.dimension_semantics<parallel>], iteration_bounds = array<i64: 2, 1>, scalar_prefetch = 0 : i64, scratch_operands = 0 : i64, tpu.core_type = #tpu.core_type<tc>, window_params = [{transform_indices = @transform_0, window_bounds = array<i64: 1, 344, 64>}, {transform_indices = @transform_1, window_bounds = array<i64: 9, 64, 64>}, {transform_indices = @transform_2, window_bounds = array<i64: 1, 64>}, {transform_indices = @transform_3, window_bounds = array<i64: 1, 64>}, {transform_indices = @transform_4, window_bounds = array<i64: 1, 288, 64>}]} {
    %c0 = arith.constant 0 : index
    %c0_0 = arith.constant 0 : index
    %c0_1 = arith.constant 0 : index
    %0 = vector.load %arg2[%c0, %c0_0, %c0_1] : memref<1x344x64xf32, #tpu.memory_space<vmem>>, vector<1x288x64xf32>
    %1 = vector.shape_cast %0 : vector<1x288x64xf32> to vector<288x64xf32>
    %2 = arith.truncf %1 : vector<288x64xf32> to vector<288x64xbf16>
    %c0_2 = arith.constant 0 : index
    %c0_3 = arith.constant 0 : index
    %c0_4 = arith.constant 0 : index
    %3 = vector.load %arg3[%c0_2, %c0_3, %c0_4] : memref<9x64x64xbf16, #tpu.memory_space<vmem>>, vector<1x64x64xbf16>
    %4 = vector.shape_cast %3 : vector<1x64x64xbf16> to vector<64x64xbf16>
    %cst = arith.constant dense<0.000000e+00> : vector<288x64xf32>
    %5 = tpu.matmul %2, %4, %cst {dimension_numbers = #tpu.dot_dimension_numbers<[1], [0], [0], [1], [0, 0, 1, 1], [], []>} : vector<288x64xbf16>, vector<64x64xbf16>, vector<288x64xf32> -> vector<288x64xf32>
    %c0_5 = arith.constant 0 : index
    %c1 = arith.constant 1 : index
    %c0_6 = arith.constant 0 : index
    %6 = vector.load %arg2[%c0_5, %c1, %c0_6] : memref<1x344x64xf32, #tpu.memory_space<vmem>>, vector<1x288x64xf32>
    %7 = vector.shape_cast %6 : vector<1x288x64xf32> to vector<288x64xf32>
    %8 = arith.truncf %7 : vector<288x64xf32> to vector<288x64xbf16>
    %c1_7 = arith.constant 1 : index
    %c0_8 = arith.constant 0 : index
    %c0_9 = arith.constant 0 : index
    %9 = vector.load %arg3[%c1_7, %c0_8, %c0_9] : memref<9x64x64xbf16, #tpu.memory_space<vmem>>, vector<1x64x64xbf16>
    %10 = vector.shape_cast %9 : vector<1x64x64xbf16> to vector<64x64xbf16>
    %cst_10 = arith.constant dense<0.000000e+00> : vector<288x64xf32>
    %11 = tpu.matmul %8, %10, %cst_10 {dimension_numbers = #tpu.dot_dimension_numbers<[1], [0], [0], [1], [0, 0, 1, 1], [], []>} : vector<288x64xbf16>, vector<64x64xbf16>, vector<288x64xf32> -> vector<288x64xf32>
    %12 = arith.addf %5, %11 : vector<288x64xf32>
    %c0_11 = arith.constant 0 : index
    %c2 = arith.constant 2 : index
    %c0_12 = arith.constant 0 : index
    %13 = vector.load %arg2[%c0_11, %c2, %c0_12] : memref<1x344x64xf32, #tpu.memory_space<vmem>>, vector<1x288x64xf32>
    %14 = vector.shape_cast %13 : vector<1x288x64xf32> to vector<288x64xf32>
    %15 = arith.truncf %14 : vector<288x64xf32> to vector<288x64xbf16>
    %c2_13 = arith.constant 2 : index
    %c0_14 = arith.constant 0 : index
    %c0_15 = arith.constant 0 : index
    %16 = vector.load %arg3[%c2_13, %c0_14, %c0_15] : memref<9x64x64xbf16, #tpu.memory_space<vmem>>, vector<1x64x64xbf16>
    %17 = vector.shape_cast %16 : vector<1x64x64xbf16> to vector<64x64xbf16>
    %cst_16 = arith.constant dense<0.000000e+00> : vector<288x64xf32>
    %18 = tpu.matmul %15, %17, %cst_16 {dimension_numbers = #tpu.dot_dimension_numbers<[1], [0], [0], [1], [0, 0, 1, 1], [], []>} : vector<288x64xbf16>, vector<64x64xbf16>, vector<288x64xf32> -> vector<288x64xf32>
    %19 = arith.addf %12, %18 : vector<288x64xf32>
    %c0_17 = arith.constant 0 : index
    %c18 = arith.constant 18 : index
    %c0_18 = arith.constant 0 : index
    %20 = vector.load %arg2[%c0_17, %c18, %c0_18] : memref<1x344x64xf32, #tpu.memory_space<vmem>>, vector<1x288x64xf32>
    %21 = vector.shape_cast %20 : vector<1x288x64xf32> to vector<288x64xf32>
    %22 = arith.truncf %21 : vector<288x64xf32> to vector<288x64xbf16>
    %c3 = arith.constant 3 : index
    %c0_19 = arith.constant 0 : index
    %c0_20 = arith.constant 0 : index
    %23 = vector.load %arg3[%c3, %c0_19, %c0_20] : memref<9x64x64xbf16, #tpu.memory_space<vmem>>, vector<1x64x64xbf16>
    %24 = vector.shape_cast %23 : vector<1x64x64xbf16> to vector<64x64xbf16>
    %cst_21 = arith.constant dense<0.000000e+00> : vector<288x64xf32>
    %25 = tpu.matmul %22, %24, %cst_21 {dimension_numbers = #tpu.dot_dimension_numbers<[1], [0], [0], [1], [0, 0, 1, 1], [], []>} : vector<288x64xbf16>, vector<64x64xbf16>, vector<288x64xf32> -> vector<288x64xf32>
    %26 = arith.addf %19, %25 : vector<288x64xf32>
    %c0_22 = arith.constant 0 : index
    %c19 = arith.constant 19 : index
    %c0_23 = arith.constant 0 : index
    %27 = vector.load %arg2[%c0_22, %c19, %c0_23] : memref<1x344x64xf32, #tpu.memory_space<vmem>>, vector<1x288x64xf32>
    %28 = vector.shape_cast %27 : vector<1x288x64xf32> to vector<288x64xf32>
    %29 = arith.truncf %28 : vector<288x64xf32> to vector<288x64xbf16>
    %c4 = arith.constant 4 : index
    %c0_24 = arith.constant 0 : index
    %c0_25 = arith.constant 0 : index
    %30 = vector.load %arg3[%c4, %c0_24, %c0_25] : memref<9x64x64xbf16, #tpu.memory_space<vmem>>, vector<1x64x64xbf16>
    %31 = vector.shape_cast %30 : vector<1x64x64xbf16> to vector<64x64xbf16>
    %cst_26 = arith.constant dense<0.000000e+00> : vector<288x64xf32>
    %32 = tpu.matmul %29, %31, %cst_26 {dimension_numbers = #tpu.dot_dimension_numbers<[1], [0], [0], [1], [0, 0, 1, 1], [], []>} : vector<288x64xbf16>, vector<64x64xbf16>, vector<288x64xf32> -> vector<288x64xf32>
    %33 = arith.addf %26, %32 : vector<288x64xf32>
    %c0_27 = arith.constant 0 : index
    %c20 = arith.constant 20 : index
    %c0_28 = arith.constant 0 : index
    %34 = vector.load %arg2[%c0_27, %c20, %c0_28] : memref<1x344x64xf32, #tpu.memory_space<vmem>>, vector<1x288x64xf32>
    %35 = vector.shape_cast %34 : vector<1x288x64xf32> to vector<288x64xf32>
    %36 = arith.truncf %35 : vector<288x64xf32> to vector<288x64xbf16>
    %c5 = arith.constant 5 : index
    %c0_29 = arith.constant 0 : index
    %c0_30 = arith.constant 0 : index
    %37 = vector.load %arg3[%c5, %c0_29, %c0_30] : memref<9x64x64xbf16, #tpu.memory_space<vmem>>, vector<1x64x64xbf16>
    %38 = vector.shape_cast %37 : vector<1x64x64xbf16> to vector<64x64xbf16>
    %cst_31 = arith.constant dense<0.000000e+00> : vector<288x64xf32>
    %39 = tpu.matmul %36, %38, %cst_31 {dimension_numbers = #tpu.dot_dimension_numbers<[1], [0], [0], [1], [0, 0, 1, 1], [], []>} : vector<288x64xbf16>, vector<64x64xbf16>, vector<288x64xf32> -> vector<288x64xf32>
    %40 = arith.addf %33, %39 : vector<288x64xf32>
    %c0_32 = arith.constant 0 : index
    %c36 = arith.constant 36 : index
    %c0_33 = arith.constant 0 : index
    %41 = vector.load %arg2[%c0_32, %c36, %c0_33] : memref<1x344x64xf32, #tpu.memory_space<vmem>>, vector<1x288x64xf32>
    %42 = vector.shape_cast %41 : vector<1x288x64xf32> to vector<288x64xf32>
    %43 = arith.truncf %42 : vector<288x64xf32> to vector<288x64xbf16>
    %c6 = arith.constant 6 : index
    %c0_34 = arith.constant 0 : index
    %c0_35 = arith.constant 0 : index
    %44 = vector.load %arg3[%c6, %c0_34, %c0_35] : memref<9x64x64xbf16, #tpu.memory_space<vmem>>, vector<1x64x64xbf16>
    %45 = vector.shape_cast %44 : vector<1x64x64xbf16> to vector<64x64xbf16>
    %cst_36 = arith.constant dense<0.000000e+00> : vector<288x64xf32>
    %46 = tpu.matmul %43, %45, %cst_36 {dimension_numbers = #tpu.dot_dimension_numbers<[1], [0], [0], [1], [0, 0, 1, 1], [], []>} : vector<288x64xbf16>, vector<64x64xbf16>, vector<288x64xf32> -> vector<288x64xf32>
    %47 = arith.addf %40, %46 : vector<288x64xf32>
    %c0_37 = arith.constant 0 : index
    %c37 = arith.constant 37 : index
    %c0_38 = arith.constant 0 : index
    %48 = vector.load %arg2[%c0_37, %c37, %c0_38] : memref<1x344x64xf32, #tpu.memory_space<vmem>>, vector<1x288x64xf32>
    %49 = vector.shape_cast %48 : vector<1x288x64xf32> to vector<288x64xf32>
    %50 = arith.truncf %49 : vector<288x64xf32> to vector<288x64xbf16>
    %c7 = arith.constant 7 : index
    %c0_39 = arith.constant 0 : index
    %c0_40 = arith.constant 0 : index
    %51 = vector.load %arg3[%c7, %c0_39, %c0_40] : memref<9x64x64xbf16, #tpu.memory_space<vmem>>, vector<1x64x64xbf16>
    %52 = vector.shape_cast %51 : vector<1x64x64xbf16> to vector<64x64xbf16>
    %cst_41 = arith.constant dense<0.000000e+00> : vector<288x64xf32>
    %53 = tpu.matmul %50, %52, %cst_41 {dimension_numbers = #tpu.dot_dimension_numbers<[1], [0], [0], [1], [0, 0, 1, 1], [], []>} : vector<288x64xbf16>, vector<64x64xbf16>, vector<288x64xf32> -> vector<288x64xf32>
    %54 = arith.addf %47, %53 : vector<288x64xf32>
    %c0_42 = arith.constant 0 : index
    %c38 = arith.constant 38 : index
    %c0_43 = arith.constant 0 : index
    %55 = vector.load %arg2[%c0_42, %c38, %c0_43] : memref<1x344x64xf32, #tpu.memory_space<vmem>>, vector<1x288x64xf32>
    %56 = vector.shape_cast %55 : vector<1x288x64xf32> to vector<288x64xf32>
    %57 = arith.truncf %56 : vector<288x64xf32> to vector<288x64xbf16>
    %c8 = arith.constant 8 : index
    %c0_44 = arith.constant 0 : index
    %c0_45 = arith.constant 0 : index
    %58 = vector.load %arg3[%c8, %c0_44, %c0_45] : memref<9x64x64xbf16, #tpu.memory_space<vmem>>, vector<1x64x64xbf16>
    %59 = vector.shape_cast %58 : vector<1x64x64xbf16> to vector<64x64xbf16>
    %cst_46 = arith.constant dense<0.000000e+00> : vector<288x64xf32>
    %60 = tpu.matmul %57, %59, %cst_46 {dimension_numbers = #tpu.dot_dimension_numbers<[1], [0], [0], [1], [0, 0, 1, 1], [], []>} : vector<288x64xbf16>, vector<64x64xbf16>, vector<288x64xf32> -> vector<288x64xf32>
    %61 = arith.addf %54, %60 : vector<288x64xf32>
    %cst_47 = arith.constant 1.000000e+00 : f32
    %62 = vector.broadcast %cst_47 : f32 to vector<288x64xf32>
    %63 = arith.addf %61, %62 : vector<288x64xf32>
    %64 = arith.mulf %63, %63 : vector<288x64xf32>
    %65 = arith.mulf %64, %63 : vector<288x64xf32>
    %c0_48 = arith.constant 0 : index
    %c0_49 = arith.constant 0 : index
    %66 = vector.load %arg4[%c0_48, %c0_49] : memref<1x64xf32, #tpu.memory_space<vmem>>, vector<1x64xf32>
    %67 = vector.broadcast %66 : vector<1x64xf32> to vector<288x64xf32>
    %68 = arith.mulf %65, %67 : vector<288x64xf32>
    %c0_50 = arith.constant 0 : index
    %c0_51 = arith.constant 0 : index
    %69 = vector.load %arg5[%c0_50, %c0_51] : memref<1x64xf32, #tpu.memory_space<vmem>>, vector<1x64xf32>
    %70 = vector.broadcast %69 : vector<1x64xf32> to vector<288x64xf32>
    %71 = arith.addf %68, %70 : vector<288x64xf32>
    %cst_52 = arith.constant 0.000000e+00 : f32
    %72 = vector.broadcast %cst_52 : f32 to vector<288x64xf32>
    %73 = arith.maximumf %71, %72 : vector<288x64xf32>
    %74 = arith.truncf %73 : vector<288x64xf32> to vector<288x64xbf16>
    %c0_53 = arith.constant 0 : index
    %c0_54 = arith.constant 0 : index
    %c0_55 = arith.constant 0 : index
    %75 = vector.load %arg6[%c0_53, %c0_54, %c0_55] : memref<1x288x64xbf16, #tpu.memory_space<vmem>>, vector<1x288x64xbf16>
    %76 = vector.shape_cast %75 : vector<1x288x64xbf16> to vector<288x64xbf16>
    %77 = vector.shape_cast %74 : vector<288x64xbf16> to vector<1x288x64xbf16>
    tpu.vector_store %arg6[%c0_53, %c0_54, %c0_55], %77 {strides = array<i32>} : memref<1x288x64xbf16, #tpu.memory_space<vmem>>, vector<1x288x64xbf16>,
    return
  }
  func.func @transform_0(%arg0: i32, %arg1: i32) -> (i32, i32, i32) {
    %c0_i32 = arith.constant 0 : i32
    %c0_i32_0 = arith.constant 0 : i32
    %c0_i32_1 = arith.constant 0 : i32
    return %arg0, %c0_i32, %c0_i32_0 : i32, i32, i32
  }
  func.func @transform_1(%arg0: i32, %arg1: i32) -> (i32, i32, i32) {
    %c0_i32 = arith.constant 0 : i32
    %c0_i32_0 = arith.constant 0 : i32
    %c0_i32_1 = arith.constant 0 : i32
    return %c0_i32, %c0_i32_0, %arg1 : i32, i32, i32
  }
  func.func @transform_2(%arg0: i32, %arg1: i32) -> (i32, i32) {
    %c0_i32 = arith.constant 0 : i32
    %c0_i32_0 = arith.constant 0 : i32
    return %c0_i32, %arg1 : i32, i32
  }
  func.func @transform_3(%arg0: i32, %arg1: i32) -> (i32, i32) {
    %c0_i32 = arith.constant 0 : i32
    %c0_i32_0 = arith.constant 0 : i32
    return %c0_i32, %arg1 : i32, i32
  }
  func.func @transform_4(%arg0: i32, %arg1: i32) -> (i32, i32, i32) {
    %c0_i32 = arith.constant 0 : i32
    %c0_i32_0 = arith.constant 0 : i32
    return %arg0, %c0_i32, %arg1 : i32, i32, i32
  }
}

module attributes {stable_mosaic.version = 11 : i64} {
  func.func @_kerv_mm_kernel(%arg0: i32, %arg1: i32, %arg2: i32, %arg3: memref<256x64xbf16, #tpu.memory_space<vmem>>, %arg4: memref<64x256xbf16, #tpu.memory_space<vmem>>, %arg5: memref<1x256xf32, #tpu.memory_space<vmem>>, %arg6: memref<1x256xf32, #tpu.memory_space<vmem>>, %arg7: memref<256x256xf32, #tpu.memory_space<vmem>>, %arg8: memref<256x256xf32, #tpu.memory_space<vmem>>) attributes {dimension_semantics = [#tpu.dimension_semantics<parallel>, #tpu.dimension_semantics<parallel>, #tpu.dimension_semantics<arbitrary>], iteration_bounds = array<i64: 2, 1, 1>, scalar_prefetch = 0 : i64, scratch_operands = 1 : i64, tpu.core_type = #tpu.core_type<tc>, window_params = [{transform_indices = @transform_0, window_bounds = array<i64: 256, 64>}, {transform_indices = @transform_1, window_bounds = array<i64: 64, 256>}, {transform_indices = @transform_2, window_bounds = array<i64: 1, 256>}, {transform_indices = @transform_3, window_bounds = array<i64: 1, 256>}, {transform_indices = @transform_4, window_bounds = array<i64: 256, 256>}]} {
    %c0_i32 = arith.constant 0 : i32
    %0 = arith.cmpi eq, %arg2, %c0_i32 : i32
    %1 = arith.extui %0 : i1 to i32
    %c0_i32_0 = arith.constant 0 : i32
    %2 = arith.cmpi ne, %1, %c0_i32_0 : i32
    scf.if %2 {
      %cst_10 = arith.constant 0.000000e+00 : f32
      %12 = vector.broadcast %cst_10 : f32 to vector<256x256xf32>
      %c0_11 = arith.constant 0 : index
      %c0_12 = arith.constant 0 : index
      %13 = vector.load %arg8[%c0_11, %c0_12] : memref<256x256xf32, #tpu.memory_space<vmem>>, vector<256x256xf32>
      tpu.vector_store %arg8[%c0_11, %c0_12], %12 {strides = array<i32>} : memref<256x256xf32, #tpu.memory_space<vmem>>, vector<256x256xf32>,
    } else {
    }
    %c0 = arith.constant 0 : index
    %c0_1 = arith.constant 0 : index
    %3 = vector.load %arg8[%c0, %c0_1] : memref<256x256xf32, #tpu.memory_space<vmem>>, vector<256x256xf32>
    %c0_2 = arith.constant 0 : index
    %c0_3 = arith.constant 0 : index
    %4 = vector.load %arg3[%c0_2, %c0_3] : memref<256x64xbf16, #tpu.memory_space<vmem>>, vector<256x64xbf16>
    %c0_4 = arith.constant 0 : index
    %c0_5 = arith.constant 0 : index
    %5 = vector.load %arg4[%c0_4, %c0_5] : memref<64x256xbf16, #tpu.memory_space<vmem>>, vector<64x256xbf16>
    %cst = arith.constant dense<0.000000e+00> : vector<256x256xf32>
    %6 = tpu.matmul %4, %5, %cst {dimension_numbers = #tpu.dot_dimension_numbers<[1], [0], [0], [1], [0, 0, 1, 1], [], []>} : vector<256x64xbf16>, vector<64x256xbf16>, vector<256x256xf32> -> vector<256x256xf32>
    %7 = arith.addf %3, %6 : vector<256x256xf32>
    %c0_6 = arith.constant 0 : index
    %c0_7 = arith.constant 0 : index
    %8 = vector.load %arg8[%c0_6, %c0_7] : memref<256x256xf32, #tpu.memory_space<vmem>>, vector<256x256xf32>
    tpu.vector_store %arg8[%c0_6, %c0_7], %7 {strides = array<i32>} : memref<256x256xf32, #tpu.memory_space<vmem>>, vector<256x256xf32>,
    %c0_i32_8 = arith.constant 0 : i32
    %9 = arith.cmpi eq, %arg2, %c0_i32_8 : i32
    %10 = arith.extui %9 : i1 to i32
    %c0_i32_9 = arith.constant 0 : i32
    %11 = arith.cmpi ne, %10, %c0_i32_9 : i32
    scf.if %11 {
      %c0_10 = arith.constant 0 : index
      %c0_11 = arith.constant 0 : index
      %12 = vector.load %arg8[%c0_10, %c0_11] : memref<256x256xf32, #tpu.memory_space<vmem>>, vector<256x256xf32>
      %cst_12 = arith.constant 1.000000e+00 : f32
      %13 = vector.broadcast %cst_12 : f32 to vector<256x256xf32>
      %14 = arith.addf %12, %13 : vector<256x256xf32>
      %15 = arith.mulf %14, %14 : vector<256x256xf32>
      %16 = arith.mulf %15, %14 : vector<256x256xf32>
      %c0_13 = arith.constant 0 : index
      %c0_14 = arith.constant 0 : index
      %17 = vector.load %arg5[%c0_13, %c0_14] : memref<1x256xf32, #tpu.memory_space<vmem>>, vector<1x256xf32>
      %18 = vector.broadcast %17 : vector<1x256xf32> to vector<256x256xf32>
      %19 = arith.mulf %16, %18 : vector<256x256xf32>
      %c0_15 = arith.constant 0 : index
      %c0_16 = arith.constant 0 : index
      %20 = vector.load %arg6[%c0_15, %c0_16] : memref<1x256xf32, #tpu.memory_space<vmem>>, vector<1x256xf32>
      %21 = vector.broadcast %20 : vector<1x256xf32> to vector<256x256xf32>
      %22 = arith.addf %19, %21 : vector<256x256xf32>
      %c0_17 = arith.constant 0 : index
      %c0_18 = arith.constant 0 : index
      %23 = vector.load %arg7[%c0_17, %c0_18] : memref<256x256xf32, #tpu.memory_space<vmem>>, vector<256x256xf32>
      tpu.vector_store %arg7[%c0_17, %c0_18], %22 {strides = array<i32>} : memref<256x256xf32, #tpu.memory_space<vmem>>, vector<256x256xf32>,
    } else {
    }
    return
  }
  func.func @transform_0(%arg0: i32, %arg1: i32, %arg2: i32) -> (i32, i32) {
    %c0_i32 = arith.constant 0 : i32
    return %arg0, %arg2 : i32, i32
  }
  func.func @transform_1(%arg0: i32, %arg1: i32, %arg2: i32) -> (i32, i32) {
    %c0_i32 = arith.constant 0 : i32
    return %arg2, %arg1 : i32, i32
  }
  func.func @transform_2(%arg0: i32, %arg1: i32, %arg2: i32) -> (i32, i32) {
    %c0_i32 = arith.constant 0 : i32
    %c0_i32_0 = arith.constant 0 : i32
    return %c0_i32, %arg1 : i32, i32
  }
  func.func @transform_3(%arg0: i32, %arg1: i32, %arg2: i32) -> (i32, i32) {
    %c0_i32 = arith.constant 0 : i32
    %c0_i32_0 = arith.constant 0 : i32
    return %c0_i32, %arg1 : i32, i32
  }
  func.func @transform_4(%arg0: i32, %arg1: i32, %arg2: i32) -> (i32, i32) {
    %c0_i32 = arith.constant 0 : i32
    return %arg0, %arg1 : i32, i32
  }
}

module attributes {stable_mosaic.version = 11 : i64} {
  func.func @_kerv_mm_kernel(%arg0: i32, %arg1: i32, %arg2: i32, %arg3: memref<256x64xbf16, #tpu.memory_space<vmem>>, %arg4: memref<64x256xbf16, #tpu.memory_space<vmem>>, %arg5: memref<1x256xf32, #tpu.memory_space<vmem>>, %arg6: memref<1x256xf32, #tpu.memory_space<vmem>>, %arg7: memref<256x256xf32, #tpu.memory_space<vmem>>, %arg8: memref<256x256xf32, #tpu.memory_space<vmem>>, %arg9: memref<256x256xf32, #tpu.memory_space<vmem>>) attributes {dimension_semantics = [#tpu.dimension_semantics<parallel>, #tpu.dimension_semantics<parallel>, #tpu.dimension_semantics<arbitrary>], iteration_bounds = array<i64: 2, 1, 1>, scalar_prefetch = 0 : i64, scratch_operands = 1 : i64, tpu.core_type = #tpu.core_type<tc>, window_params = [{transform_indices = @transform_0, window_bounds = array<i64: 256, 64>}, {transform_indices = @transform_1, window_bounds = array<i64: 64, 256>}, {transform_indices = @transform_2, window_bounds = array<i64: 1, 256>}, {transform_indices = @transform_3, window_bounds = array<i64: 1, 256>}, {transform_indices = @transform_4, window_bounds = array<i64: 256, 256>}, {transform_indices = @transform_5, window_bounds = array<i64: 256, 256>}]} {
    %c0_i32 = arith.constant 0 : i32
    %0 = arith.cmpi eq, %arg2, %c0_i32 : i32
    %1 = arith.extui %0 : i1 to i32
    %c0_i32_0 = arith.constant 0 : i32
    %2 = arith.cmpi ne, %1, %c0_i32_0 : i32
    scf.if %2 {
      %cst_10 = arith.constant 0.000000e+00 : f32
      %12 = vector.broadcast %cst_10 : f32 to vector<256x256xf32>
      %c0_11 = arith.constant 0 : index
      %c0_12 = arith.constant 0 : index
      %13 = vector.load %arg9[%c0_11, %c0_12] : memref<256x256xf32, #tpu.memory_space<vmem>>, vector<256x256xf32>
      tpu.vector_store %arg9[%c0_11, %c0_12], %12 {strides = array<i32>} : memref<256x256xf32, #tpu.memory_space<vmem>>, vector<256x256xf32>,
    } else {
    }
    %c0 = arith.constant 0 : index
    %c0_1 = arith.constant 0 : index
    %3 = vector.load %arg9[%c0, %c0_1] : memref<256x256xf32, #tpu.memory_space<vmem>>, vector<256x256xf32>
    %c0_2 = arith.constant 0 : index
    %c0_3 = arith.constant 0 : index
    %4 = vector.load %arg3[%c0_2, %c0_3] : memref<256x64xbf16, #tpu.memory_space<vmem>>, vector<256x64xbf16>
    %c0_4 = arith.constant 0 : index
    %c0_5 = arith.constant 0 : index
    %5 = vector.load %arg4[%c0_4, %c0_5] : memref<64x256xbf16, #tpu.memory_space<vmem>>, vector<64x256xbf16>
    %cst = arith.constant dense<0.000000e+00> : vector<256x256xf32>
    %6 = tpu.matmul %4, %5, %cst {dimension_numbers = #tpu.dot_dimension_numbers<[1], [0], [0], [1], [0, 0, 1, 1], [], []>} : vector<256x64xbf16>, vector<64x256xbf16>, vector<256x256xf32> -> vector<256x256xf32>
    %7 = arith.addf %3, %6 : vector<256x256xf32>
    %c0_6 = arith.constant 0 : index
    %c0_7 = arith.constant 0 : index
    %8 = vector.load %arg9[%c0_6, %c0_7] : memref<256x256xf32, #tpu.memory_space<vmem>>, vector<256x256xf32>
    tpu.vector_store %arg9[%c0_6, %c0_7], %7 {strides = array<i32>} : memref<256x256xf32, #tpu.memory_space<vmem>>, vector<256x256xf32>,
    %c0_i32_8 = arith.constant 0 : i32
    %9 = arith.cmpi eq, %arg2, %c0_i32_8 : i32
    %10 = arith.extui %9 : i1 to i32
    %c0_i32_9 = arith.constant 0 : i32
    %11 = arith.cmpi ne, %10, %c0_i32_9 : i32
    scf.if %11 {
      %c0_10 = arith.constant 0 : index
      %c0_11 = arith.constant 0 : index
      %12 = vector.load %arg9[%c0_10, %c0_11] : memref<256x256xf32, #tpu.memory_space<vmem>>, vector<256x256xf32>
      %cst_12 = arith.constant 1.000000e+00 : f32
      %13 = vector.broadcast %cst_12 : f32 to vector<256x256xf32>
      %14 = arith.addf %12, %13 : vector<256x256xf32>
      %15 = arith.mulf %14, %14 : vector<256x256xf32>
      %16 = arith.mulf %15, %14 : vector<256x256xf32>
      %c0_13 = arith.constant 0 : index
      %c0_14 = arith.constant 0 : index
      %17 = vector.load %arg5[%c0_13, %c0_14] : memref<1x256xf32, #tpu.memory_space<vmem>>, vector<1x256xf32>
      %18 = vector.broadcast %17 : vector<1x256xf32> to vector<256x256xf32>
      %19 = arith.mulf %16, %18 : vector<256x256xf32>
      %c0_15 = arith.constant 0 : index
      %c0_16 = arith.constant 0 : index
      %20 = vector.load %arg6[%c0_15, %c0_16] : memref<1x256xf32, #tpu.memory_space<vmem>>, vector<1x256xf32>
      %21 = vector.broadcast %20 : vector<1x256xf32> to vector<256x256xf32>
      %22 = arith.addf %19, %21 : vector<256x256xf32>
      %c0_17 = arith.constant 0 : index
      %c0_18 = arith.constant 0 : index
      %23 = vector.load %arg7[%c0_17, %c0_18] : memref<256x256xf32, #tpu.memory_space<vmem>>, vector<256x256xf32>
      %24 = arith.addf %22, %23 : vector<256x256xf32>
      %cst_19 = arith.constant 0.000000e+00 : f32
      %25 = vector.broadcast %cst_19 : f32 to vector<256x256xf32>
      %26 = arith.maximumf %24, %25 : vector<256x256xf32>
      %c0_20 = arith.constant 0 : index
      %c0_21 = arith.constant 0 : index
      %27 = vector.load %arg8[%c0_20, %c0_21] : memref<256x256xf32, #tpu.memory_space<vmem>>, vector<256x256xf32>
      tpu.vector_store %arg8[%c0_20, %c0_21], %26 {strides = array<i32>} : memref<256x256xf32, #tpu.memory_space<vmem>>, vector<256x256xf32>,
    } else {
    }
    return
  }
  func.func @transform_0(%arg0: i32, %arg1: i32, %arg2: i32) -> (i32, i32) {
    %c0_i32 = arith.constant 0 : i32
    return %arg0, %arg2 : i32, i32
  }
  func.func @transform_1(%arg0: i32, %arg1: i32, %arg2: i32) -> (i32, i32) {
    %c0_i32 = arith.constant 0 : i32
    return %arg2, %arg1 : i32, i32
  }
  func.func @transform_2(%arg0: i32, %arg1: i32, %arg2: i32) -> (i32, i32) {
    %c0_i32 = arith.constant 0 : i32
    %c0_i32_0 = arith.constant 0 : i32
    return %c0_i32, %arg1 : i32, i32
  }
  func.func @transform_3(%arg0: i32, %arg1: i32, %arg2: i32) -> (i32, i32) {
    %c0_i32 = arith.constant 0 : i32
    %c0_i32_0 = arith.constant 0 : i32
    return %c0_i32, %arg1 : i32, i32
  }
  func.func @transform_4(%arg0: i32, %arg1: i32, %arg2: i32) -> (i32, i32) {
    %c0_i32 = arith.constant 0 : i32
    return %arg0, %arg1 : i32, i32
  }
  func.func @transform_5(%arg0: i32, %arg1: i32, %arg2: i32) -> (i32, i32) {
    %c0_i32 = arith.constant 0 : i32
    return %arg0, %arg1 : i32, i32
  }
}

</mosaic_0001>

<llo_original>
// kernel: _lambda_.4
$region0: #{_lambda_.4}
  #allocation0 [shape = 'u32[]', space=smem, size = 0x4, offset = 0x4, fixed_abs, tag = 'smem constant byte address 0x4 - core index']
  #allocation1 [shape = 'u32[144,128]{1,0:T(1,128)}', space=vmem, size = 0x12000, scoped, tag = 'internal scratch']
  #allocation2 [shape = 'f32[256,64]{1,0:T(8,128)}', space=vmem, size = 0x20000, scoped, tag = 'scratch operand']
  %s0 = inlined_call_operand.vmem [shape: bf16[512,64], index: 0, kind: input, shape index: {}]
  %s1 = inlined_call_operand.vmem [shape: bf16[64,64], index: 1, kind: input, shape index: {}]
  %s2 = inlined_call_operand.vmem [shape: f32[1,64], index: 2, kind: input, shape index: {}]
  %s3 = inlined_call_operand.vmem [shape: f32[1,64], index: 3, kind: input, shape index: {}]
  %s4 = inlined_call_operand.vmem [shape: f32[512,64], index: 4, kind: output, shape index: {}]
  %s5 = sld [smem:[#allocation0]]
  $region57: #{_lambda_.4} parent=0
    _
  %s7 = ssub.s32 1, %s5
  %s8 = scalar_select 0, %s7, %s5
  loop: start=0, step=1, limit=4
  $region2: #{_lambda_.4} parent=0 // loop_pre_header
    _
  $region3: #{_lambda_.4} parent=0 // loop_header
    %s10 = sphi 0, %s14
    %p11 = scmp.ge.s32.totalorder %s10, 4
    %s17 = sphi 0, %s36
    %s18 = sphi 0, %s32
    %s19 = sphi 0, %s28
    %s20 = sphi 0, %s17
    %s21 = sphi 0, %s18
    %s22 = sphi 0, %s19
    %s23 = sphi 0, %s20
    %s24 = sphi 0, %s21
    %s25 = sphi 0, %s22
    %s41 = sphi 0, %s43
    %s44 = sphi 0, %s41
    %s45 = sphi 0, %s44
    %s61 = sphi 0, %s45
    %s69 = sphi 0, %s71
    %s72 = sphi 0, %s69
    %s73 = sphi 0, %s72
    %s89 = sphi 0, %s73
    %s95 = sphi 0, %s97
    %s98 = sphi 0, %s95
    %s99 = sphi 0, %s98
    %s115 = sphi 0, %s99
    %s121 = sphi 0, %s123
    %s124 = sphi 0, %s121
    %s125 = sphi 0, %s124
    %s141 = sphi 0, %s125
    %s149 = sphi 0, %s151
    %s152 = sphi 0, %s149
    %s153 = sphi 0, %s152
    %s169 = sphi 0, %s153
  $region4: #{_lambda_.4} parent=0 // loop_header_branch
    %13 = sbr.rel (%p11) target = $region8
  $region5: #{_lambda_.4} parent=0 // loop_body
    %s15 = ssub.s32 %s10, 1
    %s16 = ssub.s32 %s10, 2
    %s26 = sadd.s32 1, %s19
    %p27 = scmp.ge.s32.totalorder %s26, 1
    %s28 = scalar_select %p27, 0, %s26
    %s29 = sadd.s32 1, %s18
    %s30 = scalar_select %p27, %s29, %s18
    %p31 = scmp.ge.s32.totalorder %s30, 1
    %s32 = scalar_select %p31, 0, %s30
    %s33 = sadd.s32 1, %s17
    %s34 = scalar_select %p31, %s33, %s17
    %p35 = scmp.ge.s32.totalorder %s34, 2
    %s36 = scalar_select %p35, 0, %s34
    %s37 = ssub.s32 %s17, %s36
    %s38 = ssub.s32 %s19, %s28
    %s39 = sor.u32 %s37, %s38
    %p40 = scmp.eq.s32.totalorder %s39, 0
    %s42 = sadd.s32 %s41, 1
    %s43 = scalar_select %p40, %s41, %s42
    %p46 = pneg %p40
    %p47 = scmp.eq.s32.totalorder %s10, 1
    %p48 = por %p46, %p47
    %p49 = scmp.ne.s32.totalorder %s41, %s44
    %p50 = scmp.eq.s32.totalorder %s10, 0
    %p51 = por %p49, %p50
    %p52 = scmp.ne.s32.totalorder %s41, %s44
    %p53 = scmp.eq.s32.totalorder %s15, 1
    %p54 = por %p52, %p53
    %p55 = scmp.ne.s32.totalorder %s44, %s45
    %p56 = scmp.eq.s32.totalorder %s15, 0
    %p57 = por %p55, %p56
    %p58 = scmp.ne.s32.totalorder %s44, %s45
    %p59 = scmp.eq.s32.totalorder %s16, 1
    %p60 = por %p58, %p59
    %p62 = scmp.ne.s32.totalorder %s45, %s61
    %p63 = scmp.eq.s32.totalorder %s16, 0
    %p64 = por %p62, %p63
    %s65 = ssub.s32 %s19, %s28
    %s66 = ssub.s32 %s18, %s32
    %s67 = sor.u32 %s65, %s66
    %p68 = scmp.eq.s32.totalorder %s67, 0
    %s70 = sadd.s32 %s69, 1
    %s71 = scalar_select %p68, %s69, %s70
    %p74 = pneg %p68
    %p75 = scmp.eq.s32.totalorder %s10, 1
    %p76 = por %p74, %p75
    %p77 = scmp.ne.s32.totalorder %s69, %s72
    %p78 = scmp.eq.s32.totalorder %s10, 0
    %p79 = por %p77, %p78
    %p80 = scmp.ne.s32.totalorder %s69, %s72
    %p81 = scmp.eq.s32.totalorder %s15, 1
    %p82 = por %p80, %p81
    %p83 = scmp.ne.s32.totalorder %s72, %s73
    %p84 = scmp.eq.s32.totalorder %s15, 0
    %p85 = por %p83, %p84
    %p86 = scmp.ne.s32.totalorder %s72, %s73
    %p87 = scmp.eq.s32.totalorder %s16, 1
    %p88 = por %p86, %p87
    %p90 = scmp.ne.s32.totalorder %s73, %s89
    %p91 = scmp.eq.s32.totalorder %s16, 0
    %p92 = por %p90, %p91
    %s93 = ssub.s32 %s18, %s32
    %p94 = scmp.eq.s32.totalorder %s93, 0
    %s96 = sadd.s32 %s95, 1
    %s97 = scalar_select %p94, %s95, %s96
    %p100 = pneg %p94
    %p101 = scmp.eq.s32.totalorder %s10, 1
    %p102 = por %p100, %p101
    %p103 = scmp.ne.s32.totalorder %s95, %s98
    %p104 = scmp.eq.s32.totalorder %s10, 0
    %p105 = por %p103, %p104
    %p106 = scmp.ne.s32.totalorder %s95, %s98
    %p107 = scmp.eq.s32.totalorder %s15, 1
    %p108 = por %p106, %p107
    %p109 = scmp.ne.s32.totalorder %s98, %s99
    %p110 = scmp.eq.s32.totalorder %s15, 0
    %p111 = por %p109, %p110
    %p112 = scmp.ne.s32.totalorder %s98, %s99
    %p113 = scmp.eq.s32.totalorder %s16, 1
    %p114 = por %p112, %p113
    %p116 = scmp.ne.s32.totalorder %s99, %s115
    %p117 = scmp.eq.s32.totalorder %s16, 0
    %p118 = por %p116, %p117
    %s119 = ssub.s32 %s18, %s32
    %p120 = scmp.eq.s32.totalorder %s119, 0
    %s122 = sadd.s32 %s121, 1
    %s123 = scalar_select %p120, %s121, %s122
    %p126 = pneg %p120
    %p127 = scmp.eq.s32.totalorder %s10, 1
    %p128 = por %p126, %p127
    %p129 = scmp.ne.s32.totalorder %s121, %s124
    %p130 = scmp.eq.s32.totalorder %s10, 0
    %p131 = por %p129, %p130
    %p132 = scmp.ne.s32.totalorder %s121, %s124
    %p133 = scmp.eq.s32.totalorder %s15, 1
    %p134 = por %p132, %p133
    %p135 = scmp.ne.s32.totalorder %s124, %s125
    %p136 = scmp.eq.s32.totalorder %s15, 0
    %p137 = por %p135, %p136
    %p138 = scmp.ne.s32.totalorder %s124, %s125
    %p139 = scmp.eq.s32.totalorder %s16, 1
    %p140 = por %p138, %p139
    %p142 = scmp.ne.s32.totalorder %s125, %s141
    %p143 = scmp.eq.s32.totalorder %s16, 0
    %p144 = por %p142, %p143
    %s145 = ssub.s32 %s17, %s36
    %s146 = ssub.s32 %s18, %s32
    %s147 = sor.u32 %s145, %s146
    %p148 = scmp.eq.s32.totalorder %s147, 0
    %s150 = sadd.s32 %s149, 1
    %s151 = scalar_select %p148, %s149, %s150
    %p154 = pneg %p148
    %p155 = scmp.eq.s32.totalorder %s10, 1
    %p156 = por %p154, %p155
    %p157 = scmp.ne.s32.totalorder %s149, %s152
    %p158 = scmp.eq.s32.totalorder %s10, 0
    %p159 = por %p157, %p158
    %p160 = scmp.ne.s32.totalorder %s149, %s152
    %p161 = scmp.eq.s32.totalorder %s15, 1
    %p162 = por %p160, %p161
    %p163 = scmp.ne.s32.totalorder %s152, %s153
    %p164 = scmp.eq.s32.totalorder %s15, 0
    %p165 = por %p163, %p164
    %p166 = scmp.ne.s32.totalorder %s152, %s153
    %p167 = scmp.eq.s32.totalorder %s16, 1
    %p168 = por %p166, %p167
    %p170 = scmp.ne.s32.totalorder %s153, %s169
    %p171 = scmp.eq.s32.totalorder %s16, 0
    %p172 = por %p170, %p171
    %p173 = scmp.le.s32.totalorder 1, %s10
    %p174 = scmp.lt.s32.totalorder %s10, 3
    %p175 = pnand %p173, %p174
    %p176 = pneg %p175
    // Predicated region
    $region9: #{_lambda_.4} parent=5 // pred_check
      _
    $region10: #{_lambda_.4} parent=5 // pred_check_branch
      %178 = sbr.rel (%p175) target = $region12
    $region11: #{_lambda_.4} parent=5 // pred_region
      %s179 = ssub.s32 %s10, 1
      // Predicated region
      $region13: #{_lambda_.4} parent=11 // pred_check
        %p180 = pneg %p85
      $region14: #{_lambda_.4} parent=11 // pred_check_branch
        %182 = sbr.rel (%p180) target = $region16
      $region15: #{_lambda_.4} parent=11 // pred_region
        %s183 = smul.u32 8, %s22
        %p184 = scmp.lt.s32.totalorder %s183, 7
        %s185 = scalar_select %p184, %s183, 7
        %p186 = scmp.lt.s32.totalorder %s21, 0
        %s187 = scalar_select %p186, %s21, 0
        %s188 = sadd.s32 %s187, %s185
        %s189 = smul.addr %s188, 4
        %s190 = scalar_lea.vmem %s1, %s189
        %s191 = smul.u32 8, %s22
      $region16: #{_lambda_.4} parent=11 // pred_fallthru
        _
      // Predicated region
      $region17: #{_lambda_.4} parent=11 // pred_check
        %p192 = pneg %p111
      $region18: #{_lambda_.4} parent=11 // pred_check_branch
        %194 = sbr.rel (%p192) target = $region20
      $region19: #{_lambda_.4} parent=11 // pred_region
        %p195 = scmp.lt.s32.totalorder %s21, 0
        %s196 = scalar_select %p195, %s21, 0
        %s197 = scalar_lea.vmem %s2, %s196
      $region20: #{_lambda_.4} parent=11 // pred_fallthru
        _
      // Predicated region
      $region21: #{_lambda_.4} parent=11 // pred_check
        %p198 = pneg %p137
      $region22: #{_lambda_.4} parent=11 // pred_check_branch
        %200 = sbr.rel (%p198) target = $region24
      $region23: #{_lambda_.4} parent=11 // pred_region
        %p201 = scmp.lt.s32.totalorder %s21, 0
        %s202 = scalar_select %p201, %s21, 0
        %s203 = scalar_lea.vmem %s3, %s202
      $region24: #{_lambda_.4} parent=11 // pred_fallthru
        _
    $region12: #{_lambda_.4} parent=5 // pred_fallthru
      _
    %p204 = scmp.lt.s32.totalorder %s10, 2
    // Predicated region
    $region25: #{_lambda_.4} parent=5 // pred_check
      %p205 = pneg %p204
    $region26: #{_lambda_.4} parent=5 // pred_check_branch
      %207 = sbr.rel (%p205) target = $region28
    $region27: #{_lambda_.4} parent=5 // pred_region
      // Predicated region
      $region29: #{_lambda_.4} parent=27 // pred_check
        %p208 = pneg %p51
      $region30: #{_lambda_.4} parent=27 // pred_check_branch
        %210 = sbr.rel (%p208) target = $region32
      $region31: #{_lambda_.4} parent=27 // pred_region
        %s211 = smul.u32 32, %s17
        %p212 = scmp.lt.s32.totalorder %s211, 63
        %s213 = scalar_select %p212, %s211, 63
        %p214 = scmp.lt.s32.totalorder %s19, 0
        %s215 = scalar_select %p214, %s19, 0
        %s216 = sadd.s32 %s215, %s213
        %s217 = smul.addr %s216, 4
        %s218 = scalar_lea.vmem %s0, %s217
        %s219 = smul.u32 32, %s17
      $region32: #{_lambda_.4} parent=27 // pred_fallthru
        _
    $region28: #{_lambda_.4} parent=5 // pred_fallthru
      _
    %p220 = scmp.le.s32.totalorder 1, %s10
    %p221 = scmp.lt.s32.totalorder %s10, 3
    %p222 = pnand %p220, %p221
    %p223 = pneg %p222
    // Predicated region
    $region33: #{_lambda_.4} parent=5 // pred_check
      _
    $region34: #{_lambda_.4} parent=5 // pred_check_branch
      %225 = sbr.rel (%p222) target = $region36
    $region35: #{_lambda_.4} parent=5 // pred_region
      %s226 = ssub.s32 %s10, 1
      %s227 = smul.u32 32, %s20
      %p228 = scmp.lt.s32.totalorder %s227, 63
      %s229 = scalar_select %p228, %s227, 63
      %p230 = scmp.lt.s32.totalorder %s22, 0
      %s231 = scalar_select %p230, %s22, 0
      %s232 = sadd.s32 %s231, %s229
      %s233 = smul.addr %s232, 4
      %s234 = scalar_lea.vmem %s0, %s233
      %p235 = pneg %p57
      %p236 = pneg %p54
      %s237 = smul.u32 8, %s22
      %p238 = scmp.lt.s32.totalorder %s237, 7
      %s239 = scalar_select %p238, %s237, 7
      %p240 = scmp.lt.s32.totalorder %s21, 0
      %s241 = scalar_select %p240, %s21, 0
      %s242 = sadd.s32 %s241, %s239
      %s243 = smul.addr %s242, 4
      %s244 = scalar_lea.vmem %s1, %s243
      %p245 = pneg %p85
      %p246 = pneg %p82
      %p247 = scmp.lt.s32.totalorder %s21, 0
      %s248 = scalar_select %p247, %s21, 0
      %s249 = scalar_lea.vmem %s2, %s248
      %p250 = pneg %p111
      %p251 = pneg %p108
      %p252 = scmp.lt.s32.totalorder %s21, 0
      %s253 = scalar_select %p252, %s21, 0
      %s254 = scalar_lea.vmem %s3, %s253
      %p255 = pneg %p137
      %p256 = pneg %p134
      %p257 = pneg %p165
      %p258 = pneg %p162
      %s259 = smul.u32 32, %s20
      %p260 = scmp.lt.s32.totalorder %s259, 63
      %s261 = scalar_select %p260, %s259, 63
      %p262 = scmp.lt.s32.totalorder %s21, 0
      %s263 = scalar_select %p262, %s21, 0
      %s264 = sadd.s32 %s263, %s261
      %s265 = smul.addr %s264, 8
      %s266 = scalar_lea.vmem %s4, %s265
      %s267 = smul.u32 32, %s20
      %p268 = scmp.lt.s32.totalorder %s267, 63
      %s269 = scalar_select %p268, %s267, 63
      %p270 = scmp.lt.s32.totalorder %s22, 0
      %s271 = scalar_select %p270, %s22, 0
      %s272 = sadd.s32 %s271, %s269
      %s273 = smul.addr %s272, 4
      %s274 = scalar_lea.vmem %s0, %s273
      %s275 = smul.u32 32, %s20
      %s276 = smul.u32 8, %s22
      %p277 = scmp.lt.s32.totalorder %s276, 7
      %s278 = scalar_select %p277, %s276, 7
      %p279 = scmp.lt.s32.totalorder %s21, 0
      %s280 = scalar_select %p279, %s21, 0
      %s281 = sadd.s32 %s280, %s278
      %s282 = smul.addr %s281, 4
      %s283 = scalar_lea.vmem %s1, %s282
      %s284 = smul.u32 8, %s22
      %p285 = scmp.lt.s32.totalorder %s21, 0
      %s286 = scalar_select %p285, %s21, 0
      %s287 = scalar_lea.vmem %s2, %s286
      %p288 = scmp.lt.s32.totalorder %s21, 0
      %s289 = scalar_select %p288, %s21, 0
      %s290 = scalar_lea.vmem %s3, %s289
      %s291 = smul.u32 32, %s20
      %p292 = scmp.lt.s32.totalorder %s291, 63
      %s293 = scalar_select %p292, %s291, 63
      %p294 = scmp.lt.s32.totalorder %s21, 0
      %s295 = scalar_select %p294, %s21, 0
      %s296 = sadd.s32 %s295, %s293
      %s297 = smul.addr %s296, 8
      %s298 = scalar_lea.vmem %s4, %s297
      %s299 = smul.u32 32, %s20
      %p301 = scmp.eq.s32.totalorder %s22, 0
      // Predicated region
      $region37: #{_lambda_.4} parent=35 // pred_check
        %p302 = pneg %p301
      $region38: #{_lambda_.4} parent=35 // pred_check_branch
        %304 = sbr.rel (%p302) target = $region40
      $region39: #{_lambda_.4} parent=35 // pred_region
        %vm305 = vcmask 523264
        %306 = vst.msk [vmem:[#allocation2] sm:$0xff] %vm305, 0.0
        %307 = vst.msk [vmem:[#allocation2 + $0x8] sm:$0xff] %vm305, 0.0
        %308 = vst.msk [vmem:[#allocation2 + $0x10] sm:$0xff] %vm305, 0.0
        %309 = vst.msk [vmem:[#allocation2 + $0x18] sm:$0xff] %vm305, 0.0
        %310 = vst.msk [vmem:[#allocation2 + $0x20] sm:$0xff] %vm305, 0.0
        %311 = vst.msk [vmem:[#allocation2 + $0x28] sm:$0xff] %vm305, 0.0
        %312 = vst.msk [vmem:[#allocation2 + $0x30] sm:$0xff] %vm305, 0.0
        %313 = vst.msk [vmem:[#allocation2 + $0x38] sm:$0xff] %vm305, 0.0
        %314 = vst.msk [vmem:[#allocation2 + $0x40] sm:$0xff] %vm305, 0.0
        %315 = vst.msk [vmem:[#allocation2 + $0x48] sm:$0xff] %vm305, 0.0
        %316 = vst.msk [vmem:[#allocation2 + $0x50] sm:$0xff] %vm305, 0.0
        %317 = vst.msk [vmem:[#allocation2 + $0x58] sm:$0xff] %vm305, 0.0
        %318 = vst.msk [vmem:[#allocation2 + $0x60] sm:$0xff] %vm305, 0.0
        %319 = vst.msk [vmem:[#allocation2 + $0x68] sm:$0xff] %vm305, 0.0
        %320 = vst.msk [vmem:[#allocation2 + $0x70] sm:$0xff] %vm305, 0.0
        %321 = vst.msk [vmem:[#allocation2 + $0x78] sm:$0xff] %vm305, 0.0
        %322 = vst.msk [vmem:[#allocation2 + $0x80] sm:$0xff] %vm305, 0.0
        %323 = vst.msk [vmem:[#allocation2 + $0x88] sm:$0xff] %vm305, 0.0
        %324 = vst.msk [vmem:[#allocation2 + $0x90] sm:$0xff] %vm305, 0.0
        %325 = vst.msk [vmem:[#allocation2 + $0x98] sm:$0xff] %vm305, 0.0
        %326 = vst.msk [vmem:[#allocation2 + $0xa0] sm:$0xff] %vm305, 0.0
        %327 = vst.msk [vmem:[#allocation2 + $0xa8] sm:$0xff] %vm305, 0.0
        %328 = vst.msk [vmem:[#allocation2 + $0xb0] sm:$0xff] %vm305, 0.0
        %329 = vst.msk [vmem:[#allocation2 + $0xb8] sm:$0xff] %vm305, 0.0
        %330 = vst.msk [vmem:[#allocation2 + $0xc0] sm:$0xff] %vm305, 0.0
        %331 = vst.msk [vmem:[#allocation2 + $0xc8] sm:$0xff] %vm305, 0.0
        %332 = vst.msk [vmem:[#allocation2 + $0xd0] sm:$0xff] %vm305, 0.0
        %333 = vst.msk [vmem:[#allocation2 + $0xd8] sm:$0xff] %vm305, 0.0
        %334 = vst.msk [vmem:[#allocation2 + $0xe0] sm:$0xff] %vm305, 0.0
        %335 = vst.msk [vmem:[#allocation2 + $0xe8] sm:$0xff] %vm305, 0.0
        %336 = vst.msk [vmem:[#allocation2 + $0xf0] sm:$0xff] %vm305, 0.0
        %337 = vst.msk [vmem:[#allocation2 + $0xf8] sm:$0xff] %vm305, 0.0
      $region40: #{_lambda_.4} parent=35 // pred_fallthru
        _
      %v338 = vld [vmem:[#allocation2] sm:$0xff]
      %v339 = vld [vmem:[#allocation2 + $0x8] sm:$0xff]
      %v340 = vld [vmem:[#allocation2 + $0x10] sm:$0xff]
      %v341 = vld [vmem:[#allocation2 + $0x18] sm:$0xff]
      %v342 = vld [vmem:[#allocation2 + $0x20] sm:$0xff]
      %v343 = vld [vmem:[#allocation2 + $0x28] sm:$0xff]
      %v344 = vld [vmem:[#allocation2 + $0x30] sm:$0xff]
      %v345 = vld [vmem:[#allocation2 + $0x38] sm:$0xff]
      %v346 = vld [vmem:[#allocation2 + $0x40] sm:$0xff]
      %v347 = vld [vmem:[#allocation2 + $0x48] sm:$0xff]
      %v348 = vld [vmem:[#allocation2 + $0x50] sm:$0xff]
      %v349 = vld [vmem:[#allocation2 + $0x58] sm:$0xff]
      %v350 = vld [vmem:[#allocation2 + $0x60] sm:$0xff]
      %v351 = vld [vmem:[#allocation2 + $0x68] sm:$0xff]
      %v352 = vld [vmem:[#allocation2 + $0x70] sm:$0xff]
      %v353 = vld [vmem:[#allocation2 + $0x78] sm:$0xff]
      %v354 = vld [vmem:[#allocation2 + $0x80] sm:$0xff]
      %v355 = vld [vmem:[#allocation2 + $0x88] sm:$0xff]
      %v356 = vld [vmem:[#allocation2 + $0x90] sm:$0xff]
      %v357 = vld [vmem:[#allocation2 + $0x98] sm:$0xff]
      %v358 = vld [vmem:[#allocation2 + $0xa0] sm:$0xff]
      %v359 = vld [vmem:[#allocation2 + $0xa8] sm:$0xff]
      %v360 = vld [vmem:[#allocation2 + $0xb0] sm:$0xff]
      %v361 = vld [vmem:[#allocation2 + $0xb8] sm:$0xff]
      %v362 = vld [vmem:[#allocation2 + $0xc0] sm:$0xff]
      %v363 = vld [vmem:[#allocation2 + $0xc8] sm:$0xff]
      %v364 = vld [vmem:[#allocation2 + $0xd0] sm:$0xff]
      %v365 = vld [vmem:[#allocation2 + $0xd8] sm:$0xff]
      %v366 = vld [vmem:[#allocation2 + $0xe0] sm:$0xff]
      %v367 = vld [vmem:[#allocation2 + $0xe8] sm:$0xff]
      %v368 = vld [vmem:[#allocation2 + $0xf0] sm:$0xff]
      %v369 = vld [vmem:[#allocation2 + $0xf8] sm:$0xff]
      %v370 = vld [vmem:[%s274] sm:$0xf]
      %v371 = vld [vmem:[%s274 + $0x4] sm:$0xf]
      %v372 = vld [vmem:[%s274 + $0x8] sm:$0xf]
      %v373 = vld [vmem:[%s274 + $0xc] sm:$0xf]
      %v374 = vld [vmem:[%s274 + $0x10] sm:$0xf]
      %v375 = vld [vmem:[%s274 + $0x14] sm:$0xf]
      %v376 = vld [vmem:[%s274 + $0x18] sm:$0xf]
      %v377 = vld [vmem:[%s274 + $0x1c] sm:$0xf]
      %v378 = vld [vmem:[%s274 + $0x20] sm:$0xf]
      %v379 = vld [vmem:[%s274 + $0x24] sm:$0xf]
      %v380 = vld [vmem:[%s274 + $0x28] sm:$0xf]
      %v381 = vld [vmem:[%s274 + $0x2c] sm:$0xf]
      %v382 = vld [vmem:[%s274 + $0x30] sm:$0xf]
      %v383 = vld [vmem:[%s274 + $0x34] sm:$0xf]
      %v384 = vld [vmem:[%s274 + $0x38] sm:$0xf]
      %v385 = vld [vmem:[%s274 + $0x3c] sm:$0xf]
      %v386 = vld [vmem:[%s274 + $0x40] sm:$0xf]
      %v387 = vld [vmem:[%s274 + $0x44] sm:$0xf]
      %v388 = vld [vmem:[%s274 + $0x48] sm:$0xf]
      %v389 = vld [vmem:[%s274 + $0x4c] sm:$0xf]
      %v390 = vld [vmem:[%s274 + $0x50] sm:$0xf]
      %v391 = vld [vmem:[%s274 + $0x54] sm:$0xf]
      %v392 = vld [vmem:[%s274 + $0x58] sm:$0xf]
      %v393 = vld [vmem:[%s274 + $0x5c] sm:$0xf]
      %v394 = vld [vmem:[%s274 + $0x60] sm:$0xf]
      %v395 = vld [vmem:[%s274 + $0x64] sm:$0xf]
      %v396 = vld [vmem:[%s274 + $0x68] sm:$0xf]
      %v397 = vld [vmem:[%s274 + $0x6c] sm:$0xf]
      %v398 = vld [vmem:[%s274 + $0x70] sm:$0xf]
      %v399 = vld [vmem:[%s274 + $0x74] sm:$0xf]
      %v400 = vld [vmem:[%s274 + $0x78] sm:$0xf]
      %v401 = vld [vmem:[%s274 + $0x7c] sm:$0xf]
      %v402 = vld [vmem:[%s283] sm:$0xf]
      %v403 = vld [vmem:[%s283 + $0x4] sm:$0xf]
      %v404 = vld [vmem:[%s283 + $0x8] sm:$0xf]
      %v405 = vld [vmem:[%s283 + $0xc] sm:$0xf]
      %v406 = vld [vmem:[%s283 + $0x10] sm:$0xf]
      %v407 = vld [vmem:[%s283 + $0x14] sm:$0xf]
      %v408 = vld [vmem:[%s283 + $0x18] sm:$0xf]
      %v409 = vld [vmem:[%s283 + $0x1c] sm:$0xf]
      %v442 = vunpack.c.l.b16 %v370
      %v443 = vunpack.c.l.b16 %v371
      %v444 = vunpack.c.l.b16 %v372
      %v445 = vunpack.c.l.b16 %v373
      %v446 = vunpack.c.l.b16 %v374
      %v447 = vunpack.c.l.b16 %v375
      %v448 = vunpack.c.l.b16 %v376
      %v449 = vunpack.c.l.b16 %v377
      %v450 = vunpack.c.l.b16 %v378
      %v451 = vunpack.c.l.b16 %v379
      %v452 = vunpack.c.l.b16 %v380
      %v453 = vunpack.c.l.b16 %v381
      %v454 = vunpack.c.l.b16 %v382
      %v455 = vunpack.c.l.b16 %v383
      %v456 = vunpack.c.l.b16 %v384
      %v457 = vunpack.c.l.b16 %v385
      %v458 = vunpack.c.l.b16 %v386
      %v459 = vunpack.c.l.b16 %v387
      %v460 = vunpack.c.l.b16 %v388
      %v461 = vunpack.c.l.b16 %v389
      %v462 = vunpack.c.l.b16 %v390
      %v463 = vunpack.c.l.b16 %v391
      %v464 = vunpack.c.l.b16 %v392
      %v465 = vunpack.c.l.b16 %v393
      %v466 = vunpack.c.l.b16 %v394
      %v467 = vunpack.c.l.b16 %v395
      %v468 = vunpack.c.l.b16 %v396
      %v469 = vunpack.c.l.b16 %v397
      %v470 = vunpack.c.l.b16 %v398
      %v471 = vunpack.c.l.b16 %v399
      %v472 = vunpack.c.l.b16 %v400
      %v473 = vunpack.c.l.b16 %v401
      %v474 = vpack.c.b16 %v443, %v442
      %v475 = vpack.c.b16 %v445, %v444
      %v476 = vpack.c.b16 %v447, %v446
      %v477 = vpack.c.b16 %v449, %v448
      %v478 = vpack.c.b16 %v451, %v450
      %v479 = vpack.c.b16 %v453, %v452
      %v480 = vpack.c.b16 %v455, %v454
      %v481 = vpack.c.b16 %v457, %v456
      %v482 = vpack.c.b16 %v459, %v458
      %v483 = vpack.c.b16 %v461, %v460
      %v484 = vpack.c.b16 %v463, %v462
      %v485 = vpack.c.b16 %v465, %v464
      %v486 = vpack.c.b16 %v467, %v466
      %v487 = vpack.c.b16 %v469, %v468
      %v488 = vpack.c.b16 %v471, %v470
      %v489 = vpack.c.b16 %v473, %v472
      %v498 = vunpack.c.l.b16 %v402
      %v499 = vunpack.c.l.b16 %v403
      %v500 = vunpack.c.l.b16 %v404
      %v501 = vunpack.c.l.b16 %v405
      %v502 = vunpack.c.l.b16 %v406
      %v503 = vunpack.c.l.b16 %v407
      %v504 = vunpack.c.l.b16 %v408
      %v505 = vunpack.c.l.b16 %v409
      %v506 = vpack.c.b16 %v499, %v498
      %v507 = vpack.c.b16 %v501, %v500
      %v508 = vpack.c.b16 %v503, %v502
      %v509 = vpack.c.b16 %v505, %v504
      %vm514 = vcmask 523264
      %v516 = vsel %vm514, %v474, 0
      %v519 = vsel %vm514, %v475, 0
      %v522 = vsel %vm514, %v476, 0
      %v525 = vsel %vm514, %v477, 0
      %v528 = vsel %vm514, %v478, 0
      %v531 = vsel %vm514, %v479, 0
      %v534 = vsel %vm514, %v480, 0
      %v537 = vsel %vm514, %v481, 0
      %v540 = vsel %vm514, %v482, 0
      %v543 = vsel %vm514, %v483, 0
      %v546 = vsel %vm514, %v484, 0
      %v549 = vsel %vm514, %v485, 0
      %v552 = vsel %vm514, %v486, 0
      %v555 = vsel %vm514, %v487, 0
      %v558 = vsel %vm514, %v488, 0
      %v561 = vsel %vm514, %v489, 0
      %563 = vmatprep.subr.bf16.mxu0 0
      %564 = vmatpush1.bf16.msra.mxu0 0
      %565 = vmatprep.subr.bf16.mxu0 0
      %566 = vmatpush1.bf16.msra.mxu0 0
      %567 = vmatprep.subr.bf16.mxu0 0
      %568 = vmatpush1.bf16.msra.mxu0 0
      %569 = vmatprep.subr.bf16.mxu0 0
      %570 = vmatpush1.bf16.msra.mxu0 0
      %571 = vmatprep.subr.bf16.mxu0 0
      %572 = vmatpush1.bf16.msra.mxu0 %v509
      %573 = vmatprep.subr.bf16.mxu0 0
      %574 = vmatpush1.bf16.msra.mxu0 %v508
      %575 = vmatprep.subr.bf16.mxu0 0
      %576 = vmatpush1.bf16.msra.mxu0 %v507
      %577 = vmatprep.subr.bf16.mxu0 0
      %578 = vmatpush1.bf16.msra.mxu0 %v506
      %579 = vmatprep.subr.bf16.mxu0 0
      %580 = vmatpush2.bf16.msra.mxu0 0
      %581 = vmatprep.subr.bf16.mxu0 0
      %582 = vmatpush2.bf16.msra.mxu0 0
      %583 = vmatprep.subr.bf16.mxu0 0
      %584 = vmatpush2.bf16.msra.mxu0 0
      %585 = vmatprep.subr.bf16.mxu0 0
      %586 = vmatpush2.bf16.msra.mxu0 0
      %587 = vmatprep.subr.bf16.mxu0 0
      %588 = vmatpush2.bf16.msra.mxu0 0
      %589 = vmatprep.subr.bf16.mxu0 0
      %590 = vmatpush2.bf16.msra.mxu0 0
      %591 = vmatprep.subr.bf16.mxu0 0
      %592 = vmatpush2.bf16.msra.mxu0 0
      %593 = vmatprep.subr.bf16.mxu0 0
      %594 = vmatpush2.bf16.msra.mxu0 0
      %595 = vmatprep.mubr.bf16.mxu0 0
      %596 = vmatmul.mubr.bf16.gmra.mxu0 %v516
      %v597 = vpop.f32.mrf.mxu0
      %v598 = vadd.f32 0.0, %v597
      %v599 = vpop.f32.mrf.mxu0
      %v600 = vpop.f32.mrf.mxu0
      %v601 = vadd.f32 0.0, %v600
      %v602 = vpop.f32.mrf.mxu0
      %603 = vmatprep.mubr.bf16.mxu0 0
      %604 = vmatmul.mubr.bf16.gmra.mxu0 %v519
      %v605 = vpop.f32.mrf.mxu0
      %v606 = vadd.f32 0.0, %v605
      %v607 = vpop.f32.mrf.mxu0
      %v608 = vpop.f32.mrf.mxu0
      %v609 = vadd.f32 0.0, %v608
      %v610 = vpop.f32.mrf.mxu0
      %611 = vmatprep.mubr.bf16.mxu0 0
      %612 = vmatmul.mubr.bf16.gmra.mxu0 %v522
      %v613 = vpop.f32.mrf.mxu0
      %v614 = vadd.f32 0.0, %v613
      %v615 = vpop.f32.mrf.mxu0
      %v616 = vpop.f32.mrf.mxu0
      %v617 = vadd.f32 0.0, %v616
      %v618 = vpop.f32.mrf.mxu0
      %619 = vmatprep.mubr.bf16.mxu0 0
      %620 = vmatmul.mubr.bf16.gmra.mxu0 %v525
      %v621 = vpop.f32.mrf.mxu0
      %v622 = vadd.f32 0.0, %v621
      %v623 = vpop.f32.mrf.mxu0
      %v624 = vpop.f32.mrf.mxu0
      %v625 = vadd.f32 0.0, %v624
      %v626 = vpop.f32.mrf.mxu0
      %627 = vmatprep.mubr.bf16.mxu0 0
      %628 = vmatmul.mubr.bf16.gmra.mxu0 %v528
      %v629 = vpop.f32.mrf.mxu0
      %v630 = vadd.f32 0.0, %v629
      %v631 = vpop.f32.mrf.mxu0
      %v632 = vpop.f32.mrf.mxu0
      %v633 = vadd.f32 0.0, %v632
      %v634 = vpop.f32.mrf.mxu0
      %635 = vmatprep.mubr.bf16.mxu0 0
      %636 = vmatmul.mubr.bf16.gmra.mxu0 %v531
      %v637 = vpop.f32.mrf.mxu0
      %v638 = vadd.f32 0.0, %v637
      %v639 = vpop.f32.mrf.mxu0
      %v640 = vpop.f32.mrf.mxu0
      %v641 = vadd.f32 0.0, %v640
      %v642 = vpop.f32.mrf.mxu0
      %643 = vmatprep.mubr.bf16.mxu0 0
      %644 = vmatmul.mubr.bf16.gmra.mxu0 %v534
      %v645 = vpop.f32.mrf.mxu0
      %v646 = vadd.f32 0.0, %v645
      %v647 = vpop.f32.mrf.mxu0
      %v648 = vpop.f32.mrf.mxu0
      %v649 = vadd.f32 0.0, %v648
      %v650 = vpop.f32.mrf.mxu0
      %651 = vmatprep.mubr.bf16.mxu0 0
      %652 = vmatmul.mubr.bf16.gmra.mxu0 %v537
      %v653 = vpop.f32.mrf.mxu0
      %v654 = vadd.f32 0.0, %v653
      %v655 = vpop.f32.mrf.mxu0
      %v656 = vpop.f32.mrf.mxu0
      %v657 = vadd.f32 0.0, %v656
      %v658 = vpop.f32.mrf.mxu0
      %659 = vmatprep.mubr.bf16.mxu0 0
      %660 = vmatmul.mubr.bf16.gmra.mxu0 %v540
      %v661 = vpop.f32.mrf.mxu0
      %v662 = vadd.f32 0.0, %v661
      %v663 = vpop.f32.mrf.mxu0
      %v664 = vpop.f32.mrf.mxu0
      %v665 = vadd.f32 0.0, %v664
      %v666 = vpop.f32.mrf.mxu0
      %667 = vmatprep.mubr.bf16.mxu0 0
      %668 = vmatmul.mubr.bf16.gmra.mxu0 %v543
      %v669 = vpop.f32.mrf.mxu0
      %v670 = vadd.f32 0.0, %v669
      %v671 = vpop.f32.mrf.mxu0
      %v672 = vpop.f32.mrf.mxu0
      %v673 = vadd.f32 0.0, %v672
      %v674 = vpop.f32.mrf.mxu0
      %675 = vmatprep.mubr.bf16.mxu0 0
      %676 = vmatmul.mubr.bf16.gmra.mxu0 %v546
      %v677 = vpop.f32.mrf.mxu0
      %v678 = vadd.f32 0.0, %v677
      %v679 = vpop.f32.mrf.mxu0
      %v680 = vpop.f32.mrf.mxu0
      %v681 = vadd.f32 0.0, %v680
      %v682 = vpop.f32.mrf.mxu0
      %683 = vmatprep.mubr.bf16.mxu0 0
      %684 = vmatmul.mubr.bf16.gmra.mxu0 %v549
      %v685 = vpop.f32.mrf.mxu0
      %v686 = vadd.f32 0.0, %v685
      %v687 = vpop.f32.mrf.mxu0
      %v688 = vpop.f32.mrf.mxu0
      %v689 = vadd.f32 0.0, %v688
      %v690 = vpop.f32.mrf.mxu0
      %691 = vmatprep.mubr.bf16.mxu0 0
      %692 = vmatmul.mubr.bf16.gmra.mxu0 %v552
      %v693 = vpop.f32.mrf.mxu0
      %v694 = vadd.f32 0.0, %v693
      %v695 = vpop.f32.mrf.mxu0
      %v696 = vpop.f32.mrf.mxu0
      %v697 = vadd.f32 0.0, %v696
      %v698 = vpop.f32.mrf.mxu0
      %699 = vmatprep.mubr.bf16.mxu0 0
      %700 = vmatmul.mubr.bf16.gmra.mxu0 %v555
      %v701 = vpop.f32.mrf.mxu0
      %v702 = vadd.f32 0.0, %v701
      %v703 = vpop.f32.mrf.mxu0
      %v704 = vpop.f32.mrf.mxu0
      %v705 = vadd.f32 0.0, %v704
      %v706 = vpop.f32.mrf.mxu0
      %707 = vmatprep.mubr.bf16.mxu0 0
      %708 = vmatmul.mubr.bf16.gmra.mxu0 %v558
      %v709 = vpop.f32.mrf.mxu0
      %v710 = vadd.f32 0.0, %v709
      %v711 = vpop.f32.mrf.mxu0
      %v712 = vpop.f32.mrf.mxu0
      %v713 = vadd.f32 0.0, %v712
      %v714 = vpop.f32.mrf.mxu0
      %715 = vmatprep.mubr.bf16.mxu0 0
      %716 = vmatmul.mubr.bf16.gmra.mxu0 %v561
      %v717 = vpop.f32.mrf.mxu0
      %v718 = vadd.f32 0.0, %v717
      %v719 = vpop.f32.mrf.mxu0
      %v720 = vpop.f32.mrf.mxu0
      %v721 = vadd.f32 0.0, %v720
      %v722 = vpop.f32.mrf.mxu0
      %723 = vdwg.mxu0
      %v724 = vadd.f32 %v338, %v598
      %v725 = vadd.f32 %v339, %v601
      %v726 = vadd.f32 %v340, %v606
      %v727 = vadd.f32 %v341, %v609
      %v728 = vadd.f32 %v342, %v614
      %v729 = vadd.f32 %v343, %v617
      %v730 = vadd.f32 %v344, %v622
      %v731 = vadd.f32 %v345, %v625
      %v732 = vadd.f32 %v346, %v630
      %v733 = vadd.f32 %v347, %v633
      %v734 = vadd.f32 %v348, %v638
      %v735 = vadd.f32 %v349, %v641
      %v736 = vadd.f32 %v350, %v646
      %v737 = vadd.f32 %v351, %v649
      %v738 = vadd.f32 %v352, %v654
      %v739 = vadd.f32 %v353, %v657
      %v740 = vadd.f32 %v354, %v662
      %v741 = vadd.f32 %v355, %v665
      %v742 = vadd.f32 %v356, %v670
      %v743 = vadd.f32 %v357, %v673
      %v744 = vadd.f32 %v358, %v678
      %v745 = vadd.f32 %v359, %v681
      %v746 = vadd.f32 %v360, %v686
      %v747 = vadd.f32 %v361, %v689
      %v748 = vadd.f32 %v362, %v694
      %v749 = vadd.f32 %v363, %v697
      %v750 = vadd.f32 %v364, %v702
      %v751 = vadd.f32 %v365, %v705
      %v752 = vadd.f32 %v366, %v710
      %v753 = vadd.f32 %v367, %v713
      %v754 = vadd.f32 %v368, %v718
      %v755 = vadd.f32 %v369, %v721
      %756 = vst.msk [vmem:[#allocation2] sm:$0xff] %vm514, %v724
      %757 = vst.msk [vmem:[#allocation2 + $0x8] sm:$0xff] %vm514, %v725
      %758 = vst.msk [vmem:[#allocation2 + $0x10] sm:$0xff] %vm514, %v726
      %759 = vst.msk [vmem:[#allocation2 + $0x18] sm:$0xff] %vm514, %v727
      %760 = vst.msk [vmem:[#allocation2 + $0x20] sm:$0xff] %vm514, %v728
      %761 = vst.msk [vmem:[#allocation2 + $0x28] sm:$0xff] %vm514, %v729
      %762 = vst.msk [vmem:[#allocation2 + $0x30] sm:$0xff] %vm514, %v730
      %763 = vst.msk [vmem:[#allocation2 + $0x38] sm:$0xff] %vm514, %v731
      %764 = vst.msk [vmem:[#allocation2 + $0x40] sm:$0xff] %vm514, %v732
      %765 = vst.msk [vmem:[#allocation2 + $0x48] sm:$0xff] %vm514, %v733
      %766 = vst.msk [vmem:[#allocation2 + $0x50] sm:$0xff] %vm514, %v734
      %767 = vst.msk [vmem:[#allocation2 + $0x58] sm:$0xff] %vm514, %v735
      %768 = vst.msk [vmem:[#allocation2 + $0x60] sm:$0xff] %vm514, %v736
      %769 = vst.msk [vmem:[#allocation2 + $0x68] sm:$0xff] %vm514, %v737
      %770 = vst.msk [vmem:[#allocation2 + $0x70] sm:$0xff] %vm514, %v738
      %771 = vst.msk [vmem:[#allocation2 + $0x78] sm:$0xff] %vm514, %v739
      %772 = vst.msk [vmem:[#allocation2 + $0x80] sm:$0xff] %vm514, %v740
      %773 = vst.msk [vmem:[#allocation2 + $0x88] sm:$0xff] %vm514, %v741
      %774 = vst.msk [vmem:[#allocation2 + $0x90] sm:$0xff] %vm514, %v742
      %775 = vst.msk [vmem:[#allocation2 + $0x98] sm:$0xff] %vm514, %v743
      %776 = vst.msk [vmem:[#allocation2 + $0xa0] sm:$0xff] %vm514, %v744
      %777 = vst.msk [vmem:[#allocation2 + $0xa8] sm:$0xff] %vm514, %v745
      %778 = vst.msk [vmem:[#allocation2 + $0xb0] sm:$0xff] %vm514, %v746
      %779 = vst.msk [vmem:[#allocation2 + $0xb8] sm:$0xff] %vm514, %v747
      %780 = vst.msk [vmem:[#allocation2 + $0xc0] sm:$0xff] %vm514, %v748
      %781 = vst.msk [vmem:[#allocation2 + $0xc8] sm:$0xff] %vm514, %v749
      %782 = vst.msk [vmem:[#allocation2 + $0xd0] sm:$0xff] %vm514, %v750
      %783 = vst.msk [vmem:[#allocation2 + $0xd8] sm:$0xff] %vm514, %v751
      %784 = vst.msk [vmem:[#allocation2 + $0xe0] sm:$0xff] %vm514, %v752
      %785 = vst.msk [vmem:[#allocation2 + $0xe8] sm:$0xff] %vm514, %v753
      %786 = vst.msk [vmem:[#allocation2 + $0xf0] sm:$0xff] %vm514, %v754
      %787 = vst.msk [vmem:[#allocation2 + $0xf8] sm:$0xff] %vm514, %v755
      // Predicated region
      $region41: #{_lambda_.4} parent=35 // pred_check
        %p788 = pneg %p301
      $region42: #{_lambda_.4} parent=35 // pred_check_branch
        %790 = sbr.rel (%p788) target = $region44
      $region43: #{_lambda_.4} parent=35 // pred_region
        %v791 = vld [vmem:[#allocation2] sm:$0xff]
        %v792 = vld [vmem:[#allocation2 + $0x8] sm:$0xff]
        %v793 = vld [vmem:[#allocation2 + $0x10] sm:$0xff]
        %v794 = vld [vmem:[#allocation2 + $0x18] sm:$0xff]
        %v795 = vld [vmem:[#allocation2 + $0x20] sm:$0xff]
        %v796 = vld [vmem:[#allocation2 + $0x28] sm:$0xff]
        %v797 = vld [vmem:[#allocation2 + $0x30] sm:$0xff]
        %v798 = vld [vmem:[#allocation2 + $0x38] sm:$0xff]
        %v799 = vld [vmem:[#allocation2 + $0x40] sm:$0xff]
        %v800 = vld [vmem:[#allocation2 + $0x48] sm:$0xff]
        %v801 = vld [vmem:[#allocation2 + $0x50] sm:$0xff]
        %v802 = vld [vmem:[#allocation2 + $0x58] sm:$0xff]
        %v803 = vld [vmem:[#allocation2 + $0x60] sm:$0xff]
        %v804 = vld [vmem:[#allocation2 + $0x68] sm:$0xff]
        %v805 = vld [vmem:[#allocation2 + $0x70] sm:$0xff]
        %v806 = vld [vmem:[#allocation2 + $0x78] sm:$0xff]
        %v807 = vld [vmem:[#allocation2 + $0x80] sm:$0xff]
        %v808 = vld [vmem:[#allocation2 + $0x88] sm:$0xff]
        %v809 = vld [vmem:[#allocation2 + $0x90] sm:$0xff]
        %v810 = vld [vmem:[#allocation2 + $0x98] sm:$0xff]
        %v811 = vld [vmem:[#allocation2 + $0xa0] sm:$0xff]
        %v812 = vld [vmem:[#allocation2 + $0xa8] sm:$0xff]
        %v813 = vld [vmem:[#allocation2 + $0xb0] sm:$0xff]
        %v814 = vld [vmem:[#allocation2 + $0xb8] sm:$0xff]
        %v815 = vld [vmem:[#allocation2 + $0xc0] sm:$0xff]
        %v816 = vld [vmem:[#allocation2 + $0xc8] sm:$0xff]
        %v817 = vld [vmem:[#allocation2 + $0xd0] sm:$0xff]
        %v818 = vld [vmem:[#allocation2 + $0xd8] sm:$0xff]
        %v819 = vld [vmem:[#allocation2 + $0xe0] sm:$0xff]
        %v820 = vld [vmem:[#allocation2 + $0xe8] sm:$0xff]
        %v821 = vld [vmem:[#allocation2 + $0xf0] sm:$0xff]
        %v822 = vld [vmem:[#allocation2 + $0xf8] sm:$0xff]
        %v823 = vadd.f32 %v791, 1.0
        %v824 = vadd.f32 %v792, 1.0
        %v825 = vadd.f32 %v793, 1.0
        %v826 = vadd.f32 %v794, 1.0
        %v827 = vadd.f32 %v795, 1.0
        %v828 = vadd.f32 %v796, 1.0
        %v829 = vadd.f32 %v797, 1.0
        %v830 = vadd.f32 %v798, 1.0
        %v831 = vadd.f32 %v799, 1.0
        %v832 = vadd.f32 %v800, 1.0
        %v833 = vadd.f32 %v801, 1.0
        %v834 = vadd.f32 %v802, 1.0
        %v835 = vadd.f32 %v803, 1.0
        %v836 = vadd.f32 %v804, 1.0
        %v837 = vadd.f32 %v805, 1.0
        %v838 = vadd.f32 %v806, 1.0
        %v839 = vadd.f32 %v807, 1.0
        %v840 = vadd.f32 %v808, 1.0
        %v841 = vadd.f32 %v809, 1.0
        %v842 = vadd.f32 %v810, 1.0
        %v843 = vadd.f32 %v811, 1.0
        %v844 = vadd.f32 %v812, 1.0
        %v845 = vadd.f32 %v813, 1.0
        %v846 = vadd.f32 %v814, 1.0
        %v847 = vadd.f32 %v815, 1.0
        %v848 = vadd.f32 %v816, 1.0
        %v849 = vadd.f32 %v817, 1.0
        %v850 = vadd.f32 %v818, 1.0
        %v851 = vadd.f32 %v819, 1.0
        %v852 = vadd.f32 %v820, 1.0
        %v853 = vadd.f32 %v821, 1.0
        %v854 = vadd.f32 %v822, 1.0
        %v855 = vmul.f32 %v823, %v823
        %v856 = vmul.f32 %v824, %v824
        %v857 = vmul.f32 %v825, %v825
        %v858 = vmul.f32 %v826, %v826
        %v859 = vmul.f32 %v827, %v827
        %v860 = vmul.f32 %v828, %v828
        %v861 = vmul.f32 %v829, %v829
        %v862 = vmul.f32 %v830, %v830
        %v863 = vmul.f32 %v831, %v831
        %v864 = vmul.f32 %v832, %v832
        %v865 = vmul.f32 %v833, %v833
        %v866 = vmul.f32 %v834, %v834
        %v867 = vmul.f32 %v835, %v835
        %v868 = vmul.f32 %v836, %v836
        %v869 = vmul.f32 %v837, %v837
        %v870 = vmul.f32 %v838, %v838
        %v871 = vmul.f32 %v839, %v839
        %v872 = vmul.f32 %v840, %v840
        %v873 = vmul.f32 %v841, %v841
        %v874 = vmul.f32 %v842, %v842
        %v875 = vmul.f32 %v843, %v843
        %v876 = vmul.f32 %v844, %v844
        %v877 = vmul.f32 %v845, %v845
        %v878 = vmul.f32 %v846, %v846
        %v879 = vmul.f32 %v847, %v847
        %v880 = vmul.f32 %v848, %v848
        %v881 = vmul.f32 %v849, %v849
        %v882 = vmul.f32 %v850, %v850
        %v883 = vmul.f32 %v851, %v851
        %v884 = vmul.f32 %v852, %v852
        %v885 = vmul.f32 %v853, %v853
        %v886 = vmul.f32 %v854, %v854
        %v887 = vmul.f32 %v855, %v823
        %v888 = vmul.f32 %v856, %v824
        %v889 = vmul.f32 %v857, %v825
        %v890 = vmul.f32 %v858, %v826
        %v891 = vmul.f32 %v859, %v827
        %v892 = vmul.f32 %v860, %v828
        %v893 = vmul.f32 %v861, %v829
        %v894 = vmul.f32 %v862, %v830
        %v895 = vmul.f32 %v863, %v831
        %v896 = vmul.f32 %v864, %v832
        %v897 = vmul.f32 %v865, %v833
        %v898 = vmul.f32 %v866, %v834
        %v899 = vmul.f32 %v867, %v835
        %v900 = vmul.f32 %v868, %v836
        %v901 = vmul.f32 %v869, %v837
        %v902 = vmul.f32 %v870, %v838
        %v903 = vmul.f32 %v871, %v839
        %v904 = vmul.f32 %v872, %v840
        %v905 = vmul.f32 %v873, %v841
        %v906 = vmul.f32 %v874, %v842
        %v907 = vmul.f32 %v875, %v843
        %v908 = vmul.f32 %v876, %v844
        %v909 = vmul.f32 %v877, %v845
        %v910 = vmul.f32 %v878, %v846
        %v911 = vmul.f32 %v879, %v847
        %v912 = vmul.f32 %v880, %v848
        %v913 = vmul.f32 %v881, %v849
        %v914 = vmul.f32 %v882, %v850
        %v915 = vmul.f32 %v883, %v851
        %v916 = vmul.f32 %v884, %v852
        %v917 = vmul.f32 %v885, %v853
        %v918 = vmul.f32 %v886, %v854
        %v919 = vld [vmem:[%s287] sm:$0x1]
        %v921 = vlaneseq
        %v922 = vshrl.u32 %v921, 7
        %v923 = vsub.s32 0, %v922
        %v924 = vrot.slane %v919, %v923
        %v926 = vmul.f32 %v887, %v924
        %v927 = vmul.f32 %v888, %v924
        %v928 = vmul.f32 %v889, %v924
        %v929 = vmul.f32 %v890, %v924
        %v930 = vmul.f32 %v891, %v924
        %v931 = vmul.f32 %v892, %v924
        %v932 = vmul.f32 %v893, %v924
        %v933 = vmul.f32 %v894, %v924
        %v934 = vmul.f32 %v895, %v924
        %v935 = vmul.f32 %v896, %v924
        %v936 = vmul.f32 %v897, %v924
        %v937 = vmul.f32 %v898, %v924
        %v938 = vmul.f32 %v899, %v924
        %v939 = vmul.f32 %v900, %v924
        %v940 = vmul.f32 %v901, %v924
        %v941 = vmul.f32 %v902, %v924
        %v942 = vmul.f32 %v903, %v924
        %v943 = vmul.f32 %v904, %v924
        %v944 = vmul.f32 %v905, %v924
        %v945 = vmul.f32 %v906, %v924
        %v946 = vmul.f32 %v907, %v924
        %v947 = vmul.f32 %v908, %v924
        %v948 = vmul.f32 %v909, %v924
        %v949 = vmul.f32 %v910, %v924
        %v950 = vmul.f32 %v911, %v924
        %v951 = vmul.f32 %v912, %v924
        %v952 = vmul.f32 %v913, %v924
        %v953 = vmul.f32 %v914, %v924
        %v954 = vmul.f32 %v915, %v924
        %v955 = vmul.f32 %v916, %v924
        %v956 = vmul.f32 %v917, %v924
        %v957 = vmul.f32 %v918, %v924
        %v958 = vld [vmem:[%s290] sm:$0x1]
        %v960 = vlaneseq
        %v961 = vshrl.u32 %v960, 7
        %v962 = vsub.s32 0, %v961
        %v963 = vrot.slane %v958, %v962
        %v965 = vadd.f32 %v926, %v963
        %v966 = vadd.f32 %v927, %v963
        %v967 = vadd.f32 %v928, %v963
        %v968 = vadd.f32 %v929, %v963
        %v969 = vadd.f32 %v930, %v963
        %v970 = vadd.f32 %v931, %v963
        %v971 = vadd.f32 %v932, %v963
        %v972 = vadd.f32 %v933, %v963
        %v973 = vadd.f32 %v934, %v963
        %v974 = vadd.f32 %v935, %v963
        %v975 = vadd.f32 %v936, %v963
        %v976 = vadd.f32 %v937, %v963
        %v977 = vadd.f32 %v938, %v963
        %v978 = vadd.f32 %v939, %v963
        %v979 = vadd.f32 %v940, %v963
        %v980 = vadd.f32 %v941, %v963
        %v981 = vadd.f32 %v942, %v963
        %v982 = vadd.f32 %v943, %v963
        %v983 = vadd.f32 %v944, %v963
        %v984 = vadd.f32 %v945, %v963
        %v985 = vadd.f32 %v946, %v963
        %v986 = vadd.f32 %v947, %v963
        %v987 = vadd.f32 %v948, %v963
        %v988 = vadd.f32 %v949, %v963
        %v989 = vadd.f32 %v950, %v963
        %v990 = vadd.f32 %v951, %v963
        %v991 = vadd.f32 %v952, %v963
        %v992 = vadd.f32 %v953, %v963
        %v993 = vadd.f32 %v954, %v963
        %v994 = vadd.f32 %v955, %v963
        %v995 = vadd.f32 %v956, %v963
        %v996 = vadd.f32 %v957, %v963
        %v997 = vmax.f32 %v965, 0.0
        %v998 = vmax.f32 %v966, 0.0
        %v999 = vmax.f32 %v967, 0.0
        %v1000 = vmax.f32 %v968, 0.0
        %v1001 = vmax.f32 %v969, 0.0
        %v1002 = vmax.f32 %v970, 0.0
        %v1003 = vmax.f32 %v971, 0.0
        %v1004 = vmax.f32 %v972, 0.0
        %v1005 = vmax.f32 %v973, 0.0
        %v1006 = vmax.f32 %v974, 0.0
        %v1007 = vmax.f32 %v975, 0.0
        %v1008 = vmax.f32 %v976, 0.0
        %v1009 = vmax.f32 %v977, 0.0
        %v1010 = vmax.f32 %v978, 0.0
        %v1011 = vmax.f32 %v979, 0.0
        %v1012 = vmax.f32 %v980, 0.0
        %v1013 = vmax.f32 %v981, 0.0
        %v1014 = vmax.f32 %v982, 0.0
        %v1015 = vmax.f32 %v983, 0.0
        %v1016 = vmax.f32 %v984, 0.0
        %v1017 = vmax.f32 %v985, 0.0
        %v1018 = vmax.f32 %v986, 0.0
        %v1019 = vmax.f32 %v987, 0.0
        %v1020 = vmax.f32 %v988, 0.0
        %v1021 = vmax.f32 %v989, 0.0
        %v1022 = vmax.f32 %v990, 0.0
        %v1023 = vmax.f32 %v991, 0.0
        %v1024 = vmax.f32 %v992, 0.0
        %v1025 = vmax.f32 %v993, 0.0
        %v1026 = vmax.f32 %v994, 0.0
        %v1027 = vmax.f32 %v995, 0.0
        %v1028 = vmax.f32 %v996, 0.0
        %1029 = vst.msk [vmem:[%s298] sm:$0xff] %vm514, %v997
        %1030 = vst.msk [vmem:[%s298 + $0x8] sm:$0xff] %vm514, %v998
        %1031 = vst.msk [vmem:[%s298 + $0x10] sm:$0xff] %vm514, %v999
        %1032 = vst.msk [vmem:[%s298 + $0x18] sm:$0xff] %vm514, %v1000
        %1033 = vst.msk [vmem:[%s298 + $0x20] sm:$0xff] %vm514, %v1001
        %1034 = vst.msk [vmem:[%s298 + $0x28] sm:$0xff] %vm514, %v1002
        %1035 = vst.msk [vmem:[%s298 + $0x30] sm:$0xff] %vm514, %v1003
        %1036 = vst.msk [vmem:[%s298 + $0x38] sm:$0xff] %vm514, %v1004
        %1037 = vst.msk [vmem:[%s298 + $0x40] sm:$0xff] %vm514, %v1005
        %1038 = vst.msk [vmem:[%s298 + $0x48] sm:$0xff] %vm514, %v1006
        %1039 = vst.msk [vmem:[%s298 + $0x50] sm:$0xff] %vm514, %v1007
        %1040 = vst.msk [vmem:[%s298 + $0x58] sm:$0xff] %vm514, %v1008
        %1041 = vst.msk [vmem:[%s298 + $0x60] sm:$0xff] %vm514, %v1009
        %1042 = vst.msk [vmem:[%s298 + $0x68] sm:$0xff] %vm514, %v1010
        %1043 = vst.msk [vmem:[%s298 + $0x70] sm:$0xff] %vm514, %v1011
        %1044 = vst.msk [vmem:[%s298 + $0x78] sm:$0xff] %vm514, %v1012
        %1045 = vst.msk [vmem:[%s298 + $0x80] sm:$0xff] %vm514, %v1013
        %1046 = vst.msk [vmem:[%s298 + $0x88] sm:$0xff] %vm514, %v1014
        %1047 = vst.msk [vmem:[%s298 + $0x90] sm:$0xff] %vm514, %v1015
        %1048 = vst.msk [vmem:[%s298 + $0x98] sm:$0xff] %vm514, %v1016
        %1049 = vst.msk [vmem:[%s298 + $0xa0] sm:$0xff] %vm514, %v1017
        %1050 = vst.msk [vmem:[%s298 + $0xa8] sm:$0xff] %vm514, %v1018
        %1051 = vst.msk [vmem:[%s298 + $0xb0] sm:$0xff] %vm514, %v1019
        %1052 = vst.msk [vmem:[%s298 + $0xb8] sm:$0xff] %vm514, %v1020
        %1053 = vst.msk [vmem:[%s298 + $0xc0] sm:$0xff] %vm514, %v1021
        %1054 = vst.msk [vmem:[%s298 + $0xc8] sm:$0xff] %vm514, %v1022
        %1055 = vst.msk [vmem:[%s298 + $0xd0] sm:$0xff] %vm514, %v1023
        %1056 = vst.msk [vmem:[%s298 + $0xd8] sm:$0xff] %vm514, %v1024
        %1057 = vst.msk [vmem:[%s298 + $0xe0] sm:$0xff] %vm514, %v1025
        %1058 = vst.msk [vmem:[%s298 + $0xe8] sm:$0xff] %vm514, %v1026
        %1059 = vst.msk [vmem:[%s298 + $0xf0] sm:$0xff] %vm514, %v1027
        %1060 = vst.msk [vmem:[%s298 + $0xf8] sm:$0xff] %vm514, %v1028
      $region44: #{_lambda_.4} parent=35 // pred_fallthru
        _
      %s1061 = smul.u32 32, %s20
      %p1062 = scmp.lt.s32.totalorder %s1061, 63
      %s1063 = scalar_select %p1062, %s1061, 63
      %p1064 = scmp.lt.s32.totalorder %s21, 0
      %s1065 = scalar_select %p1064, %s21, 0
      %s1066 = sadd.s32 %s1065, %s1063
      %s1067 = smul.addr %s1066, 8
      %s1068 = scalar_lea.vmem %s4, %s1067
      // Predicated region
      $region45: #{_lambda_.4} parent=35 // pred_check
        %p1069 = pneg %p162
      $region46: #{_lambda_.4} parent=35 // pred_check_branch
        %1071 = sbr.rel (%p1069) target = $region48
      $region47: #{_lambda_.4} parent=35 // pred_region
        %s1072 = smul.u32 32, %s20
      $region48: #{_lambda_.4} parent=35 // pred_fallthru
        _
    $region36: #{_lambda_.4} parent=5 // pred_fallthru
      _
    %p1073 = scmp.le.s32.totalorder 2, %s10
    // Predicated region
    $region49: #{_lambda_.4} parent=5 // pred_check
      %p1074 = pneg %p1073
    $region50: #{_lambda_.4} parent=5 // pred_check_branch
      %1076 = sbr.rel (%p1074) target = $region52
    $region51: #{_lambda_.4} parent=5 // pred_region
      %s1077 = ssub.s32 %s10, 2
      // Predicated region
      $region53: #{_lambda_.4} parent=51 // pred_check
        %p1078 = pneg %p168
      $region54: #{_lambda_.4} parent=51 // pred_check_branch
        %1080 = sbr.rel (%p1078) target = $region56
      $region55: #{_lambda_.4} parent=51 // pred_region
        %s1081 = smul.u32 32, %s23
        %p1082 = scmp.lt.s32.totalorder %s1081, 63
        %s1083 = scalar_select %p1082, %s1081, 63
        %p1084 = scmp.lt.s32.totalorder %s24, 0
        %s1085 = scalar_select %p1084, %s24, 0
        %s1086 = sadd.s32 %s1085, %s1083
        %s1087 = smul.addr %s1086, 8
        %s1088 = scalar_lea.vmem %s4, %s1087
      $region56: #{_lambda_.4} parent=51 // pred_fallthru
        _
    $region52: #{_lambda_.4} parent=5 // pred_fallthru
      _
  $region6: #{_lambda_.4} parent=0 // loop_footer
    %s14 = sadd.s32 1, %s10
  $region7: #{_lambda_.4} parent=0 // loop_footer_branch
    %9 = sbr.rel target = $region3
  $region8: #{_lambda_.4} parent=0 // loop_exit
    _

// kernel: _lambda_.6
$region0: #{_lambda_.6}
  #allocation0 [shape = 'u32[]', space=smem, size = 0x4, offset = 0x4, fixed_abs, tag = 'smem constant byte address 0x4 - core index']
  #allocation1 [shape = 'u32[144,128]{1,0:T(1,128)}', space=vmem, size = 0x12000, scoped, tag = 'internal scratch']
  #allocation2 [shape = 'f32[256,256]{1,0:T(8,128)}', space=vmem, size = 0x40000, scoped, tag = 'scratch operand']
  %s0 = inlined_call_operand.vmem [shape: bf16[512,64], index: 0, kind: input, shape index: {}]
  %s1 = inlined_call_operand.vmem [shape: bf16[64,256], index: 1, kind: input, shape index: {}]
  %s2 = inlined_call_operand.vmem [shape: f32[1,256], index: 2, kind: input, shape index: {}]
  %s3 = inlined_call_operand.vmem [shape: f32[1,256], index: 3, kind: input, shape index: {}]
  %s4 = inlined_call_operand.vmem [shape: f32[512,256], index: 4, kind: output, shape index: {}]
  %s5 = sld [smem:[#allocation0]]
  $region57: #{_lambda_.6} parent=0
    _
  %s7 = ssub.s32 1, %s5
  %s8 = scalar_select 0, %s7, %s5
  loop: start=0, step=1, limit=4
  $region2: #{_lambda_.6} parent=0 // loop_pre_header
    _
  $region3: #{_lambda_.6} parent=0 // loop_header
    %s10 = sphi 0, %s14
    %p11 = scmp.ge.s32.totalorder %s10, 4
    %s17 = sphi 0, %s36
    %s18 = sphi 0, %s32
    %s19 = sphi 0, %s28
    %s20 = sphi 0, %s17
    %s21 = sphi 0, %s18
    %s22 = sphi 0, %s19
    %s23 = sphi 0, %s20
    %s24 = sphi 0, %s21
    %s25 = sphi 0, %s22
    %s41 = sphi 0, %s43
    %s44 = sphi 0, %s41
    %s45 = sphi 0, %s44
    %s61 = sphi 0, %s45
    %s69 = sphi 0, %s71
    %s72 = sphi 0, %s69
    %s73 = sphi 0, %s72
    %s89 = sphi 0, %s73
    %s95 = sphi 0, %s97
    %s98 = sphi 0, %s95
    %s99 = sphi 0, %s98
    %s115 = sphi 0, %s99
    %s121 = sphi 0, %s123
    %s124 = sphi 0, %s121
    %s125 = sphi 0, %s124
    %s141 = sphi 0, %s125
    %s149 = sphi 0, %s151
    %s152 = sphi 0, %s149
    %s153 = sphi 0, %s152
    %s169 = sphi 0, %s153
  $region4: #{_lambda_.6} parent=0 // loop_header_branch
    %13 = sbr.rel (%p11) target = $region8
  $region5: #{_lambda_.6} parent=0 // loop_body
    %s15 = ssub.s32 %s10, 1
    %s16 = ssub.s32 %s10, 2
    %s26 = sadd.s32 1, %s19
    %p27 = scmp.ge.s32.totalorder %s26, 1
    %s28 = scalar_select %p27, 0, %s26
    %s29 = sadd.s32 1, %s18
    %s30 = scalar_select %p27, %s29, %s18
    %p31 = scmp.ge.s32.totalorder %s30, 1
    %s32 = scalar_select %p31, 0, %s30
    %s33 = sadd.s32 1, %s17
    %s34 = scalar_select %p31, %s33, %s17
    %p35 = scmp.ge.s32.totalorder %s34, 2
    %s36 = scalar_select %p35, 0, %s34
    %s37 = ssub.s32 %s17, %s36
    %s38 = ssub.s32 %s19, %s28
    %s39 = sor.u32 %s37, %s38
    %p40 = scmp.eq.s32.totalorder %s39, 0
    %s42 = sadd.s32 %s41, 1
    %s43 = scalar_select %p40, %s41, %s42
    %p46 = pneg %p40
    %p47 = scmp.eq.s32.totalorder %s10, 1
    %p48 = por %p46, %p47
    %p49 = scmp.ne.s32.totalorder %s41, %s44
    %p50 = scmp.eq.s32.totalorder %s10, 0
    %p51 = por %p49, %p50
    %p52 = scmp.ne.s32.totalorder %s41, %s44
    %p53 = scmp.eq.s32.totalorder %s15, 1
    %p54 = por %p52, %p53
    %p55 = scmp.ne.s32.totalorder %s44, %s45
    %p56 = scmp.eq.s32.totalorder %s15, 0
    %p57 = por %p55, %p56
    %p58 = scmp.ne.s32.totalorder %s44, %s45
    %p59 = scmp.eq.s32.totalorder %s16, 1
    %p60 = por %p58, %p59
    %p62 = scmp.ne.s32.totalorder %s45, %s61
    %p63 = scmp.eq.s32.totalorder %s16, 0
    %p64 = por %p62, %p63
    %s65 = ssub.s32 %s19, %s28
    %s66 = ssub.s32 %s18, %s32
    %s67 = sor.u32 %s65, %s66
    %p68 = scmp.eq.s32.totalorder %s67, 0
    %s70 = sadd.s32 %s69, 1
    %s71 = scalar_select %p68, %s69, %s70
    %p74 = pneg %p68
    %p75 = scmp.eq.s32.totalorder %s10, 1
    %p76 = por %p74, %p75
    %p77 = scmp.ne.s32.totalorder %s69, %s72
    %p78 = scmp.eq.s32.totalorder %s10, 0
    %p79 = por %p77, %p78
    %p80 = scmp.ne.s32.totalorder %s69, %s72
    %p81 = scmp.eq.s32.totalorder %s15, 1
    %p82 = por %p80, %p81
    %p83 = scmp.ne.s32.totalorder %s72, %s73
    %p84 = scmp.eq.s32.totalorder %s15, 0
    %p85 = por %p83, %p84
    %p86 = scmp.ne.s32.totalorder %s72, %s73
    %p87 = scmp.eq.s32.totalorder %s16, 1
    %p88 = por %p86, %p87
    %p90 = scmp.ne.s32.totalorder %s73, %s89
    %p91 = scmp.eq.s32.totalorder %s16, 0
    %p92 = por %p90, %p91
    %s93 = ssub.s32 %s18, %s32
    %p94 = scmp.eq.s32.totalorder %s93, 0
    %s96 = sadd.s32 %s95, 1
    %s97 = scalar_select %p94, %s95, %s96
    %p100 = pneg %p94
    %p101 = scmp.eq.s32.totalorder %s10, 1
    %p102 = por %p100, %p101
    %p103 = scmp.ne.s32.totalorder %s95, %s98
    %p104 = scmp.eq.s32.totalorder %s10, 0
    %p105 = por %p103, %p104
    %p106 = scmp.ne.s32.totalorder %s95, %s98
    %p107 = scmp.eq.s32.totalorder %s15, 1
    %p108 = por %p106, %p107
    %p109 = scmp.ne.s32.totalorder %s98, %s99
    %p110 = scmp.eq.s32.totalorder %s15, 0
    %p111 = por %p109, %p110
    %p112 = scmp.ne.s32.totalorder %s98, %s99
    %p113 = scmp.eq.s32.totalorder %s16, 1
    %p114 = por %p112, %p113
    %p116 = scmp.ne.s32.totalorder %s99, %s115
    %p117 = scmp.eq.s32.totalorder %s16, 0
    %p118 = por %p116, %p117
    %s119 = ssub.s32 %s18, %s32
    %p120 = scmp.eq.s32.totalorder %s119, 0
    %s122 = sadd.s32 %s121, 1
    %s123 = scalar_select %p120, %s121, %s122
    %p126 = pneg %p120
    %p127 = scmp.eq.s32.totalorder %s10, 1
    %p128 = por %p126, %p127
    %p129 = scmp.ne.s32.totalorder %s121, %s124
    %p130 = scmp.eq.s32.totalorder %s10, 0
    %p131 = por %p129, %p130
    %p132 = scmp.ne.s32.totalorder %s121, %s124
    %p133 = scmp.eq.s32.totalorder %s15, 1
    %p134 = por %p132, %p133
    %p135 = scmp.ne.s32.totalorder %s124, %s125
    %p136 = scmp.eq.s32.totalorder %s15, 0
    %p137 = por %p135, %p136
    %p138 = scmp.ne.s32.totalorder %s124, %s125
    %p139 = scmp.eq.s32.totalorder %s16, 1
    %p140 = por %p138, %p139
    %p142 = scmp.ne.s32.totalorder %s125, %s141
    %p143 = scmp.eq.s32.totalorder %s16, 0
    %p144 = por %p142, %p143
    %s145 = ssub.s32 %s17, %s36
    %s146 = ssub.s32 %s18, %s32
    %s147 = sor.u32 %s145, %s146
    %p148 = scmp.eq.s32.totalorder %s147, 0
    %s150 = sadd.s32 %s149, 1
    %s151 = scalar_select %p148, %s149, %s150
    %p154 = pneg %p148
    %p155 = scmp.eq.s32.totalorder %s10, 1
    %p156 = por %p154, %p155
    %p157 = scmp.ne.s32.totalorder %s149, %s152
    %p158 = scmp.eq.s32.totalorder %s10, 0
    %p159 = por %p157, %p158
    %p160 = scmp.ne.s32.totalorder %s149, %s152
    %p161 = scmp.eq.s32.totalorder %s15, 1
    %p162 = por %p160, %p161
    %p163 = scmp.ne.s32.totalorder %s152, %s153
    %p164 = scmp.eq.s32.totalorder %s15, 0
    %p165 = por %p163, %p164
    %p166 = scmp.ne.s32.totalorder %s152, %s153
    %p167 = scmp.eq.s32.totalorder %s16, 1
    %p168 = por %p166, %p167
    %p170 = scmp.ne.s32.totalorder %s153, %s169
    %p171 = scmp.eq.s32.totalorder %s16, 0
    %p172 = por %p170, %p171
    %p173 = scmp.le.s32.totalorder 1, %s10
    %p174 = scmp.lt.s32.totalorder %s10, 3
    %p175 = pnand %p173, %p174
    %p176 = pneg %p175
    // Predicated region
    $region9: #{_lambda_.6} parent=5 // pred_check
      _
    $region10: #{_lambda_.6} parent=5 // pred_check_branch
      %178 = sbr.rel (%p175) target = $region12
    $region11: #{_lambda_.6} parent=5 // pred_region
      %s179 = ssub.s32 %s10, 1
      // Predicated region
      $region13: #{_lambda_.6} parent=11 // pred_check
        %p180 = pneg %p85
      $region14: #{_lambda_.6} parent=11 // pred_check_branch
        %182 = sbr.rel (%p180) target = $region16
      $region15: #{_lambda_.6} parent=11 // pred_region
        %s183 = smul.u32 8, %s22
        %s184 = smul.u32 2, %s21
        %p185 = scmp.lt.s32.totalorder %s183, 7
        %s186 = scalar_select %p185, %s183, 7
        %p187 = scmp.lt.s32.totalorder %s184, 1
        %s188 = scalar_select %p187, %s184, 1
        %s189 = smul.addr %s186, 2
        %s190 = sadd.s32 %s188, %s189
        %s191 = smul.addr %s190, 4
        %s192 = scalar_lea.vmem %s1, %s191
        %s193 = smul.u32 8, %s22
        %s194 = smul.u32 2, %s21
      $region16: #{_lambda_.6} parent=11 // pred_fallthru
        _
      // Predicated region
      $region17: #{_lambda_.6} parent=11 // pred_check
        %p195 = pneg %p111
      $region18: #{_lambda_.6} parent=11 // pred_check_branch
        %197 = sbr.rel (%p195) target = $region20
      $region19: #{_lambda_.6} parent=11 // pred_region
        %s198 = smul.u32 2, %s21
        %p199 = scmp.lt.s32.totalorder %s198, 1
        %s200 = scalar_select %p199, %s198, 1
        %s201 = scalar_lea.vmem %s2, %s200
        %s202 = smul.u32 2, %s21
      $region20: #{_lambda_.6} parent=11 // pred_fallthru
        _
      // Predicated region
      $region21: #{_lambda_.6} parent=11 // pred_check
        %p203 = pneg %p137
      $region22: #{_lambda_.6} parent=11 // pred_check_branch
        %205 = sbr.rel (%p203) target = $region24
      $region23: #{_lambda_.6} parent=11 // pred_region
        %s206 = smul.u32 2, %s21
        %p207 = scmp.lt.s32.totalorder %s206, 1
        %s208 = scalar_select %p207, %s206, 1
        %s209 = scalar_lea.vmem %s3, %s208
        %s210 = smul.u32 2, %s21
      $region24: #{_lambda_.6} parent=11 // pred_fallthru
        _
    $region12: #{_lambda_.6} parent=5 // pred_fallthru
      _
    %p211 = scmp.lt.s32.totalorder %s10, 2
    // Predicated region
    $region25: #{_lambda_.6} parent=5 // pred_check
      %p212 = pneg %p211
    $region26: #{_lambda_.6} parent=5 // pred_check_branch
      %214 = sbr.rel (%p212) target = $region28
    $region27: #{_lambda_.6} parent=5 // pred_region
      // Predicated region
      $region29: #{_lambda_.6} parent=27 // pred_check
        %p215 = pneg %p51
      $region30: #{_lambda_.6} parent=27 // pred_check_branch
        %217 = sbr.rel (%p215) target = $region32
      $region31: #{_lambda_.6} parent=27 // pred_region
        %s218 = smul.u32 32, %s17
        %p219 = scmp.lt.s32.totalorder %s218, 63
        %s220 = scalar_select %p219, %s218, 63
        %p221 = scmp.lt.s32.totalorder %s19, 0
        %s222 = scalar_select %p221, %s19, 0
        %s223 = sadd.s32 %s222, %s220
        %s224 = smul.addr %s223, 4
        %s225 = scalar_lea.vmem %s0, %s224
        %s226 = smul.u32 32, %s17
      $region32: #{_lambda_.6} parent=27 // pred_fallthru
        _
    $region28: #{_lambda_.6} parent=5 // pred_fallthru
      _
    %p227 = scmp.le.s32.totalorder 1, %s10
    %p228 = scmp.lt.s32.totalorder %s10, 3
    %p229 = pnand %p227, %p228
    %p230 = pneg %p229
    // Predicated region
    $region33: #{_lambda_.6} parent=5 // pred_check
      _
    $region34: #{_lambda_.6} parent=5 // pred_check_branch
      %232 = sbr.rel (%p229) target = $region36
    $region35: #{_lambda_.6} parent=5 // pred_region
      %s233 = ssub.s32 %s10, 1
      %s234 = smul.u32 32, %s20
      %p235 = scmp.lt.s32.totalorder %s234, 63
      %s236 = scalar_select %p235, %s234, 63
      %p237 = scmp.lt.s32.totalorder %s22, 0
      %s238 = scalar_select %p237, %s22, 0
      %s239 = sadd.s32 %s238, %s236
      %s240 = smul.addr %s239, 4
      %s241 = scalar_lea.vmem %s0, %s240
      %p242 = pneg %p57
      %p243 = pneg %p54
      %s244 = smul.u32 8, %s22
      %s245 = smul.u32 2, %s21
      %p246 = scmp.lt.s32.totalorder %s244, 7
      %s247 = scalar_select %p246, %s244, 7
      %p248 = scmp.lt.s32.totalorder %s245, 1
      %s249 = scalar_select %p248, %s245, 1
      %s250 = smul.addr %s247, 2
      %s251 = sadd.s32 %s249, %s250
      %s252 = smul.addr %s251, 4
      %s253 = scalar_lea.vmem %s1, %s252
      %p254 = pneg %p85
      %p255 = pneg %p82
      %s256 = smul.u32 2, %s21
      %p257 = scmp.lt.s32.totalorder %s256, 1
      %s258 = scalar_select %p257, %s256, 1
      %s259 = scalar_lea.vmem %s2, %s258
      %p260 = pneg %p111
      %p261 = pneg %p108
      %s262 = smul.u32 2, %s21
      %p263 = scmp.lt.s32.totalorder %s262, 1
      %s264 = scalar_select %p263, %s262, 1
      %s265 = scalar_lea.vmem %s3, %s264
      %p266 = pneg %p137
      %p267 = pneg %p134
      %p268 = pneg %p165
      %p269 = pneg %p162
      %s270 = smul.u32 32, %s20
      %s271 = smul.u32 2, %s21
      %p272 = scmp.lt.s32.totalorder %s270, 63
      %s273 = scalar_select %p272, %s270, 63
      %p274 = scmp.lt.s32.totalorder %s271, 1
      %s275 = scalar_select %p274, %s271, 1
      %s276 = smul.addr %s273, 2
      %s277 = sadd.s32 %s275, %s276
      %s278 = smul.addr %s277, 8
      %s279 = scalar_lea.vmem %s4, %s278
      %s280 = smul.u32 32, %s20
      %p281 = scmp.lt.s32.totalorder %s280, 63
      %s282 = scalar_select %p281, %s280, 63
      %p283 = scmp.lt.s32.totalorder %s22, 0
      %s284 = scalar_select %p283, %s22, 0
      %s285 = sadd.s32 %s284, %s282
      %s286 = smul.addr %s285, 4
      %s287 = scalar_lea.vmem %s0, %s286
      %s288 = smul.u32 32, %s20
      %s289 = smul.u32 8, %s22
      %s290 = smul.u32 2, %s21
      %p291 = scmp.lt.s32.totalorder %s289, 7
      %s292 = scalar_select %p291, %s289, 7
      %p293 = scmp.lt.s32.totalorder %s290, 1
      %s294 = scalar_select %p293, %s290, 1
      %s295 = smul.addr %s292, 2
      %s296 = sadd.s32 %s294, %s295
      %s297 = smul.addr %s296, 4
      %s298 = scalar_lea.vmem %s1, %s297
      %s299 = smul.u32 8, %s22
      %s300 = smul.u32 2, %s21
      %s301 = smul.u32 2, %s21
      %p302 = scmp.lt.s32.totalorder %s301, 1
      %s303 = scalar_select %p302, %s301, 1
      %s304 = scalar_lea.vmem %s2, %s303
      %s305 = smul.u32 2, %s21
      %s306 = smul.u32 2, %s21
      %p307 = scmp.lt.s32.totalorder %s306, 1
      %s308 = scalar_select %p307, %s306, 1
      %s309 = scalar_lea.vmem %s3, %s308
      %s310 = smul.u32 2, %s21
      %s311 = smul.u32 32, %s20
      %s312 = smul.u32 2, %s21
      %p313 = scmp.lt.s32.totalorder %s311, 63
      %s314 = scalar_select %p313, %s311, 63
      %p315 = scmp.lt.s32.totalorder %s312, 1
      %s316 = scalar_select %p315, %s312, 1
      %s317 = smul.addr %s314, 2
      %s318 = sadd.s32 %s316, %s317
      %s319 = smul.addr %s318, 8
      %s320 = scalar_lea.vmem %s4, %s319
      %s321 = smul.u32 32, %s20
      %s322 = smul.u32 2, %s21
      %p324 = scmp.eq.s32.totalorder %s22, 0
      // Predicated region
      $region37: #{_lambda_.6} parent=35 // pred_check
        %p325 = pneg %p324
      $region38: #{_lambda_.6} parent=35 // pred_check_branch
        %327 = sbr.rel (%p325) target = $region40
      $region39: #{_lambda_.6} parent=35 // pred_region
        %328 = vst [vmem:[#allocation2] sm:$0xff] 0.0
        %329 = vst [vmem:[#allocation2 + $0x8] sm:$0xff] 0.0
        %330 = vst [vmem:[#allocation2 + $0x10] sm:$0xff] 0.0
        %331 = vst [vmem:[#allocation2 + $0x18] sm:$0xff] 0.0
        %332 = vst [vmem:[#allocation2 + $0x20] sm:$0xff] 0.0
        %333 = vst [vmem:[#allocation2 + $0x28] sm:$0xff] 0.0
        %334 = vst [vmem:[#allocation2 + $0x30] sm:$0xff] 0.0
        %335 = vst [vmem:[#allocation2 + $0x38] sm:$0xff] 0.0
        %336 = vst [vmem:[#allocation2 + $0x40] sm:$0xff] 0.0
        %337 = vst [vmem:[#allocation2 + $0x48] sm:$0xff] 0.0
        %338 = vst [vmem:[#allocation2 + $0x50] sm:$0xff] 0.0
        %339 = vst [vmem:[#allocation2 + $0x58] sm:$0xff] 0.0
        %340 = vst [vmem:[#allocation2 + $0x60] sm:$0xff] 0.0
        %341 = vst [vmem:[#allocation2 + $0x68] sm:$0xff] 0.0
        %342 = vst [vmem:[#allocation2 + $0x70] sm:$0xff] 0.0
        %343 = vst [vmem:[#allocation2 + $0x78] sm:$0xff] 0.0
        %344 = vst [vmem:[#allocation2 + $0x80] sm:$0xff] 0.0
        %345 = vst [vmem:[#allocation2 + $0x88] sm:$0xff] 0.0
        %346 = vst [vmem:[#allocation2 + $0x90] sm:$0xff] 0.0
        %347 = vst [vmem:[#allocation2 + $0x98] sm:$0xff] 0.0
        %348 = vst [vmem:[#allocation2 + $0xa0] sm:$0xff] 0.0
        %349 = vst [vmem:[#allocation2 + $0xa8] sm:$0xff] 0.0
        %350 = vst [vmem:[#allocation2 + $0xb0] sm:$0xff] 0.0
        %351 = vst [vmem:[#allocation2 + $0xb8] sm:$0xff] 0.0
        %352 = vst [vmem:[#allocation2 + $0xc0] sm:$0xff] 0.0
        %353 = vst [vmem:[#allocation2 + $0xc8] sm:$0xff] 0.0
        %354 = vst [vmem:[#allocation2 + $0xd0] sm:$0xff] 0.0
        %355 = vst [vmem:[#allocation2 + $0xd8] sm:$0xff] 0.0
        %356 = vst [vmem:[#allocation2 + $0xe0] sm:$0xff] 0.0
        %357 = vst [vmem:[#allocation2 + $0xe8] sm:$0xff] 0.0
        %358 = vst [vmem:[#allocation2 + $0xf0] sm:$0xff] 0.0
        %359 = vst [vmem:[#allocation2 + $0xf8] sm:$0xff] 0.0
        %360 = vst [vmem:[#allocation2 + $0x100] sm:$0xff] 0.0
        %361 = vst [vmem:[#allocation2 + $0x108] sm:$0xff] 0.0
        %362 = vst [vmem:[#allocation2 + $0x110] sm:$0xff] 0.0
        %363 = vst [vmem:[#allocation2 + $0x118] sm:$0xff] 0.0
        %364 = vst [vmem:[#allocation2 + $0x120] sm:$0xff] 0.0
        %365 = vst [vmem:[#allocation2 + $0x128] sm:$0xff] 0.0
        %366 = vst [vmem:[#allocation2 + $0x130] sm:$0xff] 0.0
        %367 = vst [vmem:[#allocation2 + $0x138] sm:$0xff] 0.0
        %368 = vst [vmem:[#allocation2 + $0x140] sm:$0xff] 0.0
        %369 = vst [vmem:[#allocation2 + $0x148] sm:$0xff] 0.0
        %370 = vst [vmem:[#allocation2 + $0x150] sm:$0xff] 0.0
        %371 = vst [vmem:[#allocation2 + $0x158] sm:$0xff] 0.0
        %372 = vst [vmem:[#allocation2 + $0x160] sm:$0xff] 0.0
        %373 = vst [vmem:[#allocation2 + $0x168] sm:$0xff] 0.0
        %374 = vst [vmem:[#allocation2 + $0x170] sm:$0xff] 0.0
        %375 = vst [vmem:[#allocation2 + $0x178] sm:$0xff] 0.0
        %376 = vst [vmem:[#allocation2 + $0x180] sm:$0xff] 0.0
        %377 = vst [vmem:[#allocation2 + $0x188] sm:$0xff] 0.0
        %378 = vst [vmem:[#allocation2 + $0x190] sm:$0xff] 0.0
        %379 = vst [vmem:[#allocation2 + $0x198] sm:$0xff] 0.0
        %380 = vst [vmem:[#allocation2 + $0x1a0] sm:$0xff] 0.0
        %381 = vst [vmem:[#allocation2 + $0x1a8] sm:$0xff] 0.0
        %382 = vst [vmem:[#allocation2 + $0x1b0] sm:$0xff] 0.0
        %383 = vst [vmem:[#allocation2 + $0x1b8] sm:$0xff] 0.0
        %384 = vst [vmem:[#allocation2 + $0x1c0] sm:$0xff] 0.0
        %385 = vst [vmem:[#allocation2 + $0x1c8] sm:$0xff] 0.0
        %386 = vst [vmem:[#allocation2 + $0x1d0] sm:$0xff] 0.0
        %387 = vst [vmem:[#allocation2 + $0x1d8] sm:$0xff] 0.0
        %388 = vst [vmem:[#allocation2 + $0x1e0] sm:$0xff] 0.0
        %389 = vst [vmem:[#allocation2 + $0x1e8] sm:$0xff] 0.0
        %390 = vst [vmem:[#allocation2 + $0x1f0] sm:$0xff] 0.0
        %391 = vst [vmem:[#allocation2 + $0x1f8] sm:$0xff] 0.0
      $region40: #{_lambda_.6} parent=35 // pred_fallthru
        _
      %v392 = vld [vmem:[#allocation2] sm:$0xff]
      %v393 = vld [vmem:[#allocation2 + $0x8] sm:$0xff]
      %v394 = vld [vmem:[#allocation2 + $0x10] sm:$0xff]
      %v395 = vld [vmem:[#allocation2 + $0x18] sm:$0xff]
      %v396 = vld [vmem:[#allocation2 + $0x20] sm:$0xff]
      %v397 = vld [vmem:[#allocation2 + $0x28] sm:$0xff]
      %v398 = vld [vmem:[#allocation2 + $0x30] sm:$0xff]
      %v399 = vld [vmem:[#allocation2 + $0x38] sm:$0xff]
      %v400 = vld [vmem:[#allocation2 + $0x40] sm:$0xff]
      %v401 = vld [vmem:[#allocation2 + $0x48] sm:$0xff]
      %v402 = vld [vmem:[#allocation2 + $0x50] sm:$0xff]
      %v403 = vld [vmem:[#allocation2 + $0x58] sm:$0xff]
      %v404 = vld [vmem:[#allocation2 + $0x60] sm:$0xff]
      %v405 = vld [vmem:[#allocation2 + $0x68] sm:$0xff]
      %v406 = vld [vmem:[#allocation2 + $0x70] sm:$0xff]
      %v407 = vld [vmem:[#allocation2 + $0x78] sm:$0xff]
      %v408 = vld [vmem:[#allocation2 + $0x80] sm:$0xff]
      %v409 = vld [vmem:[#allocation2 + $0x88] sm:$0xff]
      %v410 = vld [vmem:[#allocation2 + $0x90] sm:$0xff]
      %v411 = vld [vmem:[#allocation2 + $0x98] sm:$0xff]
      %v412 = vld [vmem:[#allocation2 + $0xa0] sm:$0xff]
      %v413 = vld [vmem:[#allocation2 + $0xa8] sm:$0xff]
      %v414 = vld [vmem:[#allocation2 + $0xb0] sm:$0xff]
      %v415 = vld [vmem:[#allocation2 + $0xb8] sm:$0xff]
      %v416 = vld [vmem:[#allocation2 + $0xc0] sm:$0xff]
      %v417 = vld [vmem:[#allocation2 + $0xc8] sm:$0xff]
      %v418 = vld [vmem:[#allocation2 + $0xd0] sm:$0xff]
      %v419 = vld [vmem:[#allocation2 + $0xd8] sm:$0xff]
      %v420 = vld [vmem:[#allocation2 + $0xe0] sm:$0xff]
      %v421 = vld [vmem:[#allocation2 + $0xe8] sm:$0xff]
      %v422 = vld [vmem:[#allocation2 + $0xf0] sm:$0xff]
      %v423 = vld [vmem:[#allocation2 + $0xf8] sm:$0xff]
      %v424 = vld [vmem:[#allocation2 + $0x100] sm:$0xff]
      %v425 = vld [vmem:[#allocation2 + $0x108] sm:$0xff]
      %v426 = vld [vmem:[#allocation2 + $0x110] sm:$0xff]
      %v427 = vld [vmem:[#allocation2 + $0x118] sm:$0xff]
      %v428 = vld [vmem:[#allocation2 + $0x120] sm:$0xff]
      %v429 = vld [vmem:[#allocation2 + $0x128] sm:$0xff]
      %v430 = vld [vmem:[#allocation2 + $0x130] sm:$0xff]
      %v431 = vld [vmem:[#allocation2 + $0x138] sm:$0xff]
      %v432 = vld [vmem:[#allocation2 + $0x140] sm:$0xff]
      %v433 = vld [vmem:[#allocation2 + $0x148] sm:$0xff]
      %v434 = vld [vmem:[#allocation2 + $0x150] sm:$0xff]
      %v435 = vld [vmem:[#allocation2 + $0x158] sm:$0xff]
      %v436 = vld [vmem:[#allocation2 + $0x160] sm:$0xff]
      %v437 = vld [vmem:[#allocation2 + $0x168] sm:$0xff]
      %v438 = vld [vmem:[#allocation2 + $0x170] sm:$0xff]
      %v439 = vld [vmem:[#allocation2 + $0x178] sm:$0xff]
      %v440 = vld [vmem:[#allocation2 + $0x180] sm:$0xff]
      %v441 = vld [vmem:[#allocation2 + $0x188] sm:$0xff]
      %v442 = vld [vmem:[#allocation2 + $0x190] sm:$0xff]
      %v443 = vld [vmem:[#allocation2 + $0x198] sm:$0xff]
      %v444 = vld [vmem:[#allocation2 + $0x1a0] sm:$0xff]
      %v445 = vld [vmem:[#allocation2 + $0x1a8] sm:$0xff]
      %v446 = vld [vmem:[#allocation2 + $0x1b0] sm:$0xff]
      %v447 = vld [vmem:[#allocation2 + $0x1b8] sm:$0xff]
      %v448 = vld [vmem:[#allocation2 + $0x1c0] sm:$0xff]
      %v449 = vld [vmem:[#allocation2 + $0x1c8] sm:$0xff]
      %v450 = vld [vmem:[#allocation2 + $0x1d0] sm:$0xff]
      %v451 = vld [vmem:[#allocation2 + $0x1d8] sm:$0xff]
      %v452 = vld [vmem:[#allocation2 + $0x1e0] sm:$0xff]
      %v453 = vld [vmem:[#allocation2 + $0x1e8] sm:$0xff]
      %v454 = vld [vmem:[#allocation2 + $0x1f0] sm:$0xff]
      %v455 = vld [vmem:[#allocation2 + $0x1f8] sm:$0xff]
      %v456 = vld [vmem:[%s287] sm:$0xf]
      %v457 = vld [vmem:[%s287 + $0x4] sm:$0xf]
      %v458 = vld [vmem:[%s287 + $0x8] sm:$0xf]
      %v459 = vld [vmem:[%s287 + $0xc] sm:$0xf]
      %v460 = vld [vmem:[%s287 + $0x10] sm:$0xf]
      %v461 = vld [vmem:[%s287 + $0x14] sm:$0xf]
      %v462 = vld [vmem:[%s287 + $0x18] sm:$0xf]
      %v463 = vld [vmem:[%s287 + $0x1c] sm:$0xf]
      %v464 = vld [vmem:[%s287 + $0x20] sm:$0xf]
      %v465 = vld [vmem:[%s287 + $0x24] sm:$0xf]
      %v466 = vld [vmem:[%s287 + $0x28] sm:$0xf]
      %v467 = vld [vmem:[%s287 + $0x2c] sm:$0xf]
      %v468 = vld [vmem:[%s287 + $0x30] sm:$0xf]
      %v469 = vld [vmem:[%s287 + $0x34] sm:$0xf]
      %v470 = vld [vmem:[%s287 + $0x38] sm:$0xf]
      %v471 = vld [vmem:[%s287 + $0x3c] sm:$0xf]
      %v472 = vld [vmem:[%s287 + $0x40] sm:$0xf]
      %v473 = vld [vmem:[%s287 + $0x44] sm:$0xf]
      %v474 = vld [vmem:[%s287 + $0x48] sm:$0xf]
      %v475 = vld [vmem:[%s287 + $0x4c] sm:$0xf]
      %v476 = vld [vmem:[%s287 + $0x50] sm:$0xf]
      %v477 = vld [vmem:[%s287 + $0x54] sm:$0xf]
      %v478 = vld [vmem:[%s287 + $0x58] sm:$0xf]
      %v479 = vld [vmem:[%s287 + $0x5c] sm:$0xf]
      %v480 = vld [vmem:[%s287 + $0x60] sm:$0xf]
      %v481 = vld [vmem:[%s287 + $0x64] sm:$0xf]
      %v482 = vld [vmem:[%s287 + $0x68] sm:$0xf]
      %v483 = vld [vmem:[%s287 + $0x6c] sm:$0xf]
      %v484 = vld [vmem:[%s287 + $0x70] sm:$0xf]
      %v485 = vld [vmem:[%s287 + $0x74] sm:$0xf]
      %v486 = vld [vmem:[%s287 + $0x78] sm:$0xf]
      %v487 = vld [vmem:[%s287 + $0x7c] sm:$0xf]
      %v488 = vld [vmem:[%s298] sm:$0xff]
      %v489 = vld [vmem:[%s298 + $0x8] sm:$0xff]
      %v490 = vld [vmem:[%s298 + $0x10] sm:$0xff]
      %v491 = vld [vmem:[%s298 + $0x18] sm:$0xff]
      %v492 = vld [vmem:[%s298 + $0x20] sm:$0xff]
      %v493 = vld [vmem:[%s298 + $0x28] sm:$0xff]
      %v494 = vld [vmem:[%s298 + $0x30] sm:$0xff]
      %v495 = vld [vmem:[%s298 + $0x38] sm:$0xff]
      %v528 = vunpack.c.l.b16 %v456
      %v529 = vunpack.c.l.b16 %v457
      %v530 = vunpack.c.l.b16 %v458
      %v531 = vunpack.c.l.b16 %v459
      %v532 = vunpack.c.l.b16 %v460
      %v533 = vunpack.c.l.b16 %v461
      %v534 = vunpack.c.l.b16 %v462
      %v535 = vunpack.c.l.b16 %v463
      %v536 = vunpack.c.l.b16 %v464
      %v537 = vunpack.c.l.b16 %v465
      %v538 = vunpack.c.l.b16 %v466
      %v539 = vunpack.c.l.b16 %v467
      %v540 = vunpack.c.l.b16 %v468
      %v541 = vunpack.c.l.b16 %v469
      %v542 = vunpack.c.l.b16 %v470
      %v543 = vunpack.c.l.b16 %v471
      %v544 = vunpack.c.l.b16 %v472
      %v545 = vunpack.c.l.b16 %v473
      %v546 = vunpack.c.l.b16 %v474
      %v547 = vunpack.c.l.b16 %v475
      %v548 = vunpack.c.l.b16 %v476
      %v549 = vunpack.c.l.b16 %v477
      %v550 = vunpack.c.l.b16 %v478
      %v551 = vunpack.c.l.b16 %v479
      %v552 = vunpack.c.l.b16 %v480
      %v553 = vunpack.c.l.b16 %v481
      %v554 = vunpack.c.l.b16 %v482
      %v555 = vunpack.c.l.b16 %v483
      %v556 = vunpack.c.l.b16 %v484
      %v557 = vunpack.c.l.b16 %v485
      %v558 = vunpack.c.l.b16 %v486
      %v559 = vunpack.c.l.b16 %v487
      %v560 = vpack.c.b16 %v529, %v528
      %v561 = vpack.c.b16 %v531, %v530
      %v562 = vpack.c.b16 %v533, %v532
      %v563 = vpack.c.b16 %v535, %v534
      %v564 = vpack.c.b16 %v537, %v536
      %v565 = vpack.c.b16 %v539, %v538
      %v566 = vpack.c.b16 %v541, %v540
      %v567 = vpack.c.b16 %v543, %v542
      %v568 = vpack.c.b16 %v545, %v544
      %v569 = vpack.c.b16 %v547, %v546
      %v570 = vpack.c.b16 %v549, %v548
      %v571 = vpack.c.b16 %v551, %v550
      %v572 = vpack.c.b16 %v553, %v552
      %v573 = vpack.c.b16 %v555, %v554
      %v574 = vpack.c.b16 %v557, %v556
      %v575 = vpack.c.b16 %v559, %v558
      %v584 = vunpack.c.l.b16 %v488
      %v585 = vunpack.c.h.b16 %v488
      %v586 = vunpack.c.l.b16 %v489
      %v587 = vunpack.c.h.b16 %v489
      %v588 = vunpack.c.l.b16 %v490
      %v589 = vunpack.c.h.b16 %v490
      %v590 = vunpack.c.l.b16 %v491
      %v591 = vunpack.c.h.b16 %v491
      %v592 = vunpack.c.l.b16 %v492
      %v593 = vunpack.c.h.b16 %v492
      %v594 = vunpack.c.l.b16 %v493
      %v595 = vunpack.c.h.b16 %v493
      %v596 = vunpack.c.l.b16 %v494
      %v597 = vunpack.c.h.b16 %v494
      %v598 = vunpack.c.l.b16 %v495
      %v599 = vunpack.c.h.b16 %v495
      %v600 = vpack.c.b16 %v586, %v584
      %v601 = vpack.c.b16 %v587, %v585
      %v602 = vpack.c.b16 %v590, %v588
      %v603 = vpack.c.b16 %v591, %v589
      %v604 = vpack.c.b16 %v594, %v592
      %v605 = vpack.c.b16 %v595, %v593
      %v606 = vpack.c.b16 %v598, %v596
      %v607 = vpack.c.b16 %v599, %v597
      %vm616 = vcmask 523264
      %v618 = vsel %vm616, %v560, 0
      %v621 = vsel %vm616, %v561, 0
      %v624 = vsel %vm616, %v562, 0
      %v627 = vsel %vm616, %v563, 0
      %v630 = vsel %vm616, %v564, 0
      %v633 = vsel %vm616, %v565, 0
      %v636 = vsel %vm616, %v566, 0
      %v639 = vsel %vm616, %v567, 0
      %v642 = vsel %vm616, %v568, 0
      %v645 = vsel %vm616, %v569, 0
      %v648 = vsel %vm616, %v570, 0
      %v651 = vsel %vm616, %v571, 0
      %v654 = vsel %vm616, %v572, 0
      %v657 = vsel %vm616, %v573, 0
      %v660 = vsel %vm616, %v574, 0
      %v663 = vsel %vm616, %v575, 0
      %665 = vmatprep.subr.bf16.mxu0 0
      %666 = vmatpush1.bf16.msra.mxu0 0
      %667 = vmatprep.subr.bf16.mxu0 0
      %668 = vmatpush1.bf16.msra.mxu0 0
      %669 = vmatprep.subr.bf16.mxu0 0
      %670 = vmatpush1.bf16.msra.mxu0 0
      %671 = vmatprep.subr.bf16.mxu0 0
      %672 = vmatpush1.bf16.msra.mxu0 0
      %673 = vmatprep.subr.bf16.mxu0 %v607
      %674 = vmatpush1.bf16.msra.mxu0 %v606
      %675 = vmatprep.subr.bf16.mxu0 %v605
      %676 = vmatpush1.bf16.msra.mxu0 %v604
      %677 = vmatprep.subr.bf16.mxu0 %v603
      %678 = vmatpush1.bf16.msra.mxu0 %v602
      %679 = vmatprep.subr.bf16.mxu0 %v601
      %680 = vmatpush1.bf16.msra.mxu0 %v600
      %681 = vmatprep.subr.bf16.mxu0 0
      %682 = vmatpush2.bf16.msra.mxu0 0
      %683 = vmatprep.subr.bf16.mxu0 0
      %684 = vmatpush2.bf16.msra.mxu0 0
      %685 = vmatprep.subr.bf16.mxu0 0
      %686 = vmatpush2.bf16.msra.mxu0 0
      %687 = vmatprep.subr.bf16.mxu0 0
      %688 = vmatpush2.bf16.msra.mxu0 0
      %689 = vmatprep.subr.bf16.mxu0 0
      %690 = vmatpush2.bf16.msra.mxu0 0
      %691 = vmatprep.subr.bf16.mxu0 0
      %692 = vmatpush2.bf16.msra.mxu0 0
      %693 = vmatprep.subr.bf16.mxu0 0
      %694 = vmatpush2.bf16.msra.mxu0 0
      %695 = vmatprep.subr.bf16.mxu0 0
      %696 = vmatpush2.bf16.msra.mxu0 0
      %697 = vmatprep.mubr.bf16.mxu0 0
      %698 = vmatmul.mubr.bf16.gmra.mxu0 %v618
      %v699 = vpop.f32.mrf.mxu0
      %v700 = vadd.f32 0.0, %v699
      %v701 = vpop.f32.mrf.mxu0
      %v702 = vadd.f32 0.0, %v701
      %v703 = vpop.f32.mrf.mxu0
      %v704 = vadd.f32 0.0, %v703
      %v705 = vpop.f32.mrf.mxu0
      %v706 = vadd.f32 0.0, %v705
      %707 = vmatprep.mubr.bf16.mxu0 0
      %708 = vmatmul.mubr.bf16.gmra.mxu0 %v621
      %v709 = vpop.f32.mrf.mxu0
      %v710 = vadd.f32 0.0, %v709
      %v711 = vpop.f32.mrf.mxu0
      %v712 = vadd.f32 0.0, %v711
      %v713 = vpop.f32.mrf.mxu0
      %v714 = vadd.f32 0.0, %v713
      %v715 = vpop.f32.mrf.mxu0
      %v716 = vadd.f32 0.0, %v715
      %717 = vmatprep.mubr.bf16.mxu0 0
      %718 = vmatmul.mubr.bf16.gmra.mxu0 %v624
      %v719 = vpop.f32.mrf.mxu0
      %v720 = vadd.f32 0.0, %v719
      %v721 = vpop.f32.mrf.mxu0
      %v722 = vadd.f32 0.0, %v721
      %v723 = vpop.f32.mrf.mxu0
      %v724 = vadd.f32 0.0, %v723
      %v725 = vpop.f32.mrf.mxu0
      %v726 = vadd.f32 0.0, %v725
      %727 = vmatprep.mubr.bf16.mxu0 0
      %728 = vmatmul.mubr.bf16.gmra.mxu0 %v627
      %v729 = vpop.f32.mrf.mxu0
      %v730 = vadd.f32 0.0, %v729
      %v731 = vpop.f32.mrf.mxu0
      %v732 = vadd.f32 0.0, %v731
      %v733 = vpop.f32.mrf.mxu0
      %v734 = vadd.f32 0.0, %v733
      %v735 = vpop.f32.mrf.mxu0
      %v736 = vadd.f32 0.0, %v735
      %737 = vmatprep.mubr.bf16.mxu0 0
      %738 = vmatmul.mubr.bf16.gmra.mxu0 %v630
      %v739 = vpop.f32.mrf.mxu0
      %v740 = vadd.f32 0.0, %v739
      %v741 = vpop.f32.mrf.mxu0
      %v742 = vadd.f32 0.0, %v741
      %v743 = vpop.f32.mrf.mxu0
      %v744 = vadd.f32 0.0, %v743
      %v745 = vpop.f32.mrf.mxu0
      %v746 = vadd.f32 0.0, %v745
      %747 = vmatprep.mubr.bf16.mxu0 0
      %748 = vmatmul.mubr.bf16.gmra.mxu0 %v633
      %v749 = vpop.f32.mrf.mxu0
      %v750 = vadd.f32 0.0, %v749
      %v751 = vpop.f32.mrf.mxu0
      %v752 = vadd.f32 0.0, %v751
      %v753 = vpop.f32.mrf.mxu0
      %v754 = vadd.f32 0.0, %v753
      %v755 = vpop.f32.mrf.mxu0
      %v756 = vadd.f32 0.0, %v755
      %757 = vmatprep.mubr.bf16.mxu0 0
      %758 = vmatmul.mubr.bf16.gmra.mxu0 %v636
      %v759 = vpop.f32.mrf.mxu0
      %v760 = vadd.f32 0.0, %v759
      %v761 = vpop.f32.mrf.mxu0
      %v762 = vadd.f32 0.0, %v761
      %v763 = vpop.f32.mrf.mxu0
      %v764 = vadd.f32 0.0, %v763
      %v765 = vpop.f32.mrf.mxu0
      %v766 = vadd.f32 0.0, %v765
      %767 = vmatprep.mubr.bf16.mxu0 0
      %768 = vmatmul.mubr.bf16.gmra.mxu0 %v639
      %v769 = vpop.f32.mrf.mxu0
      %v770 = vadd.f32 0.0, %v769
      %v771 = vpop.f32.mrf.mxu0
      %v772 = vadd.f32 0.0, %v771
      %v773 = vpop.f32.mrf.mxu0
      %v774 = vadd.f32 0.0, %v773
      %v775 = vpop.f32.mrf.mxu0
      %v776 = vadd.f32 0.0, %v775
      %777 = vmatprep.mubr.bf16.mxu0 0
      %778 = vmatmul.mubr.bf16.gmra.mxu0 %v642
      %v779 = vpop.f32.mrf.mxu0
      %v780 = vadd.f32 0.0, %v779
      %v781 = vpop.f32.mrf.mxu0
      %v782 = vadd.f32 0.0, %v781
      %v783 = vpop.f32.mrf.mxu0
      %v784 = vadd.f32 0.0, %v783
      %v785 = vpop.f32.mrf.mxu0
      %v786 = vadd.f32 0.0, %v785
      %787 = vmatprep.mubr.bf16.mxu0 0
      %788 = vmatmul.mubr.bf16.gmra.mxu0 %v645
      %v789 = vpop.f32.mrf.mxu0
      %v790 = vadd.f32 0.0, %v789
      %v791 = vpop.f32.mrf.mxu0
      %v792 = vadd.f32 0.0, %v791
      %v793 = vpop.f32.mrf.mxu0
      %v794 = vadd.f32 0.0, %v793
      %v795 = vpop.f32.mrf.mxu0
      %v796 = vadd.f32 0.0, %v795
      %797 = vmatprep.mubr.bf16.mxu0 0
      %798 = vmatmul.mubr.bf16.gmra.mxu0 %v648
      %v799 = vpop.f32.mrf.mxu0
      %v800 = vadd.f32 0.0, %v799
      %v801 = vpop.f32.mrf.mxu0
      %v802 = vadd.f32 0.0, %v801
      %v803 = vpop.f32.mrf.mxu0
      %v804 = vadd.f32 0.0, %v803
      %v805 = vpop.f32.mrf.mxu0
      %v806 = vadd.f32 0.0, %v805
      %807 = vmatprep.mubr.bf16.mxu0 0
      %808 = vmatmul.mubr.bf16.gmra.mxu0 %v651
      %v809 = vpop.f32.mrf.mxu0
      %v810 = vadd.f32 0.0, %v809
      %v811 = vpop.f32.mrf.mxu0
      %v812 = vadd.f32 0.0, %v811
      %v813 = vpop.f32.mrf.mxu0
      %v814 = vadd.f32 0.0, %v813
      %v815 = vpop.f32.mrf.mxu0
      %v816 = vadd.f32 0.0, %v815
      %817 = vmatprep.mubr.bf16.mxu0 0
      %818 = vmatmul.mubr.bf16.gmra.mxu0 %v654
      %v819 = vpop.f32.mrf.mxu0
      %v820 = vadd.f32 0.0, %v819
      %v821 = vpop.f32.mrf.mxu0
      %v822 = vadd.f32 0.0, %v821
      %v823 = vpop.f32.mrf.mxu0
      %v824 = vadd.f32 0.0, %v823
      %v825 = vpop.f32.mrf.mxu0
      %v826 = vadd.f32 0.0, %v825
      %827 = vmatprep.mubr.bf16.mxu0 0
      %828 = vmatmul.mubr.bf16.gmra.mxu0 %v657
      %v829 = vpop.f32.mrf.mxu0
      %v830 = vadd.f32 0.0, %v829
      %v831 = vpop.f32.mrf.mxu0
      %v832 = vadd.f32 0.0, %v831
      %v833 = vpop.f32.mrf.mxu0
      %v834 = vadd.f32 0.0, %v833
      %v835 = vpop.f32.mrf.mxu0
      %v836 = vadd.f32 0.0, %v835
      %837 = vmatprep.mubr.bf16.mxu0 0
      %838 = vmatmul.mubr.bf16.gmra.mxu0 %v660
      %v839 = vpop.f32.mrf.mxu0
      %v840 = vadd.f32 0.0, %v839
      %v841 = vpop.f32.mrf.mxu0
      %v842 = vadd.f32 0.0, %v841
      %v843 = vpop.f32.mrf.mxu0
      %v844 = vadd.f32 0.0, %v843
      %v845 = vpop.f32.mrf.mxu0
      %v846 = vadd.f32 0.0, %v845
      %847 = vmatprep.mubr.bf16.mxu0 0
      %848 = vmatmul.mubr.bf16.gmra.mxu0 %v663
      %v849 = vpop.f32.mrf.mxu0
      %v850 = vadd.f32 0.0, %v849
      %v851 = vpop.f32.mrf.mxu0
      %v852 = vadd.f32 0.0, %v851
      %v853 = vpop.f32.mrf.mxu0
      %v854 = vadd.f32 0.0, %v853
      %v855 = vpop.f32.mrf.mxu0
      %v856 = vadd.f32 0.0, %v855
      %857 = vdwg.mxu0
      %v858 = vadd.f32 %v392, %v700
      %v859 = vadd.f32 %v393, %v702
      %v860 = vadd.f32 %v394, %v704
      %v861 = vadd.f32 %v395, %v706
      %v862 = vadd.f32 %v396, %v710
      %v863 = vadd.f32 %v397, %v712
      %v864 = vadd.f32 %v398, %v714
      %v865 = vadd.f32 %v399, %v716
      %v866 = vadd.f32 %v400, %v720
      %v867 = vadd.f32 %v401, %v722
      %v868 = vadd.f32 %v402, %v724
      %v869 = vadd.f32 %v403, %v726
      %v870 = vadd.f32 %v404, %v730
      %v871 = vadd.f32 %v405, %v732
      %v872 = vadd.f32 %v406, %v734
      %v873 = vadd.f32 %v407, %v736
      %v874 = vadd.f32 %v408, %v740
      %v875 = vadd.f32 %v409, %v742
      %v876 = vadd.f32 %v410, %v744
      %v877 = vadd.f32 %v411, %v746
      %v878 = vadd.f32 %v412, %v750
      %v879 = vadd.f32 %v413, %v752
      %v880 = vadd.f32 %v414, %v754
      %v881 = vadd.f32 %v415, %v756
      %v882 = vadd.f32 %v416, %v760
      %v883 = vadd.f32 %v417, %v762
      %v884 = vadd.f32 %v418, %v764
      %v885 = vadd.f32 %v419, %v766
      %v886 = vadd.f32 %v420, %v770
      %v887 = vadd.f32 %v421, %v772
      %v888 = vadd.f32 %v422, %v774
      %v889 = vadd.f32 %v423, %v776
      %v890 = vadd.f32 %v424, %v780
      %v891 = vadd.f32 %v425, %v782
      %v892 = vadd.f32 %v426, %v784
      %v893 = vadd.f32 %v427, %v786
      %v894 = vadd.f32 %v428, %v790
      %v895 = vadd.f32 %v429, %v792
      %v896 = vadd.f32 %v430, %v794
      %v897 = vadd.f32 %v431, %v796
      %v898 = vadd.f32 %v432, %v800
      %v899 = vadd.f32 %v433, %v802
      %v900 = vadd.f32 %v434, %v804
      %v901 = vadd.f32 %v435, %v806
      %v902 = vadd.f32 %v436, %v810
      %v903 = vadd.f32 %v437, %v812
      %v904 = vadd.f32 %v438, %v814
      %v905 = vadd.f32 %v439, %v816
      %v906 = vadd.f32 %v440, %v820
      %v907 = vadd.f32 %v441, %v822
      %v908 = vadd.f32 %v442, %v824
      %v909 = vadd.f32 %v443, %v826
      %v910 = vadd.f32 %v444, %v830
      %v911 = vadd.f32 %v445, %v832
      %v912 = vadd.f32 %v446, %v834
      %v913 = vadd.f32 %v447, %v836
      %v914 = vadd.f32 %v448, %v840
      %v915 = vadd.f32 %v449, %v842
      %v916 = vadd.f32 %v450, %v844
      %v917 = vadd.f32 %v451, %v846
      %v918 = vadd.f32 %v452, %v850
      %v919 = vadd.f32 %v453, %v852
      %v920 = vadd.f32 %v454, %v854
      %v921 = vadd.f32 %v455, %v856
      %922 = vst [vmem:[#allocation2] sm:$0xff] %v858
      %923 = vst [vmem:[#allocation2 + $0x8] sm:$0xff] %v859
      %924 = vst [vmem:[#allocation2 + $0x10] sm:$0xff] %v860
      %925 = vst [vmem:[#allocation2 + $0x18] sm:$0xff] %v861
      %926 = vst [vmem:[#allocation2 + $0x20] sm:$0xff] %v862
      %927 = vst [vmem:[#allocation2 + $0x28] sm:$0xff] %v863
      %928 = vst [vmem:[#allocation2 + $0x30] sm:$0xff] %v864
      %929 = vst [vmem:[#allocation2 + $0x38] sm:$0xff] %v865
      %930 = vst [vmem:[#allocation2 + $0x40] sm:$0xff] %v866
      %931 = vst [vmem:[#allocation2 + $0x48] sm:$0xff] %v867
      %932 = vst [vmem:[#allocation2 + $0x50] sm:$0xff] %v868
      %933 = vst [vmem:[#allocation2 + $0x58] sm:$0xff] %v869
      %934 = vst [vmem:[#allocation2 + $0x60] sm:$0xff] %v870
      %935 = vst [vmem:[#allocation2 + $0x68] sm:$0xff] %v871
      %936 = vst [vmem:[#allocation2 + $0x70] sm:$0xff] %v872
      %937 = vst [vmem:[#allocation2 + $0x78] sm:$0xff] %v873
      %938 = vst [vmem:[#allocation2 + $0x80] sm:$0xff] %v874
      %939 = vst [vmem:[#allocation2 + $0x88] sm:$0xff] %v875
      %940 = vst [vmem:[#allocation2 + $0x90] sm:$0xff] %v876
      %941 = vst [vmem:[#allocation2 + $0x98] sm:$0xff] %v877
      %942 = vst [vmem:[#allocation2 + $0xa0] sm:$0xff] %v878
      %943 = vst [vmem:[#allocation2 + $0xa8] sm:$0xff] %v879
      %944 = vst [vmem:[#allocation2 + $0xb0] sm:$0xff] %v880
      %945 = vst [vmem:[#allocation2 + $0xb8] sm:$0xff] %v881
      %946 = vst [vmem:[#allocation2 + $0xc0] sm:$0xff] %v882
      %947 = vst [vmem:[#allocation2 + $0xc8] sm:$0xff] %v883
      %948 = vst [vmem:[#allocation2 + $0xd0] sm:$0xff] %v884
      %949 = vst [vmem:[#allocation2 + $0xd8] sm:$0xff] %v885
      %950 = vst [vmem:[#allocation2 + $0xe0] sm:$0xff] %v886
      %951 = vst [vmem:[#allocation2 + $0xe8] sm:$0xff] %v887
      %952 = vst [vmem:[#allocation2 + $0xf0] sm:$0xff] %v888
      %953 = vst [vmem:[#allocation2 + $0xf8] sm:$0xff] %v889
      %954 = vst [vmem:[#allocation2 + $0x100] sm:$0xff] %v890
      %955 = vst [vmem:[#allocation2 + $0x108] sm:$0xff] %v891
      %956 = vst [vmem:[#allocation2 + $0x110] sm:$0xff] %v892
      %957 = vst [vmem:[#allocation2 + $0x118] sm:$0xff] %v893
      %958 = vst [vmem:[#allocation2 + $0x120] sm:$0xff] %v894
      %959 = vst [vmem:[#allocation2 + $0x128] sm:$0xff] %v895
      %960 = vst [vmem:[#allocation2 + $0x130] sm:$0xff] %v896
      %961 = vst [vmem:[#allocation2 + $0x138] sm:$0xff] %v897
      %962 = vst [vmem:[#allocation2 + $0x140] sm:$0xff] %v898
      %963 = vst [vmem:[#allocation2 + $0x148] sm:$0xff] %v899
      %964 = vst [vmem:[#allocation2 + $0x150] sm:$0xff] %v900
      %965 = vst [vmem:[#allocation2 + $0x158] sm:$0xff] %v901
      %966 = vst [vmem:[#allocation2 + $0x160] sm:$0xff] %v902
      %967 = vst [vmem:[#allocation2 + $0x168] sm:$0xff] %v903
      %968 = vst [vmem:[#allocation2 + $0x170] sm:$0xff] %v904
      %969 = vst [vmem:[#allocation2 + $0x178] sm:$0xff] %v905
      %970 = vst [vmem:[#allocation2 + $0x180] sm:$0xff] %v906
      %971 = vst [vmem:[#allocation2 + $0x188] sm:$0xff] %v907
      %972 = vst [vmem:[#allocation2 + $0x190] sm:$0xff] %v908
      %973 = vst [vmem:[#allocation2 + $0x198] sm:$0xff] %v909
      %974 = vst [vmem:[#allocation2 + $0x1a0] sm:$0xff] %v910
      %975 = vst [vmem:[#allocation2 + $0x1a8] sm:$0xff] %v911
      %976 = vst [vmem:[#allocation2 + $0x1b0] sm:$0xff] %v912
      %977 = vst [vmem:[#allocation2 + $0x1b8] sm:$0xff] %v913
      %978 = vst [vmem:[#allocation2 + $0x1c0] sm:$0xff] %v914
      %979 = vst [vmem:[#allocation2 + $0x1c8] sm:$0xff] %v915
      %980 = vst [vmem:[#allocation2 + $0x1d0] sm:$0xff] %v916
      %981 = vst [vmem:[#allocation2 + $0x1d8] sm:$0xff] %v917
      %982 = vst [vmem:[#allocation2 + $0x1e0] sm:$0xff] %v918
      %983 = vst [vmem:[#allocation2 + $0x1e8] sm:$0xff] %v919
      %984 = vst [vmem:[#allocation2 + $0x1f0] sm:$0xff] %v920
      %985 = vst [vmem:[#allocation2 + $0x1f8] sm:$0xff] %v921
      // Predicated region
      $region41: #{_lambda_.6} parent=35 // pred_check
        %p986 = pneg %p324
      $region42: #{_lambda_.6} parent=35 // pred_check_branch
        %988 = sbr.rel (%p986) target = $region44
      $region43: #{_lambda_.6} parent=35 // pred_region
        %v989 = vld [vmem:[#allocation2] sm:$0xff]
        %v990 = vld [vmem:[#allocation2 + $0x8] sm:$0xff]
        %v991 = vld [vmem:[#allocation2 + $0x10] sm:$0xff]
        %v992 = vld [vmem:[#allocation2 + $0x18] sm:$0xff]
        %v993 = vld [vmem:[#allocation2 + $0x20] sm:$0xff]
        %v994 = vld [vmem:[#allocation2 + $0x28] sm:$0xff]
        %v995 = vld [vmem:[#allocation2 + $0x30] sm:$0xff]
        %v996 = vld [vmem:[#allocation2 + $0x38] sm:$0xff]
        %v997 = vld [vmem:[#allocation2 + $0x40] sm:$0xff]
        %v998 = vld [vmem:[#allocation2 + $0x48] sm:$0xff]
        %v999 = vld [vmem:[#allocation2 + $0x50] sm:$0xff]
        %v1000 = vld [vmem:[#allocation2 + $0x58] sm:$0xff]
        %v1001 = vld [vmem:[#allocation2 + $0x60] sm:$0xff]
        %v1002 = vld [vmem:[#allocation2 + $0x68] sm:$0xff]
        %v1003 = vld [vmem:[#allocation2 + $0x70] sm:$0xff]
        %v1004 = vld [vmem:[#allocation2 + $0x78] sm:$0xff]
        %v1005 = vld [vmem:[#allocation2 + $0x80] sm:$0xff]
        %v1006 = vld [vmem:[#allocation2 + $0x88] sm:$0xff]
        %v1007 = vld [vmem:[#allocation2 + $0x90] sm:$0xff]
        %v1008 = vld [vmem:[#allocation2 + $0x98] sm:$0xff]
        %v1009 = vld [vmem:[#allocation2 + $0xa0] sm:$0xff]
        %v1010 = vld [vmem:[#allocation2 + $0xa8] sm:$0xff]
        %v1011 = vld [vmem:[#allocation2 + $0xb0] sm:$0xff]
        %v1012 = vld [vmem:[#allocation2 + $0xb8] sm:$0xff]
        %v1013 = vld [vmem:[#allocation2 + $0xc0] sm:$0xff]
        %v1014 = vld [vmem:[#allocation2 + $0xc8] sm:$0xff]
        %v1015 = vld [vmem:[#allocation2 + $0xd0] sm:$0xff]
        %v1016 = vld [vmem:[#allocation2 + $0xd8] sm:$0xff]
        %v1017 = vld [vmem:[#allocation2 + $0xe0] sm:$0xff]
        %v1018 = vld [vmem:[#allocation2 + $0xe8] sm:$0xff]
        %v1019 = vld [vmem:[#allocation2 + $0xf0] sm:$0xff]
        %v1020 = vld [vmem:[#allocation2 + $0xf8] sm:$0xff]
        %v1021 = vld [vmem:[#allocation2 + $0x100] sm:$0xff]
        %v1022 = vld [vmem:[#allocation2 + $0x108] sm:$0xff]
        %v1023 = vld [vmem:[#allocation2 + $0x110] sm:$0xff]
        %v1024 = vld [vmem:[#allocation2 + $0x118] sm:$0xff]
        %v1025 = vld [vmem:[#allocation2 + $0x120] sm:$0xff]
        %v1026 = vld [vmem:[#allocation2 + $0x128] sm:$0xff]
        %v1027 = vld [vmem:[#allocation2 + $0x130] sm:$0xff]
        %v1028 = vld [vmem:[#allocation2 + $0x138] sm:$0xff]
        %v1029 = vld [vmem:[#allocation2 + $0x140] sm:$0xff]
        %v1030 = vld [vmem:[#allocation2 + $0x148] sm:$0xff]
        %v1031 = vld [vmem:[#allocation2 + $0x150] sm:$0xff]
        %v1032 = vld [vmem:[#allocation2 + $0x158] sm:$0xff]
        %v1033 = vld [vmem:[#allocation2 + $0x160] sm:$0xff]
        %v1034 = vld [vmem:[#allocation2 + $0x168] sm:$0xff]
        %v1035 = vld [vmem:[#allocation2 + $0x170] sm:$0xff]
        %v1036 = vld [vmem:[#allocation2 + $0x178] sm:$0xff]
        %v1037 = vld [vmem:[#allocation2 + $0x180] sm:$0xff]
        %v1038 = vld [vmem:[#allocation2 + $0x188] sm:$0xff]
        %v1039 = vld [vmem:[#allocation2 + $0x190] sm:$0xff]
        %v1040 = vld [vmem:[#allocation2 + $0x198] sm:$0xff]
        %v1041 = vld [vmem:[#allocation2 + $0x1a0] sm:$0xff]
        %v1042 = vld [vmem:[#allocation2 + $0x1a8] sm:$0xff]
        %v1043 = vld [vmem:[#allocation2 + $0x1b0] sm:$0xff]
        %v1044 = vld [vmem:[#allocation2 + $0x1b8] sm:$0xff]
        %v1045 = vld [vmem:[#allocation2 + $0x1c0] sm:$0xff]
        %v1046 = vld [vmem:[#allocation2 + $0x1c8] sm:$0xff]
        %v1047 = vld [vmem:[#allocation2 + $0x1d0] sm:$0xff]
        %v1048 = vld [vmem:[#allocation2 + $0x1d8] sm:$0xff]
        %v1049 = vld [vmem:[#allocation2 + $0x1e0] sm:$0xff]
        %v1050 = vld [vmem:[#allocation2 + $0x1e8] sm:$0xff]
        %v1051 = vld [vmem:[#allocation2 + $0x1f0] sm:$0xff]
        %v1052 = vld [vmem:[#allocation2 + $0x1f8] sm:$0xff]
        %v1053 = vadd.f32 %v989, 1.0
        %v1054 = vadd.f32 %v990, 1.0
        %v1055 = vadd.f32 %v991, 1.0
        %v1056 = vadd.f32 %v992, 1.0
        %v1057 = vadd.f32 %v993, 1.0
        %v1058 = vadd.f32 %v994, 1.0
        %v1059 = vadd.f32 %v995, 1.0
        %v1060 = vadd.f32 %v996, 1.0
        %v1061 = vadd.f32 %v997, 1.0
        %v1062 = vadd.f32 %v998, 1.0
        %v1063 = vadd.f32 %v999, 1.0
        %v1064 = vadd.f32 %v1000, 1.0
        %v1065 = vadd.f32 %v1001, 1.0
        %v1066 = vadd.f32 %v1002, 1.0
        %v1067 = vadd.f32 %v1003, 1.0
        %v1068 = vadd.f32 %v1004, 1.0
        %v1069 = vadd.f32 %v1005, 1.0
        %v1070 = vadd.f32 %v1006, 1.0
        %v1071 = vadd.f32 %v1007, 1.0
        %v1072 = vadd.f32 %v1008, 1.0
        %v1073 = vadd.f32 %v1009, 1.0
        %v1074 = vadd.f32 %v1010, 1.0
        %v1075 = vadd.f32 %v1011, 1.0
        %v1076 = vadd.f32 %v1012, 1.0
        %v1077 = vadd.f32 %v1013, 1.0
        %v1078 = vadd.f32 %v1014, 1.0
        %v1079 = vadd.f32 %v1015, 1.0
        %v1080 = vadd.f32 %v1016, 1.0
        %v1081 = vadd.f32 %v1017, 1.0
        %v1082 = vadd.f32 %v1018, 1.0
        %v1083 = vadd.f32 %v1019, 1.0
        %v1084 = vadd.f32 %v1020, 1.0
        %v1085 = vadd.f32 %v1021, 1.0
        %v1086 = vadd.f32 %v1022, 1.0
        %v1087 = vadd.f32 %v1023, 1.0
        %v1088 = vadd.f32 %v1024, 1.0
        %v1089 = vadd.f32 %v1025, 1.0
        %v1090 = vadd.f32 %v1026, 1.0
        %v1091 = vadd.f32 %v1027, 1.0
        %v1092 = vadd.f32 %v1028, 1.0
        %v1093 = vadd.f32 %v1029, 1.0
        %v1094 = vadd.f32 %v1030, 1.0
        %v1095 = vadd.f32 %v1031, 1.0
        %v1096 = vadd.f32 %v1032, 1.0
        %v1097 = vadd.f32 %v1033, 1.0
        %v1098 = vadd.f32 %v1034, 1.0
        %v1099 = vadd.f32 %v1035, 1.0
        %v1100 = vadd.f32 %v1036, 1.0
        %v1101 = vadd.f32 %v1037, 1.0
        %v1102 = vadd.f32 %v1038, 1.0
        %v1103 = vadd.f32 %v1039, 1.0
        %v1104 = vadd.f32 %v1040, 1.0
        %v1105 = vadd.f32 %v1041, 1.0
        %v1106 = vadd.f32 %v1042, 1.0
        %v1107 = vadd.f32 %v1043, 1.0
        %v1108 = vadd.f32 %v1044, 1.0
        %v1109 = vadd.f32 %v1045, 1.0
        %v1110 = vadd.f32 %v1046, 1.0
        %v1111 = vadd.f32 %v1047, 1.0
        %v1112 = vadd.f32 %v1048, 1.0
        %v1113 = vadd.f32 %v1049, 1.0
        %v1114 = vadd.f32 %v1050, 1.0
        %v1115 = vadd.f32 %v1051, 1.0
        %v1116 = vadd.f32 %v1052, 1.0
        %v1117 = vmul.f32 %v1053, %v1053
        %v1118 = vmul.f32 %v1054, %v1054
        %v1119 = vmul.f32 %v1055, %v1055
        %v1120 = vmul.f32 %v1056, %v1056
        %v1121 = vmul.f32 %v1057, %v1057
        %v1122 = vmul.f32 %v1058, %v1058
        %v1123 = vmul.f32 %v1059, %v1059
        %v1124 = vmul.f32 %v1060, %v1060
        %v1125 = vmul.f32 %v1061, %v1061
        %v1126 = vmul.f32 %v1062, %v1062
        %v1127 = vmul.f32 %v1063, %v1063
        %v1128 = vmul.f32 %v1064, %v1064
        %v1129 = vmul.f32 %v1065, %v1065
        %v1130 = vmul.f32 %v1066, %v1066
        %v1131 = vmul.f32 %v1067, %v1067
        %v1132 = vmul.f32 %v1068, %v1068
        %v1133 = vmul.f32 %v1069, %v1069
        %v1134 = vmul.f32 %v1070, %v1070
        %v1135 = vmul.f32 %v1071, %v1071
        %v1136 = vmul.f32 %v1072, %v1072
        %v1137 = vmul.f32 %v1073, %v1073
        %v1138 = vmul.f32 %v1074, %v1074
        %v1139 = vmul.f32 %v1075, %v1075
        %v1140 = vmul.f32 %v1076, %v1076
        %v1141 = vmul.f32 %v1077, %v1077
        %v1142 = vmul.f32 %v1078, %v1078
        %v1143 = vmul.f32 %v1079, %v1079
        %v1144 = vmul.f32 %v1080, %v1080
        %v1145 = vmul.f32 %v1081, %v1081
        %v1146 = vmul.f32 %v1082, %v1082
        %v1147 = vmul.f32 %v1083, %v1083
        %v1148 = vmul.f32 %v1084, %v1084
        %v1149 = vmul.f32 %v1085, %v1085
        %v1150 = vmul.f32 %v1086, %v1086
        %v1151 = vmul.f32 %v1087, %v1087
        %v1152 = vmul.f32 %v1088, %v1088
        %v1153 = vmul.f32 %v1089, %v1089
        %v1154 = vmul.f32 %v1090, %v1090
        %v1155 = vmul.f32 %v1091, %v1091
        %v1156 = vmul.f32 %v1092, %v1092
        %v1157 = vmul.f32 %v1093, %v1093
        %v1158 = vmul.f32 %v1094, %v1094
        %v1159 = vmul.f32 %v1095, %v1095
        %v1160 = vmul.f32 %v1096, %v1096
        %v1161 = vmul.f32 %v1097, %v1097
        %v1162 = vmul.f32 %v1098, %v1098
        %v1163 = vmul.f32 %v1099, %v1099
        %v1164 = vmul.f32 %v1100, %v1100
        %v1165 = vmul.f32 %v1101, %v1101
        %v1166 = vmul.f32 %v1102, %v1102
        %v1167 = vmul.f32 %v1103, %v1103
        %v1168 = vmul.f32 %v1104, %v1104
        %v1169 = vmul.f32 %v1105, %v1105
        %v1170 = vmul.f32 %v1106, %v1106
        %v1171 = vmul.f32 %v1107, %v1107
        %v1172 = vmul.f32 %v1108, %v1108
        %v1173 = vmul.f32 %v1109, %v1109
        %v1174 = vmul.f32 %v1110, %v1110
        %v1175 = vmul.f32 %v1111, %v1111
        %v1176 = vmul.f32 %v1112, %v1112
        %v1177 = vmul.f32 %v1113, %v1113
        %v1178 = vmul.f32 %v1114, %v1114
        %v1179 = vmul.f32 %v1115, %v1115
        %v1180 = vmul.f32 %v1116, %v1116
        %v1181 = vmul.f32 %v1117, %v1053
        %v1182 = vmul.f32 %v1118, %v1054
        %v1183 = vmul.f32 %v1119, %v1055
        %v1184 = vmul.f32 %v1120, %v1056
        %v1185 = vmul.f32 %v1121, %v1057
        %v1186 = vmul.f32 %v1122, %v1058
        %v1187 = vmul.f32 %v1123, %v1059
        %v1188 = vmul.f32 %v1124, %v1060
        %v1189 = vmul.f32 %v1125, %v1061
        %v1190 = vmul.f32 %v1126, %v1062
        %v1191 = vmul.f32 %v1127, %v1063
        %v1192 = vmul.f32 %v1128, %v1064
        %v1193 = vmul.f32 %v1129, %v1065
        %v1194 = vmul.f32 %v1130, %v1066
        %v1195 = vmul.f32 %v1131, %v1067
        %v1196 = vmul.f32 %v1132, %v1068
        %v1197 = vmul.f32 %v1133, %v1069
        %v1198 = vmul.f32 %v1134, %v1070
        %v1199 = vmul.f32 %v1135, %v1071
        %v1200 = vmul.f32 %v1136, %v1072
        %v1201 = vmul.f32 %v1137, %v1073
        %v1202 = vmul.f32 %v1138, %v1074
        %v1203 = vmul.f32 %v1139, %v1075
        %v1204 = vmul.f32 %v1140, %v1076
        %v1205 = vmul.f32 %v1141, %v1077
        %v1206 = vmul.f32 %v1142, %v1078
        %v1207 = vmul.f32 %v1143, %v1079
        %v1208 = vmul.f32 %v1144, %v1080
        %v1209 = vmul.f32 %v1145, %v1081
        %v1210 = vmul.f32 %v1146, %v1082
        %v1211 = vmul.f32 %v1147, %v1083
        %v1212 = vmul.f32 %v1148, %v1084
        %v1213 = vmul.f32 %v1149, %v1085
        %v1214 = vmul.f32 %v1150, %v1086
        %v1215 = vmul.f32 %v1151, %v1087
        %v1216 = vmul.f32 %v1152, %v1088
        %v1217 = vmul.f32 %v1153, %v1089
        %v1218 = vmul.f32 %v1154, %v1090
        %v1219 = vmul.f32 %v1155, %v1091
        %v1220 = vmul.f32 %v1156, %v1092
        %v1221 = vmul.f32 %v1157, %v1093
        %v1222 = vmul.f32 %v1158, %v1094
        %v1223 = vmul.f32 %v1159, %v1095
        %v1224 = vmul.f32 %v1160, %v1096
        %v1225 = vmul.f32 %v1161, %v1097
        %v1226 = vmul.f32 %v1162, %v1098
        %v1227 = vmul.f32 %v1163, %v1099
        %v1228 = vmul.f32 %v1164, %v1100
        %v1229 = vmul.f32 %v1165, %v1101
        %v1230 = vmul.f32 %v1166, %v1102
        %v1231 = vmul.f32 %v1167, %v1103
        %v1232 = vmul.f32 %v1168, %v1104
        %v1233 = vmul.f32 %v1169, %v1105
        %v1234 = vmul.f32 %v1170, %v1106
        %v1235 = vmul.f32 %v1171, %v1107
        %v1236 = vmul.f32 %v1172, %v1108
        %v1237 = vmul.f32 %v1173, %v1109
        %v1238 = vmul.f32 %v1174, %v1110
        %v1239 = vmul.f32 %v1175, %v1111
        %v1240 = vmul.f32 %v1176, %v1112
        %v1241 = vmul.f32 %v1177, %v1113
        %v1242 = vmul.f32 %v1178, %v1114
        %v1243 = vmul.f32 %v1179, %v1115
        %v1244 = vmul.f32 %v1180, %v1116
        %v1245 = vld [vmem:[%s304] sm:$0x3]
        %v1247 = vlaneseq
        %v1248 = vshrl.u32 %v1247, 7
        %v1249 = vsub.s32 0, %v1248
        %v1250 = vrot.slane %v1245, %v1249
        %v1251 = vlaneseq
        %v1252 = vshrl.u32 %v1251, 7
        %v1253 = vsub.s32 1, %v1252
        %v1254 = vrot.slane %v1245, %v1253
        %v1257 = vmul.f32 %v1181, %v1250
        %v1258 = vmul.f32 %v1182, %v1254
        %v1259 = vmul.f32 %v1183, %v1250
        %v1260 = vmul.f32 %v1184, %v1254
        %v1261 = vmul.f32 %v1185, %v1250
        %v1262 = vmul.f32 %v1186, %v1254
        %v1263 = vmul.f32 %v1187, %v1250
        %v1264 = vmul.f32 %v1188, %v1254
        %v1265 = vmul.f32 %v1189, %v1250
        %v1266 = vmul.f32 %v1190, %v1254
        %v1267 = vmul.f32 %v1191, %v1250
        %v1268 = vmul.f32 %v1192, %v1254
        %v1269 = vmul.f32 %v1193, %v1250
        %v1270 = vmul.f32 %v1194, %v1254
        %v1271 = vmul.f32 %v1195, %v1250
        %v1272 = vmul.f32 %v1196, %v1254
        %v1273 = vmul.f32 %v1197, %v1250
        %v1274 = vmul.f32 %v1198, %v1254
        %v1275 = vmul.f32 %v1199, %v1250
        %v1276 = vmul.f32 %v1200, %v1254
        %v1277 = vmul.f32 %v1201, %v1250
        %v1278 = vmul.f32 %v1202, %v1254
        %v1279 = vmul.f32 %v1203, %v1250
        %v1280 = vmul.f32 %v1204, %v1254
        %v1281 = vmul.f32 %v1205, %v1250
        %v1282 = vmul.f32 %v1206, %v1254
        %v1283 = vmul.f32 %v1207, %v1250
        %v1284 = vmul.f32 %v1208, %v1254
        %v1285 = vmul.f32 %v1209, %v1250
        %v1286 = vmul.f32 %v1210, %v1254
        %v1287 = vmul.f32 %v1211, %v1250
        %v1288 = vmul.f32 %v1212, %v1254
        %v1289 = vmul.f32 %v1213, %v1250
        %v1290 = vmul.f32 %v1214, %v1254
        %v1291 = vmul.f32 %v1215, %v1250
        %v1292 = vmul.f32 %v1216, %v1254
        %v1293 = vmul.f32 %v1217, %v1250
        %v1294 = vmul.f32 %v1218, %v1254
        %v1295 = vmul.f32 %v1219, %v1250
        %v1296 = vmul.f32 %v1220, %v1254
        %v1297 = vmul.f32 %v1221, %v1250
        %v1298 = vmul.f32 %v1222, %v1254
        %v1299 = vmul.f32 %v1223, %v1250
        %v1300 = vmul.f32 %v1224, %v1254
        %v1301 = vmul.f32 %v1225, %v1250
        %v1302 = vmul.f32 %v1226, %v1254
        %v1303 = vmul.f32 %v1227, %v1250
        %v1304 = vmul.f32 %v1228, %v1254
        %v1305 = vmul.f32 %v1229, %v1250
        %v1306 = vmul.f32 %v1230, %v1254
        %v1307 = vmul.f32 %v1231, %v1250
        %v1308 = vmul.f32 %v1232, %v1254
        %v1309 = vmul.f32 %v1233, %v1250
        %v1310 = vmul.f32 %v1234, %v1254
        %v1311 = vmul.f32 %v1235, %v1250
        %v1312 = vmul.f32 %v1236, %v1254
        %v1313 = vmul.f32 %v1237, %v1250
        %v1314 = vmul.f32 %v1238, %v1254
        %v1315 = vmul.f32 %v1239, %v1250
        %v1316 = vmul.f32 %v1240, %v1254
        %v1317 = vmul.f32 %v1241, %v1250
        %v1318 = vmul.f32 %v1242, %v1254
        %v1319 = vmul.f32 %v1243, %v1250
        %v1320 = vmul.f32 %v1244, %v1254
        %v1321 = vld [vmem:[%s309] sm:$0x3]
        %v1323 = vlaneseq
        %v1324 = vshrl.u32 %v1323, 7
        %v1325 = vsub.s32 0, %v1324
        %v1326 = vrot.slane %v1321, %v1325
        %v1327 = vlaneseq
        %v1328 = vshrl.u32 %v1327, 7
        %v1329 = vsub.s32 1, %v1328
        %v1330 = vrot.slane %v1321, %v1329
        %v1333 = vadd.f32 %v1257, %v1326
        %v1334 = vadd.f32 %v1258, %v1330
        %v1335 = vadd.f32 %v1259, %v1326
        %v1336 = vadd.f32 %v1260, %v1330
        %v1337 = vadd.f32 %v1261, %v1326
        %v1338 = vadd.f32 %v1262, %v1330
        %v1339 = vadd.f32 %v1263, %v1326
        %v1340 = vadd.f32 %v1264, %v1330
        %v1341 = vadd.f32 %v1265, %v1326
        %v1342 = vadd.f32 %v1266, %v1330
        %v1343 = vadd.f32 %v1267, %v1326
        %v1344 = vadd.f32 %v1268, %v1330
        %v1345 = vadd.f32 %v1269, %v1326
        %v1346 = vadd.f32 %v1270, %v1330
        %v1347 = vadd.f32 %v1271, %v1326
        %v1348 = vadd.f32 %v1272, %v1330
        %v1349 = vadd.f32 %v1273, %v1326
        %v1350 = vadd.f32 %v1274, %v1330
        %v1351 = vadd.f32 %v1275, %v1326
        %v1352 = vadd.f32 %v1276, %v1330
        %v1353 = vadd.f32 %v1277, %v1326
        %v1354 = vadd.f32 %v1278, %v1330
        %v1355 = vadd.f32 %v1279, %v1326
        %v1356 = vadd.f32 %v1280, %v1330
        %v1357 = vadd.f32 %v1281, %v1326
        %v1358 = vadd.f32 %v1282, %v1330
        %v1359 = vadd.f32 %v1283, %v1326
        %v1360 = vadd.f32 %v1284, %v1330
        %v1361 = vadd.f32 %v1285, %v1326
        %v1362 = vadd.f32 %v1286, %v1330
        %v1363 = vadd.f32 %v1287, %v1326
        %v1364 = vadd.f32 %v1288, %v1330
        %v1365 = vadd.f32 %v1289, %v1326
        %v1366 = vadd.f32 %v1290, %v1330
        %v1367 = vadd.f32 %v1291, %v1326
        %v1368 = vadd.f32 %v1292, %v1330
        %v1369 = vadd.f32 %v1293, %v1326
        %v1370 = vadd.f32 %v1294, %v1330
        %v1371 = vadd.f32 %v1295, %v1326
        %v1372 = vadd.f32 %v1296, %v1330
        %v1373 = vadd.f32 %v1297, %v1326
        %v1374 = vadd.f32 %v1298, %v1330
        %v1375 = vadd.f32 %v1299, %v1326
        %v1376 = vadd.f32 %v1300, %v1330
        %v1377 = vadd.f32 %v1301, %v1326
        %v1378 = vadd.f32 %v1302, %v1330
        %v1379 = vadd.f32 %v1303, %v1326
        %v1380 = vadd.f32 %v1304, %v1330
        %v1381 = vadd.f32 %v1305, %v1326
        %v1382 = vadd.f32 %v1306, %v1330
        %v1383 = vadd.f32 %v1307, %v1326
        %v1384 = vadd.f32 %v1308, %v1330
        %v1385 = vadd.f32 %v1309, %v1326
        %v1386 = vadd.f32 %v1310, %v1330
        %v1387 = vadd.f32 %v1311, %v1326
        %v1388 = vadd.f32 %v1312, %v1330
        %v1389 = vadd.f32 %v1313, %v1326
        %v1390 = vadd.f32 %v1314, %v1330
        %v1391 = vadd.f32 %v1315, %v1326
        %v1392 = vadd.f32 %v1316, %v1330
        %v1393 = vadd.f32 %v1317, %v1326
        %v1394 = vadd.f32 %v1318, %v1330
        %v1395 = vadd.f32 %v1319, %v1326
        %v1396 = vadd.f32 %v1320, %v1330
        %1397 = vst [vmem:[%s320] sm:$0xff] %v1333
        %1398 = vst [vmem:[%s320 + $0x8] sm:$0xff] %v1334
        %1399 = vst [vmem:[%s320 + $0x10] sm:$0xff] %v1335
        %1400 = vst [vmem:[%s320 + $0x18] sm:$0xff] %v1336
        %1401 = vst [vmem:[%s320 + $0x20] sm:$0xff] %v1337
        %1402 = vst [vmem:[%s320 + $0x28] sm:$0xff] %v1338
        %1403 = vst [vmem:[%s320 + $0x30] sm:$0xff] %v1339
        %1404 = vst [vmem:[%s320 + $0x38] sm:$0xff] %v1340
        %1405 = vst [vmem:[%s320 + $0x40] sm:$0xff] %v1341
        %1406 = vst [vmem:[%s320 + $0x48] sm:$0xff] %v1342
        %1407 = vst [vmem:[%s320 + $0x50] sm:$0xff] %v1343
        %1408 = vst [vmem:[%s320 + $0x58] sm:$0xff] %v1344
        %1409 = vst [vmem:[%s320 + $0x60] sm:$0xff] %v1345
        %1410 = vst [vmem:[%s320 + $0x68] sm:$0xff] %v1346
        %1411 = vst [vmem:[%s320 + $0x70] sm:$0xff] %v1347
        %1412 = vst [vmem:[%s320 + $0x78] sm:$0xff] %v1348
        %1413 = vst [vmem:[%s320 + $0x80] sm:$0xff] %v1349
        %1414 = vst [vmem:[%s320 + $0x88] sm:$0xff] %v1350
        %1415 = vst [vmem:[%s320 + $0x90] sm:$0xff] %v1351
        %1416 = vst [vmem:[%s320 + $0x98] sm:$0xff] %v1352
        %1417 = vst [vmem:[%s320 + $0xa0] sm:$0xff] %v1353
        %1418 = vst [vmem:[%s320 + $0xa8] sm:$0xff] %v1354
        %1419 = vst [vmem:[%s320 + $0xb0] sm:$0xff] %v1355
        %1420 = vst [vmem:[%s320 + $0xb8] sm:$0xff] %v1356
        %1421 = vst [vmem:[%s320 + $0xc0] sm:$0xff] %v1357
        %1422 = vst [vmem:[%s320 + $0xc8] sm:$0xff] %v1358
        %1423 = vst [vmem:[%s320 + $0xd0] sm:$0xff] %v1359
        %1424 = vst [vmem:[%s320 + $0xd8] sm:$0xff] %v1360
        %1425 = vst [vmem:[%s320 + $0xe0] sm:$0xff] %v1361
        %1426 = vst [vmem:[%s320 + $0xe8] sm:$0xff] %v1362
        %1427 = vst [vmem:[%s320 + $0xf0] sm:$0xff] %v1363
        %1428 = vst [vmem:[%s320 + $0xf8] sm:$0xff] %v1364
        %1429 = vst [vmem:[%s320 + $0x100] sm:$0xff] %v1365
        %1430 = vst [vmem:[%s320 + $0x108] sm:$0xff] %v1366
        %1431 = vst [vmem:[%s320 + $0x110] sm:$0xff] %v1367
        %1432 = vst [vmem:[%s320 + $0x118] sm:$0xff] %v1368
        %1433 = vst [vmem:[%s320 + $0x120] sm:$0xff] %v1369
        %1434 = vst [vmem:[%s320 + $0x128] sm:$0xff] %v1370
        %1435 = vst [vmem:[%s320 + $0x130] sm:$0xff] %v1371
        %1436 = vst [vmem:[%s320 + $0x138] sm:$0xff] %v1372
        %1437 = vst [vmem:[%s320 + $0x140] sm:$0xff] %v1373
        %1438 = vst [vmem:[%s320 + $0x148] sm:$0xff] %v1374
        %1439 = vst [vmem:[%s320 + $0x150] sm:$0xff] %v1375
        %1440 = vst [vmem:[%s320 + $0x158] sm:$0xff] %v1376
        %1441 = vst [vmem:[%s320 + $0x160] sm:$0xff] %v1377
        %1442 = vst [vmem:[%s320 + $0x168] sm:$0xff] %v1378
        %1443 = vst [vmem:[%s320 + $0x170] sm:$0xff] %v1379
        %1444 = vst [vmem:[%s320 + $0x178] sm:$0xff] %v1380
        %1445 = vst [vmem:[%s320 + $0x180] sm:$0xff] %v1381
        %1446 = vst [vmem:[%s320 + $0x188] sm:$0xff] %v1382
        %1447 = vst [vmem:[%s320 + $0x190] sm:$0xff] %v1383
        %1448 = vst [vmem:[%s320 + $0x198] sm:$0xff] %v1384
        %1449 = vst [vmem:[%s320 + $0x1a0] sm:$0xff] %v1385
        %1450 = vst [vmem:[%s320 + $0x1a8] sm:$0xff] %v1386
        %1451 = vst [vmem:[%s320 + $0x1b0] sm:$0xff] %v1387
        %1452 = vst [vmem:[%s320 + $0x1b8] sm:$0xff] %v1388
        %1453 = vst [vmem:[%s320 + $0x1c0] sm:$0xff] %v1389
        %1454 = vst [vmem:[%s320 + $0x1c8] sm:$0xff] %v1390
        %1455 = vst [vmem:[%s320 + $0x1d0] sm:$0xff] %v1391
        %1456 = vst [vmem:[%s320 + $0x1d8] sm:$0xff] %v1392
        %1457 = vst [vmem:[%s320 + $0x1e0] sm:$0xff] %v1393
        %1458 = vst [vmem:[%s320 + $0x1e8] sm:$0xff] %v1394
        %1459 = vst [vmem:[%s320 + $0x1f0] sm:$0xff] %v1395
        %1460 = vst [vmem:[%s320 + $0x1f8] sm:$0xff] %v1396
      $region44: #{_lambda_.6} parent=35 // pred_fallthru
        _
      %s1461 = smul.u32 32, %s20
      %s1462 = smul.u32 2, %s21
      %p1463 = scmp.lt.s32.totalorder %s1461, 63
      %s1464 = scalar_select %p1463, %s1461, 63
      %p1465 = scmp.lt.s32.totalorder %s1462, 1
      %s1466 = scalar_select %p1465, %s1462, 1
      %s1467 = smul.addr %s1464, 2
      %s1468 = sadd.s32 %s1466, %s1467
      %s1469 = smul.addr %s1468, 8
      %s1470 = scalar_lea.vmem %s4, %s1469
      // Predicated region
      $region45: #{_lambda_.6} parent=35 // pred_check
        %p1471 = pneg %p162
      $region46: #{_lambda_.6} parent=35 // pred_check_branch
        %1473 = sbr.rel (%p1471) target = $region48
      $region47: #{_lambda_.6} parent=35 // pred_region
        %s1474 = smul.u32 32, %s20
        %s1475 = smul.u32 2, %s21
      $region48: #{_lambda_.6} parent=35 // pred_fallthru
        _
    $region36: #{_lambda_.6} parent=5 // pred_fallthru
      _
    %p1476 = scmp.le.s32.totalorder 2, %s10
    // Predicated region
    $region49: #{_lambda_.6} parent=5 // pred_check
      %p1477 = pneg %p1476
    $region50: #{_lambda_.6} parent=5 // pred_check_branch
      %1479 = sbr.rel (%p1477) target = $region52
    $region51: #{_lambda_.6} parent=5 // pred_region
      %s1480 = ssub.s32 %s10, 2
      // Predicated region
      $region53: #{_lambda_.6} parent=51 // pred_check
        %p1481 = pneg %p168
      $region54: #{_lambda_.6} parent=51 // pred_check_branch
        %1483 = sbr.rel (%p1481) target = $region56
      $region55: #{_lambda_.6} parent=51 // pred_region
        %s1484 = smul.u32 32, %s23
        %s1485 = smul.u32 2, %s24
        %p1486 = scmp.lt.s32.totalorder %s1484, 63
        %s1487 = scalar_select %p1486, %s1484, 63
        %p1488 = scmp.lt.s32.totalorder %s1485, 1
        %s1489 = scalar_select %p1488, %s1485, 1
        %s1490 = smul.addr %s1487, 2
        %s1491 = sadd.s32 %s1489, %s1490
        %s1492 = smul.addr %s1491, 8
        %s1493 = scalar_lea.vmem %s4, %s1492
      $region56: #{_lambda_.6} parent=51 // pred_fallthru
        _
    $region52: #{_lambda_.6} parent=5 // pred_fallthru
      _
  $region6: #{_lambda_.6} parent=0 // loop_footer
    %s14 = sadd.s32 1, %s10
  $region7: #{_lambda_.6} parent=0 // loop_footer_branch
    %9 = sbr.rel target = $region3
  $region8: #{_lambda_.6} parent=0 // loop_exit
    _

// kernel: _lambda_.5
$region0: #{_lambda_.5}
  #allocation0 [shape = 'u32[]', space=smem, size = 0x4, offset = 0x4, fixed_abs, tag = 'smem constant byte address 0x4 - core index']
  #allocation1 [shape = 'u32[144,128]{1,0:T(1,128)}', space=vmem, size = 0x12000, scoped, tag = 'internal scratch']
  %s0 = inlined_call_operand.vmem [shape: f32[2,344,64], index: 0, kind: input, shape index: {}]
  %s1 = inlined_call_operand.vmem [shape: bf16[9,64,64], index: 1, kind: input, shape index: {}]
  %s2 = inlined_call_operand.vmem [shape: f32[1,64], index: 2, kind: input, shape index: {}]
  %s3 = inlined_call_operand.vmem [shape: f32[1,64], index: 3, kind: input, shape index: {}]
  %s4 = inlined_call_operand.vmem [shape: bf16[2,288,64], index: 4, kind: output, shape index: {}]
  %s5 = sld [smem:[#allocation0]]
  $region49: #{_lambda_.5} parent=0
    _
  %s7 = ssub.s32 1, %s5
  %s8 = scalar_select 0, %s7, %s5
  loop: start=0, step=1, limit=4
  $region2: #{_lambda_.5} parent=0 // loop_pre_header
    _
  $region3: #{_lambda_.5} parent=0 // loop_header
    %s10 = sphi 0, %s14
    %p11 = scmp.ge.s32.totalorder %s10, 4
    %s17 = sphi 0, %s29
    %s18 = sphi 0, %s25
    %s19 = sphi 0, %s17
    %s20 = sphi 0, %s18
    %s21 = sphi 0, %s19
    %s22 = sphi 0, %s20
    %s32 = sphi 0, %s34
    %s35 = sphi 0, %s32
    %s36 = sphi 0, %s35
    %s52 = sphi 0, %s36
    %s58 = sphi 0, %s60
    %s61 = sphi 0, %s58
    %s62 = sphi 0, %s61
    %s78 = sphi 0, %s62
    %s84 = sphi 0, %s86
    %s87 = sphi 0, %s84
    %s88 = sphi 0, %s87
    %s104 = sphi 0, %s88
    %s110 = sphi 0, %s112
    %s113 = sphi 0, %s110
    %s114 = sphi 0, %s113
    %s130 = sphi 0, %s114
    %s138 = sphi 0, %s140
    %s141 = sphi 0, %s138
    %s142 = sphi 0, %s141
    %s158 = sphi 0, %s142
  $region4: #{_lambda_.5} parent=0 // loop_header_branch
    %13 = sbr.rel (%p11) target = $region8
  $region5: #{_lambda_.5} parent=0 // loop_body
    %s15 = ssub.s32 %s10, 1
    %s16 = ssub.s32 %s10, 2
    %s23 = sadd.s32 1, %s18
    %p24 = scmp.ge.s32.totalorder %s23, 1
    %s25 = scalar_select %p24, 0, %s23
    %s26 = sadd.s32 1, %s17
    %s27 = scalar_select %p24, %s26, %s17
    %p28 = scmp.ge.s32.totalorder %s27, 2
    %s29 = scalar_select %p28, 0, %s27
    %s30 = ssub.s32 %s17, %s29
    %p31 = scmp.eq.s32.totalorder %s30, 0
    %s33 = sadd.s32 %s32, 1
    %s34 = scalar_select %p31, %s32, %s33
    %p37 = pneg %p31
    %p38 = scmp.eq.s32.totalorder %s10, 1
    %p39 = por %p37, %p38
    %p40 = scmp.ne.s32.totalorder %s32, %s35
    %p41 = scmp.eq.s32.totalorder %s10, 0
    %p42 = por %p40, %p41
    %p43 = scmp.ne.s32.totalorder %s32, %s35
    %p44 = scmp.eq.s32.totalorder %s15, 1
    %p45 = por %p43, %p44
    %p46 = scmp.ne.s32.totalorder %s35, %s36
    %p47 = scmp.eq.s32.totalorder %s15, 0
    %p48 = por %p46, %p47
    %p49 = scmp.ne.s32.totalorder %s35, %s36
    %p50 = scmp.eq.s32.totalorder %s16, 1
    %p51 = por %p49, %p50
    %p53 = scmp.ne.s32.totalorder %s36, %s52
    %p54 = scmp.eq.s32.totalorder %s16, 0
    %p55 = por %p53, %p54
    %s56 = ssub.s32 %s18, %s25
    %p57 = scmp.eq.s32.totalorder %s56, 0
    %s59 = sadd.s32 %s58, 1
    %s60 = scalar_select %p57, %s58, %s59
    %p63 = pneg %p57
    %p64 = scmp.eq.s32.totalorder %s10, 1
    %p65 = por %p63, %p64
    %p66 = scmp.ne.s32.totalorder %s58, %s61
    %p67 = scmp.eq.s32.totalorder %s10, 0
    %p68 = por %p66, %p67
    %p69 = scmp.ne.s32.totalorder %s58, %s61
    %p70 = scmp.eq.s32.totalorder %s15, 1
    %p71 = por %p69, %p70
    %p72 = scmp.ne.s32.totalorder %s61, %s62
    %p73 = scmp.eq.s32.totalorder %s15, 0
    %p74 = por %p72, %p73
    %p75 = scmp.ne.s32.totalorder %s61, %s62
    %p76 = scmp.eq.s32.totalorder %s16, 1
    %p77 = por %p75, %p76
    %p79 = scmp.ne.s32.totalorder %s62, %s78
    %p80 = scmp.eq.s32.totalorder %s16, 0
    %p81 = por %p79, %p80
    %s82 = ssub.s32 %s18, %s25
    %p83 = scmp.eq.s32.totalorder %s82, 0
    %s85 = sadd.s32 %s84, 1
    %s86 = scalar_select %p83, %s84, %s85
    %p89 = pneg %p83
    %p90 = scmp.eq.s32.totalorder %s10, 1
    %p91 = por %p89, %p90
    %p92 = scmp.ne.s32.totalorder %s84, %s87
    %p93 = scmp.eq.s32.totalorder %s10, 0
    %p94 = por %p92, %p93
    %p95 = scmp.ne.s32.totalorder %s84, %s87
    %p96 = scmp.eq.s32.totalorder %s15, 1
    %p97 = por %p95, %p96
    %p98 = scmp.ne.s32.totalorder %s87, %s88
    %p99 = scmp.eq.s32.totalorder %s15, 0
    %p100 = por %p98, %p99
    %p101 = scmp.ne.s32.totalorder %s87, %s88
    %p102 = scmp.eq.s32.totalorder %s16, 1
    %p103 = por %p101, %p102
    %p105 = scmp.ne.s32.totalorder %s88, %s104
    %p106 = scmp.eq.s32.totalorder %s16, 0
    %p107 = por %p105, %p106
    %s108 = ssub.s32 %s18, %s25
    %p109 = scmp.eq.s32.totalorder %s108, 0
    %s111 = sadd.s32 %s110, 1
    %s112 = scalar_select %p109, %s110, %s111
    %p115 = pneg %p109
    %p116 = scmp.eq.s32.totalorder %s10, 1
    %p117 = por %p115, %p116
    %p118 = scmp.ne.s32.totalorder %s110, %s113
    %p119 = scmp.eq.s32.totalorder %s10, 0
    %p120 = por %p118, %p119
    %p121 = scmp.ne.s32.totalorder %s110, %s113
    %p122 = scmp.eq.s32.totalorder %s15, 1
    %p123 = por %p121, %p122
    %p124 = scmp.ne.s32.totalorder %s113, %s114
    %p125 = scmp.eq.s32.totalorder %s15, 0
    %p126 = por %p124, %p125
    %p127 = scmp.ne.s32.totalorder %s113, %s114
    %p128 = scmp.eq.s32.totalorder %s16, 1
    %p129 = por %p127, %p128
    %p131 = scmp.ne.s32.totalorder %s114, %s130
    %p132 = scmp.eq.s32.totalorder %s16, 0
    %p133 = por %p131, %p132
    %s134 = ssub.s32 %s17, %s29
    %s135 = ssub.s32 %s18, %s25
    %s136 = sor.u32 %s134, %s135
    %p137 = scmp.eq.s32.totalorder %s136, 0
    %s139 = sadd.s32 %s138, 1
    %s140 = scalar_select %p137, %s138, %s139
    %p143 = pneg %p137
    %p144 = scmp.eq.s32.totalorder %s10, 1
    %p145 = por %p143, %p144
    %p146 = scmp.ne.s32.totalorder %s138, %s141
    %p147 = scmp.eq.s32.totalorder %s10, 0
    %p148 = por %p146, %p147
    %p149 = scmp.ne.s32.totalorder %s138, %s141
    %p150 = scmp.eq.s32.totalorder %s15, 1
    %p151 = por %p149, %p150
    %p152 = scmp.ne.s32.totalorder %s141, %s142
    %p153 = scmp.eq.s32.totalorder %s15, 0
    %p154 = por %p152, %p153
    %p155 = scmp.ne.s32.totalorder %s141, %s142
    %p156 = scmp.eq.s32.totalorder %s16, 1
    %p157 = por %p155, %p156
    %p159 = scmp.ne.s32.totalorder %s142, %s158
    %p160 = scmp.eq.s32.totalorder %s16, 0
    %p161 = por %p159, %p160
    %p162 = scmp.le.s32.totalorder 1, %s10
    %p163 = scmp.lt.s32.totalorder %s10, 3
    %p164 = pnand %p162, %p163
    %p165 = pneg %p164
    // Predicated region
    $region9: #{_lambda_.5} parent=5 // pred_check
      _
    $region10: #{_lambda_.5} parent=5 // pred_check_branch
      %167 = sbr.rel (%p164) target = $region12
    $region11: #{_lambda_.5} parent=5 // pred_region
      %s168 = ssub.s32 %s10, 1
      // Predicated region
      $region13: #{_lambda_.5} parent=11 // pred_check
        %p169 = pneg %p74
      $region14: #{_lambda_.5} parent=11 // pred_check_branch
        %171 = sbr.rel (%p169) target = $region16
      $region15: #{_lambda_.5} parent=11 // pred_region
        %p172 = scmp.lt.s32.totalorder %s20, 0
        %s173 = scalar_select %p172, %s20, 0
        %s174 = smul.addr %s173, 4
        %s175 = scalar_lea.vmem %s1, %s174
      $region16: #{_lambda_.5} parent=11 // pred_fallthru
        _
      // Predicated region
      $region17: #{_lambda_.5} parent=11 // pred_check
        %p176 = pneg %p100
      $region18: #{_lambda_.5} parent=11 // pred_check_branch
        %178 = sbr.rel (%p176) target = $region20
      $region19: #{_lambda_.5} parent=11 // pred_region
        %p179 = scmp.lt.s32.totalorder %s20, 0
        %s180 = scalar_select %p179, %s20, 0
        %s181 = scalar_lea.vmem %s2, %s180
      $region20: #{_lambda_.5} parent=11 // pred_fallthru
        _
      // Predicated region
      $region21: #{_lambda_.5} parent=11 // pred_check
        %p182 = pneg %p126
      $region22: #{_lambda_.5} parent=11 // pred_check_branch
        %184 = sbr.rel (%p182) target = $region24
      $region23: #{_lambda_.5} parent=11 // pred_region
        %p185 = scmp.lt.s32.totalorder %s20, 0
        %s186 = scalar_select %p185, %s20, 0
        %s187 = scalar_lea.vmem %s3, %s186
      $region24: #{_lambda_.5} parent=11 // pred_fallthru
        _
    $region12: #{_lambda_.5} parent=5 // pred_fallthru
      _
    %p188 = scmp.lt.s32.totalorder %s10, 2
    // Predicated region
    $region25: #{_lambda_.5} parent=5 // pred_check
      %p189 = pneg %p188
    $region26: #{_lambda_.5} parent=5 // pred_check_branch
      %191 = sbr.rel (%p189) target = $region28
    $region27: #{_lambda_.5} parent=5 // pred_region
      // Predicated region
      $region29: #{_lambda_.5} parent=27 // pred_check
        %p192 = pneg %p42
      $region30: #{_lambda_.5} parent=27 // pred_check_branch
        %194 = sbr.rel (%p192) target = $region32
      $region31: #{_lambda_.5} parent=27 // pred_region
        %p195 = scmp.lt.s32.totalorder %s17, 1
        %s196 = scalar_select %p195, %s17, 1
        %s197 = smul.addr %s196, 43
        %s198 = smul.addr %s197, 8
        %s199 = scalar_lea.vmem %s0, %s198
      $region32: #{_lambda_.5} parent=27 // pred_fallthru
        _
    $region28: #{_lambda_.5} parent=5 // pred_fallthru
      _
    %p200 = scmp.le.s32.totalorder 1, %s10
    %p201 = scmp.lt.s32.totalorder %s10, 3
    %p202 = pnand %p200, %p201
    %p203 = pneg %p202
    // Predicated region
    $region33: #{_lambda_.5} parent=5 // pred_check
      _
    $region34: #{_lambda_.5} parent=5 // pred_check_branch
      %205 = sbr.rel (%p202) target = $region36
    $region35: #{_lambda_.5} parent=5 // pred_region
      %s206 = ssub.s32 %s10, 1
      %p207 = scmp.lt.s32.totalorder %s19, 1
      %s208 = scalar_select %p207, %s19, 1
      %s209 = smul.addr %s208, 43
      %s210 = smul.addr %s209, 8
      %s211 = scalar_lea.vmem %s0, %s210
      %p212 = pneg %p48
      %p213 = pneg %p45
      %p214 = scmp.lt.s32.totalorder %s20, 0
      %s215 = scalar_select %p214, %s20, 0
      %s216 = smul.addr %s215, 4
      %s217 = scalar_lea.vmem %s1, %s216
      %p218 = pneg %p74
      %p219 = pneg %p71
      %p220 = scmp.lt.s32.totalorder %s20, 0
      %s221 = scalar_select %p220, %s20, 0
      %s222 = scalar_lea.vmem %s2, %s221
      %p223 = pneg %p100
      %p224 = pneg %p97
      %p225 = scmp.lt.s32.totalorder %s20, 0
      %s226 = scalar_select %p225, %s20, 0
      %s227 = scalar_lea.vmem %s3, %s226
      %p228 = pneg %p126
      %p229 = pneg %p123
      %p230 = pneg %p154
      %p231 = pneg %p151
      %p232 = scmp.lt.s32.totalorder %s19, 1
      %s233 = scalar_select %p232, %s19, 1
      %p234 = scmp.lt.s32.totalorder %s20, 0
      %s235 = scalar_select %p234, %s20, 0
      %s236 = smul.addr %s233, 36
      %s237 = sadd.s32 %s235, %s236
      %s238 = smul.addr %s237, 4
      %s239 = scalar_lea.vmem %s4, %s238
      %p240 = scmp.lt.s32.totalorder %s19, 1
      %s241 = scalar_select %p240, %s19, 1
      %s242 = smul.addr %s241, 43
      %s243 = smul.addr %s242, 8
      %s244 = scalar_lea.vmem %s0, %s243
      %p245 = scmp.lt.s32.totalorder %s20, 0
      %s246 = scalar_select %p245, %s20, 0
      %s247 = smul.addr %s246, 4
      %s248 = scalar_lea.vmem %s1, %s247
      %p249 = scmp.lt.s32.totalorder %s20, 0
      %s250 = scalar_select %p249, %s20, 0
      %s251 = scalar_lea.vmem %s2, %s250
      %p252 = scmp.lt.s32.totalorder %s20, 0
      %s253 = scalar_select %p252, %s20, 0
      %s254 = scalar_lea.vmem %s3, %s253
      %p255 = scmp.lt.s32.totalorder %s19, 1
      %s256 = scalar_select %p255, %s19, 1
      %p257 = scmp.lt.s32.totalorder %s20, 0
      %s258 = scalar_select %p257, %s20, 0
      %s259 = smul.addr %s256, 36
      %s260 = sadd.s32 %s258, %s259
      %s261 = smul.addr %s260, 4
      %s262 = scalar_lea.vmem %s4, %s261
      %v264 = vld [vmem:[%s244] sm:$0xff]
      %v265 = vld [vmem:[%s244 + $0x8] sm:$0xff]
      %v266 = vld [vmem:[%s244 + $0x10] sm:$0xff]
      %v267 = vld [vmem:[%s244 + $0x18] sm:$0xff]
      %v268 = vld [vmem:[%s244 + $0x20] sm:$0xff]
      %v269 = vld [vmem:[%s244 + $0x28] sm:$0xff]
      %v270 = vld [vmem:[%s244 + $0x30] sm:$0xff]
      %v271 = vld [vmem:[%s244 + $0x38] sm:$0xff]
      %v272 = vld [vmem:[%s244 + $0x40] sm:$0xff]
      %v273 = vld [vmem:[%s244 + $0x48] sm:$0xff]
      %v274 = vld [vmem:[%s244 + $0x50] sm:$0xff]
      %v275 = vld [vmem:[%s244 + $0x58] sm:$0xff]
      %v276 = vld [vmem:[%s244 + $0x60] sm:$0xff]
      %v277 = vld [vmem:[%s244 + $0x68] sm:$0xff]
      %v278 = vld [vmem:[%s244 + $0x70] sm:$0xff]
      %v279 = vld [vmem:[%s244 + $0x78] sm:$0xff]
      %v280 = vld [vmem:[%s244 + $0x80] sm:$0xff]
      %v281 = vld [vmem:[%s244 + $0x88] sm:$0xff]
      %v282 = vld [vmem:[%s244 + $0x90] sm:$0xff]
      %v283 = vld [vmem:[%s244 + $0x98] sm:$0xff]
      %v284 = vld [vmem:[%s244 + $0xa0] sm:$0xff]
      %v285 = vld [vmem:[%s244 + $0xa8] sm:$0xff]
      %v286 = vld [vmem:[%s244 + $0xb0] sm:$0xff]
      %v287 = vld [vmem:[%s244 + $0xb8] sm:$0xff]
      %v288 = vld [vmem:[%s244 + $0xc0] sm:$0xff]
      %v289 = vld [vmem:[%s244 + $0xc8] sm:$0xff]
      %v290 = vld [vmem:[%s244 + $0xd0] sm:$0xff]
      %v291 = vld [vmem:[%s244 + $0xd8] sm:$0xff]
      %v292 = vld [vmem:[%s244 + $0xe0] sm:$0xff]
      %v293 = vld [vmem:[%s244 + $0xe8] sm:$0xff]
      %v294 = vld [vmem:[%s244 + $0xf0] sm:$0xff]
      %v295 = vld [vmem:[%s244 + $0xf8] sm:$0xff]
      %v296 = vld [vmem:[%s244 + $0x100] sm:$0xff]
      %v297 = vld [vmem:[%s244 + $0x108] sm:$0xff]
      %v298 = vld [vmem:[%s244 + $0x110] sm:$0xff]
      %v299 = vld [vmem:[%s244 + $0x118] sm:$0xff]
      %v300 = vpack.c.bf16 %v265, %v264
      %v301 = vpack.c.bf16 %v267, %v266
      %v302 = vpack.c.bf16 %v269, %v268
      %v303 = vpack.c.bf16 %v271, %v270
      %v304 = vpack.c.bf16 %v273, %v272
      %v305 = vpack.c.bf16 %v275, %v274
      %v306 = vpack.c.bf16 %v277, %v276
      %v307 = vpack.c.bf16 %v279, %v278
      %v308 = vpack.c.bf16 %v281, %v280
      %v309 = vpack.c.bf16 %v283, %v282
      %v310 = vpack.c.bf16 %v285, %v284
      %v311 = vpack.c.bf16 %v287, %v286
      %v312 = vpack.c.bf16 %v289, %v288
      %v313 = vpack.c.bf16 %v291, %v290
      %v314 = vpack.c.bf16 %v293, %v292
      %v315 = vpack.c.bf16 %v295, %v294
      %v316 = vpack.c.bf16 %v297, %v296
      %v317 = vpack.c.bf16 %v299, %v298
      %v318 = vld [vmem:[%s248] sm:$0xf]
      %v319 = vld [vmem:[%s248 + $0x4] sm:$0xf]
      %v320 = vld [vmem:[%s248 + $0x8] sm:$0xf]
      %v321 = vld [vmem:[%s248 + $0xc] sm:$0xf]
      %v322 = vld [vmem:[%s248 + $0x10] sm:$0xf]
      %v323 = vld [vmem:[%s248 + $0x14] sm:$0xf]
      %v324 = vld [vmem:[%s248 + $0x18] sm:$0xf]
      %v325 = vld [vmem:[%s248 + $0x1c] sm:$0xf]
      %v326 = vld [vmem:[%s244 + $0x1] sm:$0xff]
      %v327 = vld [vmem:[%s244 + $0x9] sm:$0xff]
      %v328 = vld [vmem:[%s244 + $0x11] sm:$0xff]
      %v329 = vld [vmem:[%s244 + $0x19] sm:$0xff]
      %v330 = vld [vmem:[%s244 + $0x21] sm:$0xff]
      %v331 = vld [vmem:[%s244 + $0x29] sm:$0xff]
      %v332 = vld [vmem:[%s244 + $0x31] sm:$0xff]
      %v333 = vld [vmem:[%s244 + $0x39] sm:$0xff]
      %v334 = vld [vmem:[%s244 + $0x41] sm:$0xff]
      %v335 = vld [vmem:[%s244 + $0x49] sm:$0xff]
      %v336 = vld [vmem:[%s244 + $0x51] sm:$0xff]
      %v337 = vld [vmem:[%s244 + $0x59] sm:$0xff]
      %v338 = vld [vmem:[%s244 + $0x61] sm:$0xff]
      %v339 = vld [vmem:[%s244 + $0x69] sm:$0xff]
      %v340 = vld [vmem:[%s244 + $0x71] sm:$0xff]
      %v341 = vld [vmem:[%s244 + $0x79] sm:$0xff]
      %v342 = vld [vmem:[%s244 + $0x81] sm:$0xff]
      %v343 = vld [vmem:[%s244 + $0x89] sm:$0xff]
      %v344 = vld [vmem:[%s244 + $0x91] sm:$0xff]
      %v345 = vld [vmem:[%s244 + $0x99] sm:$0xff]
      %v346 = vld [vmem:[%s244 + $0xa1] sm:$0xff]
      %v347 = vld [vmem:[%s244 + $0xa9] sm:$0xff]
      %v348 = vld [vmem:[%s244 + $0xb1] sm:$0xff]
      %v349 = vld [vmem:[%s244 + $0xb9] sm:$0xff]
      %v350 = vld [vmem:[%s244 + $0xc1] sm:$0xff]
      %v351 = vld [vmem:[%s244 + $0xc9] sm:$0xff]
      %v352 = vld [vmem:[%s244 + $0xd1] sm:$0xff]
      %v353 = vld [vmem:[%s244 + $0xd9] sm:$0xff]
      %v354 = vld [vmem:[%s244 + $0xe1] sm:$0xff]
      %v355 = vld [vmem:[%s244 + $0xe9] sm:$0xff]
      %v356 = vld [vmem:[%s244 + $0xf1] sm:$0xff]
      %v357 = vld [vmem:[%s244 + $0xf9] sm:$0xff]
      %v358 = vld [vmem:[%s244 + $0x101] sm:$0xff]
      %v359 = vld [vmem:[%s244 + $0x109] sm:$0xff]
      %v360 = vld [vmem:[%s244 + $0x111] sm:$0xff]
      %v361 = vld [vmem:[%s244 + $0x119] sm:$0xff]
      %v362 = vpack.c.bf16 %v327, %v326
      %v363 = vpack.c.bf16 %v329, %v328
      %v364 = vpack.c.bf16 %v331, %v330
      %v365 = vpack.c.bf16 %v333, %v332
      %v366 = vpack.c.bf16 %v335, %v334
      %v367 = vpack.c.bf16 %v337, %v336
      %v368 = vpack.c.bf16 %v339, %v338
      %v369 = vpack.c.bf16 %v341, %v340
      %v370 = vpack.c.bf16 %v343, %v342
      %v371 = vpack.c.bf16 %v345, %v344
      %v372 = vpack.c.bf16 %v347, %v346
      %v373 = vpack.c.bf16 %v349, %v348
      %v374 = vpack.c.bf16 %v351, %v350
      %v375 = vpack.c.bf16 %v353, %v352
      %v376 = vpack.c.bf16 %v355, %v354
      %v377 = vpack.c.bf16 %v357, %v356
      %v378 = vpack.c.bf16 %v359, %v358
      %v379 = vpack.c.bf16 %v361, %v360
      %s380 = scalar_lea.vmem %s248, 32
      %v381 = vld [vmem:[%s380] sm:$0xf]
      %v382 = vld [vmem:[%s380 + $0x4] sm:$0xf]
      %v383 = vld [vmem:[%s380 + $0x8] sm:$0xf]
      %v384 = vld [vmem:[%s380 + $0xc] sm:$0xf]
      %v385 = vld [vmem:[%s380 + $0x10] sm:$0xf]
      %v386 = vld [vmem:[%s380 + $0x14] sm:$0xf]
      %v387 = vld [vmem:[%s380 + $0x18] sm:$0xf]
      %v388 = vld [vmem:[%s380 + $0x1c] sm:$0xf]
      %v397 = vunpack.c.l.b16 %v381
      %v398 = vunpack.c.l.b16 %v382
      %v399 = vunpack.c.l.b16 %v383
      %v400 = vunpack.c.l.b16 %v384
      %v401 = vunpack.c.l.b16 %v385
      %v402 = vunpack.c.l.b16 %v386
      %v403 = vunpack.c.l.b16 %v387
      %v404 = vunpack.c.l.b16 %v388
      %v405 = vpack.c.b16 %v398, %v397
      %v406 = vpack.c.b16 %v400, %v399
      %v407 = vpack.c.b16 %v402, %v401
      %v408 = vpack.c.b16 %v404, %v403
      %vm413 = vcmask 523264
      %v415 = vsel %vm413, %v362, 0
      %v418 = vsel %vm413, %v363, 0
      %v421 = vsel %vm413, %v364, 0
      %v424 = vsel %vm413, %v365, 0
      %v427 = vsel %vm413, %v366, 0
      %v430 = vsel %vm413, %v367, 0
      %v433 = vsel %vm413, %v368, 0
      %v436 = vsel %vm413, %v369, 0
      %v439 = vsel %vm413, %v370, 0
      %v442 = vsel %vm413, %v371, 0
      %v445 = vsel %vm413, %v372, 0
      %v448 = vsel %vm413, %v373, 0
      %v451 = vsel %vm413, %v374, 0
      %v454 = vsel %vm413, %v375, 0
      %v457 = vsel %vm413, %v376, 0
      %v460 = vsel %vm413, %v377, 0
      %v463 = vsel %vm413, %v378, 0
      %v466 = vsel %vm413, %v379, 0
      %468 = vmatprep.subr.bf16.mxu0 0
      %469 = vmatpush1.bf16.msra.mxu0 0
      %470 = vmatprep.subr.bf16.mxu0 0
      %471 = vmatpush1.bf16.msra.mxu0 0
      %472 = vmatprep.subr.bf16.mxu0 0
      %473 = vmatpush1.bf16.msra.mxu0 0
      %474 = vmatprep.subr.bf16.mxu0 0
      %475 = vmatpush1.bf16.msra.mxu0 0
      %476 = vmatprep.subr.bf16.mxu0 0
      %477 = vmatpush1.bf16.msra.mxu0 %v408
      %478 = vmatprep.subr.bf16.mxu0 0
      %479 = vmatpush1.bf16.msra.mxu0 %v407
      %480 = vmatprep.subr.bf16.mxu0 0
      %481 = vmatpush1.bf16.msra.mxu0 %v406
      %482 = vmatprep.subr.bf16.mxu0 0
      %483 = vmatpush1.bf16.msra.mxu0 %v405
      %484 = vmatprep.subr.bf16.mxu0 0
      %485 = vmatpush2.bf16.msra.mxu0 0
      %486 = vmatprep.subr.bf16.mxu0 0
      %487 = vmatpush2.bf16.msra.mxu0 0
      %488 = vmatprep.subr.bf16.mxu0 0
      %489 = vmatpush2.bf16.msra.mxu0 0
      %490 = vmatprep.subr.bf16.mxu0 0
      %491 = vmatpush2.bf16.msra.mxu0 0
      %492 = vmatprep.subr.bf16.mxu0 0
      %493 = vmatpush2.bf16.msra.mxu0 0
      %494 = vmatprep.subr.bf16.mxu0 0
      %495 = vmatpush2.bf16.msra.mxu0 0
      %496 = vmatprep.subr.bf16.mxu0 0
      %497 = vmatpush2.bf16.msra.mxu0 0
      %498 = vmatprep.subr.bf16.mxu0 0
      %499 = vmatpush2.bf16.msra.mxu0 0
      %500 = vmatprep.mubr.bf16.mxu0 0
      %501 = vmatmul.mubr.bf16.gmra.mxu0 %v415
      %v502 = vpop.f32.mrf.mxu0
      %v503 = vadd.f32 0.0, %v502
      %v504 = vpop.f32.mrf.mxu0
      %v505 = vpop.f32.mrf.mxu0
      %v506 = vadd.f32 0.0, %v505
      %v507 = vpop.f32.mrf.mxu0
      %508 = vmatprep.mubr.bf16.mxu0 0
      %509 = vmatmul.mubr.bf16.gmra.mxu0 %v418
      %v510 = vpop.f32.mrf.mxu0
      %v511 = vadd.f32 0.0, %v510
      %v512 = vpop.f32.mrf.mxu0
      %v513 = vpop.f32.mrf.mxu0
      %v514 = vadd.f32 0.0, %v513
      %v515 = vpop.f32.mrf.mxu0
      %516 = vmatprep.mubr.bf16.mxu0 0
      %517 = vmatmul.mubr.bf16.gmra.mxu0 %v421
      %v518 = vpop.f32.mrf.mxu0
      %v519 = vadd.f32 0.0, %v518
      %v520 = vpop.f32.mrf.mxu0
      %v521 = vpop.f32.mrf.mxu0
      %v522 = vadd.f32 0.0, %v521
      %v523 = vpop.f32.mrf.mxu0
      %524 = vmatprep.mubr.bf16.mxu0 0
      %525 = vmatmul.mubr.bf16.gmra.mxu0 %v424
      %v526 = vpop.f32.mrf.mxu0
      %v527 = vadd.f32 0.0, %v526
      %v528 = vpop.f32.mrf.mxu0
      %v529 = vpop.f32.mrf.mxu0
      %v530 = vadd.f32 0.0, %v529
      %v531 = vpop.f32.mrf.mxu0
      %532 = vmatprep.mubr.bf16.mxu0 0
      %533 = vmatmul.mubr.bf16.gmra.mxu0 %v427
      %v534 = vpop.f32.mrf.mxu0
      %v535 = vadd.f32 0.0, %v534
      %v536 = vpop.f32.mrf.mxu0
      %v537 = vpop.f32.mrf.mxu0
      %v538 = vadd.f32 0.0, %v537
      %v539 = vpop.f32.mrf.mxu0
      %540 = vmatprep.mubr.bf16.mxu0 0
      %541 = vmatmul.mubr.bf16.gmra.mxu0 %v430
      %v542 = vpop.f32.mrf.mxu0
      %v543 = vadd.f32 0.0, %v542
      %v544 = vpop.f32.mrf.mxu0
      %v545 = vpop.f32.mrf.mxu0
      %v546 = vadd.f32 0.0, %v545
      %v547 = vpop.f32.mrf.mxu0
      %548 = vmatprep.mubr.bf16.mxu0 0
      %549 = vmatmul.mubr.bf16.gmra.mxu0 %v433
      %v550 = vpop.f32.mrf.mxu0
      %v551 = vadd.f32 0.0, %v550
      %v552 = vpop.f32.mrf.mxu0
      %v553 = vpop.f32.mrf.mxu0
      %v554 = vadd.f32 0.0, %v553
      %v555 = vpop.f32.mrf.mxu0
      %556 = vmatprep.mubr.bf16.mxu0 0
      %557 = vmatmul.mubr.bf16.gmra.mxu0 %v436
      %v558 = vpop.f32.mrf.mxu0
      %v559 = vadd.f32 0.0, %v558
      %v560 = vpop.f32.mrf.mxu0
      %v561 = vpop.f32.mrf.mxu0
      %v562 = vadd.f32 0.0, %v561
      %v563 = vpop.f32.mrf.mxu0
      %564 = vmatprep.mubr.bf16.mxu0 0
      %565 = vmatmul.mubr.bf16.gmra.mxu0 %v439
      %v566 = vpop.f32.mrf.mxu0
      %v567 = vadd.f32 0.0, %v566
      %v568 = vpop.f32.mrf.mxu0
      %v569 = vpop.f32.mrf.mxu0
      %v570 = vadd.f32 0.0, %v569
      %v571 = vpop.f32.mrf.mxu0
      %572 = vmatprep.mubr.bf16.mxu0 0
      %573 = vmatmul.mubr.bf16.gmra.mxu0 %v442
      %v574 = vpop.f32.mrf.mxu0
      %v575 = vadd.f32 0.0, %v574
      %v576 = vpop.f32.mrf.mxu0
      %v577 = vpop.f32.mrf.mxu0
      %v578 = vadd.f32 0.0, %v577
      %v579 = vpop.f32.mrf.mxu0
      %580 = vmatprep.mubr.bf16.mxu0 0
      %581 = vmatmul.mubr.bf16.gmra.mxu0 %v445
      %v582 = vpop.f32.mrf.mxu0
      %v583 = vadd.f32 0.0, %v582
      %v584 = vpop.f32.mrf.mxu0
      %v585 = vpop.f32.mrf.mxu0
      %v586 = vadd.f32 0.0, %v585
      %v587 = vpop.f32.mrf.mxu0
      %588 = vmatprep.mubr.bf16.mxu0 0
      %589 = vmatmul.mubr.bf16.gmra.mxu0 %v448
      %v590 = vpop.f32.mrf.mxu0
      %v591 = vadd.f32 0.0, %v590
      %v592 = vpop.f32.mrf.mxu0
      %v593 = vpop.f32.mrf.mxu0
      %v594 = vadd.f32 0.0, %v593
      %v595 = vpop.f32.mrf.mxu0
      %596 = vmatprep.mubr.bf16.mxu0 0
      %597 = vmatmul.mubr.bf16.gmra.mxu0 %v451
      %v598 = vpop.f32.mrf.mxu0
      %v599 = vadd.f32 0.0, %v598
      %v600 = vpop.f32.mrf.mxu0
      %v601 = vpop.f32.mrf.mxu0
      %v602 = vadd.f32 0.0, %v601
      %v603 = vpop.f32.mrf.mxu0
      %604 = vmatprep.mubr.bf16.mxu0 0
      %605 = vmatmul.mubr.bf16.gmra.mxu0 %v454
      %v606 = vpop.f32.mrf.mxu0
      %v607 = vadd.f32 0.0, %v606
      %v608 = vpop.f32.mrf.mxu0
      %v609 = vpop.f32.mrf.mxu0
      %v610 = vadd.f32 0.0, %v609
      %v611 = vpop.f32.mrf.mxu0
      %612 = vmatprep.mubr.bf16.mxu0 0
      %613 = vmatmul.mubr.bf16.gmra.mxu0 %v457
      %v614 = vpop.f32.mrf.mxu0
      %v615 = vadd.f32 0.0, %v614
      %v616 = vpop.f32.mrf.mxu0
      %v617 = vpop.f32.mrf.mxu0
      %v618 = vadd.f32 0.0, %v617
      %v619 = vpop.f32.mrf.mxu0
      %620 = vmatprep.mubr.bf16.mxu0 0
      %621 = vmatmul.mubr.bf16.gmra.mxu0 %v460
      %v622 = vpop.f32.mrf.mxu0
      %v623 = vadd.f32 0.0, %v622
      %v624 = vpop.f32.mrf.mxu0
      %v625 = vpop.f32.mrf.mxu0
      %v626 = vadd.f32 0.0, %v625
      %v627 = vpop.f32.mrf.mxu0
      %628 = vmatprep.mubr.bf16.mxu0 0
      %629 = vmatmul.mubr.bf16.gmra.mxu0 %v463
      %v630 = vpop.f32.mrf.mxu0
      %v631 = vadd.f32 0.0, %v630
      %v632 = vpop.f32.mrf.mxu0
      %v633 = vpop.f32.mrf.mxu0
      %v634 = vadd.f32 0.0, %v633
      %v635 = vpop.f32.mrf.mxu0
      %636 = vmatprep.mubr.bf16.mxu0 0
      %637 = vmatmul.mubr.bf16.gmra.mxu0 %v466
      %v638 = vpop.f32.mrf.mxu0
      %v639 = vadd.f32 0.0, %v638
      %v640 = vpop.f32.mrf.mxu0
      %v641 = vpop.f32.mrf.mxu0
      %v642 = vadd.f32 0.0, %v641
      %v643 = vpop.f32.mrf.mxu0
      %644 = vdwg.mxu0
      %v653 = vunpack.c.l.b16 %v318
      %v654 = vunpack.c.l.b16 %v319
      %v655 = vunpack.c.l.b16 %v320
      %v656 = vunpack.c.l.b16 %v321
      %v657 = vunpack.c.l.b16 %v322
      %v658 = vunpack.c.l.b16 %v323
      %v659 = vunpack.c.l.b16 %v324
      %v660 = vunpack.c.l.b16 %v325
      %v661 = vpack.c.b16 %v654, %v653
      %v662 = vpack.c.b16 %v656, %v655
      %v663 = vpack.c.b16 %v658, %v657
      %v664 = vpack.c.b16 %v660, %v659
      %v670 = vsel %vm413, %v300, 0
      %v673 = vsel %vm413, %v301, 0
      %v676 = vsel %vm413, %v302, 0
      %v679 = vsel %vm413, %v303, 0
      %v682 = vsel %vm413, %v304, 0
      %v685 = vsel %vm413, %v305, 0
      %v688 = vsel %vm413, %v306, 0
      %v691 = vsel %vm413, %v307, 0
      %v694 = vsel %vm413, %v308, 0
      %v697 = vsel %vm413, %v309, 0
      %v700 = vsel %vm413, %v310, 0
      %v703 = vsel %vm413, %v311, 0
      %v706 = vsel %vm413, %v312, 0
      %v709 = vsel %vm413, %v313, 0
      %v712 = vsel %vm413, %v314, 0
      %v715 = vsel %vm413, %v315, 0
      %v718 = vsel %vm413, %v316, 0
      %v721 = vsel %vm413, %v317, 0
      %723 = vmatprep.subr.bf16.mxu0 0
      %724 = vmatpush1.bf16.msra.mxu0 0
      %725 = vmatprep.subr.bf16.mxu0 0
      %726 = vmatpush1.bf16.msra.mxu0 0
      %727 = vmatprep.subr.bf16.mxu0 0
      %728 = vmatpush1.bf16.msra.mxu0 0
      %729 = vmatprep.subr.bf16.mxu0 0
      %730 = vmatpush1.bf16.msra.mxu0 0
      %731 = vmatprep.subr.bf16.mxu0 0
      %732 = vmatpush1.bf16.msra.mxu0 %v664
      %733 = vmatprep.subr.bf16.mxu0 0
      %734 = vmatpush1.bf16.msra.mxu0 %v663
      %735 = vmatprep.subr.bf16.mxu0 0
      %736 = vmatpush1.bf16.msra.mxu0 %v662
      %737 = vmatprep.subr.bf16.mxu0 0
      %738 = vmatpush1.bf16.msra.mxu0 %v661
      %739 = vmatprep.subr.bf16.mxu0 0
      %740 = vmatpush2.bf16.msra.mxu0 0
      %741 = vmatprep.subr.bf16.mxu0 0
      %742 = vmatpush2.bf16.msra.mxu0 0
      %743 = vmatprep.subr.bf16.mxu0 0
      %744 = vmatpush2.bf16.msra.mxu0 0
      %745 = vmatprep.subr.bf16.mxu0 0
      %746 = vmatpush2.bf16.msra.mxu0 0
      %747 = vmatprep.subr.bf16.mxu0 0
      %748 = vmatpush2.bf16.msra.mxu0 0
      %749 = vmatprep.subr.bf16.mxu0 0
      %750 = vmatpush2.bf16.msra.mxu0 0
      %751 = vmatprep.subr.bf16.mxu0 0
      %752 = vmatpush2.bf16.msra.mxu0 0
      %753 = vmatprep.subr.bf16.mxu0 0
      %754 = vmatpush2.bf16.msra.mxu0 0
      %755 = vmatprep.mubr.bf16.mxu0 0
      %756 = vmatmul.mubr.bf16.gmra.mxu0 %v670
      %v757 = vpop.f32.mrf.mxu0
      %v758 = vadd.f32 %v503, %v757
      %v759 = vpop.f32.mrf.mxu0
      %v760 = vpop.f32.mrf.mxu0
      %v761 = vadd.f32 %v506, %v760
      %v762 = vpop.f32.mrf.mxu0
      %763 = vmatprep.mubr.bf16.mxu0 0
      %764 = vmatmul.mubr.bf16.gmra.mxu0 %v673
      %v765 = vpop.f32.mrf.mxu0
      %v766 = vadd.f32 %v511, %v765
      %v767 = vpop.f32.mrf.mxu0
      %v768 = vpop.f32.mrf.mxu0
      %v769 = vadd.f32 %v514, %v768
      %v770 = vpop.f32.mrf.mxu0
      %771 = vmatprep.mubr.bf16.mxu0 0
      %772 = vmatmul.mubr.bf16.gmra.mxu0 %v676
      %v773 = vpop.f32.mrf.mxu0
      %v774 = vadd.f32 %v519, %v773
      %v775 = vpop.f32.mrf.mxu0
      %v776 = vpop.f32.mrf.mxu0
      %v777 = vadd.f32 %v522, %v776
      %v778 = vpop.f32.mrf.mxu0
      %779 = vmatprep.mubr.bf16.mxu0 0
      %780 = vmatmul.mubr.bf16.gmra.mxu0 %v679
      %v781 = vpop.f32.mrf.mxu0
      %v782 = vadd.f32 %v527, %v781
      %v783 = vpop.f32.mrf.mxu0
      %v784 = vpop.f32.mrf.mxu0
      %v785 = vadd.f32 %v530, %v784
      %v786 = vpop.f32.mrf.mxu0
      %787 = vmatprep.mubr.bf16.mxu0 0
      %788 = vmatmul.mubr.bf16.gmra.mxu0 %v682
      %v789 = vpop.f32.mrf.mxu0
      %v790 = vadd.f32 %v535, %v789
      %v791 = vpop.f32.mrf.mxu0
      %v792 = vpop.f32.mrf.mxu0
      %v793 = vadd.f32 %v538, %v792
      %v794 = vpop.f32.mrf.mxu0
      %795 = vmatprep.mubr.bf16.mxu0 0
      %796 = vmatmul.mubr.bf16.gmra.mxu0 %v685
      %v797 = vpop.f32.mrf.mxu0
      %v798 = vadd.f32 %v543, %v797
      %v799 = vpop.f32.mrf.mxu0
      %v800 = vpop.f32.mrf.mxu0
      %v801 = vadd.f32 %v546, %v800
      %v802 = vpop.f32.mrf.mxu0
      %803 = vmatprep.mubr.bf16.mxu0 0
      %804 = vmatmul.mubr.bf16.gmra.mxu0 %v688
      %v805 = vpop.f32.mrf.mxu0
      %v806 = vadd.f32 %v551, %v805
      %v807 = vpop.f32.mrf.mxu0
      %v808 = vpop.f32.mrf.mxu0
      %v809 = vadd.f32 %v554, %v808
      %v810 = vpop.f32.mrf.mxu0
      %811 = vmatprep.mubr.bf16.mxu0 0
      %812 = vmatmul.mubr.bf16.gmra.mxu0 %v691
      %v813 = vpop.f32.mrf.mxu0
      %v814 = vadd.f32 %v559, %v813
      %v815 = vpop.f32.mrf.mxu0
      %v816 = vpop.f32.mrf.mxu0
      %v817 = vadd.f32 %v562, %v816
      %v818 = vpop.f32.mrf.mxu0
      %819 = vmatprep.mubr.bf16.mxu0 0
      %820 = vmatmul.mubr.bf16.gmra.mxu0 %v694
      %v821 = vpop.f32.mrf.mxu0
      %v822 = vadd.f32 %v567, %v821
      %v823 = vpop.f32.mrf.mxu0
      %v824 = vpop.f32.mrf.mxu0
      %v825 = vadd.f32 %v570, %v824
      %v826 = vpop.f32.mrf.mxu0
      %827 = vmatprep.mubr.bf16.mxu0 0
      %828 = vmatmul.mubr.bf16.gmra.mxu0 %v697
      %v829 = vpop.f32.mrf.mxu0
      %v830 = vadd.f32 %v575, %v829
      %v831 = vpop.f32.mrf.mxu0
      %v832 = vpop.f32.mrf.mxu0
      %v833 = vadd.f32 %v578, %v832
      %v834 = vpop.f32.mrf.mxu0
      %835 = vmatprep.mubr.bf16.mxu0 0
      %836 = vmatmul.mubr.bf16.gmra.mxu0 %v700
      %v837 = vpop.f32.mrf.mxu0
      %v838 = vadd.f32 %v583, %v837
      %v839 = vpop.f32.mrf.mxu0
      %v840 = vpop.f32.mrf.mxu0
      %v841 = vadd.f32 %v586, %v840
      %v842 = vpop.f32.mrf.mxu0
      %843 = vmatprep.mubr.bf16.mxu0 0
      %844 = vmatmul.mubr.bf16.gmra.mxu0 %v703
      %v845 = vpop.f32.mrf.mxu0
      %v846 = vadd.f32 %v591, %v845
      %v847 = vpop.f32.mrf.mxu0
      %v848 = vpop.f32.mrf.mxu0
      %v849 = vadd.f32 %v594, %v848
      %v850 = vpop.f32.mrf.mxu0
      %851 = vmatprep.mubr.bf16.mxu0 0
      %852 = vmatmul.mubr.bf16.gmra.mxu0 %v706
      %v853 = vpop.f32.mrf.mxu0
      %v854 = vadd.f32 %v599, %v853
      %v855 = vpop.f32.mrf.mxu0
      %v856 = vpop.f32.mrf.mxu0
      %v857 = vadd.f32 %v602, %v856
      %v858 = vpop.f32.mrf.mxu0
      %859 = vmatprep.mubr.bf16.mxu0 0
      %860 = vmatmul.mubr.bf16.gmra.mxu0 %v709
      %v861 = vpop.f32.mrf.mxu0
      %v862 = vadd.f32 %v607, %v861
      %v863 = vpop.f32.mrf.mxu0
      %v864 = vpop.f32.mrf.mxu0
      %v865 = vadd.f32 %v610, %v864
      %v866 = vpop.f32.mrf.mxu0
      %867 = vmatprep.mubr.bf16.mxu0 0
      %868 = vmatmul.mubr.bf16.gmra.mxu0 %v712
      %v869 = vpop.f32.mrf.mxu0
      %v870 = vadd.f32 %v615, %v869
      %v871 = vpop.f32.mrf.mxu0
      %v872 = vpop.f32.mrf.mxu0
      %v873 = vadd.f32 %v618, %v872
      %v874 = vpop.f32.mrf.mxu0
      %875 = vmatprep.mubr.bf16.mxu0 0
      %876 = vmatmul.mubr.bf16.gmra.mxu0 %v715
      %v877 = vpop.f32.mrf.mxu0
      %v878 = vadd.f32 %v623, %v877
      %v879 = vpop.f32.mrf.mxu0
      %v880 = vpop.f32.mrf.mxu0
      %v881 = vadd.f32 %v626, %v880
      %v882 = vpop.f32.mrf.mxu0
      %883 = vmatprep.mubr.bf16.mxu0 0
      %884 = vmatmul.mubr.bf16.gmra.mxu0 %v718
      %v885 = vpop.f32.mrf.mxu0
      %v886 = vadd.f32 %v631, %v885
      %v887 = vpop.f32.mrf.mxu0
      %v888 = vpop.f32.mrf.mxu0
      %v889 = vadd.f32 %v634, %v888
      %v890 = vpop.f32.mrf.mxu0
      %891 = vmatprep.mubr.bf16.mxu0 0
      %892 = vmatmul.mubr.bf16.gmra.mxu0 %v721
      %v893 = vpop.f32.mrf.mxu0
      %v894 = vadd.f32 %v639, %v893
      %v895 = vpop.f32.mrf.mxu0
      %v896 = vpop.f32.mrf.mxu0
      %v897 = vadd.f32 %v642, %v896
      %v898 = vpop.f32.mrf.mxu0
      %899 = vdwg.mxu0
      %v900 = vld [vmem:[%s244 + $0x2] sm:$0xff]
      %v901 = vld [vmem:[%s244 + $0xa] sm:$0xff]
      %v902 = vld [vmem:[%s244 + $0x12] sm:$0xff]
      %v903 = vld [vmem:[%s244 + $0x1a] sm:$0xff]
      %v904 = vld [vmem:[%s244 + $0x22] sm:$0xff]
      %v905 = vld [vmem:[%s244 + $0x2a] sm:$0xff]
      %v906 = vld [vmem:[%s244 + $0x32] sm:$0xff]
      %v907 = vld [vmem:[%s244 + $0x3a] sm:$0xff]
      %v908 = vld [vmem:[%s244 + $0x42] sm:$0xff]
      %v909 = vld [vmem:[%s244 + $0x4a] sm:$0xff]
      %v910 = vld [vmem:[%s244 + $0x52] sm:$0xff]
      %v911 = vld [vmem:[%s244 + $0x5a] sm:$0xff]
      %v912 = vld [vmem:[%s244 + $0x62] sm:$0xff]
      %v913 = vld [vmem:[%s244 + $0x6a] sm:$0xff]
      %v914 = vld [vmem:[%s244 + $0x72] sm:$0xff]
      %v915 = vld [vmem:[%s244 + $0x7a] sm:$0xff]
      %v916 = vld [vmem:[%s244 + $0x82] sm:$0xff]
      %v917 = vld [vmem:[%s244 + $0x8a] sm:$0xff]
      %v918 = vld [vmem:[%s244 + $0x92] sm:$0xff]
      %v919 = vld [vmem:[%s244 + $0x9a] sm:$0xff]
      %v920 = vld [vmem:[%s244 + $0xa2] sm:$0xff]
      %v921 = vld [vmem:[%s244 + $0xaa] sm:$0xff]
      %v922 = vld [vmem:[%s244 + $0xb2] sm:$0xff]
      %v923 = vld [vmem:[%s244 + $0xba] sm:$0xff]
      %v924 = vld [vmem:[%s244 + $0xc2] sm:$0xff]
      %v925 = vld [vmem:[%s244 + $0xca] sm:$0xff]
      %v926 = vld [vmem:[%s244 + $0xd2] sm:$0xff]
      %v927 = vld [vmem:[%s244 + $0xda] sm:$0xff]
      %v928 = vld [vmem:[%s244 + $0xe2] sm:$0xff]
      %v929 = vld [vmem:[%s244 + $0xea] sm:$0xff]
      %v930 = vld [vmem:[%s244 + $0xf2] sm:$0xff]
      %v931 = vld [vmem:[%s244 + $0xfa] sm:$0xff]
      %v932 = vld [vmem:[%s244 + $0x102] sm:$0xff]
      %v933 = vld [vmem:[%s244 + $0x10a] sm:$0xff]
      %v934 = vld [vmem:[%s244 + $0x112] sm:$0xff]
      %v935 = vld [vmem:[%s244 + $0x11a] sm:$0xff]
      %v936 = vpack.c.bf16 %v901, %v900
      %v937 = vpack.c.bf16 %v903, %v902
      %v938 = vpack.c.bf16 %v905, %v904
      %v939 = vpack.c.bf16 %v907, %v906
      %v940 = vpack.c.bf16 %v909, %v908
      %v941 = vpack.c.bf16 %v911, %v910
      %v942 = vpack.c.bf16 %v913, %v912
      %v943 = vpack.c.bf16 %v915, %v914
      %v944 = vpack.c.bf16 %v917, %v916
      %v945 = vpack.c.bf16 %v919, %v918
      %v946 = vpack.c.bf16 %v921, %v920
      %v947 = vpack.c.bf16 %v923, %v922
      %v948 = vpack.c.bf16 %v925, %v924
      %v949 = vpack.c.bf16 %v927, %v926
      %v950 = vpack.c.bf16 %v929, %v928
      %v951 = vpack.c.bf16 %v931, %v930
      %v952 = vpack.c.bf16 %v933, %v932
      %v953 = vpack.c.bf16 %v935, %v934
      %s954 = scalar_lea.vmem %s248, 64
      %v955 = vld [vmem:[%s954] sm:$0xf]
      %v956 = vld [vmem:[%s954 + $0x4] sm:$0xf]
      %v957 = vld [vmem:[%s954 + $0x8] sm:$0xf]
      %v958 = vld [vmem:[%s954 + $0xc] sm:$0xf]
      %v959 = vld [vmem:[%s954 + $0x10] sm:$0xf]
      %v960 = vld [vmem:[%s954 + $0x14] sm:$0xf]
      %v961 = vld [vmem:[%s954 + $0x18] sm:$0xf]
      %v962 = vld [vmem:[%s954 + $0x1c] sm:$0xf]
      %v971 = vunpack.c.l.b16 %v955
      %v972 = vunpack.c.l.b16 %v956
      %v973 = vunpack.c.l.b16 %v957
      %v974 = vunpack.c.l.b16 %v958
      %v975 = vunpack.c.l.b16 %v959
      %v976 = vunpack.c.l.b16 %v960
      %v977 = vunpack.c.l.b16 %v961
      %v978 = vunpack.c.l.b16 %v962
      %v979 = vpack.c.b16 %v972, %v971
      %v980 = vpack.c.b16 %v974, %v973
      %v981 = vpack.c.b16 %v976, %v975
      %v982 = vpack.c.b16 %v978, %v977
      %v988 = vsel %vm413, %v936, 0
      %v991 = vsel %vm413, %v937, 0
      %v994 = vsel %vm413, %v938, 0
      %v997 = vsel %vm413, %v939, 0
      %v1000 = vsel %vm413, %v940, 0
      %v1003 = vsel %vm413, %v941, 0
      %v1006 = vsel %vm413, %v942, 0
      %v1009 = vsel %vm413, %v943, 0
      %v1012 = vsel %vm413, %v944, 0
      %v1015 = vsel %vm413, %v945, 0
      %v1018 = vsel %vm413, %v946, 0
      %v1021 = vsel %vm413, %v947, 0
      %v1024 = vsel %vm413, %v948, 0
      %v1027 = vsel %vm413, %v949, 0
      %v1030 = vsel %vm413, %v950, 0
      %v1033 = vsel %vm413, %v951, 0
      %v1036 = vsel %vm413, %v952, 0
      %v1039 = vsel %vm413, %v953, 0
      %1041 = vmatprep.subr.bf16.mxu0 0
      %1042 = vmatpush1.bf16.msra.mxu0 0
      %1043 = vmatprep.subr.bf16.mxu0 0
      %1044 = vmatpush1.bf16.msra.mxu0 0
      %1045 = vmatprep.subr.bf16.mxu0 0
      %1046 = vmatpush1.bf16.msra.mxu0 0
      %1047 = vmatprep.subr.bf16.mxu0 0
      %1048 = vmatpush1.bf16.msra.mxu0 0
      %1049 = vmatprep.subr.bf16.mxu0 0
      %1050 = vmatpush1.bf16.msra.mxu0 %v982
      %1051 = vmatprep.subr.bf16.mxu0 0
      %1052 = vmatpush1.bf16.msra.mxu0 %v981
      %1053 = vmatprep.subr.bf16.mxu0 0
      %1054 = vmatpush1.bf16.msra.mxu0 %v980
      %1055 = vmatprep.subr.bf16.mxu0 0
      %1056 = vmatpush1.bf16.msra.mxu0 %v979
      %1057 = vmatprep.subr.bf16.mxu0 0
      %1058 = vmatpush2.bf16.msra.mxu0 0
      %1059 = vmatprep.subr.bf16.mxu0 0
      %1060 = vmatpush2.bf16.msra.mxu0 0
      %1061 = vmatprep.subr.bf16.mxu0 0
      %1062 = vmatpush2.bf16.msra.mxu0 0
      %1063 = vmatprep.subr.bf16.mxu0 0
      %1064 = vmatpush2.bf16.msra.mxu0 0
      %1065 = vmatprep.subr.bf16.mxu0 0
      %1066 = vmatpush2.bf16.msra.mxu0 0
      %1067 = vmatprep.subr.bf16.mxu0 0
      %1068 = vmatpush2.bf16.msra.mxu0 0
      %1069 = vmatprep.subr.bf16.mxu0 0
      %1070 = vmatpush2.bf16.msra.mxu0 0
      %1071 = vmatprep.subr.bf16.mxu0 0
      %1072 = vmatpush2.bf16.msra.mxu0 0
      %1073 = vmatprep.mubr.bf16.mxu0 0
      %1074 = vmatmul.mubr.bf16.gmra.mxu0 %v988
      %v1075 = vpop.f32.mrf.mxu0
      %v1076 = vadd.f32 0.0, %v1075
      %v1077 = vpop.f32.mrf.mxu0
      %v1078 = vpop.f32.mrf.mxu0
      %v1079 = vadd.f32 0.0, %v1078
      %v1080 = vpop.f32.mrf.mxu0
      %1081 = vmatprep.mubr.bf16.mxu0 0
      %1082 = vmatmul.mubr.bf16.gmra.mxu0 %v991
      %v1083 = vpop.f32.mrf.mxu0
      %v1084 = vadd.f32 0.0, %v1083
      %v1085 = vpop.f32.mrf.mxu0
      %v1086 = vpop.f32.mrf.mxu0
      %v1087 = vadd.f32 0.0, %v1086
      %v1088 = vpop.f32.mrf.mxu0
      %1089 = vmatprep.mubr.bf16.mxu0 0
      %1090 = vmatmul.mubr.bf16.gmra.mxu0 %v994
      %v1091 = vpop.f32.mrf.mxu0
      %v1092 = vadd.f32 0.0, %v1091
      %v1093 = vpop.f32.mrf.mxu0
      %v1094 = vpop.f32.mrf.mxu0
      %v1095 = vadd.f32 0.0, %v1094
      %v1096 = vpop.f32.mrf.mxu0
      %1097 = vmatprep.mubr.bf16.mxu0 0
      %1098 = vmatmul.mubr.bf16.gmra.mxu0 %v997
      %v1099 = vpop.f32.mrf.mxu0
      %v1100 = vadd.f32 0.0, %v1099
      %v1101 = vpop.f32.mrf.mxu0
      %v1102 = vpop.f32.mrf.mxu0
      %v1103 = vadd.f32 0.0, %v1102
      %v1104 = vpop.f32.mrf.mxu0
      %1105 = vmatprep.mubr.bf16.mxu0 0
      %1106 = vmatmul.mubr.bf16.gmra.mxu0 %v1000
      %v1107 = vpop.f32.mrf.mxu0
      %v1108 = vadd.f32 0.0, %v1107
      %v1109 = vpop.f32.mrf.mxu0
      %v1110 = vpop.f32.mrf.mxu0
      %v1111 = vadd.f32 0.0, %v1110
      %v1112 = vpop.f32.mrf.mxu0
      %1113 = vmatprep.mubr.bf16.mxu0 0
      %1114 = vmatmul.mubr.bf16.gmra.mxu0 %v1003
      %v1115 = vpop.f32.mrf.mxu0
      %v1116 = vadd.f32 0.0, %v1115
      %v1117 = vpop.f32.mrf.mxu0
      %v1118 = vpop.f32.mrf.mxu0
      %v1119 = vadd.f32 0.0, %v1118
      %v1120 = vpop.f32.mrf.mxu0
      %1121 = vmatprep.mubr.bf16.mxu0 0
      %1122 = vmatmul.mubr.bf16.gmra.mxu0 %v1006
      %v1123 = vpop.f32.mrf.mxu0
      %v1124 = vadd.f32 0.0, %v1123
      %v1125 = vpop.f32.mrf.mxu0
      %v1126 = vpop.f32.mrf.mxu0
      %v1127 = vadd.f32 0.0, %v1126
      %v1128 = vpop.f32.mrf.mxu0
      %1129 = vmatprep.mubr.bf16.mxu0 0
      %1130 = vmatmul.mubr.bf16.gmra.mxu0 %v1009
      %v1131 = vpop.f32.mrf.mxu0
      %v1132 = vadd.f32 0.0, %v1131
      %v1133 = vpop.f32.mrf.mxu0
      %v1134 = vpop.f32.mrf.mxu0
      %v1135 = vadd.f32 0.0, %v1134
      %v1136 = vpop.f32.mrf.mxu0
      %1137 = vmatprep.mubr.bf16.mxu0 0
      %1138 = vmatmul.mubr.bf16.gmra.mxu0 %v1012
      %v1139 = vpop.f32.mrf.mxu0
      %v1140 = vadd.f32 0.0, %v1139
      %v1141 = vpop.f32.mrf.mxu0
      %v1142 = vpop.f32.mrf.mxu0
      %v1143 = vadd.f32 0.0, %v1142
      %v1144 = vpop.f32.mrf.mxu0
      %1145 = vmatprep.mubr.bf16.mxu0 0
      %1146 = vmatmul.mubr.bf16.gmra.mxu0 %v1015
      %v1147 = vpop.f32.mrf.mxu0
      %v1148 = vadd.f32 0.0, %v1147
      %v1149 = vpop.f32.mrf.mxu0
      %v1150 = vpop.f32.mrf.mxu0
      %v1151 = vadd.f32 0.0, %v1150
      %v1152 = vpop.f32.mrf.mxu0
      %1153 = vmatprep.mubr.bf16.mxu0 0
      %1154 = vmatmul.mubr.bf16.gmra.mxu0 %v1018
      %v1155 = vpop.f32.mrf.mxu0
      %v1156 = vadd.f32 0.0, %v1155
      %v1157 = vpop.f32.mrf.mxu0
      %v1158 = vpop.f32.mrf.mxu0
      %v1159 = vadd.f32 0.0, %v1158
      %v1160 = vpop.f32.mrf.mxu0
      %1161 = vmatprep.mubr.bf16.mxu0 0
      %1162 = vmatmul.mubr.bf16.gmra.mxu0 %v1021
      %v1163 = vpop.f32.mrf.mxu0
      %v1164 = vadd.f32 0.0, %v1163
      %v1165 = vpop.f32.mrf.mxu0
      %v1166 = vpop.f32.mrf.mxu0
      %v1167 = vadd.f32 0.0, %v1166
      %v1168 = vpop.f32.mrf.mxu0
      %1169 = vmatprep.mubr.bf16.mxu0 0
      %1170 = vmatmul.mubr.bf16.gmra.mxu0 %v1024
      %v1171 = vpop.f32.mrf.mxu0
      %v1172 = vadd.f32 0.0, %v1171
      %v1173 = vpop.f32.mrf.mxu0
      %v1174 = vpop.f32.mrf.mxu0
      %v1175 = vadd.f32 0.0, %v1174
      %v1176 = vpop.f32.mrf.mxu0
      %1177 = vmatprep.mubr.bf16.mxu0 0
      %1178 = vmatmul.mubr.bf16.gmra.mxu0 %v1027
      %v1179 = vpop.f32.mrf.mxu0
      %v1180 = vadd.f32 0.0, %v1179
      %v1181 = vpop.f32.mrf.mxu0
      %v1182 = vpop.f32.mrf.mxu0
      %v1183 = vadd.f32 0.0, %v1182
      %v1184 = vpop.f32.mrf.mxu0
      %1185 = vmatprep.mubr.bf16.mxu0 0
      %1186 = vmatmul.mubr.bf16.gmra.mxu0 %v1030
      %v1187 = vpop.f32.mrf.mxu0
      %v1188 = vadd.f32 0.0, %v1187
      %v1189 = vpop.f32.mrf.mxu0
      %v1190 = vpop.f32.mrf.mxu0
      %v1191 = vadd.f32 0.0, %v1190
      %v1192 = vpop.f32.mrf.mxu0
      %1193 = vmatprep.mubr.bf16.mxu0 0
      %1194 = vmatmul.mubr.bf16.gmra.mxu0 %v1033
      %v1195 = vpop.f32.mrf.mxu0
      %v1196 = vadd.f32 0.0, %v1195
      %v1197 = vpop.f32.mrf.mxu0
      %v1198 = vpop.f32.mrf.mxu0
      %v1199 = vadd.f32 0.0, %v1198
      %v1200 = vpop.f32.mrf.mxu0
      %1201 = vmatprep.mubr.bf16.mxu0 0
      %1202 = vmatmul.mubr.bf16.gmra.mxu0 %v1036
      %v1203 = vpop.f32.mrf.mxu0
      %v1204 = vadd.f32 0.0, %v1203
      %v1205 = vpop.f32.mrf.mxu0
      %v1206 = vpop.f32.mrf.mxu0
      %v1207 = vadd.f32 0.0, %v1206
      %v1208 = vpop.f32.mrf.mxu0
      %1209 = vmatprep.mubr.bf16.mxu0 0
      %1210 = vmatmul.mubr.bf16.gmra.mxu0 %v1039
      %v1211 = vpop.f32.mrf.mxu0
      %v1212 = vadd.f32 0.0, %v1211
      %v1213 = vpop.f32.mrf.mxu0
      %v1214 = vpop.f32.mrf.mxu0
      %v1215 = vadd.f32 0.0, %v1214
      %v1216 = vpop.f32.mrf.mxu0
      %1217 = vdwg.mxu0
      %v1218 = vadd.f32 %v758, %v1076
      %v1219 = vadd.f32 %v761, %v1079
      %v1220 = vadd.f32 %v766, %v1084
      %v1221 = vadd.f32 %v769, %v1087
      %v1222 = vadd.f32 %v774, %v1092
      %v1223 = vadd.f32 %v777, %v1095
      %v1224 = vadd.f32 %v782, %v1100
      %v1225 = vadd.f32 %v785, %v1103
      %v1226 = vadd.f32 %v790, %v1108
      %v1227 = vadd.f32 %v793, %v1111
      %v1228 = vadd.f32 %v798, %v1116
      %v1229 = vadd.f32 %v801, %v1119
      %v1230 = vadd.f32 %v806, %v1124
      %v1231 = vadd.f32 %v809, %v1127
      %v1232 = vadd.f32 %v814, %v1132
      %v1233 = vadd.f32 %v817, %v1135
      %v1234 = vadd.f32 %v822, %v1140
      %v1235 = vadd.f32 %v825, %v1143
      %v1236 = vadd.f32 %v830, %v1148
      %v1237 = vadd.f32 %v833, %v1151
      %v1238 = vadd.f32 %v838, %v1156
      %v1239 = vadd.f32 %v841, %v1159
      %v1240 = vadd.f32 %v846, %v1164
      %v1241 = vadd.f32 %v849, %v1167
      %v1242 = vadd.f32 %v854, %v1172
      %v1243 = vadd.f32 %v857, %v1175
      %v1244 = vadd.f32 %v862, %v1180
      %v1245 = vadd.f32 %v865, %v1183
      %v1246 = vadd.f32 %v870, %v1188
      %v1247 = vadd.f32 %v873, %v1191
      %v1248 = vadd.f32 %v878, %v1196
      %v1249 = vadd.f32 %v881, %v1199
      %v1250 = vadd.f32 %v886, %v1204
      %v1251 = vadd.f32 %v889, %v1207
      %v1252 = vadd.f32 %v894, %v1212
      %v1253 = vadd.f32 %v897, %v1215
      %v1254 = vld [vmem:[%s244 + $0x12] sm:$0xff]
      %v1255 = vld [vmem:[%s244 + $0x1a] sm:$0xff]
      %v1256 = vld [vmem:[%s244 + $0x22] sm:$0xff]
      %v1257 = vld [vmem:[%s244 + $0x2a] sm:$0xff]
      %v1258 = vld [vmem:[%s244 + $0x32] sm:$0xff]
      %v1259 = vld [vmem:[%s244 + $0x3a] sm:$0xff]
      %v1260 = vld [vmem:[%s244 + $0x42] sm:$0xff]
      %v1261 = vld [vmem:[%s244 + $0x4a] sm:$0xff]
      %v1262 = vld [vmem:[%s244 + $0x52] sm:$0xff]
      %v1263 = vld [vmem:[%s244 + $0x5a] sm:$0xff]
      %v1264 = vld [vmem:[%s244 + $0x62] sm:$0xff]
      %v1265 = vld [vmem:[%s244 + $0x6a] sm:$0xff]
      %v1266 = vld [vmem:[%s244 + $0x72] sm:$0xff]
      %v1267 = vld [vmem:[%s244 + $0x7a] sm:$0xff]
      %v1268 = vld [vmem:[%s244 + $0x82] sm:$0xff]
      %v1269 = vld [vmem:[%s244 + $0x8a] sm:$0xff]
      %v1270 = vld [vmem:[%s244 + $0x92] sm:$0xff]
      %v1271 = vld [vmem:[%s244 + $0x9a] sm:$0xff]
      %v1272 = vld [vmem:[%s244 + $0xa2] sm:$0xff]
      %v1273 = vld [vmem:[%s244 + $0xaa] sm:$0xff]
      %v1274 = vld [vmem:[%s244 + $0xb2] sm:$0xff]
      %v1275 = vld [vmem:[%s244 + $0xba] sm:$0xff]
      %v1276 = vld [vmem:[%s244 + $0xc2] sm:$0xff]
      %v1277 = vld [vmem:[%s244 + $0xca] sm:$0xff]
      %v1278 = vld [vmem:[%s244 + $0xd2] sm:$0xff]
      %v1279 = vld [vmem:[%s244 + $0xda] sm:$0xff]
      %v1280 = vld [vmem:[%s244 + $0xe2] sm:$0xff]
      %v1281 = vld [vmem:[%s244 + $0xea] sm:$0xff]
      %v1282 = vld [vmem:[%s244 + $0xf2] sm:$0xff]
      %v1283 = vld [vmem:[%s244 + $0xfa] sm:$0xff]
      %v1284 = vld [vmem:[%s244 + $0x102] sm:$0xff]
      %v1285 = vld [vmem:[%s244 + $0x10a] sm:$0xff]
      %v1286 = vld [vmem:[%s244 + $0x112] sm:$0xff]
      %v1287 = vld [vmem:[%s244 + $0x11a] sm:$0xff]
      %v1288 = vld [vmem:[%s244 + $0x122] sm:$0xff]
      %v1289 = vld [vmem:[%s244 + $0x12a] sm:$0xff]
      %v1290 = vpack.c.bf16 %v1255, %v1254
      %v1291 = vpack.c.bf16 %v1257, %v1256
      %v1292 = vpack.c.bf16 %v1259, %v1258
      %v1293 = vpack.c.bf16 %v1261, %v1260
      %v1294 = vpack.c.bf16 %v1263, %v1262
      %v1295 = vpack.c.bf16 %v1265, %v1264
      %v1296 = vpack.c.bf16 %v1267, %v1266
      %v1297 = vpack.c.bf16 %v1269, %v1268
      %v1298 = vpack.c.bf16 %v1271, %v1270
      %v1299 = vpack.c.bf16 %v1273, %v1272
      %v1300 = vpack.c.bf16 %v1275, %v1274
      %v1301 = vpack.c.bf16 %v1277, %v1276
      %v1302 = vpack.c.bf16 %v1279, %v1278
      %v1303 = vpack.c.bf16 %v1281, %v1280
      %v1304 = vpack.c.bf16 %v1283, %v1282
      %v1305 = vpack.c.bf16 %v1285, %v1284
      %v1306 = vpack.c.bf16 %v1287, %v1286
      %v1307 = vpack.c.bf16 %v1289, %v1288
      %s1308 = scalar_lea.vmem %s248, 96
      %v1309 = vld [vmem:[%s1308] sm:$0xf]
      %v1310 = vld [vmem:[%s1308 + $0x4] sm:$0xf]
      %v1311 = vld [vmem:[%s1308 + $0x8] sm:$0xf]
      %v1312 = vld [vmem:[%s1308 + $0xc] sm:$0xf]
      %v1313 = vld [vmem:[%s1308 + $0x10] sm:$0xf]
      %v1314 = vld [vmem:[%s1308 + $0x14] sm:$0xf]
      %v1315 = vld [vmem:[%s1308 + $0x18] sm:$0xf]
      %v1316 = vld [vmem:[%s1308 + $0x1c] sm:$0xf]
      %v1325 = vunpack.c.l.b16 %v1309
      %v1326 = vunpack.c.l.b16 %v1310
      %v1327 = vunpack.c.l.b16 %v1311
      %v1328 = vunpack.c.l.b16 %v1312
      %v1329 = vunpack.c.l.b16 %v1313
      %v1330 = vunpack.c.l.b16 %v1314
      %v1331 = vunpack.c.l.b16 %v1315
      %v1332 = vunpack.c.l.b16 %v1316
      %v1333 = vpack.c.b16 %v1326, %v1325
      %v1334 = vpack.c.b16 %v1328, %v1327
      %v1335 = vpack.c.b16 %v1330, %v1329
      %v1336 = vpack.c.b16 %v1332, %v1331
      %v1342 = vsel %vm413, %v1290, 0
      %v1345 = vsel %vm413, %v1291, 0
      %v1348 = vsel %vm413, %v1292, 0
      %v1351 = vsel %vm413, %v1293, 0
      %v1354 = vsel %vm413, %v1294, 0
      %v1357 = vsel %vm413, %v1295, 0
      %v1360 = vsel %vm413, %v1296, 0
      %v1363 = vsel %vm413, %v1297, 0
      %v1366 = vsel %vm413, %v1298, 0
      %v1369 = vsel %vm413, %v1299, 0
      %v1372 = vsel %vm413, %v1300, 0
      %v1375 = vsel %vm413, %v1301, 0
      %v1378 = vsel %vm413, %v1302, 0
      %v1381 = vsel %vm413, %v1303, 0
      %v1384 = vsel %vm413, %v1304, 0
      %v1387 = vsel %vm413, %v1305, 0
      %v1390 = vsel %vm413, %v1306, 0
      %v1393 = vsel %vm413, %v1307, 0
      %1395 = vmatprep.subr.bf16.mxu0 0
      %1396 = vmatpush1.bf16.msra.mxu0 0
      %1397 = vmatprep.subr.bf16.mxu0 0
      %1398 = vmatpush1.bf16.msra.mxu0 0
      %1399 = vmatprep.subr.bf16.mxu0 0
      %1400 = vmatpush1.bf16.msra.mxu0 0
      %1401 = vmatprep.subr.bf16.mxu0 0
      %1402 = vmatpush1.bf16.msra.mxu0 0
      %1403 = vmatprep.subr.bf16.mxu0 0
      %1404 = vmatpush1.bf16.msra.mxu0 %v1336
      %1405 = vmatprep.subr.bf16.mxu0 0
      %1406 = vmatpush1.bf16.msra.mxu0 %v1335
      %1407 = vmatprep.subr.bf16.mxu0 0
      %1408 = vmatpush1.bf16.msra.mxu0 %v1334
      %1409 = vmatprep.subr.bf16.mxu0 0
      %1410 = vmatpush1.bf16.msra.mxu0 %v1333
      %1411 = vmatprep.subr.bf16.mxu0 0
      %1412 = vmatpush2.bf16.msra.mxu0 0
      %1413 = vmatprep.subr.bf16.mxu0 0
      %1414 = vmatpush2.bf16.msra.mxu0 0
      %1415 = vmatprep.subr.bf16.mxu0 0
      %1416 = vmatpush2.bf16.msra.mxu0 0
      %1417 = vmatprep.subr.bf16.mxu0 0
      %1418 = vmatpush2.bf16.msra.mxu0 0
      %1419 = vmatprep.subr.bf16.mxu0 0
      %1420 = vmatpush2.bf16.msra.mxu0 0
      %1421 = vmatprep.subr.bf16.mxu0 0
      %1422 = vmatpush2.bf16.msra.mxu0 0
      %1423 = vmatprep.subr.bf16.mxu0 0
      %1424 = vmatpush2.bf16.msra.mxu0 0
      %1425 = vmatprep.subr.bf16.mxu0 0
      %1426 = vmatpush2.bf16.msra.mxu0 0
      %1427 = vmatprep.mubr.bf16.mxu0 0
      %1428 = vmatmul.mubr.bf16.gmra.mxu0 %v1342
      %v1429 = vpop.f32.mrf.mxu0
      %v1430 = vadd.f32 0.0, %v1429
      %v1431 = vpop.f32.mrf.mxu0
      %v1432 = vpop.f32.mrf.mxu0
      %v1433 = vadd.f32 0.0, %v1432
      %v1434 = vpop.f32.mrf.mxu0
      %1435 = vmatprep.mubr.bf16.mxu0 0
      %1436 = vmatmul.mubr.bf16.gmra.mxu0 %v1345
      %v1437 = vpop.f32.mrf.mxu0
      %v1438 = vadd.f32 0.0, %v1437
      %v1439 = vpop.f32.mrf.mxu0
      %v1440 = vpop.f32.mrf.mxu0
      %v1441 = vadd.f32 0.0, %v1440
      %v1442 = vpop.f32.mrf.mxu0
      %1443 = vmatprep.mubr.bf16.mxu0 0
      %1444 = vmatmul.mubr.bf16.gmra.mxu0 %v1348
      %v1445 = vpop.f32.mrf.mxu0
      %v1446 = vadd.f32 0.0, %v1445
      %v1447 = vpop.f32.mrf.mxu0
      %v1448 = vpop.f32.mrf.mxu0
      %v1449 = vadd.f32 0.0, %v1448
      %v1450 = vpop.f32.mrf.mxu0
      %1451 = vmatprep.mubr.bf16.mxu0 0
      %1452 = vmatmul.mubr.bf16.gmra.mxu0 %v1351
      %v1453 = vpop.f32.mrf.mxu0
      %v1454 = vadd.f32 0.0, %v1453
      %v1455 = vpop.f32.mrf.mxu0
      %v1456 = vpop.f32.mrf.mxu0
      %v1457 = vadd.f32 0.0, %v1456
      %v1458 = vpop.f32.mrf.mxu0
      %1459 = vmatprep.mubr.bf16.mxu0 0
      %1460 = vmatmul.mubr.bf16.gmra.mxu0 %v1354
      %v1461 = vpop.f32.mrf.mxu0
      %v1462 = vadd.f32 0.0, %v1461
      %v1463 = vpop.f32.mrf.mxu0
      %v1464 = vpop.f32.mrf.mxu0
      %v1465 = vadd.f32 0.0, %v1464
      %v1466 = vpop.f32.mrf.mxu0
      %1467 = vmatprep.mubr.bf16.mxu0 0
      %1468 = vmatmul.mubr.bf16.gmra.mxu0 %v1357
      %v1469 = vpop.f32.mrf.mxu0
      %v1470 = vadd.f32 0.0, %v1469
      %v1471 = vpop.f32.mrf.mxu0
      %v1472 = vpop.f32.mrf.mxu0
      %v1473 = vadd.f32 0.0, %v1472
      %v1474 = vpop.f32.mrf.mxu0
      %1475 = vmatprep.mubr.bf16.mxu0 0
      %1476 = vmatmul.mubr.bf16.gmra.mxu0 %v1360
      %v1477 = vpop.f32.mrf.mxu0
      %v1478 = vadd.f32 0.0, %v1477
      %v1479 = vpop.f32.mrf.mxu0
      %v1480 = vpop.f32.mrf.mxu0
      %v1481 = vadd.f32 0.0, %v1480
      %v1482 = vpop.f32.mrf.mxu0
      %1483 = vmatprep.mubr.bf16.mxu0 0
      %1484 = vmatmul.mubr.bf16.gmra.mxu0 %v1363
      %v1485 = vpop.f32.mrf.mxu0
      %v1486 = vadd.f32 0.0, %v1485
      %v1487 = vpop.f32.mrf.mxu0
      %v1488 = vpop.f32.mrf.mxu0
      %v1489 = vadd.f32 0.0, %v1488
      %v1490 = vpop.f32.mrf.mxu0
      %1491 = vmatprep.mubr.bf16.mxu0 0
      %1492 = vmatmul.mubr.bf16.gmra.mxu0 %v1366
      %v1493 = vpop.f32.mrf.mxu0
      %v1494 = vadd.f32 0.0, %v1493
      %v1495 = vpop.f32.mrf.mxu0
      %v1496 = vpop.f32.mrf.mxu0
      %v1497 = vadd.f32 0.0, %v1496
      %v1498 = vpop.f32.mrf.mxu0
      %1499 = vmatprep.mubr.bf16.mxu0 0
      %1500 = vmatmul.mubr.bf16.gmra.mxu0 %v1369
      %v1501 = vpop.f32.mrf.mxu0
      %v1502 = vadd.f32 0.0, %v1501
      %v1503 = vpop.f32.mrf.mxu0
      %v1504 = vpop.f32.mrf.mxu0
      %v1505 = vadd.f32 0.0, %v1504
      %v1506 = vpop.f32.mrf.mxu0
      %1507 = vmatprep.mubr.bf16.mxu0 0
      %1508 = vmatmul.mubr.bf16.gmra.mxu0 %v1372
      %v1509 = vpop.f32.mrf.mxu0
      %v1510 = vadd.f32 0.0, %v1509
      %v1511 = vpop.f32.mrf.mxu0
      %v1512 = vpop.f32.mrf.mxu0
      %v1513 = vadd.f32 0.0, %v1512
      %v1514 = vpop.f32.mrf.mxu0
      %1515 = vmatprep.mubr.bf16.mxu0 0
      %1516 = vmatmul.mubr.bf16.gmra.mxu0 %v1375
      %v1517 = vpop.f32.mrf.mxu0
      %v1518 = vadd.f32 0.0, %v1517
      %v1519 = vpop.f32.mrf.mxu0
      %v1520 = vpop.f32.mrf.mxu0
      %v1521 = vadd.f32 0.0, %v1520
      %v1522 = vpop.f32.mrf.mxu0
      %1523 = vmatprep.mubr.bf16.mxu0 0
      %1524 = vmatmul.mubr.bf16.gmra.mxu0 %v1378
      %v1525 = vpop.f32.mrf.mxu0
      %v1526 = vadd.f32 0.0, %v1525
      %v1527 = vpop.f32.mrf.mxu0
      %v1528 = vpop.f32.mrf.mxu0
      %v1529 = vadd.f32 0.0, %v1528
      %v1530 = vpop.f32.mrf.mxu0
      %1531 = vmatprep.mubr.bf16.mxu0 0
      %1532 = vmatmul.mubr.bf16.gmra.mxu0 %v1381
      %v1533 = vpop.f32.mrf.mxu0
      %v1534 = vadd.f32 0.0, %v1533
      %v1535 = vpop.f32.mrf.mxu0
      %v1536 = vpop.f32.mrf.mxu0
      %v1537 = vadd.f32 0.0, %v1536
      %v1538 = vpop.f32.mrf.mxu0
      %1539 = vmatprep.mubr.bf16.mxu0 0
      %1540 = vmatmul.mubr.bf16.gmra.mxu0 %v1384
      %v1541 = vpop.f32.mrf.mxu0
      %v1542 = vadd.f32 0.0, %v1541
      %v1543 = vpop.f32.mrf.mxu0
      %v1544 = vpop.f32.mrf.mxu0
      %v1545 = vadd.f32 0.0, %v1544
      %v1546 = vpop.f32.mrf.mxu0
      %1547 = vmatprep.mubr.bf16.mxu0 0
      %1548 = vmatmul.mubr.bf16.gmra.mxu0 %v1387
      %v1549 = vpop.f32.mrf.mxu0
      %v1550 = vadd.f32 0.0, %v1549
      %v1551 = vpop.f32.mrf.mxu0
      %v1552 = vpop.f32.mrf.mxu0
      %v1553 = vadd.f32 0.0, %v1552
      %v1554 = vpop.f32.mrf.mxu0
      %1555 = vmatprep.mubr.bf16.mxu0 0
      %1556 = vmatmul.mubr.bf16.gmra.mxu0 %v1390
      %v1557 = vpop.f32.mrf.mxu0
      %v1558 = vadd.f32 0.0, %v1557
      %v1559 = vpop.f32.mrf.mxu0
      %v1560 = vpop.f32.mrf.mxu0
      %v1561 = vadd.f32 0.0, %v1560
      %v1562 = vpop.f32.mrf.mxu0
      %1563 = vmatprep.mubr.bf16.mxu0 0
      %1564 = vmatmul.mubr.bf16.gmra.mxu0 %v1393
      %v1565 = vpop.f32.mrf.mxu0
      %v1566 = vadd.f32 0.0, %v1565
      %v1567 = vpop.f32.mrf.mxu0
      %v1568 = vpop.f32.mrf.mxu0
      %v1569 = vadd.f32 0.0, %v1568
      %v1570 = vpop.f32.mrf.mxu0
      %1571 = vdwg.mxu0
      %v1572 = vadd.f32 %v1218, %v1430
      %v1573 = vadd.f32 %v1219, %v1433
      %v1574 = vadd.f32 %v1220, %v1438
      %v1575 = vadd.f32 %v1221, %v1441
      %v1576 = vadd.f32 %v1222, %v1446
      %v1577 = vadd.f32 %v1223, %v1449
      %v1578 = vadd.f32 %v1224, %v1454
      %v1579 = vadd.f32 %v1225, %v1457
      %v1580 = vadd.f32 %v1226, %v1462
      %v1581 = vadd.f32 %v1227, %v1465
      %v1582 = vadd.f32 %v1228, %v1470
      %v1583 = vadd.f32 %v1229, %v1473
      %v1584 = vadd.f32 %v1230, %v1478
      %v1585 = vadd.f32 %v1231, %v1481
      %v1586 = vadd.f32 %v1232, %v1486
      %v1587 = vadd.f32 %v1233, %v1489
      %v1588 = vadd.f32 %v1234, %v1494
      %v1589 = vadd.f32 %v1235, %v1497
      %v1590 = vadd.f32 %v1236, %v1502
      %v1591 = vadd.f32 %v1237, %v1505
      %v1592 = vadd.f32 %v1238, %v1510
      %v1593 = vadd.f32 %v1239, %v1513
      %v1594 = vadd.f32 %v1240, %v1518
      %v1595 = vadd.f32 %v1241, %v1521
      %v1596 = vadd.f32 %v1242, %v1526
      %v1597 = vadd.f32 %v1243, %v1529
      %v1598 = vadd.f32 %v1244, %v1534
      %v1599 = vadd.f32 %v1245, %v1537
      %v1600 = vadd.f32 %v1246, %v1542
      %v1601 = vadd.f32 %v1247, %v1545
      %v1602 = vadd.f32 %v1248, %v1550
      %v1603 = vadd.f32 %v1249, %v1553
      %v1604 = vadd.f32 %v1250, %v1558
      %v1605 = vadd.f32 %v1251, %v1561
      %v1606 = vadd.f32 %v1252, %v1566
      %v1607 = vadd.f32 %v1253, %v1569
      %v1608 = vld [vmem:[%s244 + $0x13] sm:$0xff]
      %v1609 = vld [vmem:[%s244 + $0x1b] sm:$0xff]
      %v1610 = vld [vmem:[%s244 + $0x23] sm:$0xff]
      %v1611 = vld [vmem:[%s244 + $0x2b] sm:$0xff]
      %v1612 = vld [vmem:[%s244 + $0x33] sm:$0xff]
      %v1613 = vld [vmem:[%s244 + $0x3b] sm:$0xff]
      %v1614 = vld [vmem:[%s244 + $0x43] sm:$0xff]
      %v1615 = vld [vmem:[%s244 + $0x4b] sm:$0xff]
      %v1616 = vld [vmem:[%s244 + $0x53] sm:$0xff]
      %v1617 = vld [vmem:[%s244 + $0x5b] sm:$0xff]
      %v1618 = vld [vmem:[%s244 + $0x63] sm:$0xff]
      %v1619 = vld [vmem:[%s244 + $0x6b] sm:$0xff]
      %v1620 = vld [vmem:[%s244 + $0x73] sm:$0xff]
      %v1621 = vld [vmem:[%s244 + $0x7b] sm:$0xff]
      %v1622 = vld [vmem:[%s244 + $0x83] sm:$0xff]
      %v1623 = vld [vmem:[%s244 + $0x8b] sm:$0xff]
      %v1624 = vld [vmem:[%s244 + $0x93] sm:$0xff]
      %v1625 = vld [vmem:[%s244 + $0x9b] sm:$0xff]
      %v1626 = vld [vmem:[%s244 + $0xa3] sm:$0xff]
      %v1627 = vld [vmem:[%s244 + $0xab] sm:$0xff]
      %v1628 = vld [vmem:[%s244 + $0xb3] sm:$0xff]
      %v1629 = vld [vmem:[%s244 + $0xbb] sm:$0xff]
      %v1630 = vld [vmem:[%s244 + $0xc3] sm:$0xff]
      %v1631 = vld [vmem:[%s244 + $0xcb] sm:$0xff]
      %v1632 = vld [vmem:[%s244 + $0xd3] sm:$0xff]
      %v1633 = vld [vmem:[%s244 + $0xdb] sm:$0xff]
      %v1634 = vld [vmem:[%s244 + $0xe3] sm:$0xff]
      %v1635 = vld [vmem:[%s244 + $0xeb] sm:$0xff]
      %v1636 = vld [vmem:[%s244 + $0xf3] sm:$0xff]
      %v1637 = vld [vmem:[%s244 + $0xfb] sm:$0xff]
      %v1638 = vld [vmem:[%s244 + $0x103] sm:$0xff]
      %v1639 = vld [vmem:[%s244 + $0x10b] sm:$0xff]
      %v1640 = vld [vmem:[%s244 + $0x113] sm:$0xff]
      %v1641 = vld [vmem:[%s244 + $0x11b] sm:$0xff]
      %v1642 = vld [vmem:[%s244 + $0x123] sm:$0xff]
      %v1643 = vld [vmem:[%s244 + $0x12b] sm:$0xff]
      %v1644 = vpack.c.bf16 %v1609, %v1608
      %v1645 = vpack.c.bf16 %v1611, %v1610
      %v1646 = vpack.c.bf16 %v1613, %v1612
      %v1647 = vpack.c.bf16 %v1615, %v1614
      %v1648 = vpack.c.bf16 %v1617, %v1616
      %v1649 = vpack.c.bf16 %v1619, %v1618
      %v1650 = vpack.c.bf16 %v1621, %v1620
      %v1651 = vpack.c.bf16 %v1623, %v1622
      %v1652 = vpack.c.bf16 %v1625, %v1624
      %v1653 = vpack.c.bf16 %v1627, %v1626
      %v1654 = vpack.c.bf16 %v1629, %v1628
      %v1655 = vpack.c.bf16 %v1631, %v1630
      %v1656 = vpack.c.bf16 %v1633, %v1632
      %v1657 = vpack.c.bf16 %v1635, %v1634
      %v1658 = vpack.c.bf16 %v1637, %v1636
      %v1659 = vpack.c.bf16 %v1639, %v1638
      %v1660 = vpack.c.bf16 %v1641, %v1640
      %v1661 = vpack.c.bf16 %v1643, %v1642
      %s1662 = scalar_lea.vmem %s248, 128
      %v1663 = vld [vmem:[%s1662] sm:$0xf]
      %v1664 = vld [vmem:[%s1662 + $0x4] sm:$0xf]
      %v1665 = vld [vmem:[%s1662 + $0x8] sm:$0xf]
      %v1666 = vld [vmem:[%s1662 + $0xc] sm:$0xf]
      %v1667 = vld [vmem:[%s1662 + $0x10] sm:$0xf]
      %v1668 = vld [vmem:[%s1662 + $0x14] sm:$0xf]
      %v1669 = vld [vmem:[%s1662 + $0x18] sm:$0xf]
      %v1670 = vld [vmem:[%s1662 + $0x1c] sm:$0xf]
      %v1679 = vunpack.c.l.b16 %v1663
      %v1680 = vunpack.c.l.b16 %v1664
      %v1681 = vunpack.c.l.b16 %v1665
      %v1682 = vunpack.c.l.b16 %v1666
      %v1683 = vunpack.c.l.b16 %v1667
      %v1684 = vunpack.c.l.b16 %v1668
      %v1685 = vunpack.c.l.b16 %v1669
      %v1686 = vunpack.c.l.b16 %v1670
      %v1687 = vpack.c.b16 %v1680, %v1679
      %v1688 = vpack.c.b16 %v1682, %v1681
      %v1689 = vpack.c.b16 %v1684, %v1683
      %v1690 = vpack.c.b16 %v1686, %v1685
      %v1696 = vsel %vm413, %v1644, 0
      %v1699 = vsel %vm413, %v1645, 0
      %v1702 = vsel %vm413, %v1646, 0
      %v1705 = vsel %vm413, %v1647, 0
      %v1708 = vsel %vm413, %v1648, 0
      %v1711 = vsel %vm413, %v1649, 0
      %v1714 = vsel %vm413, %v1650, 0
      %v1717 = vsel %vm413, %v1651, 0
      %v1720 = vsel %vm413, %v1652, 0
      %v1723 = vsel %vm413, %v1653, 0
      %v1726 = vsel %vm413, %v1654, 0
      %v1729 = vsel %vm413, %v1655, 0
      %v1732 = vsel %vm413, %v1656, 0
      %v1735 = vsel %vm413, %v1657, 0
      %v1738 = vsel %vm413, %v1658, 0
      %v1741 = vsel %vm413, %v1659, 0
      %v1744 = vsel %vm413, %v1660, 0
      %v1747 = vsel %vm413, %v1661, 0
      %1749 = vmatprep.subr.bf16.mxu0 0
      %1750 = vmatpush1.bf16.msra.mxu0 0
      %1751 = vmatprep.subr.bf16.mxu0 0
      %1752 = vmatpush1.bf16.msra.mxu0 0
      %1753 = vmatprep.subr.bf16.mxu0 0
      %1754 = vmatpush1.bf16.msra.mxu0 0
      %1755 = vmatprep.subr.bf16.mxu0 0
      %1756 = vmatpush1.bf16.msra.mxu0 0
      %1757 = vmatprep.subr.bf16.mxu0 0
      %1758 = vmatpush1.bf16.msra.mxu0 %v1690
      %1759 = vmatprep.subr.bf16.mxu0 0
      %1760 = vmatpush1.bf16.msra.mxu0 %v1689
      %1761 = vmatprep.subr.bf16.mxu0 0
      %1762 = vmatpush1.bf16.msra.mxu0 %v1688
      %1763 = vmatprep.subr.bf16.mxu0 0
      %1764 = vmatpush1.bf16.msra.mxu0 %v1687
      %1765 = vmatprep.subr.bf16.mxu0 0
      %1766 = vmatpush2.bf16.msra.mxu0 0
      %1767 = vmatprep.subr.bf16.mxu0 0
      %1768 = vmatpush2.bf16.msra.mxu0 0
      %1769 = vmatprep.subr.bf16.mxu0 0
      %1770 = vmatpush2.bf16.msra.mxu0 0
      %1771 = vmatprep.subr.bf16.mxu0 0
      %1772 = vmatpush2.bf16.msra.mxu0 0
      %1773 = vmatprep.subr.bf16.mxu0 0
      %1774 = vmatpush2.bf16.msra.mxu0 0
      %1775 = vmatprep.subr.bf16.mxu0 0
      %1776 = vmatpush2.bf16.msra.mxu0 0
      %1777 = vmatprep.subr.bf16.mxu0 0
      %1778 = vmatpush2.bf16.msra.mxu0 0
      %1779 = vmatprep.subr.bf16.mxu0 0
      %1780 = vmatpush2.bf16.msra.mxu0 0
      %1781 = vmatprep.mubr.bf16.mxu0 0
      %1782 = vmatmul.mubr.bf16.gmra.mxu0 %v1696
      %v1783 = vpop.f32.mrf.mxu0
      %v1784 = vadd.f32 0.0, %v1783
      %v1785 = vpop.f32.mrf.mxu0
      %v1786 = vpop.f32.mrf.mxu0
      %v1787 = vadd.f32 0.0, %v1786
      %v1788 = vpop.f32.mrf.mxu0
      %1789 = vmatprep.mubr.bf16.mxu0 0
      %1790 = vmatmul.mubr.bf16.gmra.mxu0 %v1699
      %v1791 = vpop.f32.mrf.mxu0
      %v1792 = vadd.f32 0.0, %v1791
      %v1793 = vpop.f32.mrf.mxu0
      %v1794 = vpop.f32.mrf.mxu0
      %v1795 = vadd.f32 0.0, %v1794
      %v1796 = vpop.f32.mrf.mxu0
      %1797 = vmatprep.mubr.bf16.mxu0 0
      %1798 = vmatmul.mubr.bf16.gmra.mxu0 %v1702
      %v1799 = vpop.f32.mrf.mxu0
      %v1800 = vadd.f32 0.0, %v1799
      %v1801 = vpop.f32.mrf.mxu0
      %v1802 = vpop.f32.mrf.mxu0
      %v1803 = vadd.f32 0.0, %v1802
      %v1804 = vpop.f32.mrf.mxu0
      %1805 = vmatprep.mubr.bf16.mxu0 0
      %1806 = vmatmul.mubr.bf16.gmra.mxu0 %v1705
      %v1807 = vpop.f32.mrf.mxu0
      %v1808 = vadd.f32 0.0, %v1807
      %v1809 = vpop.f32.mrf.mxu0
      %v1810 = vpop.f32.mrf.mxu0
      %v1811 = vadd.f32 0.0, %v1810
      %v1812 = vpop.f32.mrf.mxu0
      %1813 = vmatprep.mubr.bf16.mxu0 0
      %1814 = vmatmul.mubr.bf16.gmra.mxu0 %v1708
      %v1815 = vpop.f32.mrf.mxu0
      %v1816 = vadd.f32 0.0, %v1815
      %v1817 = vpop.f32.mrf.mxu0
      %v1818 = vpop.f32.mrf.mxu0
      %v1819 = vadd.f32 0.0, %v1818
      %v1820 = vpop.f32.mrf.mxu0
      %1821 = vmatprep.mubr.bf16.mxu0 0
      %1822 = vmatmul.mubr.bf16.gmra.mxu0 %v1711
      %v1823 = vpop.f32.mrf.mxu0
      %v1824 = vadd.f32 0.0, %v1823
      %v1825 = vpop.f32.mrf.mxu0
      %v1826 = vpop.f32.mrf.mxu0
      %v1827 = vadd.f32 0.0, %v1826
      %v1828 = vpop.f32.mrf.mxu0
      %1829 = vmatprep.mubr.bf16.mxu0 0
      %1830 = vmatmul.mubr.bf16.gmra.mxu0 %v1714
      %v1831 = vpop.f32.mrf.mxu0
      %v1832 = vadd.f32 0.0, %v1831
      %v1833 = vpop.f32.mrf.mxu0
      %v1834 = vpop.f32.mrf.mxu0
      %v1835 = vadd.f32 0.0, %v1834
      %v1836 = vpop.f32.mrf.mxu0
      %1837 = vmatprep.mubr.bf16.mxu0 0
      %1838 = vmatmul.mubr.bf16.gmra.mxu0 %v1717
      %v1839 = vpop.f32.mrf.mxu0
      %v1840 = vadd.f32 0.0, %v1839
      %v1841 = vpop.f32.mrf.mxu0
      %v1842 = vpop.f32.mrf.mxu0
      %v1843 = vadd.f32 0.0, %v1842
      %v1844 = vpop.f32.mrf.mxu0
      %1845 = vmatprep.mubr.bf16.mxu0 0
      %1846 = vmatmul.mubr.bf16.gmra.mxu0 %v1720
      %v1847 = vpop.f32.mrf.mxu0
      %v1848 = vadd.f32 0.0, %v1847
      %v1849 = vpop.f32.mrf.mxu0
      %v1850 = vpop.f32.mrf.mxu0
      %v1851 = vadd.f32 0.0, %v1850
      %v1852 = vpop.f32.mrf.mxu0
      %1853 = vmatprep.mubr.bf16.mxu0 0
      %1854 = vmatmul.mubr.bf16.gmra.mxu0 %v1723
      %v1855 = vpop.f32.mrf.mxu0
      %v1856 = vadd.f32 0.0, %v1855
      %v1857 = vpop.f32.mrf.mxu0
      %v1858 = vpop.f32.mrf.mxu0
      %v1859 = vadd.f32 0.0, %v1858
      %v1860 = vpop.f32.mrf.mxu0
      %1861 = vmatprep.mubr.bf16.mxu0 0
      %1862 = vmatmul.mubr.bf16.gmra.mxu0 %v1726
      %v1863 = vpop.f32.mrf.mxu0
      %v1864 = vadd.f32 0.0, %v1863
      %v1865 = vpop.f32.mrf.mxu0
      %v1866 = vpop.f32.mrf.mxu0
      %v1867 = vadd.f32 0.0, %v1866
      %v1868 = vpop.f32.mrf.mxu0
      %1869 = vmatprep.mubr.bf16.mxu0 0
      %1870 = vmatmul.mubr.bf16.gmra.mxu0 %v1729
      %v1871 = vpop.f32.mrf.mxu0
      %v1872 = vadd.f32 0.0, %v1871
      %v1873 = vpop.f32.mrf.mxu0
      %v1874 = vpop.f32.mrf.mxu0
      %v1875 = vadd.f32 0.0, %v1874
      %v1876 = vpop.f32.mrf.mxu0
      %1877 = vmatprep.mubr.bf16.mxu0 0
      %1878 = vmatmul.mubr.bf16.gmra.mxu0 %v1732
      %v1879 = vpop.f32.mrf.mxu0
      %v1880 = vadd.f32 0.0, %v1879
      %v1881 = vpop.f32.mrf.mxu0
      %v1882 = vpop.f32.mrf.mxu0
      %v1883 = vadd.f32 0.0, %v1882
      %v1884 = vpop.f32.mrf.mxu0
      %1885 = vmatprep.mubr.bf16.mxu0 0
      %1886 = vmatmul.mubr.bf16.gmra.mxu0 %v1735
      %v1887 = vpop.f32.mrf.mxu0
      %v1888 = vadd.f32 0.0, %v1887
      %v1889 = vpop.f32.mrf.mxu0
      %v1890 = vpop.f32.mrf.mxu0
      %v1891 = vadd.f32 0.0, %v1890
      %v1892 = vpop.f32.mrf.mxu0
      %1893 = vmatprep.mubr.bf16.mxu0 0
      %1894 = vmatmul.mubr.bf16.gmra.mxu0 %v1738
      %v1895 = vpop.f32.mrf.mxu0
      %v1896 = vadd.f32 0.0, %v1895
      %v1897 = vpop.f32.mrf.mxu0
      %v1898 = vpop.f32.mrf.mxu0
      %v1899 = vadd.f32 0.0, %v1898
      %v1900 = vpop.f32.mrf.mxu0
      %1901 = vmatprep.mubr.bf16.mxu0 0
      %1902 = vmatmul.mubr.bf16.gmra.mxu0 %v1741
      %v1903 = vpop.f32.mrf.mxu0
      %v1904 = vadd.f32 0.0, %v1903
      %v1905 = vpop.f32.mrf.mxu0
      %v1906 = vpop.f32.mrf.mxu0
      %v1907 = vadd.f32 0.0, %v1906
      %v1908 = vpop.f32.mrf.mxu0
      %1909 = vmatprep.mubr.bf16.mxu0 0
      %1910 = vmatmul.mubr.bf16.gmra.mxu0 %v1744
      %v1911 = vpop.f32.mrf.mxu0
      %v1912 = vadd.f32 0.0, %v1911
      %v1913 = vpop.f32.mrf.mxu0
      %v1914 = vpop.f32.mrf.mxu0
      %v1915 = vadd.f32 0.0, %v1914
      %v1916 = vpop.f32.mrf.mxu0
      %1917 = vmatprep.mubr.bf16.mxu0 0
      %1918 = vmatmul.mubr.bf16.gmra.mxu0 %v1747
      %v1919 = vpop.f32.mrf.mxu0
      %v1920 = vadd.f32 0.0, %v1919
      %v1921 = vpop.f32.mrf.mxu0
      %v1922 = vpop.f32.mrf.mxu0
      %v1923 = vadd.f32 0.0, %v1922
      %v1924 = vpop.f32.mrf.mxu0
      %1925 = vdwg.mxu0
      %v1926 = vadd.f32 %v1572, %v1784
      %v1927 = vadd.f32 %v1573, %v1787
      %v1928 = vadd.f32 %v1574, %v1792
      %v1929 = vadd.f32 %v1575, %v1795
      %v1930 = vadd.f32 %v1576, %v1800
      %v1931 = vadd.f32 %v1577, %v1803
      %v1932 = vadd.f32 %v1578, %v1808
      %v1933 = vadd.f32 %v1579, %v1811
      %v1934 = vadd.f32 %v1580, %v1816
      %v1935 = vadd.f32 %v1581, %v1819
      %v1936 = vadd.f32 %v1582, %v1824
      %v1937 = vadd.f32 %v1583, %v1827
      %v1938 = vadd.f32 %v1584, %v1832
      %v1939 = vadd.f32 %v1585, %v1835
      %v1940 = vadd.f32 %v1586, %v1840
      %v1941 = vadd.f32 %v1587, %v1843
      %v1942 = vadd.f32 %v1588, %v1848
      %v1943 = vadd.f32 %v1589, %v1851
      %v1944 = vadd.f32 %v1590, %v1856
      %v1945 = vadd.f32 %v1591, %v1859
      %v1946 = vadd.f32 %v1592, %v1864
      %v1947 = vadd.f32 %v1593, %v1867
      %v1948 = vadd.f32 %v1594, %v1872
      %v1949 = vadd.f32 %v1595, %v1875
      %v1950 = vadd.f32 %v1596, %v1880
      %v1951 = vadd.f32 %v1597, %v1883
      %v1952 = vadd.f32 %v1598, %v1888
      %v1953 = vadd.f32 %v1599, %v1891
      %v1954 = vadd.f32 %v1600, %v1896
      %v1955 = vadd.f32 %v1601, %v1899
      %v1956 = vadd.f32 %v1602, %v1904
      %v1957 = vadd.f32 %v1603, %v1907
      %v1958 = vadd.f32 %v1604, %v1912
      %v1959 = vadd.f32 %v1605, %v1915
      %v1960 = vadd.f32 %v1606, %v1920
      %v1961 = vadd.f32 %v1607, %v1923
      %v1962 = vld [vmem:[%s244 + $0x14] sm:$0xff]
      %v1963 = vld [vmem:[%s244 + $0x1c] sm:$0xff]
      %v1964 = vld [vmem:[%s244 + $0x24] sm:$0xff]
      %v1965 = vld [vmem:[%s244 + $0x2c] sm:$0xff]
      %v1966 = vld [vmem:[%s244 + $0x34] sm:$0xff]
      %v1967 = vld [vmem:[%s244 + $0x3c] sm:$0xff]
      %v1968 = vld [vmem:[%s244 + $0x44] sm:$0xff]
      %v1969 = vld [vmem:[%s244 + $0x4c] sm:$0xff]
      %v1970 = vld [vmem:[%s244 + $0x54] sm:$0xff]
      %v1971 = vld [vmem:[%s244 + $0x5c] sm:$0xff]
      %v1972 = vld [vmem:[%s244 + $0x64] sm:$0xff]
      %v1973 = vld [vmem:[%s244 + $0x6c] sm:$0xff]
      %v1974 = vld [vmem:[%s244 + $0x74] sm:$0xff]
      %v1975 = vld [vmem:[%s244 + $0x7c] sm:$0xff]
      %v1976 = vld [vmem:[%s244 + $0x84] sm:$0xff]
      %v1977 = vld [vmem:[%s244 + $0x8c] sm:$0xff]
      %v1978 = vld [vmem:[%s244 + $0x94] sm:$0xff]
      %v1979 = vld [vmem:[%s244 + $0x9c] sm:$0xff]
      %v1980 = vld [vmem:[%s244 + $0xa4] sm:$0xff]
      %v1981 = vld [vmem:[%s244 + $0xac] sm:$0xff]
      %v1982 = vld [vmem:[%s244 + $0xb4] sm:$0xff]
      %v1983 = vld [vmem:[%s244 + $0xbc] sm:$0xff]
      %v1984 = vld [vmem:[%s244 + $0xc4] sm:$0xff]
      %v1985 = vld [vmem:[%s244 + $0xcc] sm:$0xff]
      %v1986 = vld [vmem:[%s244 + $0xd4] sm:$0xff]
      %v1987 = vld [vmem:[%s244 + $0xdc] sm:$0xff]
      %v1988 = vld [vmem:[%s244 + $0xe4] sm:$0xff]
      %v1989 = vld [vmem:[%s244 + $0xec] sm:$0xff]
      %v1990 = vld [vmem:[%s244 + $0xf4] sm:$0xff]
      %v1991 = vld [vmem:[%s244 + $0xfc] sm:$0xff]
      %v1992 = vld [vmem:[%s244 + $0x104] sm:$0xff]
      %v1993 = vld [vmem:[%s244 + $0x10c] sm:$0xff]
      %v1994 = vld [vmem:[%s244 + $0x114] sm:$0xff]
      %v1995 = vld [vmem:[%s244 + $0x11c] sm:$0xff]
      %v1996 = vld [vmem:[%s244 + $0x124] sm:$0xff]
      %v1997 = vld [vmem:[%s244 + $0x12c] sm:$0xff]
      %v1998 = vpack.c.bf16 %v1963, %v1962
      %v1999 = vpack.c.bf16 %v1965, %v1964
      %v2000 = vpack.c.bf16 %v1967, %v1966
      %v2001 = vpack.c.bf16 %v1969, %v1968
      %v2002 = vpack.c.bf16 %v1971, %v1970
      %v2003 = vpack.c.bf16 %v1973, %v1972
      %v2004 = vpack.c.bf16 %v1975, %v1974
      %v2005 = vpack.c.bf16 %v1977, %v1976
      %v2006 = vpack.c.bf16 %v1979, %v1978
      %v2007 = vpack.c.bf16 %v1981, %v1980
      %v2008 = vpack.c.bf16 %v1983, %v1982
      %v2009 = vpack.c.bf16 %v1985, %v1984
      %v2010 = vpack.c.bf16 %v1987, %v1986
      %v2011 = vpack.c.bf16 %v1989, %v1988
      %v2012 = vpack.c.bf16 %v1991, %v1990
      %v2013 = vpack.c.bf16 %v1993, %v1992
      %v2014 = vpack.c.bf16 %v1995, %v1994
      %v2015 = vpack.c.bf16 %v1997, %v1996
      %s2016 = scalar_lea.vmem %s248, 160
      %v2017 = vld [vmem:[%s2016] sm:$0xf]
      %v2018 = vld [vmem:[%s2016 + $0x4] sm:$0xf]
      %v2019 = vld [vmem:[%s2016 + $0x8] sm:$0xf]
      %v2020 = vld [vmem:[%s2016 + $0xc] sm:$0xf]
      %v2021 = vld [vmem:[%s2016 + $0x10] sm:$0xf]
      %v2022 = vld [vmem:[%s2016 + $0x14] sm:$0xf]
      %v2023 = vld [vmem:[%s2016 + $0x18] sm:$0xf]
      %v2024 = vld [vmem:[%s2016 + $0x1c] sm:$0xf]
      %v2033 = vunpack.c.l.b16 %v2017
      %v2034 = vunpack.c.l.b16 %v2018
      %v2035 = vunpack.c.l.b16 %v2019
      %v2036 = vunpack.c.l.b16 %v2020
      %v2037 = vunpack.c.l.b16 %v2021
      %v2038 = vunpack.c.l.b16 %v2022
      %v2039 = vunpack.c.l.b16 %v2023
      %v2040 = vunpack.c.l.b16 %v2024
      %v2041 = vpack.c.b16 %v2034, %v2033
      %v2042 = vpack.c.b16 %v2036, %v2035
      %v2043 = vpack.c.b16 %v2038, %v2037
      %v2044 = vpack.c.b16 %v2040, %v2039
      %v2050 = vsel %vm413, %v1998, 0
      %v2053 = vsel %vm413, %v1999, 0
      %v2056 = vsel %vm413, %v2000, 0
      %v2059 = vsel %vm413, %v2001, 0
      %v2062 = vsel %vm413, %v2002, 0
      %v2065 = vsel %vm413, %v2003, 0
      %v2068 = vsel %vm413, %v2004, 0
      %v2071 = vsel %vm413, %v2005, 0
      %v2074 = vsel %vm413, %v2006, 0
      %v2077 = vsel %vm413, %v2007, 0
      %v2080 = vsel %vm413, %v2008, 0
      %v2083 = vsel %vm413, %v2009, 0
      %v2086 = vsel %vm413, %v2010, 0
      %v2089 = vsel %vm413, %v2011, 0
      %v2092 = vsel %vm413, %v2012, 0
      %v2095 = vsel %vm413, %v2013, 0
      %v2098 = vsel %vm413, %v2014, 0
      %v2101 = vsel %vm413, %v2015, 0
      %2103 = vmatprep.subr.bf16.mxu0 0
      %2104 = vmatpush1.bf16.msra.mxu0 0
      %2105 = vmatprep.subr.bf16.mxu0 0
      %2106 = vmatpush1.bf16.msra.mxu0 0
      %2107 = vmatprep.subr.bf16.mxu0 0
      %2108 = vmatpush1.bf16.msra.mxu0 0
      %2109 = vmatprep.subr.bf16.mxu0 0
      %2110 = vmatpush1.bf16.msra.mxu0 0
      %2111 = vmatprep.subr.bf16.mxu0 0
      %2112 = vmatpush1.bf16.msra.mxu0 %v2044
      %2113 = vmatprep.subr.bf16.mxu0 0
      %2114 = vmatpush1.bf16.msra.mxu0 %v2043
      %2115 = vmatprep.subr.bf16.mxu0 0
      %2116 = vmatpush1.bf16.msra.mxu0 %v2042
      %2117 = vmatprep.subr.bf16.mxu0 0
      %2118 = vmatpush1.bf16.msra.mxu0 %v2041
      %2119 = vmatprep.subr.bf16.mxu0 0
      %2120 = vmatpush2.bf16.msra.mxu0 0
      %2121 = vmatprep.subr.bf16.mxu0 0
      %2122 = vmatpush2.bf16.msra.mxu0 0
      %2123 = vmatprep.subr.bf16.mxu0 0
      %2124 = vmatpush2.bf16.msra.mxu0 0
      %2125 = vmatprep.subr.bf16.mxu0 0
      %2126 = vmatpush2.bf16.msra.mxu0 0
      %2127 = vmatprep.subr.bf16.mxu0 0
      %2128 = vmatpush2.bf16.msra.mxu0 0
      %2129 = vmatprep.subr.bf16.mxu0 0
      %2130 = vmatpush2.bf16.msra.mxu0 0
      %2131 = vmatprep.subr.bf16.mxu0 0
      %2132 = vmatpush2.bf16.msra.mxu0 0
      %2133 = vmatprep.subr.bf16.mxu0 0
      %2134 = vmatpush2.bf16.msra.mxu0 0
      %2135 = vmatprep.mubr.bf16.mxu0 0
      %2136 = vmatmul.mubr.bf16.gmra.mxu0 %v2050
      %v2137 = vpop.f32.mrf.mxu0
      %v2138 = vadd.f32 0.0, %v2137
      %v2139 = vpop.f32.mrf.mxu0
      %v2140 = vpop.f32.mrf.mxu0
      %v2141 = vadd.f32 0.0, %v2140
      %v2142 = vpop.f32.mrf.mxu0
      %2143 = vmatprep.mubr.bf16.mxu0 0
      %2144 = vmatmul.mubr.bf16.gmra.mxu0 %v2053
      %v2145 = vpop.f32.mrf.mxu0
      %v2146 = vadd.f32 0.0, %v2145
      %v2147 = vpop.f32.mrf.mxu0
      %v2148 = vpop.f32.mrf.mxu0
      %v2149 = vadd.f32 0.0, %v2148
      %v2150 = vpop.f32.mrf.mxu0
      %2151 = vmatprep.mubr.bf16.mxu0 0
      %2152 = vmatmul.mubr.bf16.gmra.mxu0 %v2056
      %v2153 = vpop.f32.mrf.mxu0
      %v2154 = vadd.f32 0.0, %v2153
      %v2155 = vpop.f32.mrf.mxu0
      %v2156 = vpop.f32.mrf.mxu0
      %v2157 = vadd.f32 0.0, %v2156
      %v2158 = vpop.f32.mrf.mxu0
      %2159 = vmatprep.mubr.bf16.mxu0 0
      %2160 = vmatmul.mubr.bf16.gmra.mxu0 %v2059
      %v2161 = vpop.f32.mrf.mxu0
      %v2162 = vadd.f32 0.0, %v2161
      %v2163 = vpop.f32.mrf.mxu0
      %v2164 = vpop.f32.mrf.mxu0
      %v2165 = vadd.f32 0.0, %v2164
      %v2166 = vpop.f32.mrf.mxu0
      %2167 = vmatprep.mubr.bf16.mxu0 0
      %2168 = vmatmul.mubr.bf16.gmra.mxu0 %v2062
      %v2169 = vpop.f32.mrf.mxu0
      %v2170 = vadd.f32 0.0, %v2169
      %v2171 = vpop.f32.mrf.mxu0
      %v2172 = vpop.f32.mrf.mxu0
      %v2173 = vadd.f32 0.0, %v2172
      %v2174 = vpop.f32.mrf.mxu0
      %2175 = vmatprep.mubr.bf16.mxu0 0
      %2176 = vmatmul.mubr.bf16.gmra.mxu0 %v2065
      %v2177 = vpop.f32.mrf.mxu0
      %v2178 = vadd.f32 0.0, %v2177
      %v2179 = vpop.f32.mrf.mxu0
      %v2180 = vpop.f32.mrf.mxu0
      %v2181 = vadd.f32 0.0, %v2180
      %v2182 = vpop.f32.mrf.mxu0
      %2183 = vmatprep.mubr.bf16.mxu0 0
      %2184 = vmatmul.mubr.bf16.gmra.mxu0 %v2068
      %v2185 = vpop.f32.mrf.mxu0
      %v2186 = vadd.f32 0.0, %v2185
      %v2187 = vpop.f32.mrf.mxu0
      %v2188 = vpop.f32.mrf.mxu0
      %v2189 = vadd.f32 0.0, %v2188
      %v2190 = vpop.f32.mrf.mxu0
      %2191 = vmatprep.mubr.bf16.mxu0 0
      %2192 = vmatmul.mubr.bf16.gmra.mxu0 %v2071
      %v2193 = vpop.f32.mrf.mxu0
      %v2194 = vadd.f32 0.0, %v2193
      %v2195 = vpop.f32.mrf.mxu0
      %v2196 = vpop.f32.mrf.mxu0
      %v2197 = vadd.f32 0.0, %v2196
      %v2198 = vpop.f32.mrf.mxu0
      %2199 = vmatprep.mubr.bf16.mxu0 0
      %2200 = vmatmul.mubr.bf16.gmra.mxu0 %v2074
      %v2201 = vpop.f32.mrf.mxu0
      %v2202 = vadd.f32 0.0, %v2201
      %v2203 = vpop.f32.mrf.mxu0
      %v2204 = vpop.f32.mrf.mxu0
      %v2205 = vadd.f32 0.0, %v2204
      %v2206 = vpop.f32.mrf.mxu0
      %2207 = vmatprep.mubr.bf16.mxu0 0
      %2208 = vmatmul.mubr.bf16.gmra.mxu0 %v2077
      %v2209 = vpop.f32.mrf.mxu0
      %v2210 = vadd.f32 0.0, %v2209
      %v2211 = vpop.f32.mrf.mxu0
      %v2212 = vpop.f32.mrf.mxu0
      %v2213 = vadd.f32 0.0, %v2212
      %v2214 = vpop.f32.mrf.mxu0
      %2215 = vmatprep.mubr.bf16.mxu0 0
      %2216 = vmatmul.mubr.bf16.gmra.mxu0 %v2080
      %v2217 = vpop.f32.mrf.mxu0
      %v2218 = vadd.f32 0.0, %v2217
      %v2219 = vpop.f32.mrf.mxu0
      %v2220 = vpop.f32.mrf.mxu0
      %v2221 = vadd.f32 0.0, %v2220
      %v2222 = vpop.f32.mrf.mxu0
      %2223 = vmatprep.mubr.bf16.mxu0 0
      %2224 = vmatmul.mubr.bf16.gmra.mxu0 %v2083
      %v2225 = vpop.f32.mrf.mxu0
      %v2226 = vadd.f32 0.0, %v2225
      %v2227 = vpop.f32.mrf.mxu0
      %v2228 = vpop.f32.mrf.mxu0
      %v2229 = vadd.f32 0.0, %v2228
      %v2230 = vpop.f32.mrf.mxu0
      %2231 = vmatprep.mubr.bf16.mxu0 0
      %2232 = vmatmul.mubr.bf16.gmra.mxu0 %v2086
      %v2233 = vpop.f32.mrf.mxu0
      %v2234 = vadd.f32 0.0, %v2233
      %v2235 = vpop.f32.mrf.mxu0
      %v2236 = vpop.f32.mrf.mxu0
      %v2237 = vadd.f32 0.0, %v2236
      %v2238 = vpop.f32.mrf.mxu0
      %2239 = vmatprep.mubr.bf16.mxu0 0
      %2240 = vmatmul.mubr.bf16.gmra.mxu0 %v2089
      %v2241 = vpop.f32.mrf.mxu0
      %v2242 = vadd.f32 0.0, %v2241
      %v2243 = vpop.f32.mrf.mxu0
      %v2244 = vpop.f32.mrf.mxu0
      %v2245 = vadd.f32 0.0, %v2244
      %v2246 = vpop.f32.mrf.mxu0
      %2247 = vmatprep.mubr.bf16.mxu0 0
      %2248 = vmatmul.mubr.bf16.gmra.mxu0 %v2092
      %v2249 = vpop.f32.mrf.mxu0
      %v2250 = vadd.f32 0.0, %v2249
      %v2251 = vpop.f32.mrf.mxu0
      %v2252 = vpop.f32.mrf.mxu0
      %v2253 = vadd.f32 0.0, %v2252
      %v2254 = vpop.f32.mrf.mxu0
      %2255 = vmatprep.mubr.bf16.mxu0 0
      %2256 = vmatmul.mubr.bf16.gmra.mxu0 %v2095
      %v2257 = vpop.f32.mrf.mxu0
      %v2258 = vadd.f32 0.0, %v2257
      %v2259 = vpop.f32.mrf.mxu0
      %v2260 = vpop.f32.mrf.mxu0
      %v2261 = vadd.f32 0.0, %v2260
      %v2262 = vpop.f32.mrf.mxu0
      %2263 = vmatprep.mubr.bf16.mxu0 0
      %2264 = vmatmul.mubr.bf16.gmra.mxu0 %v2098
      %v2265 = vpop.f32.mrf.mxu0
      %v2266 = vadd.f32 0.0, %v2265
      %v2267 = vpop.f32.mrf.mxu0
      %v2268 = vpop.f32.mrf.mxu0
      %v2269 = vadd.f32 0.0, %v2268
      %v2270 = vpop.f32.mrf.mxu0
      %2271 = vmatprep.mubr.bf16.mxu0 0
      %2272 = vmatmul.mubr.bf16.gmra.mxu0 %v2101
      %v2273 = vpop.f32.mrf.mxu0
      %v2274 = vadd.f32 0.0, %v2273
      %v2275 = vpop.f32.mrf.mxu0
      %v2276 = vpop.f32.mrf.mxu0
      %v2277 = vadd.f32 0.0, %v2276
      %v2278 = vpop.f32.mrf.mxu0
      %2279 = vdwg.mxu0
      %v2280 = vadd.f32 %v1926, %v2138
      %v2281 = vadd.f32 %v1927, %v2141
      %v2282 = vadd.f32 %v1928, %v2146
      %v2283 = vadd.f32 %v1929, %v2149
      %v2284 = vadd.f32 %v1930, %v2154
      %v2285 = vadd.f32 %v1931, %v2157
      %v2286 = vadd.f32 %v1932, %v2162
      %v2287 = vadd.f32 %v1933, %v2165
      %v2288 = vadd.f32 %v1934, %v2170
      %v2289 = vadd.f32 %v1935, %v2173
      %v2290 = vadd.f32 %v1936, %v2178
      %v2291 = vadd.f32 %v1937, %v2181
      %v2292 = vadd.f32 %v1938, %v2186
      %v2293 = vadd.f32 %v1939, %v2189
      %v2294 = vadd.f32 %v1940, %v2194
      %v2295 = vadd.f32 %v1941, %v2197
      %v2296 = vadd.f32 %v1942, %v2202
      %v2297 = vadd.f32 %v1943, %v2205
      %v2298 = vadd.f32 %v1944, %v2210
      %v2299 = vadd.f32 %v1945, %v2213
      %v2300 = vadd.f32 %v1946, %v2218
      %v2301 = vadd.f32 %v1947, %v2221
      %v2302 = vadd.f32 %v1948, %v2226
      %v2303 = vadd.f32 %v1949, %v2229
      %v2304 = vadd.f32 %v1950, %v2234
      %v2305 = vadd.f32 %v1951, %v2237
      %v2306 = vadd.f32 %v1952, %v2242
      %v2307 = vadd.f32 %v1953, %v2245
      %v2308 = vadd.f32 %v1954, %v2250
      %v2309 = vadd.f32 %v1955, %v2253
      %v2310 = vadd.f32 %v1956, %v2258
      %v2311 = vadd.f32 %v1957, %v2261
      %v2312 = vadd.f32 %v1958, %v2266
      %v2313 = vadd.f32 %v1959, %v2269
      %v2314 = vadd.f32 %v1960, %v2274
      %v2315 = vadd.f32 %v1961, %v2277
      %v2316 = vld [vmem:[%s244 + $0x24] sm:$0xff]
      %v2317 = vld [vmem:[%s244 + $0x2c] sm:$0xff]
      %v2318 = vld [vmem:[%s244 + $0x34] sm:$0xff]
      %v2319 = vld [vmem:[%s244 + $0x3c] sm:$0xff]
      %v2320 = vld [vmem:[%s244 + $0x44] sm:$0xff]
      %v2321 = vld [vmem:[%s244 + $0x4c] sm:$0xff]
      %v2322 = vld [vmem:[%s244 + $0x54] sm:$0xff]
      %v2323 = vld [vmem:[%s244 + $0x5c] sm:$0xff]
      %v2324 = vld [vmem:[%s244 + $0x64] sm:$0xff]
      %v2325 = vld [vmem:[%s244 + $0x6c] sm:$0xff]
      %v2326 = vld [vmem:[%s244 + $0x74] sm:$0xff]
      %v2327 = vld [vmem:[%s244 + $0x7c] sm:$0xff]
      %v2328 = vld [vmem:[%s244 + $0x84] sm:$0xff]
      %v2329 = vld [vmem:[%s244 + $0x8c] sm:$0xff]
      %v2330 = vld [vmem:[%s244 + $0x94] sm:$0xff]
      %v2331 = vld [vmem:[%s244 + $0x9c] sm:$0xff]
      %v2332 = vld [vmem:[%s244 + $0xa4] sm:$0xff]
      %v2333 = vld [vmem:[%s244 + $0xac] sm:$0xff]
      %v2334 = vld [vmem:[%s244 + $0xb4] sm:$0xff]
      %v2335 = vld [vmem:[%s244 + $0xbc] sm:$0xff]
      %v2336 = vld [vmem:[%s244 + $0xc4] sm:$0xff]
      %v2337 = vld [vmem:[%s244 + $0xcc] sm:$0xff]
      %v2338 = vld [vmem:[%s244 + $0xd4] sm:$0xff]
      %v2339 = vld [vmem:[%s244 + $0xdc] sm:$0xff]
      %v2340 = vld [vmem:[%s244 + $0xe4] sm:$0xff]
      %v2341 = vld [vmem:[%s244 + $0xec] sm:$0xff]
      %v2342 = vld [vmem:[%s244 + $0xf4] sm:$0xff]
      %v2343 = vld [vmem:[%s244 + $0xfc] sm:$0xff]
      %v2344 = vld [vmem:[%s244 + $0x104] sm:$0xff]
      %v2345 = vld [vmem:[%s244 + $0x10c] sm:$0xff]
      %v2346 = vld [vmem:[%s244 + $0x114] sm:$0xff]
      %v2347 = vld [vmem:[%s244 + $0x11c] sm:$0xff]
      %v2348 = vld [vmem:[%s244 + $0x124] sm:$0xff]
      %v2349 = vld [vmem:[%s244 + $0x12c] sm:$0xff]
      %v2350 = vld [vmem:[%s244 + $0x134] sm:$0xff]
      %v2351 = vld [vmem:[%s244 + $0x13c] sm:$0xff]
      %v2352 = vpack.c.bf16 %v2317, %v2316
      %v2353 = vpack.c.bf16 %v2319, %v2318
      %v2354 = vpack.c.bf16 %v2321, %v2320
      %v2355 = vpack.c.bf16 %v2323, %v2322
      %v2356 = vpack.c.bf16 %v2325, %v2324
      %v2357 = vpack.c.bf16 %v2327, %v2326
      %v2358 = vpack.c.bf16 %v2329, %v2328
      %v2359 = vpack.c.bf16 %v2331, %v2330
      %v2360 = vpack.c.bf16 %v2333, %v2332
      %v2361 = vpack.c.bf16 %v2335, %v2334
      %v2362 = vpack.c.bf16 %v2337, %v2336
      %v2363 = vpack.c.bf16 %v2339, %v2338
      %v2364 = vpack.c.bf16 %v2341, %v2340
      %v2365 = vpack.c.bf16 %v2343, %v2342
      %v2366 = vpack.c.bf16 %v2345, %v2344
      %v2367 = vpack.c.bf16 %v2347, %v2346
      %v2368 = vpack.c.bf16 %v2349, %v2348
      %v2369 = vpack.c.bf16 %v2351, %v2350
      %s2370 = scalar_lea.vmem %s248, 192
      %v2371 = vld [vmem:[%s2370] sm:$0xf]
      %v2372 = vld [vmem:[%s2370 + $0x4] sm:$0xf]
      %v2373 = vld [vmem:[%s2370 + $0x8] sm:$0xf]
      %v2374 = vld [vmem:[%s2370 + $0xc] sm:$0xf]
      %v2375 = vld [vmem:[%s2370 + $0x10] sm:$0xf]
      %v2376 = vld [vmem:[%s2370 + $0x14] sm:$0xf]
      %v2377 = vld [vmem:[%s2370 + $0x18] sm:$0xf]
      %v2378 = vld [vmem:[%s2370 + $0x1c] sm:$0xf]
      %v2387 = vunpack.c.l.b16 %v2371
      %v2388 = vunpack.c.l.b16 %v2372
      %v2389 = vunpack.c.l.b16 %v2373
      %v2390 = vunpack.c.l.b16 %v2374
      %v2391 = vunpack.c.l.b16 %v2375
      %v2392 = vunpack.c.l.b16 %v2376
      %v2393 = vunpack.c.l.b16 %v2377
      %v2394 = vunpack.c.l.b16 %v2378
      %v2395 = vpack.c.b16 %v2388, %v2387
      %v2396 = vpack.c.b16 %v2390, %v2389
      %v2397 = vpack.c.b16 %v2392, %v2391
      %v2398 = vpack.c.b16 %v2394, %v2393
      %v2404 = vsel %vm413, %v2352, 0
      %v2407 = vsel %vm413, %v2353, 0
      %v2410 = vsel %vm413, %v2354, 0
      %v2413 = vsel %vm413, %v2355, 0
      %v2416 = vsel %vm413, %v2356, 0
      %v2419 = vsel %vm413, %v2357, 0
      %v2422 = vsel %vm413, %v2358, 0
      %v2425 = vsel %vm413, %v2359, 0
      %v2428 = vsel %vm413, %v2360, 0
      %v2431 = vsel %vm413, %v2361, 0
      %v2434 = vsel %vm413, %v2362, 0
      %v2437 = vsel %vm413, %v2363, 0
      %v2440 = vsel %vm413, %v2364, 0
      %v2443 = vsel %vm413, %v2365, 0
      %v2446 = vsel %vm413, %v2366, 0
      %v2449 = vsel %vm413, %v2367, 0
      %v2452 = vsel %vm413, %v2368, 0
      %v2455 = vsel %vm413, %v2369, 0
      %2457 = vmatprep.subr.bf16.mxu0 0
      %2458 = vmatpush1.bf16.msra.mxu0 0
      %2459 = vmatprep.subr.bf16.mxu0 0
      %2460 = vmatpush1.bf16.msra.mxu0 0
      %2461 = vmatprep.subr.bf16.mxu0 0
      %2462 = vmatpush1.bf16.msra.mxu0 0
      %2463 = vmatprep.subr.bf16.mxu0 0
      %2464 = vmatpush1.bf16.msra.mxu0 0
      %2465 = vmatprep.subr.bf16.mxu0 0
      %2466 = vmatpush1.bf16.msra.mxu0 %v2398
      %2467 = vmatprep.subr.bf16.mxu0 0
      %2468 = vmatpush1.bf16.msra.mxu0 %v2397
      %2469 = vmatprep.subr.bf16.mxu0 0
      %2470 = vmatpush1.bf16.msra.mxu0 %v2396
      %2471 = vmatprep.subr.bf16.mxu0 0
      %2472 = vmatpush1.bf16.msra.mxu0 %v2395
      %2473 = vmatprep.subr.bf16.mxu0 0
      %2474 = vmatpush2.bf16.msra.mxu0 0
      %2475 = vmatprep.subr.bf16.mxu0 0
      %2476 = vmatpush2.bf16.msra.mxu0 0
      %2477 = vmatprep.subr.bf16.mxu0 0
      %2478 = vmatpush2.bf16.msra.mxu0 0
      %2479 = vmatprep.subr.bf16.mxu0 0
      %2480 = vmatpush2.bf16.msra.mxu0 0
      %2481 = vmatprep.subr.bf16.mxu0 0
      %2482 = vmatpush2.bf16.msra.mxu0 0
      %2483 = vmatprep.subr.bf16.mxu0 0
      %2484 = vmatpush2.bf16.msra.mxu0 0
      %2485 = vmatprep.subr.bf16.mxu0 0
      %2486 = vmatpush2.bf16.msra.mxu0 0
      %2487 = vmatprep.subr.bf16.mxu0 0
      %2488 = vmatpush2.bf16.msra.mxu0 0
      %2489 = vmatprep.mubr.bf16.mxu0 0
      %2490 = vmatmul.mubr.bf16.gmra.mxu0 %v2404
      %v2491 = vpop.f32.mrf.mxu0
      %v2492 = vadd.f32 0.0, %v2491
      %v2493 = vpop.f32.mrf.mxu0
      %v2494 = vpop.f32.mrf.mxu0
      %v2495 = vadd.f32 0.0, %v2494
      %v2496 = vpop.f32.mrf.mxu0
      %2497 = vmatprep.mubr.bf16.mxu0 0
      %2498 = vmatmul.mubr.bf16.gmra.mxu0 %v2407
      %v2499 = vpop.f32.mrf.mxu0
      %v2500 = vadd.f32 0.0, %v2499
      %v2501 = vpop.f32.mrf.mxu0
      %v2502 = vpop.f32.mrf.mxu0
      %v2503 = vadd.f32 0.0, %v2502
      %v2504 = vpop.f32.mrf.mxu0
      %2505 = vmatprep.mubr.bf16.mxu0 0
      %2506 = vmatmul.mubr.bf16.gmra.mxu0 %v2410
      %v2507 = vpop.f32.mrf.mxu0
      %v2508 = vadd.f32 0.0, %v2507
      %v2509 = vpop.f32.mrf.mxu0
      %v2510 = vpop.f32.mrf.mxu0
      %v2511 = vadd.f32 0.0, %v2510
      %v2512 = vpop.f32.mrf.mxu0
      %2513 = vmatprep.mubr.bf16.mxu0 0
      %2514 = vmatmul.mubr.bf16.gmra.mxu0 %v2413
      %v2515 = vpop.f32.mrf.mxu0
      %v2516 = vadd.f32 0.0, %v2515
      %v2517 = vpop.f32.mrf.mxu0
      %v2518 = vpop.f32.mrf.mxu0
      %v2519 = vadd.f32 0.0, %v2518
      %v2520 = vpop.f32.mrf.mxu0
      %2521 = vmatprep.mubr.bf16.mxu0 0
      %2522 = vmatmul.mubr.bf16.gmra.mxu0 %v2416
      %v2523 = vpop.f32.mrf.mxu0
      %v2524 = vadd.f32 0.0, %v2523
      %v2525 = vpop.f32.mrf.mxu0
      %v2526 = vpop.f32.mrf.mxu0
      %v2527 = vadd.f32 0.0, %v2526
      %v2528 = vpop.f32.mrf.mxu0
      %2529 = vmatprep.mubr.bf16.mxu0 0
      %2530 = vmatmul.mubr.bf16.gmra.mxu0 %v2419
      %v2531 = vpop.f32.mrf.mxu0
      %v2532 = vadd.f32 0.0, %v2531
      %v2533 = vpop.f32.mrf.mxu0
      %v2534 = vpop.f32.mrf.mxu0
      %v2535 = vadd.f32 0.0, %v2534
      %v2536 = vpop.f32.mrf.mxu0
      %2537 = vmatprep.mubr.bf16.mxu0 0
      %2538 = vmatmul.mubr.bf16.gmra.mxu0 %v2422
      %v2539 = vpop.f32.mrf.mxu0
      %v2540 = vadd.f32 0.0, %v2539
      %v2541 = vpop.f32.mrf.mxu0
      %v2542 = vpop.f32.mrf.mxu0
      %v2543 = vadd.f32 0.0, %v2542
      %v2544 = vpop.f32.mrf.mxu0
      %2545 = vmatprep.mubr.bf16.mxu0 0
      %2546 = vmatmul.mubr.bf16.gmra.mxu0 %v2425
      %v2547 = vpop.f32.mrf.mxu0
      %v2548 = vadd.f32 0.0, %v2547
      %v2549 = vpop.f32.mrf.mxu0
      %v2550 = vpop.f32.mrf.mxu0
      %v2551 = vadd.f32 0.0, %v2550
      %v2552 = vpop.f32.mrf.mxu0
      %2553 = vmatprep.mubr.bf16.mxu0 0
      %2554 = vmatmul.mubr.bf16.gmra.mxu0 %v2428
      %v2555 = vpop.f32.mrf.mxu0
      %v2556 = vadd.f32 0.0, %v2555
      %v2557 = vpop.f32.mrf.mxu0
      %v2558 = vpop.f32.mrf.mxu0
      %v2559 = vadd.f32 0.0, %v2558
      %v2560 = vpop.f32.mrf.mxu0
      %2561 = vmatprep.mubr.bf16.mxu0 0
      %2562 = vmatmul.mubr.bf16.gmra.mxu0 %v2431
      %v2563 = vpop.f32.mrf.mxu0
      %v2564 = vadd.f32 0.0, %v2563
      %v2565 = vpop.f32.mrf.mxu0
      %v2566 = vpop.f32.mrf.mxu0
      %v2567 = vadd.f32 0.0, %v2566
      %v2568 = vpop.f32.mrf.mxu0
      %2569 = vmatprep.mubr.bf16.mxu0 0
      %2570 = vmatmul.mubr.bf16.gmra.mxu0 %v2434
      %v2571 = vpop.f32.mrf.mxu0
      %v2572 = vadd.f32 0.0, %v2571
      %v2573 = vpop.f32.mrf.mxu0
      %v2574 = vpop.f32.mrf.mxu0
      %v2575 = vadd.f32 0.0, %v2574
      %v2576 = vpop.f32.mrf.mxu0
      %2577 = vmatprep.mubr.bf16.mxu0 0
      %2578 = vmatmul.mubr.bf16.gmra.mxu0 %v2437
      %v2579 = vpop.f32.mrf.mxu0
      %v2580 = vadd.f32 0.0, %v2579
      %v2581 = vpop.f32.mrf.mxu0
      %v2582 = vpop.f32.mrf.mxu0
      %v2583 = vadd.f32 0.0, %v2582
      %v2584 = vpop.f32.mrf.mxu0
      %2585 = vmatprep.mubr.bf16.mxu0 0
      %2586 = vmatmul.mubr.bf16.gmra.mxu0 %v2440
      %v2587 = vpop.f32.mrf.mxu0
      %v2588 = vadd.f32 0.0, %v2587
      %v2589 = vpop.f32.mrf.mxu0
      %v2590 = vpop.f32.mrf.mxu0
      %v2591 = vadd.f32 0.0, %v2590
      %v2592 = vpop.f32.mrf.mxu0
      %2593 = vmatprep.mubr.bf16.mxu0 0
      %2594 = vmatmul.mubr.bf16.gmra.mxu0 %v2443
      %v2595 = vpop.f32.mrf.mxu0
      %v2596 = vadd.f32 0.0, %v2595
      %v2597 = vpop.f32.mrf.mxu0
      %v2598 = vpop.f32.mrf.mxu0
      %v2599 = vadd.f32 0.0, %v2598
      %v2600 = vpop.f32.mrf.mxu0
      %2601 = vmatprep.mubr.bf16.mxu0 0
      %2602 = vmatmul.mubr.bf16.gmra.mxu0 %v2446
      %v2603 = vpop.f32.mrf.mxu0
      %v2604 = vadd.f32 0.0, %v2603
      %v2605 = vpop.f32.mrf.mxu0
      %v2606 = vpop.f32.mrf.mxu0
      %v2607 = vadd.f32 0.0, %v2606
      %v2608 = vpop.f32.mrf.mxu0
      %2609 = vmatprep.mubr.bf16.mxu0 0
      %2610 = vmatmul.mubr.bf16.gmra.mxu0 %v2449
      %v2611 = vpop.f32.mrf.mxu0
      %v2612 = vadd.f32 0.0, %v2611
      %v2613 = vpop.f32.mrf.mxu0
      %v2614 = vpop.f32.mrf.mxu0
      %v2615 = vadd.f32 0.0, %v2614
      %v2616 = vpop.f32.mrf.mxu0
      %2617 = vmatprep.mubr.bf16.mxu0 0
      %2618 = vmatmul.mubr.bf16.gmra.mxu0 %v2452
      %v2619 = vpop.f32.mrf.mxu0
      %v2620 = vadd.f32 0.0, %v2619
      %v2621 = vpop.f32.mrf.mxu0
      %v2622 = vpop.f32.mrf.mxu0
      %v2623 = vadd.f32 0.0, %v2622
      %v2624 = vpop.f32.mrf.mxu0
      %2625 = vmatprep.mubr.bf16.mxu0 0
      %2626 = vmatmul.mubr.bf16.gmra.mxu0 %v2455
      %v2627 = vpop.f32.mrf.mxu0
      %v2628 = vadd.f32 0.0, %v2627
      %v2629 = vpop.f32.mrf.mxu0
      %v2630 = vpop.f32.mrf.mxu0
      %v2631 = vadd.f32 0.0, %v2630
      %v2632 = vpop.f32.mrf.mxu0
      %2633 = vdwg.mxu0
      %v2634 = vadd.f32 %v2280, %v2492
      %v2635 = vadd.f32 %v2281, %v2495
      %v2636 = vadd.f32 %v2282, %v2500
      %v2637 = vadd.f32 %v2283, %v2503
      %v2638 = vadd.f32 %v2284, %v2508
      %v2639 = vadd.f32 %v2285, %v2511
      %v2640 = vadd.f32 %v2286, %v2516
      %v2641 = vadd.f32 %v2287, %v2519
      %v2642 = vadd.f32 %v2288, %v2524
      %v2643 = vadd.f32 %v2289, %v2527
      %v2644 = vadd.f32 %v2290, %v2532
      %v2645 = vadd.f32 %v2291, %v2535
      %v2646 = vadd.f32 %v2292, %v2540
      %v2647 = vadd.f32 %v2293, %v2543
      %v2648 = vadd.f32 %v2294, %v2548
      %v2649 = vadd.f32 %v2295, %v2551
      %v2650 = vadd.f32 %v2296, %v2556
      %v2651 = vadd.f32 %v2297, %v2559
      %v2652 = vadd.f32 %v2298, %v2564
      %v2653 = vadd.f32 %v2299, %v2567
      %v2654 = vadd.f32 %v2300, %v2572
      %v2655 = vadd.f32 %v2301, %v2575
      %v2656 = vadd.f32 %v2302, %v2580
      %v2657 = vadd.f32 %v2303, %v2583
      %v2658 = vadd.f32 %v2304, %v2588
      %v2659 = vadd.f32 %v2305, %v2591
      %v2660 = vadd.f32 %v2306, %v2596
      %v2661 = vadd.f32 %v2307, %v2599
      %v2662 = vadd.f32 %v2308, %v2604
      %v2663 = vadd.f32 %v2309, %v2607
      %v2664 = vadd.f32 %v2310, %v2612
      %v2665 = vadd.f32 %v2311, %v2615
      %v2666 = vadd.f32 %v2312, %v2620
      %v2667 = vadd.f32 %v2313, %v2623
      %v2668 = vadd.f32 %v2314, %v2628
      %v2669 = vadd.f32 %v2315, %v2631
      %v2670 = vld [vmem:[%s244 + $0x25] sm:$0xff]
      %v2671 = vld [vmem:[%s244 + $0x2d] sm:$0xff]
      %v2672 = vld [vmem:[%s244 + $0x35] sm:$0xff]
      %v2673 = vld [vmem:[%s244 + $0x3d] sm:$0xff]
      %v2674 = vld [vmem:[%s244 + $0x45] sm:$0xff]
      %v2675 = vld [vmem:[%s244 + $0x4d] sm:$0xff]
      %v2676 = vld [vmem:[%s244 + $0x55] sm:$0xff]
      %v2677 = vld [vmem:[%s244 + $0x5d] sm:$0xff]
      %v2678 = vld [vmem:[%s244 + $0x65] sm:$0xff]
      %v2679 = vld [vmem:[%s244 + $0x6d] sm:$0xff]
      %v2680 = vld [vmem:[%s244 + $0x75] sm:$0xff]
      %v2681 = vld [vmem:[%s244 + $0x7d] sm:$0xff]
      %v2682 = vld [vmem:[%s244 + $0x85] sm:$0xff]
      %v2683 = vld [vmem:[%s244 + $0x8d] sm:$0xff]
      %v2684 = vld [vmem:[%s244 + $0x95] sm:$0xff]
      %v2685 = vld [vmem:[%s244 + $0x9d] sm:$0xff]
      %v2686 = vld [vmem:[%s244 + $0xa5] sm:$0xff]
      %v2687 = vld [vmem:[%s244 + $0xad] sm:$0xff]
      %v2688 = vld [vmem:[%s244 + $0xb5] sm:$0xff]
      %v2689 = vld [vmem:[%s244 + $0xbd] sm:$0xff]
      %v2690 = vld [vmem:[%s244 + $0xc5] sm:$0xff]
      %v2691 = vld [vmem:[%s244 + $0xcd] sm:$0xff]
      %v2692 = vld [vmem:[%s244 + $0xd5] sm:$0xff]
      %v2693 = vld [vmem:[%s244 + $0xdd] sm:$0xff]
      %v2694 = vld [vmem:[%s244 + $0xe5] sm:$0xff]
      %v2695 = vld [vmem:[%s244 + $0xed] sm:$0xff]
      %v2696 = vld [vmem:[%s244 + $0xf5] sm:$0xff]
      %v2697 = vld [vmem:[%s244 + $0xfd] sm:$0xff]
      %v2698 = vld [vmem:[%s244 + $0x105] sm:$0xff]
      %v2699 = vld [vmem:[%s244 + $0x10d] sm:$0xff]
      %v2700 = vld [vmem:[%s244 + $0x115] sm:$0xff]
      %v2701 = vld [vmem:[%s244 + $0x11d] sm:$0xff]
      %v2702 = vld [vmem:[%s244 + $0x125] sm:$0xff]
      %v2703 = vld [vmem:[%s244 + $0x12d] sm:$0xff]
      %v2704 = vld [vmem:[%s244 + $0x135] sm:$0xff]
      %v2705 = vld [vmem:[%s244 + $0x13d] sm:$0xff]
      %v2706 = vpack.c.bf16 %v2671, %v2670
      %v2707 = vpack.c.bf16 %v2673, %v2672
      %v2708 = vpack.c.bf16 %v2675, %v2674
      %v2709 = vpack.c.bf16 %v2677, %v2676
      %v2710 = vpack.c.bf16 %v2679, %v2678
      %v2711 = vpack.c.bf16 %v2681, %v2680
      %v2712 = vpack.c.bf16 %v2683, %v2682
      %v2713 = vpack.c.bf16 %v2685, %v2684
      %v2714 = vpack.c.bf16 %v2687, %v2686
      %v2715 = vpack.c.bf16 %v2689, %v2688
      %v2716 = vpack.c.bf16 %v2691, %v2690
      %v2717 = vpack.c.bf16 %v2693, %v2692
      %v2718 = vpack.c.bf16 %v2695, %v2694
      %v2719 = vpack.c.bf16 %v2697, %v2696
      %v2720 = vpack.c.bf16 %v2699, %v2698
      %v2721 = vpack.c.bf16 %v2701, %v2700
      %v2722 = vpack.c.bf16 %v2703, %v2702
      %v2723 = vpack.c.bf16 %v2705, %v2704
      %s2724 = scalar_lea.vmem %s248, 224
      %v2725 = vld [vmem:[%s2724] sm:$0xf]
      %v2726 = vld [vmem:[%s2724 + $0x4] sm:$0xf]
      %v2727 = vld [vmem:[%s2724 + $0x8] sm:$0xf]
      %v2728 = vld [vmem:[%s2724 + $0xc] sm:$0xf]
      %v2729 = vld [vmem:[%s2724 + $0x10] sm:$0xf]
      %v2730 = vld [vmem:[%s2724 + $0x14] sm:$0xf]
      %v2731 = vld [vmem:[%s2724 + $0x18] sm:$0xf]
      %v2732 = vld [vmem:[%s2724 + $0x1c] sm:$0xf]
      %v2741 = vunpack.c.l.b16 %v2725
      %v2742 = vunpack.c.l.b16 %v2726
      %v2743 = vunpack.c.l.b16 %v2727
      %v2744 = vunpack.c.l.b16 %v2728
      %v2745 = vunpack.c.l.b16 %v2729
      %v2746 = vunpack.c.l.b16 %v2730
      %v2747 = vunpack.c.l.b16 %v2731
      %v2748 = vunpack.c.l.b16 %v2732
      %v2749 = vpack.c.b16 %v2742, %v2741
      %v2750 = vpack.c.b16 %v2744, %v2743
      %v2751 = vpack.c.b16 %v2746, %v2745
      %v2752 = vpack.c.b16 %v2748, %v2747
      %v2758 = vsel %vm413, %v2706, 0
      %v2761 = vsel %vm413, %v2707, 0
      %v2764 = vsel %vm413, %v2708, 0
      %v2767 = vsel %vm413, %v2709, 0
      %v2770 = vsel %vm413, %v2710, 0
      %v2773 = vsel %vm413, %v2711, 0
      %v2776 = vsel %vm413, %v2712, 0
      %v2779 = vsel %vm413, %v2713, 0
      %v2782 = vsel %vm413, %v2714, 0
      %v2785 = vsel %vm413, %v2715, 0
      %v2788 = vsel %vm413, %v2716, 0
      %v2791 = vsel %vm413, %v2717, 0
      %v2794 = vsel %vm413, %v2718, 0
      %v2797 = vsel %vm413, %v2719, 0
      %v2800 = vsel %vm413, %v2720, 0
      %v2803 = vsel %vm413, %v2721, 0
      %v2806 = vsel %vm413, %v2722, 0
      %v2809 = vsel %vm413, %v2723, 0
      %2811 = vmatprep.subr.bf16.mxu0 0
      %2812 = vmatpush1.bf16.msra.mxu0 0
      %2813 = vmatprep.subr.bf16.mxu0 0
      %2814 = vmatpush1.bf16.msra.mxu0 0
      %2815 = vmatprep.subr.bf16.mxu0 0
      %2816 = vmatpush1.bf16.msra.mxu0 0
      %2817 = vmatprep.subr.bf16.mxu0 0
      %2818 = vmatpush1.bf16.msra.mxu0 0
      %2819 = vmatprep.subr.bf16.mxu0 0
      %2820 = vmatpush1.bf16.msra.mxu0 %v2752
      %2821 = vmatprep.subr.bf16.mxu0 0
      %2822 = vmatpush1.bf16.msra.mxu0 %v2751
      %2823 = vmatprep.subr.bf16.mxu0 0
      %2824 = vmatpush1.bf16.msra.mxu0 %v2750
      %2825 = vmatprep.subr.bf16.mxu0 0
      %2826 = vmatpush1.bf16.msra.mxu0 %v2749
      %2827 = vmatprep.subr.bf16.mxu0 0
      %2828 = vmatpush2.bf16.msra.mxu0 0
      %2829 = vmatprep.subr.bf16.mxu0 0
      %2830 = vmatpush2.bf16.msra.mxu0 0
      %2831 = vmatprep.subr.bf16.mxu0 0
      %2832 = vmatpush2.bf16.msra.mxu0 0
      %2833 = vmatprep.subr.bf16.mxu0 0
      %2834 = vmatpush2.bf16.msra.mxu0 0
      %2835 = vmatprep.subr.bf16.mxu0 0
      %2836 = vmatpush2.bf16.msra.mxu0 0
      %2837 = vmatprep.subr.bf16.mxu0 0
      %2838 = vmatpush2.bf16.msra.mxu0 0
      %2839 = vmatprep.subr.bf16.mxu0 0
      %2840 = vmatpush2.bf16.msra.mxu0 0
      %2841 = vmatprep.subr.bf16.mxu0 0
      %2842 = vmatpush2.bf16.msra.mxu0 0
      %2843 = vmatprep.mubr.bf16.mxu0 0
      %2844 = vmatmul.mubr.bf16.gmra.mxu0 %v2758
      %v2845 = vpop.f32.mrf.mxu0
      %v2846 = vadd.f32 0.0, %v2845
      %v2847 = vpop.f32.mrf.mxu0
      %v2848 = vpop.f32.mrf.mxu0
      %v2849 = vadd.f32 0.0, %v2848
      %v2850 = vpop.f32.mrf.mxu0
      %2851 = vmatprep.mubr.bf16.mxu0 0
      %2852 = vmatmul.mubr.bf16.gmra.mxu0 %v2761
      %v2853 = vpop.f32.mrf.mxu0
      %v2854 = vadd.f32 0.0, %v2853
      %v2855 = vpop.f32.mrf.mxu0
      %v2856 = vpop.f32.mrf.mxu0
      %v2857 = vadd.f32 0.0, %v2856
      %v2858 = vpop.f32.mrf.mxu0
      %2859 = vmatprep.mubr.bf16.mxu0 0
      %2860 = vmatmul.mubr.bf16.gmra.mxu0 %v2764
      %v2861 = vpop.f32.mrf.mxu0
      %v2862 = vadd.f32 0.0, %v2861
      %v2863 = vpop.f32.mrf.mxu0
      %v2864 = vpop.f32.mrf.mxu0
      %v2865 = vadd.f32 0.0, %v2864
      %v2866 = vpop.f32.mrf.mxu0
      %2867 = vmatprep.mubr.bf16.mxu0 0
      %2868 = vmatmul.mubr.bf16.gmra.mxu0 %v2767
      %v2869 = vpop.f32.mrf.mxu0
      %v2870 = vadd.f32 0.0, %v2869
      %v2871 = vpop.f32.mrf.mxu0
      %v2872 = vpop.f32.mrf.mxu0
      %v2873 = vadd.f32 0.0, %v2872
      %v2874 = vpop.f32.mrf.mxu0
      %2875 = vmatprep.mubr.bf16.mxu0 0
      %2876 = vmatmul.mubr.bf16.gmra.mxu0 %v2770
      %v2877 = vpop.f32.mrf.mxu0
      %v2878 = vadd.f32 0.0, %v2877
      %v2879 = vpop.f32.mrf.mxu0
      %v2880 = vpop.f32.mrf.mxu0
      %v2881 = vadd.f32 0.0, %v2880
      %v2882 = vpop.f32.mrf.mxu0
      %2883 = vmatprep.mubr.bf16.mxu0 0
      %2884 = vmatmul.mubr.bf16.gmra.mxu0 %v2773
      %v2885 = vpop.f32.mrf.mxu0
      %v2886 = vadd.f32 0.0, %v2885
      %v2887 = vpop.f32.mrf.mxu0
      %v2888 = vpop.f32.mrf.mxu0
      %v2889 = vadd.f32 0.0, %v2888
      %v2890 = vpop.f32.mrf.mxu0
      %2891 = vmatprep.mubr.bf16.mxu0 0
      %2892 = vmatmul.mubr.bf16.gmra.mxu0 %v2776
      %v2893 = vpop.f32.mrf.mxu0
      %v2894 = vadd.f32 0.0, %v2893
      %v2895 = vpop.f32.mrf.mxu0
      %v2896 = vpop.f32.mrf.mxu0
      %v2897 = vadd.f32 0.0, %v2896
      %v2898 = vpop.f32.mrf.mxu0
      %2899 = vmatprep.mubr.bf16.mxu0 0
      %2900 = vmatmul.mubr.bf16.gmra.mxu0 %v2779
      %v2901 = vpop.f32.mrf.mxu0
      %v2902 = vadd.f32 0.0, %v2901
      %v2903 = vpop.f32.mrf.mxu0
      %v2904 = vpop.f32.mrf.mxu0
      %v2905 = vadd.f32 0.0, %v2904
      %v2906 = vpop.f32.mrf.mxu0
      %2907 = vmatprep.mubr.bf16.mxu0 0
      %2908 = vmatmul.mubr.bf16.gmra.mxu0 %v2782
      %v2909 = vpop.f32.mrf.mxu0
      %v2910 = vadd.f32 0.0, %v2909
      %v2911 = vpop.f32.mrf.mxu0
      %v2912 = vpop.f32.mrf.mxu0
      %v2913 = vadd.f32 0.0, %v2912
      %v2914 = vpop.f32.mrf.mxu0
      %2915 = vmatprep.mubr.bf16.mxu0 0
      %2916 = vmatmul.mubr.bf16.gmra.mxu0 %v2785
      %v2917 = vpop.f32.mrf.mxu0
      %v2918 = vadd.f32 0.0, %v2917
      %v2919 = vpop.f32.mrf.mxu0
      %v2920 = vpop.f32.mrf.mxu0
      %v2921 = vadd.f32 0.0, %v2920
      %v2922 = vpop.f32.mrf.mxu0
      %2923 = vmatprep.mubr.bf16.mxu0 0
      %2924 = vmatmul.mubr.bf16.gmra.mxu0 %v2788
      %v2925 = vpop.f32.mrf.mxu0
      %v2926 = vadd.f32 0.0, %v2925
      %v2927 = vpop.f32.mrf.mxu0
      %v2928 = vpop.f32.mrf.mxu0
      %v2929 = vadd.f32 0.0, %v2928
      %v2930 = vpop.f32.mrf.mxu0
      %2931 = vmatprep.mubr.bf16.mxu0 0
      %2932 = vmatmul.mubr.bf16.gmra.mxu0 %v2791
      %v2933 = vpop.f32.mrf.mxu0
      %v2934 = vadd.f32 0.0, %v2933
      %v2935 = vpop.f32.mrf.mxu0
      %v2936 = vpop.f32.mrf.mxu0
      %v2937 = vadd.f32 0.0, %v2936
      %v2938 = vpop.f32.mrf.mxu0
      %2939 = vmatprep.mubr.bf16.mxu0 0
      %2940 = vmatmul.mubr.bf16.gmra.mxu0 %v2794
      %v2941 = vpop.f32.mrf.mxu0
      %v2942 = vadd.f32 0.0, %v2941
      %v2943 = vpop.f32.mrf.mxu0
      %v2944 = vpop.f32.mrf.mxu0
      %v2945 = vadd.f32 0.0, %v2944
      %v2946 = vpop.f32.mrf.mxu0
      %2947 = vmatprep.mubr.bf16.mxu0 0
      %2948 = vmatmul.mubr.bf16.gmra.mxu0 %v2797
      %v2949 = vpop.f32.mrf.mxu0
      %v2950 = vadd.f32 0.0, %v2949
      %v2951 = vpop.f32.mrf.mxu0
      %v2952 = vpop.f32.mrf.mxu0
      %v2953 = vadd.f32 0.0, %v2952
      %v2954 = vpop.f32.mrf.mxu0
      %2955 = vmatprep.mubr.bf16.mxu0 0
      %2956 = vmatmul.mubr.bf16.gmra.mxu0 %v2800
      %v2957 = vpop.f32.mrf.mxu0
      %v2958 = vadd.f32 0.0, %v2957
      %v2959 = vpop.f32.mrf.mxu0
      %v2960 = vpop.f32.mrf.mxu0
      %v2961 = vadd.f32 0.0, %v2960
      %v2962 = vpop.f32.mrf.mxu0
      %2963 = vmatprep.mubr.bf16.mxu0 0
      %2964 = vmatmul.mubr.bf16.gmra.mxu0 %v2803
      %v2965 = vpop.f32.mrf.mxu0
      %v2966 = vadd.f32 0.0, %v2965
      %v2967 = vpop.f32.mrf.mxu0
      %v2968 = vpop.f32.mrf.mxu0
      %v2969 = vadd.f32 0.0, %v2968
      %v2970 = vpop.f32.mrf.mxu0
      %2971 = vmatprep.mubr.bf16.mxu0 0
      %2972 = vmatmul.mubr.bf16.gmra.mxu0 %v2806
      %v2973 = vpop.f32.mrf.mxu0
      %v2974 = vadd.f32 0.0, %v2973
      %v2975 = vpop.f32.mrf.mxu0
      %v2976 = vpop.f32.mrf.mxu0
      %v2977 = vadd.f32 0.0, %v2976
      %v2978 = vpop.f32.mrf.mxu0
      %2979 = vmatprep.mubr.bf16.mxu0 0
      %2980 = vmatmul.mubr.bf16.gmra.mxu0 %v2809
      %v2981 = vpop.f32.mrf.mxu0
      %v2982 = vadd.f32 0.0, %v2981
      %v2983 = vpop.f32.mrf.mxu0
      %v2984 = vpop.f32.mrf.mxu0
      %v2985 = vadd.f32 0.0, %v2984
      %v2986 = vpop.f32.mrf.mxu0
      %2987 = vdwg.mxu0
      %v2988 = vadd.f32 %v2634, %v2846
      %v2989 = vadd.f32 %v2635, %v2849
      %v2990 = vadd.f32 %v2636, %v2854
      %v2991 = vadd.f32 %v2637, %v2857
      %v2992 = vadd.f32 %v2638, %v2862
      %v2993 = vadd.f32 %v2639, %v2865
      %v2994 = vadd.f32 %v2640, %v2870
      %v2995 = vadd.f32 %v2641, %v2873
      %v2996 = vadd.f32 %v2642, %v2878
      %v2997 = vadd.f32 %v2643, %v2881
      %v2998 = vadd.f32 %v2644, %v2886
      %v2999 = vadd.f32 %v2645, %v2889
      %v3000 = vadd.f32 %v2646, %v2894
      %v3001 = vadd.f32 %v2647, %v2897
      %v3002 = vadd.f32 %v2648, %v2902
      %v3003 = vadd.f32 %v2649, %v2905
      %v3004 = vadd.f32 %v2650, %v2910
      %v3005 = vadd.f32 %v2651, %v2913
      %v3006 = vadd.f32 %v2652, %v2918
      %v3007 = vadd.f32 %v2653, %v2921
      %v3008 = vadd.f32 %v2654, %v2926
      %v3009 = vadd.f32 %v2655, %v2929
      %v3010 = vadd.f32 %v2656, %v2934
      %v3011 = vadd.f32 %v2657, %v2937
      %v3012 = vadd.f32 %v2658, %v2942
      %v3013 = vadd.f32 %v2659, %v2945
      %v3014 = vadd.f32 %v2660, %v2950
      %v3015 = vadd.f32 %v2661, %v2953
      %v3016 = vadd.f32 %v2662, %v2958
      %v3017 = vadd.f32 %v2663, %v2961
      %v3018 = vadd.f32 %v2664, %v2966
      %v3019 = vadd.f32 %v2665, %v2969
      %v3020 = vadd.f32 %v2666, %v2974
      %v3021 = vadd.f32 %v2667, %v2977
      %v3022 = vadd.f32 %v2668, %v2982
      %v3023 = vadd.f32 %v2669, %v2985
      %v3024 = vld [vmem:[%s244 + $0x26] sm:$0xff]
      %v3025 = vld [vmem:[%s244 + $0x2e] sm:$0xff]
      %v3026 = vld [vmem:[%s244 + $0x36] sm:$0xff]
      %v3027 = vld [vmem:[%s244 + $0x3e] sm:$0xff]
      %v3028 = vld [vmem:[%s244 + $0x46] sm:$0xff]
      %v3029 = vld [vmem:[%s244 + $0x4e] sm:$0xff]
      %v3030 = vld [vmem:[%s244 + $0x56] sm:$0xff]
      %v3031 = vld [vmem:[%s244 + $0x5e] sm:$0xff]
      %v3032 = vld [vmem:[%s244 + $0x66] sm:$0xff]
      %v3033 = vld [vmem:[%s244 + $0x6e] sm:$0xff]
      %v3034 = vld [vmem:[%s244 + $0x76] sm:$0xff]
      %v3035 = vld [vmem:[%s244 + $0x7e] sm:$0xff]
      %v3036 = vld [vmem:[%s244 + $0x86] sm:$0xff]
      %v3037 = vld [vmem:[%s244 + $0x8e] sm:$0xff]
      %v3038 = vld [vmem:[%s244 + $0x96] sm:$0xff]
      %v3039 = vld [vmem:[%s244 + $0x9e] sm:$0xff]
      %v3040 = vld [vmem:[%s244 + $0xa6] sm:$0xff]
      %v3041 = vld [vmem:[%s244 + $0xae] sm:$0xff]
      %v3042 = vld [vmem:[%s244 + $0xb6] sm:$0xff]
      %v3043 = vld [vmem:[%s244 + $0xbe] sm:$0xff]
      %v3044 = vld [vmem:[%s244 + $0xc6] sm:$0xff]
      %v3045 = vld [vmem:[%s244 + $0xce] sm:$0xff]
      %v3046 = vld [vmem:[%s244 + $0xd6] sm:$0xff]
      %v3047 = vld [vmem:[%s244 + $0xde] sm:$0xff]
      %v3048 = vld [vmem:[%s244 + $0xe6] sm:$0xff]
      %v3049 = vld [vmem:[%s244 + $0xee] sm:$0xff]
      %v3050 = vld [vmem:[%s244 + $0xf6] sm:$0xff]
      %v3051 = vld [vmem:[%s244 + $0xfe] sm:$0xff]
      %v3052 = vld [vmem:[%s244 + $0x106] sm:$0xff]
      %v3053 = vld [vmem:[%s244 + $0x10e] sm:$0xff]
      %v3054 = vld [vmem:[%s244 + $0x116] sm:$0xff]
      %v3055 = vld [vmem:[%s244 + $0x11e] sm:$0xff]
      %v3056 = vld [vmem:[%s244 + $0x126] sm:$0xff]
      %v3057 = vld [vmem:[%s244 + $0x12e] sm:$0xff]
      %v3058 = vld [vmem:[%s244 + $0x136] sm:$0xff]
      %v3059 = vld [vmem:[%s244 + $0x13e] sm:$0xff]
      %v3060 = vpack.c.bf16 %v3025, %v3024
      %v3061 = vpack.c.bf16 %v3027, %v3026
      %v3062 = vpack.c.bf16 %v3029, %v3028
      %v3063 = vpack.c.bf16 %v3031, %v3030
      %v3064 = vpack.c.bf16 %v3033, %v3032
      %v3065 = vpack.c.bf16 %v3035, %v3034
      %v3066 = vpack.c.bf16 %v3037, %v3036
      %v3067 = vpack.c.bf16 %v3039, %v3038
      %v3068 = vpack.c.bf16 %v3041, %v3040
      %v3069 = vpack.c.bf16 %v3043, %v3042
      %v3070 = vpack.c.bf16 %v3045, %v3044
      %v3071 = vpack.c.bf16 %v3047, %v3046
      %v3072 = vpack.c.bf16 %v3049, %v3048
      %v3073 = vpack.c.bf16 %v3051, %v3050
      %v3074 = vpack.c.bf16 %v3053, %v3052
      %v3075 = vpack.c.bf16 %v3055, %v3054
      %v3076 = vpack.c.bf16 %v3057, %v3056
      %v3077 = vpack.c.bf16 %v3059, %v3058
      %s3078 = scalar_lea.vmem %s248, 256
      %v3079 = vld [vmem:[%s3078] sm:$0xf]
      %v3080 = vld [vmem:[%s3078 + $0x4] sm:$0xf]
      %v3081 = vld [vmem:[%s3078 + $0x8] sm:$0xf]
      %v3082 = vld [vmem:[%s3078 + $0xc] sm:$0xf]
      %v3083 = vld [vmem:[%s3078 + $0x10] sm:$0xf]
      %v3084 = vld [vmem:[%s3078 + $0x14] sm:$0xf]
      %v3085 = vld [vmem:[%s3078 + $0x18] sm:$0xf]
      %v3086 = vld [vmem:[%s3078 + $0x1c] sm:$0xf]
      %v3095 = vunpack.c.l.b16 %v3079
      %v3096 = vunpack.c.l.b16 %v3080
      %v3097 = vunpack.c.l.b16 %v3081
      %v3098 = vunpack.c.l.b16 %v3082
      %v3099 = vunpack.c.l.b16 %v3083
      %v3100 = vunpack.c.l.b16 %v3084
      %v3101 = vunpack.c.l.b16 %v3085
      %v3102 = vunpack.c.l.b16 %v3086
      %v3103 = vpack.c.b16 %v3096, %v3095
      %v3104 = vpack.c.b16 %v3098, %v3097
      %v3105 = vpack.c.b16 %v3100, %v3099
      %v3106 = vpack.c.b16 %v3102, %v3101
      %v3112 = vsel %vm413, %v3060, 0
      %v3115 = vsel %vm413, %v3061, 0
      %v3118 = vsel %vm413, %v3062, 0
      %v3121 = vsel %vm413, %v3063, 0
      %v3124 = vsel %vm413, %v3064, 0
      %v3127 = vsel %vm413, %v3065, 0
      %v3130 = vsel %vm413, %v3066, 0
      %v3133 = vsel %vm413, %v3067, 0
      %v3136 = vsel %vm413, %v3068, 0
      %v3139 = vsel %vm413, %v3069, 0
      %v3142 = vsel %vm413, %v3070, 0
      %v3145 = vsel %vm413, %v3071, 0
      %v3148 = vsel %vm413, %v3072, 0
      %v3151 = vsel %vm413, %v3073, 0
      %v3154 = vsel %vm413, %v3074, 0
      %v3157 = vsel %vm413, %v3075, 0
      %v3160 = vsel %vm413, %v3076, 0
      %v3163 = vsel %vm413, %v3077, 0
      %3165 = vmatprep.subr.bf16.mxu0 0
      %3166 = vmatpush1.bf16.msra.mxu0 0
      %3167 = vmatprep.subr.bf16.mxu0 0
      %3168 = vmatpush1.bf16.msra.mxu0 0
      %3169 = vmatprep.subr.bf16.mxu0 0
      %3170 = vmatpush1.bf16.msra.mxu0 0
      %3171 = vmatprep.subr.bf16.mxu0 0
      %3172 = vmatpush1.bf16.msra.mxu0 0
      %3173 = vmatprep.subr.bf16.mxu0 0
      %3174 = vmatpush1.bf16.msra.mxu0 %v3106
      %3175 = vmatprep.subr.bf16.mxu0 0
      %3176 = vmatpush1.bf16.msra.mxu0 %v3105
      %3177 = vmatprep.subr.bf16.mxu0 0
      %3178 = vmatpush1.bf16.msra.mxu0 %v3104
      %3179 = vmatprep.subr.bf16.mxu0 0
      %3180 = vmatpush1.bf16.msra.mxu0 %v3103
      %3181 = vmatprep.subr.bf16.mxu0 0
      %3182 = vmatpush2.bf16.msra.mxu0 0
      %3183 = vmatprep.subr.bf16.mxu0 0
      %3184 = vmatpush2.bf16.msra.mxu0 0
      %3185 = vmatprep.subr.bf16.mxu0 0
      %3186 = vmatpush2.bf16.msra.mxu0 0
      %3187 = vmatprep.subr.bf16.mxu0 0
      %3188 = vmatpush2.bf16.msra.mxu0 0
      %3189 = vmatprep.subr.bf16.mxu0 0
      %3190 = vmatpush2.bf16.msra.mxu0 0
      %3191 = vmatprep.subr.bf16.mxu0 0
      %3192 = vmatpush2.bf16.msra.mxu0 0
      %3193 = vmatprep.subr.bf16.mxu0 0
      %3194 = vmatpush2.bf16.msra.mxu0 0
      %3195 = vmatprep.subr.bf16.mxu0 0
      %3196 = vmatpush2.bf16.msra.mxu0 0
      %3197 = vmatprep.mubr.bf16.mxu0 0
      %3198 = vmatmul.mubr.bf16.gmra.mxu0 %v3112
      %v3199 = vpop.f32.mrf.mxu0
      %v3200 = vadd.f32 0.0, %v3199
      %v3201 = vpop.f32.mrf.mxu0
      %v3202 = vpop.f32.mrf.mxu0
      %v3203 = vadd.f32 0.0, %v3202
      %v3204 = vpop.f32.mrf.mxu0
      %3205 = vmatprep.mubr.bf16.mxu0 0
      %3206 = vmatmul.mubr.bf16.gmra.mxu0 %v3115
      %v3207 = vpop.f32.mrf.mxu0
      %v3208 = vadd.f32 0.0, %v3207
      %v3209 = vpop.f32.mrf.mxu0
      %v3210 = vpop.f32.mrf.mxu0
      %v3211 = vadd.f32 0.0, %v3210
      %v3212 = vpop.f32.mrf.mxu0
      %3213 = vmatprep.mubr.bf16.mxu0 0
      %3214 = vmatmul.mubr.bf16.gmra.mxu0 %v3118
      %v3215 = vpop.f32.mrf.mxu0
      %v3216 = vadd.f32 0.0, %v3215
      %v3217 = vpop.f32.mrf.mxu0
      %v3218 = vpop.f32.mrf.mxu0
      %v3219 = vadd.f32 0.0, %v3218
      %v3220 = vpop.f32.mrf.mxu0
      %3221 = vmatprep.mubr.bf16.mxu0 0
      %3222 = vmatmul.mubr.bf16.gmra.mxu0 %v3121
      %v3223 = vpop.f32.mrf.mxu0
      %v3224 = vadd.f32 0.0, %v3223
      %v3225 = vpop.f32.mrf.mxu0
      %v3226 = vpop.f32.mrf.mxu0
      %v3227 = vadd.f32 0.0, %v3226
      %v3228 = vpop.f32.mrf.mxu0
      %3229 = vmatprep.mubr.bf16.mxu0 0
      %3230 = vmatmul.mubr.bf16.gmra.mxu0 %v3124
      %v3231 = vpop.f32.mrf.mxu0
      %v3232 = vadd.f32 0.0, %v3231
      %v3233 = vpop.f32.mrf.mxu0
      %v3234 = vpop.f32.mrf.mxu0
      %v3235 = vadd.f32 0.0, %v3234
      %v3236 = vpop.f32.mrf.mxu0
      %3237 = vmatprep.mubr.bf16.mxu0 0
      %3238 = vmatmul.mubr.bf16.gmra.mxu0 %v3127
      %v3239 = vpop.f32.mrf.mxu0
      %v3240 = vadd.f32 0.0, %v3239
      %v3241 = vpop.f32.mrf.mxu0
      %v3242 = vpop.f32.mrf.mxu0
      %v3243 = vadd.f32 0.0, %v3242
      %v3244 = vpop.f32.mrf.mxu0
      %3245 = vmatprep.mubr.bf16.mxu0 0
      %3246 = vmatmul.mubr.bf16.gmra.mxu0 %v3130
      %v3247 = vpop.f32.mrf.mxu0
      %v3248 = vadd.f32 0.0, %v3247
      %v3249 = vpop.f32.mrf.mxu0
      %v3250 = vpop.f32.mrf.mxu0
      %v3251 = vadd.f32 0.0, %v3250
      %v3252 = vpop.f32.mrf.mxu0
      %3253 = vmatprep.mubr.bf16.mxu0 0
      %3254 = vmatmul.mubr.bf16.gmra.mxu0 %v3133
      %v3255 = vpop.f32.mrf.mxu0
      %v3256 = vadd.f32 0.0, %v3255
      %v3257 = vpop.f32.mrf.mxu0
      %v3258 = vpop.f32.mrf.mxu0
      %v3259 = vadd.f32 0.0, %v3258
      %v3260 = vpop.f32.mrf.mxu0
      %3261 = vmatprep.mubr.bf16.mxu0 0
      %3262 = vmatmul.mubr.bf16.gmra.mxu0 %v3136
      %v3263 = vpop.f32.mrf.mxu0
      %v3264 = vadd.f32 0.0, %v3263
      %v3265 = vpop.f32.mrf.mxu0
      %v3266 = vpop.f32.mrf.mxu0
      %v3267 = vadd.f32 0.0, %v3266
      %v3268 = vpop.f32.mrf.mxu0
      %3269 = vmatprep.mubr.bf16.mxu0 0
      %3270 = vmatmul.mubr.bf16.gmra.mxu0 %v3139
      %v3271 = vpop.f32.mrf.mxu0
      %v3272 = vadd.f32 0.0, %v3271
      %v3273 = vpop.f32.mrf.mxu0
      %v3274 = vpop.f32.mrf.mxu0
      %v3275 = vadd.f32 0.0, %v3274
      %v3276 = vpop.f32.mrf.mxu0
      %3277 = vmatprep.mubr.bf16.mxu0 0
      %3278 = vmatmul.mubr.bf16.gmra.mxu0 %v3142
      %v3279 = vpop.f32.mrf.mxu0
      %v3280 = vadd.f32 0.0, %v3279
      %v3281 = vpop.f32.mrf.mxu0
      %v3282 = vpop.f32.mrf.mxu0
      %v3283 = vadd.f32 0.0, %v3282
      %v3284 = vpop.f32.mrf.mxu0
      %3285 = vmatprep.mubr.bf16.mxu0 0
      %3286 = vmatmul.mubr.bf16.gmra.mxu0 %v3145
      %v3287 = vpop.f32.mrf.mxu0
      %v3288 = vadd.f32 0.0, %v3287
      %v3289 = vpop.f32.mrf.mxu0
      %v3290 = vpop.f32.mrf.mxu0
      %v3291 = vadd.f32 0.0, %v3290
      %v3292 = vpop.f32.mrf.mxu0
      %3293 = vmatprep.mubr.bf16.mxu0 0
      %3294 = vmatmul.mubr.bf16.gmra.mxu0 %v3148
      %v3295 = vpop.f32.mrf.mxu0
      %v3296 = vadd.f32 0.0, %v3295
      %v3297 = vpop.f32.mrf.mxu0
      %v3298 = vpop.f32.mrf.mxu0
      %v3299 = vadd.f32 0.0, %v3298
      %v3300 = vpop.f32.mrf.mxu0
      %3301 = vmatprep.mubr.bf16.mxu0 0
      %3302 = vmatmul.mubr.bf16.gmra.mxu0 %v3151
      %v3303 = vpop.f32.mrf.mxu0
      %v3304 = vadd.f32 0.0, %v3303
      %v3305 = vpop.f32.mrf.mxu0
      %v3306 = vpop.f32.mrf.mxu0
      %v3307 = vadd.f32 0.0, %v3306
      %v3308 = vpop.f32.mrf.mxu0
      %3309 = vmatprep.mubr.bf16.mxu0 0
      %3310 = vmatmul.mubr.bf16.gmra.mxu0 %v3154
      %v3311 = vpop.f32.mrf.mxu0
      %v3312 = vadd.f32 0.0, %v3311
      %v3313 = vpop.f32.mrf.mxu0
      %v3314 = vpop.f32.mrf.mxu0
      %v3315 = vadd.f32 0.0, %v3314
      %v3316 = vpop.f32.mrf.mxu0
      %3317 = vmatprep.mubr.bf16.mxu0 0
      %3318 = vmatmul.mubr.bf16.gmra.mxu0 %v3157
      %v3319 = vpop.f32.mrf.mxu0
      %v3320 = vadd.f32 0.0, %v3319
      %v3321 = vpop.f32.mrf.mxu0
      %v3322 = vpop.f32.mrf.mxu0
      %v3323 = vadd.f32 0.0, %v3322
      %v3324 = vpop.f32.mrf.mxu0
      %3325 = vmatprep.mubr.bf16.mxu0 0
      %3326 = vmatmul.mubr.bf16.gmra.mxu0 %v3160
      %v3327 = vpop.f32.mrf.mxu0
      %v3328 = vadd.f32 0.0, %v3327
      %v3329 = vpop.f32.mrf.mxu0
      %v3330 = vpop.f32.mrf.mxu0
      %v3331 = vadd.f32 0.0, %v3330
      %v3332 = vpop.f32.mrf.mxu0
      %3333 = vmatprep.mubr.bf16.mxu0 0
      %3334 = vmatmul.mubr.bf16.gmra.mxu0 %v3163
      %v3335 = vpop.f32.mrf.mxu0
      %v3336 = vadd.f32 0.0, %v3335
      %v3337 = vpop.f32.mrf.mxu0
      %v3338 = vpop.f32.mrf.mxu0
      %v3339 = vadd.f32 0.0, %v3338
      %v3340 = vpop.f32.mrf.mxu0
      %3341 = vdwg.mxu0
      %v3342 = vadd.f32 %v2988, %v3200
      %v3343 = vadd.f32 %v2989, %v3203
      %v3344 = vadd.f32 %v2990, %v3208
      %v3345 = vadd.f32 %v2991, %v3211
      %v3346 = vadd.f32 %v2992, %v3216
      %v3347 = vadd.f32 %v2993, %v3219
      %v3348 = vadd.f32 %v2994, %v3224
      %v3349 = vadd.f32 %v2995, %v3227
      %v3350 = vadd.f32 %v2996, %v3232
      %v3351 = vadd.f32 %v2997, %v3235
      %v3352 = vadd.f32 %v2998, %v3240
      %v3353 = vadd.f32 %v2999, %v3243
      %v3354 = vadd.f32 %v3000, %v3248
      %v3355 = vadd.f32 %v3001, %v3251
      %v3356 = vadd.f32 %v3002, %v3256
      %v3357 = vadd.f32 %v3003, %v3259
      %v3358 = vadd.f32 %v3004, %v3264
      %v3359 = vadd.f32 %v3005, %v3267
      %v3360 = vadd.f32 %v3006, %v3272
      %v3361 = vadd.f32 %v3007, %v3275
      %v3362 = vadd.f32 %v3008, %v3280
      %v3363 = vadd.f32 %v3009, %v3283
      %v3364 = vadd.f32 %v3010, %v3288
      %v3365 = vadd.f32 %v3011, %v3291
      %v3366 = vadd.f32 %v3012, %v3296
      %v3367 = vadd.f32 %v3013, %v3299
      %v3368 = vadd.f32 %v3014, %v3304
      %v3369 = vadd.f32 %v3015, %v3307
      %v3370 = vadd.f32 %v3016, %v3312
      %v3371 = vadd.f32 %v3017, %v3315
      %v3372 = vadd.f32 %v3018, %v3320
      %v3373 = vadd.f32 %v3019, %v3323
      %v3374 = vadd.f32 %v3020, %v3328
      %v3375 = vadd.f32 %v3021, %v3331
      %v3376 = vadd.f32 %v3022, %v3336
      %v3377 = vadd.f32 %v3023, %v3339
      %v3378 = vadd.f32 %v3342, 1.0
      %v3379 = vadd.f32 %v3343, 1.0
      %v3380 = vadd.f32 %v3344, 1.0
      %v3381 = vadd.f32 %v3345, 1.0
      %v3382 = vadd.f32 %v3346, 1.0
      %v3383 = vadd.f32 %v3347, 1.0
      %v3384 = vadd.f32 %v3348, 1.0
      %v3385 = vadd.f32 %v3349, 1.0
      %v3386 = vadd.f32 %v3350, 1.0
      %v3387 = vadd.f32 %v3351, 1.0
      %v3388 = vadd.f32 %v3352, 1.0
      %v3389 = vadd.f32 %v3353, 1.0
      %v3390 = vadd.f32 %v3354, 1.0
      %v3391 = vadd.f32 %v3355, 1.0
      %v3392 = vadd.f32 %v3356, 1.0
      %v3393 = vadd.f32 %v3357, 1.0
      %v3394 = vadd.f32 %v3358, 1.0
      %v3395 = vadd.f32 %v3359, 1.0
      %v3396 = vadd.f32 %v3360, 1.0
      %v3397 = vadd.f32 %v3361, 1.0
      %v3398 = vadd.f32 %v3362, 1.0
      %v3399 = vadd.f32 %v3363, 1.0
      %v3400 = vadd.f32 %v3364, 1.0
      %v3401 = vadd.f32 %v3365, 1.0
      %v3402 = vadd.f32 %v3366, 1.0
      %v3403 = vadd.f32 %v3367, 1.0
      %v3404 = vadd.f32 %v3368, 1.0
      %v3405 = vadd.f32 %v3369, 1.0
      %v3406 = vadd.f32 %v3370, 1.0
      %v3407 = vadd.f32 %v3371, 1.0
      %v3408 = vadd.f32 %v3372, 1.0
      %v3409 = vadd.f32 %v3373, 1.0
      %v3410 = vadd.f32 %v3374, 1.0
      %v3411 = vadd.f32 %v3375, 1.0
      %v3412 = vadd.f32 %v3376, 1.0
      %v3413 = vadd.f32 %v3377, 1.0
      %v3414 = vmul.f32 %v3378, %v3378
      %v3415 = vmul.f32 %v3379, %v3379
      %v3416 = vmul.f32 %v3380, %v3380
      %v3417 = vmul.f32 %v3381, %v3381
      %v3418 = vmul.f32 %v3382, %v3382
      %v3419 = vmul.f32 %v3383, %v3383
      %v3420 = vmul.f32 %v3384, %v3384
      %v3421 = vmul.f32 %v3385, %v3385
      %v3422 = vmul.f32 %v3386, %v3386
      %v3423 = vmul.f32 %v3387, %v3387
      %v3424 = vmul.f32 %v3388, %v3388
      %v3425 = vmul.f32 %v3389, %v3389
      %v3426 = vmul.f32 %v3390, %v3390
      %v3427 = vmul.f32 %v3391, %v3391
      %v3428 = vmul.f32 %v3392, %v3392
      %v3429 = vmul.f32 %v3393, %v3393
      %v3430 = vmul.f32 %v3394, %v3394
      %v3431 = vmul.f32 %v3395, %v3395
      %v3432 = vmul.f32 %v3396, %v3396
      %v3433 = vmul.f32 %v3397, %v3397
      %v3434 = vmul.f32 %v3398, %v3398
      %v3435 = vmul.f32 %v3399, %v3399
      %v3436 = vmul.f32 %v3400, %v3400
      %v3437 = vmul.f32 %v3401, %v3401
      %v3438 = vmul.f32 %v3402, %v3402
      %v3439 = vmul.f32 %v3403, %v3403
      %v3440 = vmul.f32 %v3404, %v3404
      %v3441 = vmul.f32 %v3405, %v3405
      %v3442 = vmul.f32 %v3406, %v3406
      %v3443 = vmul.f32 %v3407, %v3407
      %v3444 = vmul.f32 %v3408, %v3408
      %v3445 = vmul.f32 %v3409, %v3409
      %v3446 = vmul.f32 %v3410, %v3410
      %v3447 = vmul.f32 %v3411, %v3411
      %v3448 = vmul.f32 %v3412, %v3412
      %v3449 = vmul.f32 %v3413, %v3413
      %v3450 = vmul.f32 %v3414, %v3378
      %v3451 = vmul.f32 %v3415, %v3379
      %v3452 = vmul.f32 %v3416, %v3380
      %v3453 = vmul.f32 %v3417, %v3381
      %v3454 = vmul.f32 %v3418, %v3382
      %v3455 = vmul.f32 %v3419, %v3383
      %v3456 = vmul.f32 %v3420, %v3384
      %v3457 = vmul.f32 %v3421, %v3385
      %v3458 = vmul.f32 %v3422, %v3386
      %v3459 = vmul.f32 %v3423, %v3387
      %v3460 = vmul.f32 %v3424, %v3388
      %v3461 = vmul.f32 %v3425, %v3389
      %v3462 = vmul.f32 %v3426, %v3390
      %v3463 = vmul.f32 %v3427, %v3391
      %v3464 = vmul.f32 %v3428, %v3392
      %v3465 = vmul.f32 %v3429, %v3393
      %v3466 = vmul.f32 %v3430, %v3394
      %v3467 = vmul.f32 %v3431, %v3395
      %v3468 = vmul.f32 %v3432, %v3396
      %v3469 = vmul.f32 %v3433, %v3397
      %v3470 = vmul.f32 %v3434, %v3398
      %v3471 = vmul.f32 %v3435, %v3399
      %v3472 = vmul.f32 %v3436, %v3400
      %v3473 = vmul.f32 %v3437, %v3401
      %v3474 = vmul.f32 %v3438, %v3402
      %v3475 = vmul.f32 %v3439, %v3403
      %v3476 = vmul.f32 %v3440, %v3404
      %v3477 = vmul.f32 %v3441, %v3405
      %v3478 = vmul.f32 %v3442, %v3406
      %v3479 = vmul.f32 %v3443, %v3407
      %v3480 = vmul.f32 %v3444, %v3408
      %v3481 = vmul.f32 %v3445, %v3409
      %v3482 = vmul.f32 %v3446, %v3410
      %v3483 = vmul.f32 %v3447, %v3411
      %v3484 = vmul.f32 %v3448, %v3412
      %v3485 = vmul.f32 %v3449, %v3413
      %v3486 = vld [vmem:[%s251] sm:$0x1]
      %v3488 = vlaneseq
      %v3489 = vshrl.u32 %v3488, 7
      %v3490 = vsub.s32 0, %v3489
      %v3491 = vrot.slane %v3486, %v3490
      %v3493 = vmul.f32 %v3450, %v3491
      %v3494 = vmul.f32 %v3451, %v3491
      %v3495 = vmul.f32 %v3452, %v3491
      %v3496 = vmul.f32 %v3453, %v3491
      %v3497 = vmul.f32 %v3454, %v3491
      %v3498 = vmul.f32 %v3455, %v3491
      %v3499 = vmul.f32 %v3456, %v3491
      %v3500 = vmul.f32 %v3457, %v3491
      %v3501 = vmul.f32 %v3458, %v3491
      %v3502 = vmul.f32 %v3459, %v3491
      %v3503 = vmul.f32 %v3460, %v3491
      %v3504 = vmul.f32 %v3461, %v3491
      %v3505 = vmul.f32 %v3462, %v3491
      %v3506 = vmul.f32 %v3463, %v3491
      %v3507 = vmul.f32 %v3464, %v3491
      %v3508 = vmul.f32 %v3465, %v3491
      %v3509 = vmul.f32 %v3466, %v3491
      %v3510 = vmul.f32 %v3467, %v3491
      %v3511 = vmul.f32 %v3468, %v3491
      %v3512 = vmul.f32 %v3469, %v3491
      %v3513 = vmul.f32 %v3470, %v3491
      %v3514 = vmul.f32 %v3471, %v3491
      %v3515 = vmul.f32 %v3472, %v3491
      %v3516 = vmul.f32 %v3473, %v3491
      %v3517 = vmul.f32 %v3474, %v3491
      %v3518 = vmul.f32 %v3475, %v3491
      %v3519 = vmul.f32 %v3476, %v3491
      %v3520 = vmul.f32 %v3477, %v3491
      %v3521 = vmul.f32 %v3478, %v3491
      %v3522 = vmul.f32 %v3479, %v3491
      %v3523 = vmul.f32 %v3480, %v3491
      %v3524 = vmul.f32 %v3481, %v3491
      %v3525 = vmul.f32 %v3482, %v3491
      %v3526 = vmul.f32 %v3483, %v3491
      %v3527 = vmul.f32 %v3484, %v3491
      %v3528 = vmul.f32 %v3485, %v3491
      %v3529 = vld [vmem:[%s254] sm:$0x1]
      %v3531 = vlaneseq
      %v3532 = vshrl.u32 %v3531, 7
      %v3533 = vsub.s32 0, %v3532
      %v3534 = vrot.slane %v3529, %v3533
      %v3536 = vadd.f32 %v3493, %v3534
      %v3537 = vadd.f32 %v3494, %v3534
      %v3538 = vadd.f32 %v3495, %v3534
      %v3539 = vadd.f32 %v3496, %v3534
      %v3540 = vadd.f32 %v3497, %v3534
      %v3541 = vadd.f32 %v3498, %v3534
      %v3542 = vadd.f32 %v3499, %v3534
      %v3543 = vadd.f32 %v3500, %v3534
      %v3544 = vadd.f32 %v3501, %v3534
      %v3545 = vadd.f32 %v3502, %v3534
      %v3546 = vadd.f32 %v3503, %v3534
      %v3547 = vadd.f32 %v3504, %v3534
      %v3548 = vadd.f32 %v3505, %v3534
      %v3549 = vadd.f32 %v3506, %v3534
      %v3550 = vadd.f32 %v3507, %v3534
      %v3551 = vadd.f32 %v3508, %v3534
      %v3552 = vadd.f32 %v3509, %v3534
      %v3553 = vadd.f32 %v3510, %v3534
      %v3554 = vadd.f32 %v3511, %v3534
      %v3555 = vadd.f32 %v3512, %v3534
      %v3556 = vadd.f32 %v3513, %v3534
      %v3557 = vadd.f32 %v3514, %v3534
      %v3558 = vadd.f32 %v3515, %v3534
      %v3559 = vadd.f32 %v3516, %v3534
      %v3560 = vadd.f32 %v3517, %v3534
      %v3561 = vadd.f32 %v3518, %v3534
      %v3562 = vadd.f32 %v3519, %v3534
      %v3563 = vadd.f32 %v3520, %v3534
      %v3564 = vadd.f32 %v3521, %v3534
      %v3565 = vadd.f32 %v3522, %v3534
      %v3566 = vadd.f32 %v3523, %v3534
      %v3567 = vadd.f32 %v3524, %v3534
      %v3568 = vadd.f32 %v3525, %v3534
      %v3569 = vadd.f32 %v3526, %v3534
      %v3570 = vadd.f32 %v3527, %v3534
      %v3571 = vadd.f32 %v3528, %v3534
      %v3572 = vmax.f32 %v3536, 0.0
      %v3573 = vmax.f32 %v3537, 0.0
      %v3574 = vmax.f32 %v3538, 0.0
      %v3575 = vmax.f32 %v3539, 0.0
      %v3576 = vmax.f32 %v3540, 0.0
      %v3577 = vmax.f32 %v3541, 0.0
      %v3578 = vmax.f32 %v3542, 0.0
      %v3579 = vmax.f32 %v3543, 0.0
      %v3580 = vmax.f32 %v3544, 0.0
      %v3581 = vmax.f32 %v3545, 0.0
      %v3582 = vmax.f32 %v3546, 0.0
      %v3583 = vmax.f32 %v3547, 0.0
      %v3584 = vmax.f32 %v3548, 0.0
      %v3585 = vmax.f32 %v3549, 0.0
      %v3586 = vmax.f32 %v3550, 0.0
      %v3587 = vmax.f32 %v3551, 0.0
      %v3588 = vmax.f32 %v3552, 0.0
      %v3589 = vmax.f32 %v3553, 0.0
      %v3590 = vmax.f32 %v3554, 0.0
      %v3591 = vmax.f32 %v3555, 0.0
      %v3592 = vmax.f32 %v3556, 0.0
      %v3593 = vmax.f32 %v3557, 0.0
      %v3594 = vmax.f32 %v3558, 0.0
      %v3595 = vmax.f32 %v3559, 0.0
      %v3596 = vmax.f32 %v3560, 0.0
      %v3597 = vmax.f32 %v3561, 0.0
      %v3598 = vmax.f32 %v3562, 0.0
      %v3599 = vmax.f32 %v3563, 0.0
      %v3600 = vmax.f32 %v3564, 0.0
      %v3601 = vmax.f32 %v3565, 0.0
      %v3602 = vmax.f32 %v3566, 0.0
      %v3603 = vmax.f32 %v3567, 0.0
      %v3604 = vmax.f32 %v3568, 0.0
      %v3605 = vmax.f32 %v3569, 0.0
      %v3606 = vmax.f32 %v3570, 0.0
      %v3607 = vmax.f32 %v3571, 0.0
      %v3608 = vpack.c.bf16 %v3573, %v3572
      %v3609 = vpack.c.bf16 %v3575, %v3574
      %v3610 = vpack.c.bf16 %v3577, %v3576
      %v3611 = vpack.c.bf16 %v3579, %v3578
      %v3612 = vpack.c.bf16 %v3581, %v3580
      %v3613 = vpack.c.bf16 %v3583, %v3582
      %v3614 = vpack.c.bf16 %v3585, %v3584
      %v3615 = vpack.c.bf16 %v3587, %v3586
      %v3616 = vpack.c.bf16 %v3589, %v3588
      %v3617 = vpack.c.bf16 %v3591, %v3590
      %v3618 = vpack.c.bf16 %v3593, %v3592
      %v3619 = vpack.c.bf16 %v3595, %v3594
      %v3620 = vpack.c.bf16 %v3597, %v3596
      %v3621 = vpack.c.bf16 %v3599, %v3598
      %v3622 = vpack.c.bf16 %v3601, %v3600
      %v3623 = vpack.c.bf16 %v3603, %v3602
      %v3624 = vpack.c.bf16 %v3605, %v3604
      %v3625 = vpack.c.bf16 %v3607, %v3606
      %v3644 = vunpack.c.l.b16 %v3608
      %v3645 = vunpack.c.h.b16 %v3608
      %v3646 = vunpack.c.l.b16 %v3609
      %v3647 = vunpack.c.h.b16 %v3609
      %v3648 = vunpack.c.l.b16 %v3610
      %v3649 = vunpack.c.h.b16 %v3610
      %v3650 = vunpack.c.l.b16 %v3611
      %v3651 = vunpack.c.h.b16 %v3611
      %v3652 = vunpack.c.l.b16 %v3612
      %v3653 = vunpack.c.h.b16 %v3612
      %v3654 = vunpack.c.l.b16 %v3613
      %v3655 = vunpack.c.h.b16 %v3613
      %v3656 = vunpack.c.l.b16 %v3614
      %v3657 = vunpack.c.h.b16 %v3614
      %v3658 = vunpack.c.l.b16 %v3615
      %v3659 = vunpack.c.h.b16 %v3615
      %v3660 = vunpack.c.l.b16 %v3616
      %v3661 = vunpack.c.h.b16 %v3616
      %v3662 = vunpack.c.l.b16 %v3617
      %v3663 = vunpack.c.h.b16 %v3617
      %v3664 = vunpack.c.l.b16 %v3618
      %v3665 = vunpack.c.h.b16 %v3618
      %v3666 = vunpack.c.l.b16 %v3619
      %v3667 = vunpack.c.h.b16 %v3619
      %v3668 = vunpack.c.l.b16 %v3620
      %v3669 = vunpack.c.h.b16 %v3620
      %v3670 = vunpack.c.l.b16 %v3621
      %v3671 = vunpack.c.h.b16 %v3621
      %v3672 = vunpack.c.l.b16 %v3622
      %v3673 = vunpack.c.h.b16 %v3622
      %v3674 = vunpack.c.l.b16 %v3623
      %v3675 = vunpack.c.h.b16 %v3623
      %v3676 = vunpack.c.l.b16 %v3624
      %v3677 = vunpack.c.h.b16 %v3624
      %v3678 = vunpack.c.l.b16 %v3625
      %v3679 = vunpack.c.h.b16 %v3625
      %v3680 = vpack.c.b16 %v3644, %v3644
      %v3681 = vpack.c.b16 %v3645, %v3645
      %v3682 = vpack.c.b16 %v3646, %v3646
      %v3683 = vpack.c.b16 %v3647, %v3647
      %v3684 = vpack.c.b16 %v3648, %v3648
      %v3685 = vpack.c.b16 %v3649, %v3649
      %v3686 = vpack.c.b16 %v3650, %v3650
      %v3687 = vpack.c.b16 %v3651, %v3651
      %v3688 = vpack.c.b16 %v3652, %v3652
      %v3689 = vpack.c.b16 %v3653, %v3653
      %v3690 = vpack.c.b16 %v3654, %v3654
      %v3691 = vpack.c.b16 %v3655, %v3655
      %v3692 = vpack.c.b16 %v3656, %v3656
      %v3693 = vpack.c.b16 %v3657, %v3657
      %v3694 = vpack.c.b16 %v3658, %v3658
      %v3695 = vpack.c.b16 %v3659, %v3659
      %v3696 = vpack.c.b16 %v3660, %v3660
      %v3697 = vpack.c.b16 %v3661, %v3661
      %v3698 = vpack.c.b16 %v3662, %v3662
      %v3699 = vpack.c.b16 %v3663, %v3663
      %v3700 = vpack.c.b16 %v3664, %v3664
      %v3701 = vpack.c.b16 %v3665, %v3665
      %v3702 = vpack.c.b16 %v3666, %v3666
      %v3703 = vpack.c.b16 %v3667, %v3667
      %v3704 = vpack.c.b16 %v3668, %v3668
      %v3705 = vpack.c.b16 %v3669, %v3669
      %v3706 = vpack.c.b16 %v3670, %v3670
      %v3707 = vpack.c.b16 %v3671, %v3671
      %v3708 = vpack.c.b16 %v3672, %v3672
      %v3709 = vpack.c.b16 %v3673, %v3673
      %v3710 = vpack.c.b16 %v3674, %v3674
      %v3711 = vpack.c.b16 %v3675, %v3675
      %v3712 = vpack.c.b16 %v3676, %v3676
      %v3713 = vpack.c.b16 %v3677, %v3677
      %v3714 = vpack.c.b16 %v3678, %v3678
      %v3715 = vpack.c.b16 %v3679, %v3679
      %vm3752 = vcmask 519168
      %3753 = vst.msk [vmem:[%s262] sm:$0xf] %vm3752, %v3680
      %3754 = vst.msk [vmem:[%s262 + $0x4] sm:$0xf] %vm3752, %v3681
      %3755 = vst.msk [vmem:[%s262 + $0x8] sm:$0xf] %vm3752, %v3682
      %3756 = vst.msk [vmem:[%s262 + $0xc] sm:$0xf] %vm3752, %v3683
      %3757 = vst.msk [vmem:[%s262 + $0x10] sm:$0xf] %vm3752, %v3684
      %3758 = vst.msk [vmem:[%s262 + $0x14] sm:$0xf] %vm3752, %v3685
      %3759 = vst.msk [vmem:[%s262 + $0x18] sm:$0xf] %vm3752, %v3686
      %3760 = vst.msk [vmem:[%s262 + $0x1c] sm:$0xf] %vm3752, %v3687
      %3761 = vst.msk [vmem:[%s262 + $0x20] sm:$0xf] %vm3752, %v3688
      %3762 = vst.msk [vmem:[%s262 + $0x24] sm:$0xf] %vm3752, %v3689
      %3763 = vst.msk [vmem:[%s262 + $0x28] sm:$0xf] %vm3752, %v3690
      %3764 = vst.msk [vmem:[%s262 + $0x2c] sm:$0xf] %vm3752, %v3691
      %3765 = vst.msk [vmem:[%s262 + $0x30] sm:$0xf] %vm3752, %v3692
      %3766 = vst.msk [vmem:[%s262 + $0x34] sm:$0xf] %vm3752, %v3693
      %3767 = vst.msk [vmem:[%s262 + $0x38] sm:$0xf] %vm3752, %v3694
      %3768 = vst.msk [vmem:[%s262 + $0x3c] sm:$0xf] %vm3752, %v3695
      %3769 = vst.msk [vmem:[%s262 + $0x40] sm:$0xf] %vm3752, %v3696
      %3770 = vst.msk [vmem:[%s262 + $0x44] sm:$0xf] %vm3752, %v3697
      %3771 = vst.msk [vmem:[%s262 + $0x48] sm:$0xf] %vm3752, %v3698
      %3772 = vst.msk [vmem:[%s262 + $0x4c] sm:$0xf] %vm3752, %v3699
      %3773 = vst.msk [vmem:[%s262 + $0x50] sm:$0xf] %vm3752, %v3700
      %3774 = vst.msk [vmem:[%s262 + $0x54] sm:$0xf] %vm3752, %v3701
      %3775 = vst.msk [vmem:[%s262 + $0x58] sm:$0xf] %vm3752, %v3702
      %3776 = vst.msk [vmem:[%s262 + $0x5c] sm:$0xf] %vm3752, %v3703
      %3777 = vst.msk [vmem:[%s262 + $0x60] sm:$0xf] %vm3752, %v3704
      %3778 = vst.msk [vmem:[%s262 + $0x64] sm:$0xf] %vm3752, %v3705
      %3779 = vst.msk [vmem:[%s262 + $0x68] sm:$0xf] %vm3752, %v3706
      %3780 = vst.msk [vmem:[%s262 + $0x6c] sm:$0xf] %vm3752, %v3707
      %3781 = vst.msk [vmem:[%s262 + $0x70] sm:$0xf] %vm3752, %v3708
      %3782 = vst.msk [vmem:[%s262 + $0x74] sm:$0xf] %vm3752, %v3709
      %3783 = vst.msk [vmem:[%s262 + $0x78] sm:$0xf] %vm3752, %v3710
      %3784 = vst.msk [vmem:[%s262 + $0x7c] sm:$0xf] %vm3752, %v3711
      %3785 = vst.msk [vmem:[%s262 + $0x80] sm:$0xf] %vm3752, %v3712
      %3786 = vst.msk [vmem:[%s262 + $0x84] sm:$0xf] %vm3752, %v3713
      %3787 = vst.msk [vmem:[%s262 + $0x88] sm:$0xf] %vm3752, %v3714
      %3788 = vst.msk [vmem:[%s262 + $0x8c] sm:$0xf] %vm3752, %v3715
      %p3789 = scmp.lt.s32.totalorder %s19, 1
      %s3790 = scalar_select %p3789, %s19, 1
      %p3791 = scmp.lt.s32.totalorder %s20, 0
      %s3792 = scalar_select %p3791, %s20, 0
      %s3793 = smul.addr %s3790, 36
      %s3794 = sadd.s32 %s3792, %s3793
      %s3795 = smul.addr %s3794, 4
      %s3796 = scalar_lea.vmem %s4, %s3795
      // Predicated region
      $region37: #{_lambda_.5} parent=35 // pred_check
        %p3797 = pneg %p151
      $region38: #{_lambda_.5} parent=35 // pred_check_branch
        %3799 = sbr.rel (%p3797) target = $region40
      $region39: #{_lambda_.5} parent=35 // pred_region
        _
      $region40: #{_lambda_.5} parent=35 // pred_fallthru
        _
    $region36: #{_lambda_.5} parent=5 // pred_fallthru
      _
    %p3800 = scmp.le.s32.totalorder 2, %s10
    // Predicated region
    $region41: #{_lambda_.5} parent=5 // pred_check
      %p3801 = pneg %p3800
    $region42: #{_lambda_.5} parent=5 // pred_check_branch
      %3803 = sbr.rel (%p3801) target = $region44
    $region43: #{_lambda_.5} parent=5 // pred_region
      %s3804 = ssub.s32 %s10, 2
      // Predicated region
      $region45: #{_lambda_.5} parent=43 // pred_check
        %p3805 = pneg %p157
      $region46: #{_lambda_.5} parent=43 // pred_check_branch
        %3807 = sbr.rel (%p3805) target = $region48
      $region47: #{_lambda_.5} parent=43 // pred_region
        %p3808 = scmp.lt.s32.totalorder %s21, 1
        %s3809 = scalar_select %p3808, %s21, 1
        %p3810 = scmp.lt.s32.totalorder %s22, 0
        %s3811 = scalar_select %p3810, %s22, 0
        %s3812 = smul.addr %s3809, 36
        %s3813 = sadd.s32 %s3811, %s3812
        %s3814 = smul.addr %s3813, 4
        %s3815 = scalar_lea.vmem %s4, %s3814
      $region48: #{_lambda_.5} parent=43 // pred_fallthru
        _
    $region44: #{_lambda_.5} parent=5 // pred_fallthru
      _
  $region6: #{_lambda_.5} parent=0 // loop_footer
    %s14 = sadd.s32 1, %s10
  $region7: #{_lambda_.5} parent=0 // loop_footer_branch
    %9 = sbr.rel target = $region3
  $region8: #{_lambda_.5} parent=0 // loop_exit
    _

// kernel: _lambda_.7
$region0: #{_lambda_.7}
  #allocation0 [shape = 'u32[]', space=smem, size = 0x4, offset = 0x4, fixed_abs, tag = 'smem constant byte address 0x4 - core index']
  #allocation1 [shape = 'u32[144,128]{1,0:T(1,128)}', space=vmem, size = 0x12000, scoped, tag = 'internal scratch']
  #allocation2 [shape = 'f32[256,256]{1,0:T(8,128)}', space=vmem, size = 0x40000, scoped, tag = 'scratch operand']
  %s0 = inlined_call_operand.vmem [shape: bf16[512,64], index: 0, kind: input, shape index: {}]
  %s1 = inlined_call_operand.vmem [shape: bf16[64,256], index: 1, kind: input, shape index: {}]
  %s2 = inlined_call_operand.vmem [shape: f32[1,256], index: 2, kind: input, shape index: {}]
  %s3 = inlined_call_operand.vmem [shape: f32[1,256], index: 3, kind: input, shape index: {}]
  %s4 = inlined_call_operand.vmem [shape: f32[512,256], index: 4, kind: input, shape index: {}]
  %s5 = inlined_call_operand.hbm [shape: f32[512,256], index: 5, kind: output, shape index: {}]
  %s6 = sld [smem:[#allocation0]]
  $region61: #{_lambda_.7} parent=0
    _
  %s8 = ssub.s32 1, %s6
  %s9 = scalar_select 0, %s8, %s6
  $region1: #{_lambda_.7} parent=0
    #allocation3 [shape = 'u8[524288]{0}', space=vmem, size = 0x80000, scoped, tag = 'output window, operand 0']
    #allocation4 [shape = 's32[2]{0}', space=sflag, size = 0x8, scoped, tag = 'scoped memory for _lambda_.7']
    %10 = vsyncpa [#allocation4], 0
    %s11 = scalar_lea.sflag [#allocation4], 1
    %12 = vsyncpa %s11, 0
    loop: start=0, step=1, limit=4
    $region2: #{_lambda_.7} parent=1 // loop_pre_header
      _
    $region3: #{_lambda_.7} parent=1 // loop_header
      %s14 = sphi 0, %s18
      %p15 = scmp.ge.s32.totalorder %s14, 4
      %s21 = sphi 0, %s40
      %s22 = sphi 0, %s36
      %s23 = sphi 0, %s32
      %s24 = sphi 0, %s21
      %s25 = sphi 0, %s22
      %s26 = sphi 0, %s23
      %s27 = sphi 0, %s24
      %s28 = sphi 0, %s25
      %s29 = sphi 0, %s26
      %s45 = sphi 0, %s47
      %s48 = sphi 0, %s45
      %s49 = sphi 0, %s48
      %s65 = sphi 0, %s49
      %s73 = sphi 0, %s75
      %s76 = sphi 0, %s73
      %s77 = sphi 0, %s76
      %s93 = sphi 0, %s77
      %s99 = sphi 0, %s101
      %s102 = sphi 0, %s99
      %s103 = sphi 0, %s102
      %s119 = sphi 0, %s103
      %s125 = sphi 0, %s127
      %s128 = sphi 0, %s125
      %s129 = sphi 0, %s128
      %s145 = sphi 0, %s129
      %s153 = sphi 0, %s155
      %s156 = sphi 0, %s153
      %s157 = sphi 0, %s156
      %s173 = sphi 0, %s157
      %s181 = sphi 0, %s183
      %s184 = sphi 0, %s181
      %s185 = sphi 0, %s184
      %s201 = sphi 0, %s185
    $region4: #{_lambda_.7} parent=1 // loop_header_branch
      %17 = sbr.rel (%p15) target = $region8
    $region5: #{_lambda_.7} parent=1 // loop_body
      %s19 = ssub.s32 %s14, 1
      %s20 = ssub.s32 %s14, 2
      %s30 = sadd.s32 1, %s23
      %p31 = scmp.ge.s32.totalorder %s30, 1
      %s32 = scalar_select %p31, 0, %s30
      %s33 = sadd.s32 1, %s22
      %s34 = scalar_select %p31, %s33, %s22
      %p35 = scmp.ge.s32.totalorder %s34, 1
      %s36 = scalar_select %p35, 0, %s34
      %s37 = sadd.s32 1, %s21
      %s38 = scalar_select %p35, %s37, %s21
      %p39 = scmp.ge.s32.totalorder %s38, 2
      %s40 = scalar_select %p39, 0, %s38
      %s41 = ssub.s32 %s21, %s40
      %s42 = ssub.s32 %s23, %s32
      %s43 = sor.u32 %s41, %s42
      %p44 = scmp.eq.s32.totalorder %s43, 0
      %s46 = sadd.s32 %s45, 1
      %s47 = scalar_select %p44, %s45, %s46
      %p50 = pneg %p44
      %p51 = scmp.eq.s32.totalorder %s14, 1
      %p52 = por %p50, %p51
      %p53 = scmp.ne.s32.totalorder %s45, %s48
      %p54 = scmp.eq.s32.totalorder %s14, 0
      %p55 = por %p53, %p54
      %p56 = scmp.ne.s32.totalorder %s45, %s48
      %p57 = scmp.eq.s32.totalorder %s19, 1
      %p58 = por %p56, %p57
      %p59 = scmp.ne.s32.totalorder %s48, %s49
      %p60 = scmp.eq.s32.totalorder %s19, 0
      %p61 = por %p59, %p60
      %p62 = scmp.ne.s32.totalorder %s48, %s49
      %p63 = scmp.eq.s32.totalorder %s20, 1
      %p64 = por %p62, %p63
      %p66 = scmp.ne.s32.totalorder %s49, %s65
      %p67 = scmp.eq.s32.totalorder %s20, 0
      %p68 = por %p66, %p67
      %s69 = ssub.s32 %s23, %s32
      %s70 = ssub.s32 %s22, %s36
      %s71 = sor.u32 %s69, %s70
      %p72 = scmp.eq.s32.totalorder %s71, 0
      %s74 = sadd.s32 %s73, 1
      %s75 = scalar_select %p72, %s73, %s74
      %p78 = pneg %p72
      %p79 = scmp.eq.s32.totalorder %s14, 1
      %p80 = por %p78, %p79
      %p81 = scmp.ne.s32.totalorder %s73, %s76
      %p82 = scmp.eq.s32.totalorder %s14, 0
      %p83 = por %p81, %p82
      %p84 = scmp.ne.s32.totalorder %s73, %s76
      %p85 = scmp.eq.s32.totalorder %s19, 1
      %p86 = por %p84, %p85
      %p87 = scmp.ne.s32.totalorder %s76, %s77
      %p88 = scmp.eq.s32.totalorder %s19, 0
      %p89 = por %p87, %p88
      %p90 = scmp.ne.s32.totalorder %s76, %s77
      %p91 = scmp.eq.s32.totalorder %s20, 1
      %p92 = por %p90, %p91
      %p94 = scmp.ne.s32.totalorder %s77, %s93
      %p95 = scmp.eq.s32.totalorder %s20, 0
      %p96 = por %p94, %p95
      %s97 = ssub.s32 %s22, %s36
      %p98 = scmp.eq.s32.totalorder %s97, 0
      %s100 = sadd.s32 %s99, 1
      %s101 = scalar_select %p98, %s99, %s100
      %p104 = pneg %p98
      %p105 = scmp.eq.s32.totalorder %s14, 1
      %p106 = por %p104, %p105
      %p107 = scmp.ne.s32.totalorder %s99, %s102
      %p108 = scmp.eq.s32.totalorder %s14, 0
      %p109 = por %p107, %p108
      %p110 = scmp.ne.s32.totalorder %s99, %s102
      %p111 = scmp.eq.s32.totalorder %s19, 1
      %p112 = por %p110, %p111
      %p113 = scmp.ne.s32.totalorder %s102, %s103
      %p114 = scmp.eq.s32.totalorder %s19, 0
      %p115 = por %p113, %p114
      %p116 = scmp.ne.s32.totalorder %s102, %s103
      %p117 = scmp.eq.s32.totalorder %s20, 1
      %p118 = por %p116, %p117
      %p120 = scmp.ne.s32.totalorder %s103, %s119
      %p121 = scmp.eq.s32.totalorder %s20, 0
      %p122 = por %p120, %p121
      %s123 = ssub.s32 %s22, %s36
      %p124 = scmp.eq.s32.totalorder %s123, 0
      %s126 = sadd.s32 %s125, 1
      %s127 = scalar_select %p124, %s125, %s126
      %p130 = pneg %p124
      %p131 = scmp.eq.s32.totalorder %s14, 1
      %p132 = por %p130, %p131
      %p133 = scmp.ne.s32.totalorder %s125, %s128
      %p134 = scmp.eq.s32.totalorder %s14, 0
      %p135 = por %p133, %p134
      %p136 = scmp.ne.s32.totalorder %s125, %s128
      %p137 = scmp.eq.s32.totalorder %s19, 1
      %p138 = por %p136, %p137
      %p139 = scmp.ne.s32.totalorder %s128, %s129
      %p140 = scmp.eq.s32.totalorder %s19, 0
      %p141 = por %p139, %p140
      %p142 = scmp.ne.s32.totalorder %s128, %s129
      %p143 = scmp.eq.s32.totalorder %s20, 1
      %p144 = por %p142, %p143
      %p146 = scmp.ne.s32.totalorder %s129, %s145
      %p147 = scmp.eq.s32.totalorder %s20, 0
      %p148 = por %p146, %p147
      %s149 = ssub.s32 %s21, %s40
      %s150 = ssub.s32 %s22, %s36
      %s151 = sor.u32 %s149, %s150
      %p152 = scmp.eq.s32.totalorder %s151, 0
      %s154 = sadd.s32 %s153, 1
      %s155 = scalar_select %p152, %s153, %s154
      %p158 = pneg %p152
      %p159 = scmp.eq.s32.totalorder %s14, 1
      %p160 = por %p158, %p159
      %p161 = scmp.ne.s32.totalorder %s153, %s156
      %p162 = scmp.eq.s32.totalorder %s14, 0
      %p163 = por %p161, %p162
      %p164 = scmp.ne.s32.totalorder %s153, %s156
      %p165 = scmp.eq.s32.totalorder %s19, 1
      %p166 = por %p164, %p165
      %p167 = scmp.ne.s32.totalorder %s156, %s157
      %p168 = scmp.eq.s32.totalorder %s19, 0
      %p169 = por %p167, %p168
      %p170 = scmp.ne.s32.totalorder %s156, %s157
      %p171 = scmp.eq.s32.totalorder %s20, 1
      %p172 = por %p170, %p171
      %p174 = scmp.ne.s32.totalorder %s157, %s173
      %p175 = scmp.eq.s32.totalorder %s20, 0
      %p176 = por %p174, %p175
      %s177 = ssub.s32 %s21, %s40
      %s178 = ssub.s32 %s22, %s36
      %s179 = sor.u32 %s177, %s178
      %p180 = scmp.eq.s32.totalorder %s179, 0
      %s182 = sadd.s32 %s181, 1
      %s183 = scalar_select %p180, %s181, %s182
      %p186 = pneg %p180
      %p187 = scmp.eq.s32.totalorder %s14, 1
      %p188 = por %p186, %p187
      %p189 = scmp.ne.s32.totalorder %s181, %s184
      %p190 = scmp.eq.s32.totalorder %s14, 0
      %p191 = por %p189, %p190
      %p192 = scmp.ne.s32.totalorder %s181, %s184
      %p193 = scmp.eq.s32.totalorder %s19, 1
      %p194 = por %p192, %p193
      %p195 = scmp.ne.s32.totalorder %s184, %s185
      %p196 = scmp.eq.s32.totalorder %s19, 0
      %p197 = por %p195, %p196
      %p198 = scmp.ne.s32.totalorder %s184, %s185
      %p199 = scmp.eq.s32.totalorder %s20, 1
      %p200 = por %p198, %p199
      %p202 = scmp.ne.s32.totalorder %s185, %s201
      %p203 = scmp.eq.s32.totalorder %s20, 0
      %p204 = por %p202, %p203
      %p205 = scmp.le.s32.totalorder 1, %s14
      %p206 = scmp.lt.s32.totalorder %s14, 3
      %p207 = pnand %p205, %p206
      %p208 = pneg %p207
      // Predicated region
      $region9: #{_lambda_.7} parent=5 // pred_check
        _
      $region10: #{_lambda_.7} parent=5 // pred_check_branch
        %210 = sbr.rel (%p207) target = $region12
      $region11: #{_lambda_.7} parent=5 // pred_region
        %s211 = ssub.s32 %s14, 1
        // Predicated region
        $region13: #{_lambda_.7} parent=11 // pred_check
          %p212 = pneg %p89
        $region14: #{_lambda_.7} parent=11 // pred_check_branch
          %214 = sbr.rel (%p212) target = $region16
        $region15: #{_lambda_.7} parent=11 // pred_region
          %s215 = smul.u32 8, %s26
          %s216 = smul.u32 2, %s25
          %p217 = scmp.lt.s32.totalorder %s215, 7
          %s218 = scalar_select %p217, %s215, 7
          %p219 = scmp.lt.s32.totalorder %s216, 1
          %s220 = scalar_select %p219, %s216, 1
          %s221 = smul.addr %s218, 2
          %s222 = sadd.s32 %s220, %s221
          %s223 = smul.addr %s222, 4
          %s224 = scalar_lea.vmem %s1, %s223
          %s225 = smul.u32 8, %s26
          %s226 = smul.u32 2, %s25
        $region16: #{_lambda_.7} parent=11 // pred_fallthru
          _
        // Predicated region
        $region17: #{_lambda_.7} parent=11 // pred_check
          %p227 = pneg %p115
        $region18: #{_lambda_.7} parent=11 // pred_check_branch
          %229 = sbr.rel (%p227) target = $region20
        $region19: #{_lambda_.7} parent=11 // pred_region
          %s230 = smul.u32 2, %s25
          %p231 = scmp.lt.s32.totalorder %s230, 1
          %s232 = scalar_select %p231, %s230, 1
          %s233 = scalar_lea.vmem %s2, %s232
          %s234 = smul.u32 2, %s25
        $region20: #{_lambda_.7} parent=11 // pred_fallthru
          _
        // Predicated region
        $region21: #{_lambda_.7} parent=11 // pred_check
          %p235 = pneg %p141
        $region22: #{_lambda_.7} parent=11 // pred_check_branch
          %237 = sbr.rel (%p235) target = $region24
        $region23: #{_lambda_.7} parent=11 // pred_region
          %s238 = smul.u32 2, %s25
          %p239 = scmp.lt.s32.totalorder %s238, 1
          %s240 = scalar_select %p239, %s238, 1
          %s241 = scalar_lea.vmem %s3, %s240
          %s242 = smul.u32 2, %s25
        $region24: #{_lambda_.7} parent=11 // pred_fallthru
          _
      $region12: #{_lambda_.7} parent=5 // pred_fallthru
        _
      %p243 = scmp.lt.s32.totalorder %s14, 2
      // Predicated region
      $region25: #{_lambda_.7} parent=5 // pred_check
        %p244 = pneg %p243
      $region26: #{_lambda_.7} parent=5 // pred_check_branch
        %246 = sbr.rel (%p244) target = $region28
      $region27: #{_lambda_.7} parent=5 // pred_region
        // Predicated region
        $region29: #{_lambda_.7} parent=27 // pred_check
          %p247 = pneg %p55
        $region30: #{_lambda_.7} parent=27 // pred_check_branch
          %249 = sbr.rel (%p247) target = $region32
        $region31: #{_lambda_.7} parent=27 // pred_region
          %s250 = smul.u32 32, %s21
          %p251 = scmp.lt.s32.totalorder %s250, 63
          %s252 = scalar_select %p251, %s250, 63
          %p253 = scmp.lt.s32.totalorder %s23, 0
          %s254 = scalar_select %p253, %s23, 0
          %s255 = sadd.s32 %s254, %s252
          %s256 = smul.addr %s255, 4
          %s257 = scalar_lea.vmem %s0, %s256
          %s258 = smul.u32 32, %s21
        $region32: #{_lambda_.7} parent=27 // pred_fallthru
          _
        // Predicated region
        $region33: #{_lambda_.7} parent=27 // pred_check
          %p259 = pneg %p163
        $region34: #{_lambda_.7} parent=27 // pred_check_branch
          %261 = sbr.rel (%p259) target = $region36
        $region35: #{_lambda_.7} parent=27 // pred_region
          %s262 = smul.u32 32, %s21
          %s263 = smul.u32 2, %s22
          %p264 = scmp.lt.s32.totalorder %s262, 63
          %s265 = scalar_select %p264, %s262, 63
          %p266 = scmp.lt.s32.totalorder %s263, 1
          %s267 = scalar_select %p266, %s263, 1
          %s268 = smul.addr %s265, 2
          %s269 = sadd.s32 %s267, %s268
          %s270 = smul.addr %s269, 8
          %s271 = scalar_lea.vmem %s4, %s270
          %s272 = smul.u32 32, %s21
          %s273 = smul.u32 2, %s22
        $region36: #{_lambda_.7} parent=27 // pred_fallthru
          _
      $region28: #{_lambda_.7} parent=5 // pred_fallthru
        _
      %p274 = scmp.le.s32.totalorder 1, %s14
      %p275 = scmp.lt.s32.totalorder %s14, 3
      %p276 = pnand %p274, %p275
      %p277 = pneg %p276
      // Predicated region
      $region37: #{_lambda_.7} parent=5 // pred_check
        _
      $region38: #{_lambda_.7} parent=5 // pred_check_branch
        %279 = sbr.rel (%p276) target = $region40
      $region39: #{_lambda_.7} parent=5 // pred_region
        %s280 = ssub.s32 %s14, 1
        %s281 = smul.u32 32, %s24
        %p282 = scmp.lt.s32.totalorder %s281, 63
        %s283 = scalar_select %p282, %s281, 63
        %p284 = scmp.lt.s32.totalorder %s26, 0
        %s285 = scalar_select %p284, %s26, 0
        %s286 = sadd.s32 %s285, %s283
        %s287 = smul.addr %s286, 4
        %s288 = scalar_lea.vmem %s0, %s287
        %p289 = pneg %p61
        %p290 = pneg %p58
        %s291 = smul.u32 8, %s26
        %s292 = smul.u32 2, %s25
        %p293 = scmp.lt.s32.totalorder %s291, 7
        %s294 = scalar_select %p293, %s291, 7
        %p295 = scmp.lt.s32.totalorder %s292, 1
        %s296 = scalar_select %p295, %s292, 1
        %s297 = smul.addr %s294, 2
        %s298 = sadd.s32 %s296, %s297
        %s299 = smul.addr %s298, 4
        %s300 = scalar_lea.vmem %s1, %s299
        %p301 = pneg %p89
        %p302 = pneg %p86
        %s303 = smul.u32 2, %s25
        %p304 = scmp.lt.s32.totalorder %s303, 1
        %s305 = scalar_select %p304, %s303, 1
        %s306 = scalar_lea.vmem %s2, %s305
        %p307 = pneg %p115
        %p308 = pneg %p112
        %s309 = smul.u32 2, %s25
        %p310 = scmp.lt.s32.totalorder %s309, 1
        %s311 = scalar_select %p310, %s309, 1
        %s312 = scalar_lea.vmem %s3, %s311
        %p313 = pneg %p141
        %p314 = pneg %p138
        %s315 = smul.u32 32, %s24
        %s316 = smul.u32 2, %s25
        %p317 = scmp.lt.s32.totalorder %s315, 63
        %s318 = scalar_select %p317, %s315, 63
        %p319 = scmp.lt.s32.totalorder %s316, 1
        %s320 = scalar_select %p319, %s316, 1
        %s321 = smul.addr %s318, 2
        %s322 = sadd.s32 %s320, %s321
        %s323 = smul.addr %s322, 8
        %s324 = scalar_lea.vmem %s4, %s323
        %p325 = pneg %p169
        %p326 = pneg %p166
        %p327 = pneg %p197
        %p328 = pneg %p194
        %s329 = sand.u32 %s184, 1
        %s330 = scalar_lea.sflag [#allocation4], %s329
        %s331 = sand.u32 %s184, 1
        %s332 = smul.addr %s331, 512
        %s333 = scalar_lea.vmem [#allocation3], %s332
        %s334 = smul.u32 32, %s24
        %p335 = scmp.lt.s32.totalorder %s334, 63
        %s336 = scalar_select %p335, %s334, 63
        %p337 = scmp.lt.s32.totalorder %s26, 0
        %s338 = scalar_select %p337, %s26, 0
        %s339 = sadd.s32 %s338, %s336
        %s340 = smul.addr %s339, 4
        %s341 = scalar_lea.vmem %s0, %s340
        %s342 = smul.u32 32, %s24
        %s343 = smul.u32 8, %s26
        %s344 = smul.u32 2, %s25
        %p345 = scmp.lt.s32.totalorder %s343, 7
        %s346 = scalar_select %p345, %s343, 7
        %p347 = scmp.lt.s32.totalorder %s344, 1
        %s348 = scalar_select %p347, %s344, 1
        %s349 = smul.addr %s346, 2
        %s350 = sadd.s32 %s348, %s349
        %s351 = smul.addr %s350, 4
        %s352 = scalar_lea.vmem %s1, %s351
        %s353 = smul.u32 8, %s26
        %s354 = smul.u32 2, %s25
        %s355 = smul.u32 2, %s25
        %p356 = scmp.lt.s32.totalorder %s355, 1
        %s357 = scalar_select %p356, %s355, 1
        %s358 = scalar_lea.vmem %s2, %s357
        %s359 = smul.u32 2, %s25
        %s360 = smul.u32 2, %s25
        %p361 = scmp.lt.s32.totalorder %s360, 1
        %s362 = scalar_select %p361, %s360, 1
        %s363 = scalar_lea.vmem %s3, %s362
        %s364 = smul.u32 2, %s25
        %s365 = smul.u32 32, %s24
        %s366 = smul.u32 2, %s25
        %p367 = scmp.lt.s32.totalorder %s365, 63
        %s368 = scalar_select %p367, %s365, 63
        %p369 = scmp.lt.s32.totalorder %s366, 1
        %s370 = scalar_select %p369, %s366, 1
        %s371 = smul.addr %s368, 2
        %s372 = sadd.s32 %s370, %s371
        %s373 = smul.addr %s372, 8
        %s374 = scalar_lea.vmem %s4, %s373
        %s375 = smul.u32 32, %s24
        %s376 = smul.u32 2, %s25
        %s377 = smul.u32 32, %s24
        %s378 = smul.u32 2, %s25
        %p380 = scmp.eq.s32.totalorder %s26, 0
        // Predicated region
        $region41: #{_lambda_.7} parent=39 // pred_check
          %p381 = pneg %p380
        $region42: #{_lambda_.7} parent=39 // pred_check_branch
          %383 = sbr.rel (%p381) target = $region44
        $region43: #{_lambda_.7} parent=39 // pred_region
          %384 = vst [vmem:[#allocation2] sm:$0xff] 0.0
          %385 = vst [vmem:[#allocation2 + $0x8] sm:$0xff] 0.0
          %386 = vst [vmem:[#allocation2 + $0x10] sm:$0xff] 0.0
          %387 = vst [vmem:[#allocation2 + $0x18] sm:$0xff] 0.0
          %388 = vst [vmem:[#allocation2 + $0x20] sm:$0xff] 0.0
          %389 = vst [vmem:[#allocation2 + $0x28] sm:$0xff] 0.0
          %390 = vst [vmem:[#allocation2 + $0x30] sm:$0xff] 0.0
          %391 = vst [vmem:[#allocation2 + $0x38] sm:$0xff] 0.0
          %392 = vst [vmem:[#allocation2 + $0x40] sm:$0xff] 0.0
          %393 = vst [vmem:[#allocation2 + $0x48] sm:$0xff] 0.0
          %394 = vst [vmem:[#allocation2 + $0x50] sm:$0xff] 0.0
          %395 = vst [vmem:[#allocation2 + $0x58] sm:$0xff] 0.0
          %396 = vst [vmem:[#allocation2 + $0x60] sm:$0xff] 0.0
          %397 = vst [vmem:[#allocation2 + $0x68] sm:$0xff] 0.0
          %398 = vst [vmem:[#allocation2 + $0x70] sm:$0xff] 0.0
          %399 = vst [vmem:[#allocation2 + $0x78] sm:$0xff] 0.0
          %400 = vst [vmem:[#allocation2 + $0x80] sm:$0xff] 0.0
          %401 = vst [vmem:[#allocation2 + $0x88] sm:$0xff] 0.0
          %402 = vst [vmem:[#allocation2 + $0x90] sm:$0xff] 0.0
          %403 = vst [vmem:[#allocation2 + $0x98] sm:$0xff] 0.0
          %404 = vst [vmem:[#allocation2 + $0xa0] sm:$0xff] 0.0
          %405 = vst [vmem:[#allocation2 + $0xa8] sm:$0xff] 0.0
          %406 = vst [vmem:[#allocation2 + $0xb0] sm:$0xff] 0.0
          %407 = vst [vmem:[#allocation2 + $0xb8] sm:$0xff] 0.0
          %408 = vst [vmem:[#allocation2 + $0xc0] sm:$0xff] 0.0
          %409 = vst [vmem:[#allocation2 + $0xc8] sm:$0xff] 0.0
          %410 = vst [vmem:[#allocation2 + $0xd0] sm:$0xff] 0.0
          %411 = vst [vmem:[#allocation2 + $0xd8] sm:$0xff] 0.0
          %412 = vst [vmem:[#allocation2 + $0xe0] sm:$0xff] 0.0
          %413 = vst [vmem:[#allocation2 + $0xe8] sm:$0xff] 0.0
          %414 = vst [vmem:[#allocation2 + $0xf0] sm:$0xff] 0.0
          %415 = vst [vmem:[#allocation2 + $0xf8] sm:$0xff] 0.0
          %416 = vst [vmem:[#allocation2 + $0x100] sm:$0xff] 0.0
          %417 = vst [vmem:[#allocation2 + $0x108] sm:$0xff] 0.0
          %418 = vst [vmem:[#allocation2 + $0x110] sm:$0xff] 0.0
          %419 = vst [vmem:[#allocation2 + $0x118] sm:$0xff] 0.0
          %420 = vst [vmem:[#allocation2 + $0x120] sm:$0xff] 0.0
          %421 = vst [vmem:[#allocation2 + $0x128] sm:$0xff] 0.0
          %422 = vst [vmem:[#allocation2 + $0x130] sm:$0xff] 0.0
          %423 = vst [vmem:[#allocation2 + $0x138] sm:$0xff] 0.0
          %424 = vst [vmem:[#allocation2 + $0x140] sm:$0xff] 0.0
          %425 = vst [vmem:[#allocation2 + $0x148] sm:$0xff] 0.0
          %426 = vst [vmem:[#allocation2 + $0x150] sm:$0xff] 0.0
          %427 = vst [vmem:[#allocation2 + $0x158] sm:$0xff] 0.0
          %428 = vst [vmem:[#allocation2 + $0x160] sm:$0xff] 0.0
          %429 = vst [vmem:[#allocation2 + $0x168] sm:$0xff] 0.0
          %430 = vst [vmem:[#allocation2 + $0x170] sm:$0xff] 0.0
          %431 = vst [vmem:[#allocation2 + $0x178] sm:$0xff] 0.0
          %432 = vst [vmem:[#allocation2 + $0x180] sm:$0xff] 0.0
          %433 = vst [vmem:[#allocation2 + $0x188] sm:$0xff] 0.0
          %434 = vst [vmem:[#allocation2 + $0x190] sm:$0xff] 0.0
          %435 = vst [vmem:[#allocation2 + $0x198] sm:$0xff] 0.0
          %436 = vst [vmem:[#allocation2 + $0x1a0] sm:$0xff] 0.0
          %437 = vst [vmem:[#allocation2 + $0x1a8] sm:$0xff] 0.0
          %438 = vst [vmem:[#allocation2 + $0x1b0] sm:$0xff] 0.0
          %439 = vst [vmem:[#allocation2 + $0x1b8] sm:$0xff] 0.0
          %440 = vst [vmem:[#allocation2 + $0x1c0] sm:$0xff] 0.0
          %441 = vst [vmem:[#allocation2 + $0x1c8] sm:$0xff] 0.0
          %442 = vst [vmem:[#allocation2 + $0x1d0] sm:$0xff] 0.0
          %443 = vst [vmem:[#allocation2 + $0x1d8] sm:$0xff] 0.0
          %444 = vst [vmem:[#allocation2 + $0x1e0] sm:$0xff] 0.0
          %445 = vst [vmem:[#allocation2 + $0x1e8] sm:$0xff] 0.0
          %446 = vst [vmem:[#allocation2 + $0x1f0] sm:$0xff] 0.0
          %447 = vst [vmem:[#allocation2 + $0x1f8] sm:$0xff] 0.0
        $region44: #{_lambda_.7} parent=39 // pred_fallthru
          _
        %v448 = vld [vmem:[#allocation2] sm:$0xff]
        %v449 = vld [vmem:[#allocation2 + $0x8] sm:$0xff]
        %v450 = vld [vmem:[#allocation2 + $0x10] sm:$0xff]
        %v451 = vld [vmem:[#allocation2 + $0x18] sm:$0xff]
        %v452 = vld [vmem:[#allocation2 + $0x20] sm:$0xff]
        %v453 = vld [vmem:[#allocation2 + $0x28] sm:$0xff]
        %v454 = vld [vmem:[#allocation2 + $0x30] sm:$0xff]
        %v455 = vld [vmem:[#allocation2 + $0x38] sm:$0xff]
        %v456 = vld [vmem:[#allocation2 + $0x40] sm:$0xff]
        %v457 = vld [vmem:[#allocation2 + $0x48] sm:$0xff]
        %v458 = vld [vmem:[#allocation2 + $0x50] sm:$0xff]
        %v459 = vld [vmem:[#allocation2 + $0x58] sm:$0xff]
        %v460 = vld [vmem:[#allocation2 + $0x60] sm:$0xff]
        %v461 = vld [vmem:[#allocation2 + $0x68] sm:$0xff]
        %v462 = vld [vmem:[#allocation2 + $0x70] sm:$0xff]
        %v463 = vld [vmem:[#allocation2 + $0x78] sm:$0xff]
        %v464 = vld [vmem:[#allocation2 + $0x80] sm:$0xff]
        %v465 = vld [vmem:[#allocation2 + $0x88] sm:$0xff]
        %v466 = vld [vmem:[#allocation2 + $0x90] sm:$0xff]
        %v467 = vld [vmem:[#allocation2 + $0x98] sm:$0xff]
        %v468 = vld [vmem:[#allocation2 + $0xa0] sm:$0xff]
        %v469 = vld [vmem:[#allocation2 + $0xa8] sm:$0xff]
        %v470 = vld [vmem:[#allocation2 + $0xb0] sm:$0xff]
        %v471 = vld [vmem:[#allocation2 + $0xb8] sm:$0xff]
        %v472 = vld [vmem:[#allocation2 + $0xc0] sm:$0xff]
        %v473 = vld [vmem:[#allocation2 + $0xc8] sm:$0xff]
        %v474 = vld [vmem:[#allocation2 + $0xd0] sm:$0xff]
        %v475 = vld [vmem:[#allocation2 + $0xd8] sm:$0xff]
        %v476 = vld [vmem:[#allocation2 + $0xe0] sm:$0xff]
        %v477 = vld [vmem:[#allocation2 + $0xe8] sm:$0xff]
        %v478 = vld [vmem:[#allocation2 + $0xf0] sm:$0xff]
        %v479 = vld [vmem:[#allocation2 + $0xf8] sm:$0xff]
        %v480 = vld [vmem:[#allocation2 + $0x100] sm:$0xff]
        %v481 = vld [vmem:[#allocation2 + $0x108] sm:$0xff]
        %v482 = vld [vmem:[#allocation2 + $0x110] sm:$0xff]
        %v483 = vld [vmem:[#allocation2 + $0x118] sm:$0xff]
        %v484 = vld [vmem:[#allocation2 + $0x120] sm:$0xff]
        %v485 = vld [vmem:[#allocation2 + $0x128] sm:$0xff]
        %v486 = vld [vmem:[#allocation2 + $0x130] sm:$0xff]
        %v487 = vld [vmem:[#allocation2 + $0x138] sm:$0xff]
        %v488 = vld [vmem:[#allocation2 + $0x140] sm:$0xff]
        %v489 = vld [vmem:[#allocation2 + $0x148] sm:$0xff]
        %v490 = vld [vmem:[#allocation2 + $0x150] sm:$0xff]
        %v491 = vld [vmem:[#allocation2 + $0x158] sm:$0xff]
        %v492 = vld [vmem:[#allocation2 + $0x160] sm:$0xff]
        %v493 = vld [vmem:[#allocation2 + $0x168] sm:$0xff]
        %v494 = vld [vmem:[#allocation2 + $0x170] sm:$0xff]
        %v495 = vld [vmem:[#allocation2 + $0x178] sm:$0xff]
        %v496 = vld [vmem:[#allocation2 + $0x180] sm:$0xff]
        %v497 = vld [vmem:[#allocation2 + $0x188] sm:$0xff]
        %v498 = vld [vmem:[#allocation2 + $0x190] sm:$0xff]
        %v499 = vld [vmem:[#allocation2 + $0x198] sm:$0xff]
        %v500 = vld [vmem:[#allocation2 + $0x1a0] sm:$0xff]
        %v501 = vld [vmem:[#allocation2 + $0x1a8] sm:$0xff]
        %v502 = vld [vmem:[#allocation2 + $0x1b0] sm:$0xff]
        %v503 = vld [vmem:[#allocation2 + $0x1b8] sm:$0xff]
        %v504 = vld [vmem:[#allocation2 + $0x1c0] sm:$0xff]
        %v505 = vld [vmem:[#allocation2 + $0x1c8] sm:$0xff]
        %v506 = vld [vmem:[#allocation2 + $0x1d0] sm:$0xff]
        %v507 = vld [vmem:[#allocation2 + $0x1d8] sm:$0xff]
        %v508 = vld [vmem:[#allocation2 + $0x1e0] sm:$0xff]
        %v509 = vld [vmem:[#allocation2 + $0x1e8] sm:$0xff]
        %v510 = vld [vmem:[#allocation2 + $0x1f0] sm:$0xff]
        %v511 = vld [vmem:[#allocation2 + $0x1f8] sm:$0xff]
        %v512 = vld [vmem:[%s341] sm:$0xf]
        %v513 = vld [vmem:[%s341 + $0x4] sm:$0xf]
        %v514 = vld [vmem:[%s341 + $0x8] sm:$0xf]
        %v515 = vld [vmem:[%s341 + $0xc] sm:$0xf]
        %v516 = vld [vmem:[%s341 + $0x10] sm:$0xf]
        %v517 = vld [vmem:[%s341 + $0x14] sm:$0xf]
        %v518 = vld [vmem:[%s341 + $0x18] sm:$0xf]
        %v519 = vld [vmem:[%s341 + $0x1c] sm:$0xf]
        %v520 = vld [vmem:[%s341 + $0x20] sm:$0xf]
        %v521 = vld [vmem:[%s341 + $0x24] sm:$0xf]
        %v522 = vld [vmem:[%s341 + $0x28] sm:$0xf]
        %v523 = vld [vmem:[%s341 + $0x2c] sm:$0xf]
        %v524 = vld [vmem:[%s341 + $0x30] sm:$0xf]
        %v525 = vld [vmem:[%s341 + $0x34] sm:$0xf]
        %v526 = vld [vmem:[%s341 + $0x38] sm:$0xf]
        %v527 = vld [vmem:[%s341 + $0x3c] sm:$0xf]
        %v528 = vld [vmem:[%s341 + $0x40] sm:$0xf]
        %v529 = vld [vmem:[%s341 + $0x44] sm:$0xf]
        %v530 = vld [vmem:[%s341 + $0x48] sm:$0xf]
        %v531 = vld [vmem:[%s341 + $0x4c] sm:$0xf]
        %v532 = vld [vmem:[%s341 + $0x50] sm:$0xf]
        %v533 = vld [vmem:[%s341 + $0x54] sm:$0xf]
        %v534 = vld [vmem:[%s341 + $0x58] sm:$0xf]
        %v535 = vld [vmem:[%s341 + $0x5c] sm:$0xf]
        %v536 = vld [vmem:[%s341 + $0x60] sm:$0xf]
        %v537 = vld [vmem:[%s341 + $0x64] sm:$0xf]
        %v538 = vld [vmem:[%s341 + $0x68] sm:$0xf]
        %v539 = vld [vmem:[%s341 + $0x6c] sm:$0xf]
        %v540 = vld [vmem:[%s341 + $0x70] sm:$0xf]
        %v541 = vld [vmem:[%s341 + $0x74] sm:$0xf]
        %v542 = vld [vmem:[%s341 + $0x78] sm:$0xf]
        %v543 = vld [vmem:[%s341 + $0x7c] sm:$0xf]
        %v544 = vld [vmem:[%s352] sm:$0xff]
        %v545 = vld [vmem:[%s352 + $0x8] sm:$0xff]
        %v546 = vld [vmem:[%s352 + $0x10] sm:$0xff]
        %v547 = vld [vmem:[%s352 + $0x18] sm:$0xff]
        %v548 = vld [vmem:[%s352 + $0x20] sm:$0xff]
        %v549 = vld [vmem:[%s352 + $0x28] sm:$0xff]
        %v550 = vld [vmem:[%s352 + $0x30] sm:$0xff]
        %v551 = vld [vmem:[%s352 + $0x38] sm:$0xff]
        %v584 = vunpack.c.l.b16 %v512
        %v585 = vunpack.c.l.b16 %v513
        %v586 = vunpack.c.l.b16 %v514
        %v587 = vunpack.c.l.b16 %v515
        %v588 = vunpack.c.l.b16 %v516
        %v589 = vunpack.c.l.b16 %v517
        %v590 = vunpack.c.l.b16 %v518
        %v591 = vunpack.c.l.b16 %v519
        %v592 = vunpack.c.l.b16 %v520
        %v593 = vunpack.c.l.b16 %v521
        %v594 = vunpack.c.l.b16 %v522
        %v595 = vunpack.c.l.b16 %v523
        %v596 = vunpack.c.l.b16 %v524
        %v597 = vunpack.c.l.b16 %v525
        %v598 = vunpack.c.l.b16 %v526
        %v599 = vunpack.c.l.b16 %v527
        %v600 = vunpack.c.l.b16 %v528
        %v601 = vunpack.c.l.b16 %v529
        %v602 = vunpack.c.l.b16 %v530
        %v603 = vunpack.c.l.b16 %v531
        %v604 = vunpack.c.l.b16 %v532
        %v605 = vunpack.c.l.b16 %v533
        %v606 = vunpack.c.l.b16 %v534
        %v607 = vunpack.c.l.b16 %v535
        %v608 = vunpack.c.l.b16 %v536
        %v609 = vunpack.c.l.b16 %v537
        %v610 = vunpack.c.l.b16 %v538
        %v611 = vunpack.c.l.b16 %v539
        %v612 = vunpack.c.l.b16 %v540
        %v613 = vunpack.c.l.b16 %v541
        %v614 = vunpack.c.l.b16 %v542
        %v615 = vunpack.c.l.b16 %v543
        %v616 = vpack.c.b16 %v585, %v584
        %v617 = vpack.c.b16 %v587, %v586
        %v618 = vpack.c.b16 %v589, %v588
        %v619 = vpack.c.b16 %v591, %v590
        %v620 = vpack.c.b16 %v593, %v592
        %v621 = vpack.c.b16 %v595, %v594
        %v622 = vpack.c.b16 %v597, %v596
        %v623 = vpack.c.b16 %v599, %v598
        %v624 = vpack.c.b16 %v601, %v600
        %v625 = vpack.c.b16 %v603, %v602
        %v626 = vpack.c.b16 %v605, %v604
        %v627 = vpack.c.b16 %v607, %v606
        %v628 = vpack.c.b16 %v609, %v608
        %v629 = vpack.c.b16 %v611, %v610
        %v630 = vpack.c.b16 %v613, %v612
        %v631 = vpack.c.b16 %v615, %v614
        %v640 = vunpack.c.l.b16 %v544
        %v641 = vunpack.c.h.b16 %v544
        %v642 = vunpack.c.l.b16 %v545
        %v643 = vunpack.c.h.b16 %v545
        %v644 = vunpack.c.l.b16 %v546
        %v645 = vunpack.c.h.b16 %v546
        %v646 = vunpack.c.l.b16 %v547
        %v647 = vunpack.c.h.b16 %v547
        %v648 = vunpack.c.l.b16 %v548
        %v649 = vunpack.c.h.b16 %v548
        %v650 = vunpack.c.l.b16 %v549
        %v651 = vunpack.c.h.b16 %v549
        %v652 = vunpack.c.l.b16 %v550
        %v653 = vunpack.c.h.b16 %v550
        %v654 = vunpack.c.l.b16 %v551
        %v655 = vunpack.c.h.b16 %v551
        %v656 = vpack.c.b16 %v642, %v640
        %v657 = vpack.c.b16 %v643, %v641
        %v658 = vpack.c.b16 %v646, %v644
        %v659 = vpack.c.b16 %v647, %v645
        %v660 = vpack.c.b16 %v650, %v648
        %v661 = vpack.c.b16 %v651, %v649
        %v662 = vpack.c.b16 %v654, %v652
        %v663 = vpack.c.b16 %v655, %v653
        %vm672 = vcmask 523264
        %v674 = vsel %vm672, %v616, 0
        %v677 = vsel %vm672, %v617, 0
        %v680 = vsel %vm672, %v618, 0
        %v683 = vsel %vm672, %v619, 0
        %v686 = vsel %vm672, %v620, 0
        %v689 = vsel %vm672, %v621, 0
        %v692 = vsel %vm672, %v622, 0
        %v695 = vsel %vm672, %v623, 0
        %v698 = vsel %vm672, %v624, 0
        %v701 = vsel %vm672, %v625, 0
        %v704 = vsel %vm672, %v626, 0
        %v707 = vsel %vm672, %v627, 0
        %v710 = vsel %vm672, %v628, 0
        %v713 = vsel %vm672, %v629, 0
        %v716 = vsel %vm672, %v630, 0
        %v719 = vsel %vm672, %v631, 0
        %721 = vmatprep.subr.bf16.mxu0 0
        %722 = vmatpush1.bf16.msra.mxu0 0
        %723 = vmatprep.subr.bf16.mxu0 0
        %724 = vmatpush1.bf16.msra.mxu0 0
        %725 = vmatprep.subr.bf16.mxu0 0
        %726 = vmatpush1.bf16.msra.mxu0 0
        %727 = vmatprep.subr.bf16.mxu0 0
        %728 = vmatpush1.bf16.msra.mxu0 0
        %729 = vmatprep.subr.bf16.mxu0 %v663
        %730 = vmatpush1.bf16.msra.mxu0 %v662
        %731 = vmatprep.subr.bf16.mxu0 %v661
        %732 = vmatpush1.bf16.msra.mxu0 %v660
        %733 = vmatprep.subr.bf16.mxu0 %v659
        %734 = vmatpush1.bf16.msra.mxu0 %v658
        %735 = vmatprep.subr.bf16.mxu0 %v657
        %736 = vmatpush1.bf16.msra.mxu0 %v656
        %737 = vmatprep.subr.bf16.mxu0 0
        %738 = vmatpush2.bf16.msra.mxu0 0
        %739 = vmatprep.subr.bf16.mxu0 0
        %740 = vmatpush2.bf16.msra.mxu0 0
        %741 = vmatprep.subr.bf16.mxu0 0
        %742 = vmatpush2.bf16.msra.mxu0 0
        %743 = vmatprep.subr.bf16.mxu0 0
        %744 = vmatpush2.bf16.msra.mxu0 0
        %745 = vmatprep.subr.bf16.mxu0 0
        %746 = vmatpush2.bf16.msra.mxu0 0
        %747 = vmatprep.subr.bf16.mxu0 0
        %748 = vmatpush2.bf16.msra.mxu0 0
        %749 = vmatprep.subr.bf16.mxu0 0
        %750 = vmatpush2.bf16.msra.mxu0 0
        %751 = vmatprep.subr.bf16.mxu0 0
        %752 = vmatpush2.bf16.msra.mxu0 0
        %753 = vmatprep.mubr.bf16.mxu0 0
        %754 = vmatmul.mubr.bf16.gmra.mxu0 %v674
        %v755 = vpop.f32.mrf.mxu0
        %v756 = vadd.f32 0.0, %v755
        %v757 = vpop.f32.mrf.mxu0
        %v758 = vadd.f32 0.0, %v757
        %v759 = vpop.f32.mrf.mxu0
        %v760 = vadd.f32 0.0, %v759
        %v761 = vpop.f32.mrf.mxu0
        %v762 = vadd.f32 0.0, %v761
        %763 = vmatprep.mubr.bf16.mxu0 0
        %764 = vmatmul.mubr.bf16.gmra.mxu0 %v677
        %v765 = vpop.f32.mrf.mxu0
        %v766 = vadd.f32 0.0, %v765
        %v767 = vpop.f32.mrf.mxu0
        %v768 = vadd.f32 0.0, %v767
        %v769 = vpop.f32.mrf.mxu0
        %v770 = vadd.f32 0.0, %v769
        %v771 = vpop.f32.mrf.mxu0
        %v772 = vadd.f32 0.0, %v771
        %773 = vmatprep.mubr.bf16.mxu0 0
        %774 = vmatmul.mubr.bf16.gmra.mxu0 %v680
        %v775 = vpop.f32.mrf.mxu0
        %v776 = vadd.f32 0.0, %v775
        %v777 = vpop.f32.mrf.mxu0
        %v778 = vadd.f32 0.0, %v777
        %v779 = vpop.f32.mrf.mxu0
        %v780 = vadd.f32 0.0, %v779
        %v781 = vpop.f32.mrf.mxu0
        %v782 = vadd.f32 0.0, %v781
        %783 = vmatprep.mubr.bf16.mxu0 0
        %784 = vmatmul.mubr.bf16.gmra.mxu0 %v683
        %v785 = vpop.f32.mrf.mxu0
        %v786 = vadd.f32 0.0, %v785
        %v787 = vpop.f32.mrf.mxu0
        %v788 = vadd.f32 0.0, %v787
        %v789 = vpop.f32.mrf.mxu0
        %v790 = vadd.f32 0.0, %v789
        %v791 = vpop.f32.mrf.mxu0
        %v792 = vadd.f32 0.0, %v791
        %793 = vmatprep.mubr.bf16.mxu0 0
        %794 = vmatmul.mubr.bf16.gmra.mxu0 %v686
        %v795 = vpop.f32.mrf.mxu0
        %v796 = vadd.f32 0.0, %v795
        %v797 = vpop.f32.mrf.mxu0
        %v798 = vadd.f32 0.0, %v797
        %v799 = vpop.f32.mrf.mxu0
        %v800 = vadd.f32 0.0, %v799
        %v801 = vpop.f32.mrf.mxu0
        %v802 = vadd.f32 0.0, %v801
        %803 = vmatprep.mubr.bf16.mxu0 0
        %804 = vmatmul.mubr.bf16.gmra.mxu0 %v689
        %v805 = vpop.f32.mrf.mxu0
        %v806 = vadd.f32 0.0, %v805
        %v807 = vpop.f32.mrf.mxu0
        %v808 = vadd.f32 0.0, %v807
        %v809 = vpop.f32.mrf.mxu0
        %v810 = vadd.f32 0.0, %v809
        %v811 = vpop.f32.mrf.mxu0
        %v812 = vadd.f32 0.0, %v811
        %813 = vmatprep.mubr.bf16.mxu0 0
        %814 = vmatmul.mubr.bf16.gmra.mxu0 %v692
        %v815 = vpop.f32.mrf.mxu0
        %v816 = vadd.f32 0.0, %v815
        %v817 = vpop.f32.mrf.mxu0
        %v818 = vadd.f32 0.0, %v817
        %v819 = vpop.f32.mrf.mxu0
        %v820 = vadd.f32 0.0, %v819
        %v821 = vpop.f32.mrf.mxu0
        %v822 = vadd.f32 0.0, %v821
        %823 = vmatprep.mubr.bf16.mxu0 0
        %824 = vmatmul.mubr.bf16.gmra.mxu0 %v695
        %v825 = vpop.f32.mrf.mxu0
        %v826 = vadd.f32 0.0, %v825
        %v827 = vpop.f32.mrf.mxu0
        %v828 = vadd.f32 0.0, %v827
        %v829 = vpop.f32.mrf.mxu0
        %v830 = vadd.f32 0.0, %v829
        %v831 = vpop.f32.mrf.mxu0
        %v832 = vadd.f32 0.0, %v831
        %833 = vmatprep.mubr.bf16.mxu0 0
        %834 = vmatmul.mubr.bf16.gmra.mxu0 %v698
        %v835 = vpop.f32.mrf.mxu0
        %v836 = vadd.f32 0.0, %v835
        %v837 = vpop.f32.mrf.mxu0
        %v838 = vadd.f32 0.0, %v837
        %v839 = vpop.f32.mrf.mxu0
        %v840 = vadd.f32 0.0, %v839
        %v841 = vpop.f32.mrf.mxu0
        %v842 = vadd.f32 0.0, %v841
        %843 = vmatprep.mubr.bf16.mxu0 0
        %844 = vmatmul.mubr.bf16.gmra.mxu0 %v701
        %v845 = vpop.f32.mrf.mxu0
        %v846 = vadd.f32 0.0, %v845
        %v847 = vpop.f32.mrf.mxu0
        %v848 = vadd.f32 0.0, %v847
        %v849 = vpop.f32.mrf.mxu0
        %v850 = vadd.f32 0.0, %v849
        %v851 = vpop.f32.mrf.mxu0
        %v852 = vadd.f32 0.0, %v851
        %853 = vmatprep.mubr.bf16.mxu0 0
        %854 = vmatmul.mubr.bf16.gmra.mxu0 %v704
        %v855 = vpop.f32.mrf.mxu0
        %v856 = vadd.f32 0.0, %v855
        %v857 = vpop.f32.mrf.mxu0
        %v858 = vadd.f32 0.0, %v857
        %v859 = vpop.f32.mrf.mxu0
        %v860 = vadd.f32 0.0, %v859
        %v861 = vpop.f32.mrf.mxu0
        %v862 = vadd.f32 0.0, %v861
        %863 = vmatprep.mubr.bf16.mxu0 0
        %864 = vmatmul.mubr.bf16.gmra.mxu0 %v707
        %v865 = vpop.f32.mrf.mxu0
        %v866 = vadd.f32 0.0, %v865
        %v867 = vpop.f32.mrf.mxu0
        %v868 = vadd.f32 0.0, %v867
        %v869 = vpop.f32.mrf.mxu0
        %v870 = vadd.f32 0.0, %v869
        %v871 = vpop.f32.mrf.mxu0
        %v872 = vadd.f32 0.0, %v871
        %873 = vmatprep.mubr.bf16.mxu0 0
        %874 = vmatmul.mubr.bf16.gmra.mxu0 %v710
        %v875 = vpop.f32.mrf.mxu0
        %v876 = vadd.f32 0.0, %v875
        %v877 = vpop.f32.mrf.mxu0
        %v878 = vadd.f32 0.0, %v877
        %v879 = vpop.f32.mrf.mxu0
        %v880 = vadd.f32 0.0, %v879
        %v881 = vpop.f32.mrf.mxu0
        %v882 = vadd.f32 0.0, %v881
        %883 = vmatprep.mubr.bf16.mxu0 0
        %884 = vmatmul.mubr.bf16.gmra.mxu0 %v713
        %v885 = vpop.f32.mrf.mxu0
        %v886 = vadd.f32 0.0, %v885
        %v887 = vpop.f32.mrf.mxu0
        %v888 = vadd.f32 0.0, %v887
        %v889 = vpop.f32.mrf.mxu0
        %v890 = vadd.f32 0.0, %v889
        %v891 = vpop.f32.mrf.mxu0
        %v892 = vadd.f32 0.0, %v891
        %893 = vmatprep.mubr.bf16.mxu0 0
        %894 = vmatmul.mubr.bf16.gmra.mxu0 %v716
        %v895 = vpop.f32.mrf.mxu0
        %v896 = vadd.f32 0.0, %v895
        %v897 = vpop.f32.mrf.mxu0
        %v898 = vadd.f32 0.0, %v897
        %v899 = vpop.f32.mrf.mxu0
        %v900 = vadd.f32 0.0, %v899
        %v901 = vpop.f32.mrf.mxu0
        %v902 = vadd.f32 0.0, %v901
        %903 = vmatprep.mubr.bf16.mxu0 0
        %904 = vmatmul.mubr.bf16.gmra.mxu0 %v719
        %v905 = vpop.f32.mrf.mxu0
        %v906 = vadd.f32 0.0, %v905
        %v907 = vpop.f32.mrf.mxu0
        %v908 = vadd.f32 0.0, %v907
        %v909 = vpop.f32.mrf.mxu0
        %v910 = vadd.f32 0.0, %v909
        %v911 = vpop.f32.mrf.mxu0
        %v912 = vadd.f32 0.0, %v911
        %913 = vdwg.mxu0
        %v914 = vadd.f32 %v448, %v756
        %v915 = vadd.f32 %v449, %v758
        %v916 = vadd.f32 %v450, %v760
        %v917 = vadd.f32 %v451, %v762
        %v918 = vadd.f32 %v452, %v766
        %v919 = vadd.f32 %v453, %v768
        %v920 = vadd.f32 %v454, %v770
        %v921 = vadd.f32 %v455, %v772
        %v922 = vadd.f32 %v456, %v776
        %v923 = vadd.f32 %v457, %v778
        %v924 = vadd.f32 %v458, %v780
        %v925 = vadd.f32 %v459, %v782
        %v926 = vadd.f32 %v460, %v786
        %v927 = vadd.f32 %v461, %v788
        %v928 = vadd.f32 %v462, %v790
        %v929 = vadd.f32 %v463, %v792
        %v930 = vadd.f32 %v464, %v796
        %v931 = vadd.f32 %v465, %v798
        %v932 = vadd.f32 %v466, %v800
        %v933 = vadd.f32 %v467, %v802
        %v934 = vadd.f32 %v468, %v806
        %v935 = vadd.f32 %v469, %v808
        %v936 = vadd.f32 %v470, %v810
        %v937 = vadd.f32 %v471, %v812
        %v938 = vadd.f32 %v472, %v816
        %v939 = vadd.f32 %v473, %v818
        %v940 = vadd.f32 %v474, %v820
        %v941 = vadd.f32 %v475, %v822
        %v942 = vadd.f32 %v476, %v826
        %v943 = vadd.f32 %v477, %v828
        %v944 = vadd.f32 %v478, %v830
        %v945 = vadd.f32 %v479, %v832
        %v946 = vadd.f32 %v480, %v836
        %v947 = vadd.f32 %v481, %v838
        %v948 = vadd.f32 %v482, %v840
        %v949 = vadd.f32 %v483, %v842
        %v950 = vadd.f32 %v484, %v846
        %v951 = vadd.f32 %v485, %v848
        %v952 = vadd.f32 %v486, %v850
        %v953 = vadd.f32 %v487, %v852
        %v954 = vadd.f32 %v488, %v856
        %v955 = vadd.f32 %v489, %v858
        %v956 = vadd.f32 %v490, %v860
        %v957 = vadd.f32 %v491, %v862
        %v958 = vadd.f32 %v492, %v866
        %v959 = vadd.f32 %v493, %v868
        %v960 = vadd.f32 %v494, %v870
        %v961 = vadd.f32 %v495, %v872
        %v962 = vadd.f32 %v496, %v876
        %v963 = vadd.f32 %v497, %v878
        %v964 = vadd.f32 %v498, %v880
        %v965 = vadd.f32 %v499, %v882
        %v966 = vadd.f32 %v500, %v886
        %v967 = vadd.f32 %v501, %v888
        %v968 = vadd.f32 %v502, %v890
        %v969 = vadd.f32 %v503, %v892
        %v970 = vadd.f32 %v504, %v896
        %v971 = vadd.f32 %v505, %v898
        %v972 = vadd.f32 %v506, %v900
        %v973 = vadd.f32 %v507, %v902
        %v974 = vadd.f32 %v508, %v906
        %v975 = vadd.f32 %v509, %v908
        %v976 = vadd.f32 %v510, %v910
        %v977 = vadd.f32 %v511, %v912
        %978 = vst [vmem:[#allocation2] sm:$0xff] %v914
        %979 = vst [vmem:[#allocation2 + $0x8] sm:$0xff] %v915
        %980 = vst [vmem:[#allocation2 + $0x10] sm:$0xff] %v916
        %981 = vst [vmem:[#allocation2 + $0x18] sm:$0xff] %v917
        %982 = vst [vmem:[#allocation2 + $0x20] sm:$0xff] %v918
        %983 = vst [vmem:[#allocation2 + $0x28] sm:$0xff] %v919
        %984 = vst [vmem:[#allocation2 + $0x30] sm:$0xff] %v920
        %985 = vst [vmem:[#allocation2 + $0x38] sm:$0xff] %v921
        %986 = vst [vmem:[#allocation2 + $0x40] sm:$0xff] %v922
        %987 = vst [vmem:[#allocation2 + $0x48] sm:$0xff] %v923
        %988 = vst [vmem:[#allocation2 + $0x50] sm:$0xff] %v924
        %989 = vst [vmem:[#allocation2 + $0x58] sm:$0xff] %v925
        %990 = vst [vmem:[#allocation2 + $0x60] sm:$0xff] %v926
        %991 = vst [vmem:[#allocation2 + $0x68] sm:$0xff] %v927
        %992 = vst [vmem:[#allocation2 + $0x70] sm:$0xff] %v928
        %993 = vst [vmem:[#allocation2 + $0x78] sm:$0xff] %v929
        %994 = vst [vmem:[#allocation2 + $0x80] sm:$0xff] %v930
        %995 = vst [vmem:[#allocation2 + $0x88] sm:$0xff] %v931
        %996 = vst [vmem:[#allocation2 + $0x90] sm:$0xff] %v932
        %997 = vst [vmem:[#allocation2 + $0x98] sm:$0xff] %v933
        %998 = vst [vmem:[#allocation2 + $0xa0] sm:$0xff] %v934
        %999 = vst [vmem:[#allocation2 + $0xa8] sm:$0xff] %v935
        %1000 = vst [vmem:[#allocation2 + $0xb0] sm:$0xff] %v936
        %1001 = vst [vmem:[#allocation2 + $0xb8] sm:$0xff] %v937
        %1002 = vst [vmem:[#allocation2 + $0xc0] sm:$0xff] %v938
        %1003 = vst [vmem:[#allocation2 + $0xc8] sm:$0xff] %v939
        %1004 = vst [vmem:[#allocation2 + $0xd0] sm:$0xff] %v940
        %1005 = vst [vmem:[#allocation2 + $0xd8] sm:$0xff] %v941
        %1006 = vst [vmem:[#allocation2 + $0xe0] sm:$0xff] %v942
        %1007 = vst [vmem:[#allocation2 + $0xe8] sm:$0xff] %v943
        %1008 = vst [vmem:[#allocation2 + $0xf0] sm:$0xff] %v944
        %1009 = vst [vmem:[#allocation2 + $0xf8] sm:$0xff] %v945
        %1010 = vst [vmem:[#allocation2 + $0x100] sm:$0xff] %v946
        %1011 = vst [vmem:[#allocation2 + $0x108] sm:$0xff] %v947
        %1012 = vst [vmem:[#allocation2 + $0x110] sm:$0xff] %v948
        %1013 = vst [vmem:[#allocation2 + $0x118] sm:$0xff] %v949
        %1014 = vst [vmem:[#allocation2 + $0x120] sm:$0xff] %v950
        %1015 = vst [vmem:[#allocation2 + $0x128] sm:$0xff] %v951
        %1016 = vst [vmem:[#allocation2 + $0x130] sm:$0xff] %v952
        %1017 = vst [vmem:[#allocation2 + $0x138] sm:$0xff] %v953
        %1018 = vst [vmem:[#allocation2 + $0x140] sm:$0xff] %v954
        %1019 = vst [vmem:[#allocation2 + $0x148] sm:$0xff] %v955
        %1020 = vst [vmem:[#allocation2 + $0x150] sm:$0xff] %v956
        %1021 = vst [vmem:[#allocation2 + $0x158] sm:$0xff] %v957
        %1022 = vst [vmem:[#allocation2 + $0x160] sm:$0xff] %v958
        %1023 = vst [vmem:[#allocation2 + $0x168] sm:$0xff] %v959
        %1024 = vst [vmem:[#allocation2 + $0x170] sm:$0xff] %v960
        %1025 = vst [vmem:[#allocation2 + $0x178] sm:$0xff] %v961
        %1026 = vst [vmem:[#allocation2 + $0x180] sm:$0xff] %v962
        %1027 = vst [vmem:[#allocation2 + $0x188] sm:$0xff] %v963
        %1028 = vst [vmem:[#allocation2 + $0x190] sm:$0xff] %v964
        %1029 = vst [vmem:[#allocation2 + $0x198] sm:$0xff] %v965
        %1030 = vst [vmem:[#allocation2 + $0x1a0] sm:$0xff] %v966
        %1031 = vst [vmem:[#allocation2 + $0x1a8] sm:$0xff] %v967
        %1032 = vst [vmem:[#allocation2 + $0x1b0] sm:$0xff] %v968
        %1033 = vst [vmem:[#allocation2 + $0x1b8] sm:$0xff] %v969
        %1034 = vst [vmem:[#allocation2 + $0x1c0] sm:$0xff] %v970
        %1035 = vst [vmem:[#allocation2 + $0x1c8] sm:$0xff] %v971
        %1036 = vst [vmem:[#allocation2 + $0x1d0] sm:$0xff] %v972
        %1037 = vst [vmem:[#allocation2 + $0x1d8] sm:$0xff] %v973
        %1038 = vst [vmem:[#allocation2 + $0x1e0] sm:$0xff] %v974
        %1039 = vst [vmem:[#allocation2 + $0x1e8] sm:$0xff] %v975
        %1040 = vst [vmem:[#allocation2 + $0x1f0] sm:$0xff] %v976
        %1041 = vst [vmem:[#allocation2 + $0x1f8] sm:$0xff] %v977
        // Predicated region
        $region45: #{_lambda_.7} parent=39 // pred_check
          %p1042 = pneg %p380
        $region46: #{_lambda_.7} parent=39 // pred_check_branch
          %1044 = sbr.rel (%p1042) target = $region48
        $region47: #{_lambda_.7} parent=39 // pred_region
          %v1045 = vld [vmem:[#allocation2] sm:$0xff]
          %v1046 = vld [vmem:[#allocation2 + $0x8] sm:$0xff]
          %v1047 = vld [vmem:[#allocation2 + $0x10] sm:$0xff]
          %v1048 = vld [vmem:[#allocation2 + $0x18] sm:$0xff]
          %v1049 = vld [vmem:[#allocation2 + $0x20] sm:$0xff]
          %v1050 = vld [vmem:[#allocation2 + $0x28] sm:$0xff]
          %v1051 = vld [vmem:[#allocation2 + $0x30] sm:$0xff]
          %v1052 = vld [vmem:[#allocation2 + $0x38] sm:$0xff]
          %v1053 = vld [vmem:[#allocation2 + $0x40] sm:$0xff]
          %v1054 = vld [vmem:[#allocation2 + $0x48] sm:$0xff]
          %v1055 = vld [vmem:[#allocation2 + $0x50] sm:$0xff]
          %v1056 = vld [vmem:[#allocation2 + $0x58] sm:$0xff]
          %v1057 = vld [vmem:[#allocation2 + $0x60] sm:$0xff]
          %v1058 = vld [vmem:[#allocation2 + $0x68] sm:$0xff]
          %v1059 = vld [vmem:[#allocation2 + $0x70] sm:$0xff]
          %v1060 = vld [vmem:[#allocation2 + $0x78] sm:$0xff]
          %v1061 = vld [vmem:[#allocation2 + $0x80] sm:$0xff]
          %v1062 = vld [vmem:[#allocation2 + $0x88] sm:$0xff]
          %v1063 = vld [vmem:[#allocation2 + $0x90] sm:$0xff]
          %v1064 = vld [vmem:[#allocation2 + $0x98] sm:$0xff]
          %v1065 = vld [vmem:[#allocation2 + $0xa0] sm:$0xff]
          %v1066 = vld [vmem:[#allocation2 + $0xa8] sm:$0xff]
          %v1067 = vld [vmem:[#allocation2 + $0xb0] sm:$0xff]
          %v1068 = vld [vmem:[#allocation2 + $0xb8] sm:$0xff]
          %v1069 = vld [vmem:[#allocation2 + $0xc0] sm:$0xff]
          %v1070 = vld [vmem:[#allocation2 + $0xc8] sm:$0xff]
          %v1071 = vld [vmem:[#allocation2 + $0xd0] sm:$0xff]
          %v1072 = vld [vmem:[#allocation2 + $0xd8] sm:$0xff]
          %v1073 = vld [vmem:[#allocation2 + $0xe0] sm:$0xff]
          %v1074 = vld [vmem:[#allocation2 + $0xe8] sm:$0xff]
          %v1075 = vld [vmem:[#allocation2 + $0xf0] sm:$0xff]
          %v1076 = vld [vmem:[#allocation2 + $0xf8] sm:$0xff]
          %v1077 = vld [vmem:[#allocation2 + $0x100] sm:$0xff]
          %v1078 = vld [vmem:[#allocation2 + $0x108] sm:$0xff]
          %v1079 = vld [vmem:[#allocation2 + $0x110] sm:$0xff]
          %v1080 = vld [vmem:[#allocation2 + $0x118] sm:$0xff]
          %v1081 = vld [vmem:[#allocation2 + $0x120] sm:$0xff]
          %v1082 = vld [vmem:[#allocation2 + $0x128] sm:$0xff]
          %v1083 = vld [vmem:[#allocation2 + $0x130] sm:$0xff]
          %v1084 = vld [vmem:[#allocation2 + $0x138] sm:$0xff]
          %v1085 = vld [vmem:[#allocation2 + $0x140] sm:$0xff]
          %v1086 = vld [vmem:[#allocation2 + $0x148] sm:$0xff]
          %v1087 = vld [vmem:[#allocation2 + $0x150] sm:$0xff]
          %v1088 = vld [vmem:[#allocation2 + $0x158] sm:$0xff]
          %v1089 = vld [vmem:[#allocation2 + $0x160] sm:$0xff]
          %v1090 = vld [vmem:[#allocation2 + $0x168] sm:$0xff]
          %v1091 = vld [vmem:[#allocation2 + $0x170] sm:$0xff]
          %v1092 = vld [vmem:[#allocation2 + $0x178] sm:$0xff]
          %v1093 = vld [vmem:[#allocation2 + $0x180] sm:$0xff]
          %v1094 = vld [vmem:[#allocation2 + $0x188] sm:$0xff]
          %v1095 = vld [vmem:[#allocation2 + $0x190] sm:$0xff]
          %v1096 = vld [vmem:[#allocation2 + $0x198] sm:$0xff]
          %v1097 = vld [vmem:[#allocation2 + $0x1a0] sm:$0xff]
          %v1098 = vld [vmem:[#allocation2 + $0x1a8] sm:$0xff]
          %v1099 = vld [vmem:[#allocation2 + $0x1b0] sm:$0xff]
          %v1100 = vld [vmem:[#allocation2 + $0x1b8] sm:$0xff]
          %v1101 = vld [vmem:[#allocation2 + $0x1c0] sm:$0xff]
          %v1102 = vld [vmem:[#allocation2 + $0x1c8] sm:$0xff]
          %v1103 = vld [vmem:[#allocation2 + $0x1d0] sm:$0xff]
          %v1104 = vld [vmem:[#allocation2 + $0x1d8] sm:$0xff]
          %v1105 = vld [vmem:[#allocation2 + $0x1e0] sm:$0xff]
          %v1106 = vld [vmem:[#allocation2 + $0x1e8] sm:$0xff]
          %v1107 = vld [vmem:[#allocation2 + $0x1f0] sm:$0xff]
          %v1108 = vld [vmem:[#allocation2 + $0x1f8] sm:$0xff]
          %v1109 = vadd.f32 %v1045, 1.0
          %v1110 = vadd.f32 %v1046, 1.0
          %v1111 = vadd.f32 %v1047, 1.0
          %v1112 = vadd.f32 %v1048, 1.0
          %v1113 = vadd.f32 %v1049, 1.0
          %v1114 = vadd.f32 %v1050, 1.0
          %v1115 = vadd.f32 %v1051, 1.0
          %v1116 = vadd.f32 %v1052, 1.0
          %v1117 = vadd.f32 %v1053, 1.0
          %v1118 = vadd.f32 %v1054, 1.0
          %v1119 = vadd.f32 %v1055, 1.0
          %v1120 = vadd.f32 %v1056, 1.0
          %v1121 = vadd.f32 %v1057, 1.0
          %v1122 = vadd.f32 %v1058, 1.0
          %v1123 = vadd.f32 %v1059, 1.0
          %v1124 = vadd.f32 %v1060, 1.0
          %v1125 = vadd.f32 %v1061, 1.0
          %v1126 = vadd.f32 %v1062, 1.0
          %v1127 = vadd.f32 %v1063, 1.0
          %v1128 = vadd.f32 %v1064, 1.0
          %v1129 = vadd.f32 %v1065, 1.0
          %v1130 = vadd.f32 %v1066, 1.0
          %v1131 = vadd.f32 %v1067, 1.0
          %v1132 = vadd.f32 %v1068, 1.0
          %v1133 = vadd.f32 %v1069, 1.0
          %v1134 = vadd.f32 %v1070, 1.0
          %v1135 = vadd.f32 %v1071, 1.0
          %v1136 = vadd.f32 %v1072, 1.0
          %v1137 = vadd.f32 %v1073, 1.0
          %v1138 = vadd.f32 %v1074, 1.0
          %v1139 = vadd.f32 %v1075, 1.0
          %v1140 = vadd.f32 %v1076, 1.0
          %v1141 = vadd.f32 %v1077, 1.0
          %v1142 = vadd.f32 %v1078, 1.0
          %v1143 = vadd.f32 %v1079, 1.0
          %v1144 = vadd.f32 %v1080, 1.0
          %v1145 = vadd.f32 %v1081, 1.0
          %v1146 = vadd.f32 %v1082, 1.0
          %v1147 = vadd.f32 %v1083, 1.0
          %v1148 = vadd.f32 %v1084, 1.0
          %v1149 = vadd.f32 %v1085, 1.0
          %v1150 = vadd.f32 %v1086, 1.0
          %v1151 = vadd.f32 %v1087, 1.0
          %v1152 = vadd.f32 %v1088, 1.0
          %v1153 = vadd.f32 %v1089, 1.0
          %v1154 = vadd.f32 %v1090, 1.0
          %v1155 = vadd.f32 %v1091, 1.0
          %v1156 = vadd.f32 %v1092, 1.0
          %v1157 = vadd.f32 %v1093, 1.0
          %v1158 = vadd.f32 %v1094, 1.0
          %v1159 = vadd.f32 %v1095, 1.0
          %v1160 = vadd.f32 %v1096, 1.0
          %v1161 = vadd.f32 %v1097, 1.0
          %v1162 = vadd.f32 %v1098, 1.0
          %v1163 = vadd.f32 %v1099, 1.0
          %v1164 = vadd.f32 %v1100, 1.0
          %v1165 = vadd.f32 %v1101, 1.0
          %v1166 = vadd.f32 %v1102, 1.0
          %v1167 = vadd.f32 %v1103, 1.0
          %v1168 = vadd.f32 %v1104, 1.0
          %v1169 = vadd.f32 %v1105, 1.0
          %v1170 = vadd.f32 %v1106, 1.0
          %v1171 = vadd.f32 %v1107, 1.0
          %v1172 = vadd.f32 %v1108, 1.0
          %v1173 = vmul.f32 %v1109, %v1109
          %v1174 = vmul.f32 %v1110, %v1110
          %v1175 = vmul.f32 %v1111, %v1111
          %v1176 = vmul.f32 %v1112, %v1112
          %v1177 = vmul.f32 %v1113, %v1113
          %v1178 = vmul.f32 %v1114, %v1114
          %v1179 = vmul.f32 %v1115, %v1115
          %v1180 = vmul.f32 %v1116, %v1116
          %v1181 = vmul.f32 %v1117, %v1117
          %v1182 = vmul.f32 %v1118, %v1118
          %v1183 = vmul.f32 %v1119, %v1119
          %v1184 = vmul.f32 %v1120, %v1120
          %v1185 = vmul.f32 %v1121, %v1121
          %v1186 = vmul.f32 %v1122, %v1122
          %v1187 = vmul.f32 %v1123, %v1123
          %v1188 = vmul.f32 %v1124, %v1124
          %v1189 = vmul.f32 %v1125, %v1125
          %v1190 = vmul.f32 %v1126, %v1126
          %v1191 = vmul.f32 %v1127, %v1127
          %v1192 = vmul.f32 %v1128, %v1128
          %v1193 = vmul.f32 %v1129, %v1129
          %v1194 = vmul.f32 %v1130, %v1130
          %v1195 = vmul.f32 %v1131, %v1131
          %v1196 = vmul.f32 %v1132, %v1132
          %v1197 = vmul.f32 %v1133, %v1133
          %v1198 = vmul.f32 %v1134, %v1134
          %v1199 = vmul.f32 %v1135, %v1135
          %v1200 = vmul.f32 %v1136, %v1136
          %v1201 = vmul.f32 %v1137, %v1137
          %v1202 = vmul.f32 %v1138, %v1138
          %v1203 = vmul.f32 %v1139, %v1139
          %v1204 = vmul.f32 %v1140, %v1140
          %v1205 = vmul.f32 %v1141, %v1141
          %v1206 = vmul.f32 %v1142, %v1142
          %v1207 = vmul.f32 %v1143, %v1143
          %v1208 = vmul.f32 %v1144, %v1144
          %v1209 = vmul.f32 %v1145, %v1145
          %v1210 = vmul.f32 %v1146, %v1146
          %v1211 = vmul.f32 %v1147, %v1147
          %v1212 = vmul.f32 %v1148, %v1148
          %v1213 = vmul.f32 %v1149, %v1149
          %v1214 = vmul.f32 %v1150, %v1150
          %v1215 = vmul.f32 %v1151, %v1151
          %v1216 = vmul.f32 %v1152, %v1152
          %v1217 = vmul.f32 %v1153, %v1153
          %v1218 = vmul.f32 %v1154, %v1154
          %v1219 = vmul.f32 %v1155, %v1155
          %v1220 = vmul.f32 %v1156, %v1156
          %v1221 = vmul.f32 %v1157, %v1157
          %v1222 = vmul.f32 %v1158, %v1158
          %v1223 = vmul.f32 %v1159, %v1159
          %v1224 = vmul.f32 %v1160, %v1160
          %v1225 = vmul.f32 %v1161, %v1161
          %v1226 = vmul.f32 %v1162, %v1162
          %v1227 = vmul.f32 %v1163, %v1163
          %v1228 = vmul.f32 %v1164, %v1164
          %v1229 = vmul.f32 %v1165, %v1165
          %v1230 = vmul.f32 %v1166, %v1166
          %v1231 = vmul.f32 %v1167, %v1167
          %v1232 = vmul.f32 %v1168, %v1168
          %v1233 = vmul.f32 %v1169, %v1169
          %v1234 = vmul.f32 %v1170, %v1170
          %v1235 = vmul.f32 %v1171, %v1171
          %v1236 = vmul.f32 %v1172, %v1172
          %v1237 = vmul.f32 %v1173, %v1109
          %v1238 = vmul.f32 %v1174, %v1110
          %v1239 = vmul.f32 %v1175, %v1111
          %v1240 = vmul.f32 %v1176, %v1112
          %v1241 = vmul.f32 %v1177, %v1113
          %v1242 = vmul.f32 %v1178, %v1114
          %v1243 = vmul.f32 %v1179, %v1115
          %v1244 = vmul.f32 %v1180, %v1116
          %v1245 = vmul.f32 %v1181, %v1117
          %v1246 = vmul.f32 %v1182, %v1118
          %v1247 = vmul.f32 %v1183, %v1119
          %v1248 = vmul.f32 %v1184, %v1120
          %v1249 = vmul.f32 %v1185, %v1121
          %v1250 = vmul.f32 %v1186, %v1122
          %v1251 = vmul.f32 %v1187, %v1123
          %v1252 = vmul.f32 %v1188, %v1124
          %v1253 = vmul.f32 %v1189, %v1125
          %v1254 = vmul.f32 %v1190, %v1126
          %v1255 = vmul.f32 %v1191, %v1127
          %v1256 = vmul.f32 %v1192, %v1128
          %v1257 = vmul.f32 %v1193, %v1129
          %v1258 = vmul.f32 %v1194, %v1130
          %v1259 = vmul.f32 %v1195, %v1131
          %v1260 = vmul.f32 %v1196, %v1132
          %v1261 = vmul.f32 %v1197, %v1133
          %v1262 = vmul.f32 %v1198, %v1134
          %v1263 = vmul.f32 %v1199, %v1135
          %v1264 = vmul.f32 %v1200, %v1136
          %v1265 = vmul.f32 %v1201, %v1137
          %v1266 = vmul.f32 %v1202, %v1138
          %v1267 = vmul.f32 %v1203, %v1139
          %v1268 = vmul.f32 %v1204, %v1140
          %v1269 = vmul.f32 %v1205, %v1141
          %v1270 = vmul.f32 %v1206, %v1142
          %v1271 = vmul.f32 %v1207, %v1143
          %v1272 = vmul.f32 %v1208, %v1144
          %v1273 = vmul.f32 %v1209, %v1145
          %v1274 = vmul.f32 %v1210, %v1146
          %v1275 = vmul.f32 %v1211, %v1147
          %v1276 = vmul.f32 %v1212, %v1148
          %v1277 = vmul.f32 %v1213, %v1149
          %v1278 = vmul.f32 %v1214, %v1150
          %v1279 = vmul.f32 %v1215, %v1151
          %v1280 = vmul.f32 %v1216, %v1152
          %v1281 = vmul.f32 %v1217, %v1153
          %v1282 = vmul.f32 %v1218, %v1154
          %v1283 = vmul.f32 %v1219, %v1155
          %v1284 = vmul.f32 %v1220, %v1156
          %v1285 = vmul.f32 %v1221, %v1157
          %v1286 = vmul.f32 %v1222, %v1158
          %v1287 = vmul.f32 %v1223, %v1159
          %v1288 = vmul.f32 %v1224, %v1160
          %v1289 = vmul.f32 %v1225, %v1161
          %v1290 = vmul.f32 %v1226, %v1162
          %v1291 = vmul.f32 %v1227, %v1163
          %v1292 = vmul.f32 %v1228, %v1164
          %v1293 = vmul.f32 %v1229, %v1165
          %v1294 = vmul.f32 %v1230, %v1166
          %v1295 = vmul.f32 %v1231, %v1167
          %v1296 = vmul.f32 %v1232, %v1168
          %v1297 = vmul.f32 %v1233, %v1169
          %v1298 = vmul.f32 %v1234, %v1170
          %v1299 = vmul.f32 %v1235, %v1171
          %v1300 = vmul.f32 %v1236, %v1172
          %v1301 = vld [vmem:[%s358] sm:$0x3]
          %v1303 = vlaneseq
          %v1304 = vshrl.u32 %v1303, 7
          %v1305 = vsub.s32 0, %v1304
          %v1306 = vrot.slane %v1301, %v1305
          %v1307 = vlaneseq
          %v1308 = vshrl.u32 %v1307, 7
          %v1309 = vsub.s32 1, %v1308
          %v1310 = vrot.slane %v1301, %v1309
          %v1313 = vmul.f32 %v1237, %v1306
          %v1314 = vmul.f32 %v1238, %v1310
          %v1315 = vmul.f32 %v1239, %v1306
          %v1316 = vmul.f32 %v1240, %v1310
          %v1317 = vmul.f32 %v1241, %v1306
          %v1318 = vmul.f32 %v1242, %v1310
          %v1319 = vmul.f32 %v1243, %v1306
          %v1320 = vmul.f32 %v1244, %v1310
          %v1321 = vmul.f32 %v1245, %v1306
          %v1322 = vmul.f32 %v1246, %v1310
          %v1323 = vmul.f32 %v1247, %v1306
          %v1324 = vmul.f32 %v1248, %v1310
          %v1325 = vmul.f32 %v1249, %v1306
          %v1326 = vmul.f32 %v1250, %v1310
          %v1327 = vmul.f32 %v1251, %v1306
          %v1328 = vmul.f32 %v1252, %v1310
          %v1329 = vmul.f32 %v1253, %v1306
          %v1330 = vmul.f32 %v1254, %v1310
          %v1331 = vmul.f32 %v1255, %v1306
          %v1332 = vmul.f32 %v1256, %v1310
          %v1333 = vmul.f32 %v1257, %v1306
          %v1334 = vmul.f32 %v1258, %v1310
          %v1335 = vmul.f32 %v1259, %v1306
          %v1336 = vmul.f32 %v1260, %v1310
          %v1337 = vmul.f32 %v1261, %v1306
          %v1338 = vmul.f32 %v1262, %v1310
          %v1339 = vmul.f32 %v1263, %v1306
          %v1340 = vmul.f32 %v1264, %v1310
          %v1341 = vmul.f32 %v1265, %v1306
          %v1342 = vmul.f32 %v1266, %v1310
          %v1343 = vmul.f32 %v1267, %v1306
          %v1344 = vmul.f32 %v1268, %v1310
          %v1345 = vmul.f32 %v1269, %v1306
          %v1346 = vmul.f32 %v1270, %v1310
          %v1347 = vmul.f32 %v1271, %v1306
          %v1348 = vmul.f32 %v1272, %v1310
          %v1349 = vmul.f32 %v1273, %v1306
          %v1350 = vmul.f32 %v1274, %v1310
          %v1351 = vmul.f32 %v1275, %v1306
          %v1352 = vmul.f32 %v1276, %v1310
          %v1353 = vmul.f32 %v1277, %v1306
          %v1354 = vmul.f32 %v1278, %v1310
          %v1355 = vmul.f32 %v1279, %v1306
          %v1356 = vmul.f32 %v1280, %v1310
          %v1357 = vmul.f32 %v1281, %v1306
          %v1358 = vmul.f32 %v1282, %v1310
          %v1359 = vmul.f32 %v1283, %v1306
          %v1360 = vmul.f32 %v1284, %v1310
          %v1361 = vmul.f32 %v1285, %v1306
          %v1362 = vmul.f32 %v1286, %v1310
          %v1363 = vmul.f32 %v1287, %v1306
          %v1364 = vmul.f32 %v1288, %v1310
          %v1365 = vmul.f32 %v1289, %v1306
          %v1366 = vmul.f32 %v1290, %v1310
          %v1367 = vmul.f32 %v1291, %v1306
          %v1368 = vmul.f32 %v1292, %v1310
          %v1369 = vmul.f32 %v1293, %v1306
          %v1370 = vmul.f32 %v1294, %v1310
          %v1371 = vmul.f32 %v1295, %v1306
          %v1372 = vmul.f32 %v1296, %v1310
          %v1373 = vmul.f32 %v1297, %v1306
          %v1374 = vmul.f32 %v1298, %v1310
          %v1375 = vmul.f32 %v1299, %v1306
          %v1376 = vmul.f32 %v1300, %v1310
          %v1377 = vld [vmem:[%s363] sm:$0x3]
          %v1379 = vlaneseq
          %v1380 = vshrl.u32 %v1379, 7
          %v1381 = vsub.s32 0, %v1380
          %v1382 = vrot.slane %v1377, %v1381
          %v1383 = vlaneseq
          %v1384 = vshrl.u32 %v1383, 7
          %v1385 = vsub.s32 1, %v1384
          %v1386 = vrot.slane %v1377, %v1385
          %v1389 = vadd.f32 %v1313, %v1382
          %v1390 = vadd.f32 %v1314, %v1386
          %v1391 = vadd.f32 %v1315, %v1382
          %v1392 = vadd.f32 %v1316, %v1386
          %v1393 = vadd.f32 %v1317, %v1382
          %v1394 = vadd.f32 %v1318, %v1386
          %v1395 = vadd.f32 %v1319, %v1382
          %v1396 = vadd.f32 %v1320, %v1386
          %v1397 = vadd.f32 %v1321, %v1382
          %v1398 = vadd.f32 %v1322, %v1386
          %v1399 = vadd.f32 %v1323, %v1382
          %v1400 = vadd.f32 %v1324, %v1386
          %v1401 = vadd.f32 %v1325, %v1382
          %v1402 = vadd.f32 %v1326, %v1386
          %v1403 = vadd.f32 %v1327, %v1382
          %v1404 = vadd.f32 %v1328, %v1386
          %v1405 = vadd.f32 %v1329, %v1382
          %v1406 = vadd.f32 %v1330, %v1386
          %v1407 = vadd.f32 %v1331, %v1382
          %v1408 = vadd.f32 %v1332, %v1386
          %v1409 = vadd.f32 %v1333, %v1382
          %v1410 = vadd.f32 %v1334, %v1386
          %v1411 = vadd.f32 %v1335, %v1382
          %v1412 = vadd.f32 %v1336, %v1386
          %v1413 = vadd.f32 %v1337, %v1382
          %v1414 = vadd.f32 %v1338, %v1386
          %v1415 = vadd.f32 %v1339, %v1382
          %v1416 = vadd.f32 %v1340, %v1386
          %v1417 = vadd.f32 %v1341, %v1382
          %v1418 = vadd.f32 %v1342, %v1386
          %v1419 = vadd.f32 %v1343, %v1382
          %v1420 = vadd.f32 %v1344, %v1386
          %v1421 = vadd.f32 %v1345, %v1382
          %v1422 = vadd.f32 %v1346, %v1386
          %v1423 = vadd.f32 %v1347, %v1382
          %v1424 = vadd.f32 %v1348, %v1386
          %v1425 = vadd.f32 %v1349, %v1382
          %v1426 = vadd.f32 %v1350, %v1386
          %v1427 = vadd.f32 %v1351, %v1382
          %v1428 = vadd.f32 %v1352, %v1386
          %v1429 = vadd.f32 %v1353, %v1382
          %v1430 = vadd.f32 %v1354, %v1386
          %v1431 = vadd.f32 %v1355, %v1382
          %v1432 = vadd.f32 %v1356, %v1386
          %v1433 = vadd.f32 %v1357, %v1382
          %v1434 = vadd.f32 %v1358, %v1386
          %v1435 = vadd.f32 %v1359, %v1382
          %v1436 = vadd.f32 %v1360, %v1386
          %v1437 = vadd.f32 %v1361, %v1382
          %v1438 = vadd.f32 %v1362, %v1386
          %v1439 = vadd.f32 %v1363, %v1382
          %v1440 = vadd.f32 %v1364, %v1386
          %v1441 = vadd.f32 %v1365, %v1382
          %v1442 = vadd.f32 %v1366, %v1386
          %v1443 = vadd.f32 %v1367, %v1382
          %v1444 = vadd.f32 %v1368, %v1386
          %v1445 = vadd.f32 %v1369, %v1382
          %v1446 = vadd.f32 %v1370, %v1386
          %v1447 = vadd.f32 %v1371, %v1382
          %v1448 = vadd.f32 %v1372, %v1386
          %v1449 = vadd.f32 %v1373, %v1382
          %v1450 = vadd.f32 %v1374, %v1386
          %v1451 = vadd.f32 %v1375, %v1382
          %v1452 = vadd.f32 %v1376, %v1386
          %v1453 = vld [vmem:[%s374] sm:$0xff]
          %v1454 = vld [vmem:[%s374 + $0x8] sm:$0xff]
          %v1455 = vld [vmem:[%s374 + $0x10] sm:$0xff]
          %v1456 = vld [vmem:[%s374 + $0x18] sm:$0xff]
          %v1457 = vld [vmem:[%s374 + $0x20] sm:$0xff]
          %v1458 = vld [vmem:[%s374 + $0x28] sm:$0xff]
          %v1459 = vld [vmem:[%s374 + $0x30] sm:$0xff]
          %v1460 = vld [vmem:[%s374 + $0x38] sm:$0xff]
          %v1461 = vld [vmem:[%s374 + $0x40] sm:$0xff]
          %v1462 = vld [vmem:[%s374 + $0x48] sm:$0xff]
          %v1463 = vld [vmem:[%s374 + $0x50] sm:$0xff]
          %v1464 = vld [vmem:[%s374 + $0x58] sm:$0xff]
          %v1465 = vld [vmem:[%s374 + $0x60] sm:$0xff]
          %v1466 = vld [vmem:[%s374 + $0x68] sm:$0xff]
          %v1467 = vld [vmem:[%s374 + $0x70] sm:$0xff]
          %v1468 = vld [vmem:[%s374 + $0x78] sm:$0xff]
          %v1469 = vld [vmem:[%s374 + $0x80] sm:$0xff]
          %v1470 = vld [vmem:[%s374 + $0x88] sm:$0xff]
          %v1471 = vld [vmem:[%s374 + $0x90] sm:$0xff]
          %v1472 = vld [vmem:[%s374 + $0x98] sm:$0xff]
          %v1473 = vld [vmem:[%s374 + $0xa0] sm:$0xff]
          %v1474 = vld [vmem:[%s374 + $0xa8] sm:$0xff]
          %v1475 = vld [vmem:[%s374 + $0xb0] sm:$0xff]
          %v1476 = vld [vmem:[%s374 + $0xb8] sm:$0xff]
          %v1477 = vld [vmem:[%s374 + $0xc0] sm:$0xff]
          %v1478 = vld [vmem:[%s374 + $0xc8] sm:$0xff]
          %v1479 = vld [vmem:[%s374 + $0xd0] sm:$0xff]
          %v1480 = vld [vmem:[%s374 + $0xd8] sm:$0xff]
          %v1481 = vld [vmem:[%s374 + $0xe0] sm:$0xff]
          %v1482 = vld [vmem:[%s374 + $0xe8] sm:$0xff]
          %v1483 = vld [vmem:[%s374 + $0xf0] sm:$0xff]
          %v1484 = vld [vmem:[%s374 + $0xf8] sm:$0xff]
          %v1485 = vld [vmem:[%s374 + $0x100] sm:$0xff]
          %v1486 = vld [vmem:[%s374 + $0x108] sm:$0xff]
          %v1487 = vld [vmem:[%s374 + $0x110] sm:$0xff]
          %v1488 = vld [vmem:[%s374 + $0x118] sm:$0xff]
          %v1489 = vld [vmem:[%s374 + $0x120] sm:$0xff]
          %v1490 = vld [vmem:[%s374 + $0x128] sm:$0xff]
          %v1491 = vld [vmem:[%s374 + $0x130] sm:$0xff]
          %v1492 = vld [vmem:[%s374 + $0x138] sm:$0xff]
          %v1493 = vld [vmem:[%s374 + $0x140] sm:$0xff]
          %v1494 = vld [vmem:[%s374 + $0x148] sm:$0xff]
          %v1495 = vld [vmem:[%s374 + $0x150] sm:$0xff]
          %v1496 = vld [vmem:[%s374 + $0x158] sm:$0xff]
          %v1497 = vld [vmem:[%s374 + $0x160] sm:$0xff]
          %v1498 = vld [vmem:[%s374 + $0x168] sm:$0xff]
          %v1499 = vld [vmem:[%s374 + $0x170] sm:$0xff]
          %v1500 = vld [vmem:[%s374 + $0x178] sm:$0xff]
          %v1501 = vld [vmem:[%s374 + $0x180] sm:$0xff]
          %v1502 = vld [vmem:[%s374 + $0x188] sm:$0xff]
          %v1503 = vld [vmem:[%s374 + $0x190] sm:$0xff]
          %v1504 = vld [vmem:[%s374 + $0x198] sm:$0xff]
          %v1505 = vld [vmem:[%s374 + $0x1a0] sm:$0xff]
          %v1506 = vld [vmem:[%s374 + $0x1a8] sm:$0xff]
          %v1507 = vld [vmem:[%s374 + $0x1b0] sm:$0xff]
          %v1508 = vld [vmem:[%s374 + $0x1b8] sm:$0xff]
          %v1509 = vld [vmem:[%s374 + $0x1c0] sm:$0xff]
          %v1510 = vld [vmem:[%s374 + $0x1c8] sm:$0xff]
          %v1511 = vld [vmem:[%s374 + $0x1d0] sm:$0xff]
          %v1512 = vld [vmem:[%s374 + $0x1d8] sm:$0xff]
          %v1513 = vld [vmem:[%s374 + $0x1e0] sm:$0xff]
          %v1514 = vld [vmem:[%s374 + $0x1e8] sm:$0xff]
          %v1515 = vld [vmem:[%s374 + $0x1f0] sm:$0xff]
          %v1516 = vld [vmem:[%s374 + $0x1f8] sm:$0xff]
          %v1517 = vadd.f32 %v1389, %v1453
          %v1518 = vadd.f32 %v1390, %v1454
          %v1519 = vadd.f32 %v1391, %v1455
          %v1520 = vadd.f32 %v1392, %v1456
          %v1521 = vadd.f32 %v1393, %v1457
          %v1522 = vadd.f32 %v1394, %v1458
          %v1523 = vadd.f32 %v1395, %v1459
          %v1524 = vadd.f32 %v1396, %v1460
          %v1525 = vadd.f32 %v1397, %v1461
          %v1526 = vadd.f32 %v1398, %v1462
          %v1527 = vadd.f32 %v1399, %v1463
          %v1528 = vadd.f32 %v1400, %v1464
          %v1529 = vadd.f32 %v1401, %v1465
          %v1530 = vadd.f32 %v1402, %v1466
          %v1531 = vadd.f32 %v1403, %v1467
          %v1532 = vadd.f32 %v1404, %v1468
          %v1533 = vadd.f32 %v1405, %v1469
          %v1534 = vadd.f32 %v1406, %v1470
          %v1535 = vadd.f32 %v1407, %v1471
          %v1536 = vadd.f32 %v1408, %v1472
          %v1537 = vadd.f32 %v1409, %v1473
          %v1538 = vadd.f32 %v1410, %v1474
          %v1539 = vadd.f32 %v1411, %v1475
          %v1540 = vadd.f32 %v1412, %v1476
          %v1541 = vadd.f32 %v1413, %v1477
          %v1542 = vadd.f32 %v1414, %v1478
          %v1543 = vadd.f32 %v1415, %v1479
          %v1544 = vadd.f32 %v1416, %v1480
          %v1545 = vadd.f32 %v1417, %v1481
          %v1546 = vadd.f32 %v1418, %v1482
          %v1547 = vadd.f32 %v1419, %v1483
          %v1548 = vadd.f32 %v1420, %v1484
          %v1549 = vadd.f32 %v1421, %v1485
          %v1550 = vadd.f32 %v1422, %v1486
          %v1551 = vadd.f32 %v1423, %v1487
          %v1552 = vadd.f32 %v1424, %v1488
          %v1553 = vadd.f32 %v1425, %v1489
          %v1554 = vadd.f32 %v1426, %v1490
          %v1555 = vadd.f32 %v1427, %v1491
          %v1556 = vadd.f32 %v1428, %v1492
          %v1557 = vadd.f32 %v1429, %v1493
          %v1558 = vadd.f32 %v1430, %v1494
          %v1559 = vadd.f32 %v1431, %v1495
          %v1560 = vadd.f32 %v1432, %v1496
          %v1561 = vadd.f32 %v1433, %v1497
          %v1562 = vadd.f32 %v1434, %v1498
          %v1563 = vadd.f32 %v1435, %v1499
          %v1564 = vadd.f32 %v1436, %v1500
          %v1565 = vadd.f32 %v1437, %v1501
          %v1566 = vadd.f32 %v1438, %v1502
          %v1567 = vadd.f32 %v1439, %v1503
          %v1568 = vadd.f32 %v1440, %v1504
          %v1569 = vadd.f32 %v1441, %v1505
          %v1570 = vadd.f32 %v1442, %v1506
          %v1571 = vadd.f32 %v1443, %v1507
          %v1572 = vadd.f32 %v1444, %v1508
          %v1573 = vadd.f32 %v1445, %v1509
          %v1574 = vadd.f32 %v1446, %v1510
          %v1575 = vadd.f32 %v1447, %v1511
          %v1576 = vadd.f32 %v1448, %v1512
          %v1577 = vadd.f32 %v1449, %v1513
          %v1578 = vadd.f32 %v1450, %v1514
          %v1579 = vadd.f32 %v1451, %v1515
          %v1580 = vadd.f32 %v1452, %v1516
          %v1581 = vmax.f32 %v1517, 0.0
          %v1582 = vmax.f32 %v1518, 0.0
          %v1583 = vmax.f32 %v1519, 0.0
          %v1584 = vmax.f32 %v1520, 0.0
          %v1585 = vmax.f32 %v1521, 0.0
          %v1586 = vmax.f32 %v1522, 0.0
          %v1587 = vmax.f32 %v1523, 0.0
          %v1588 = vmax.f32 %v1524, 0.0
          %v1589 = vmax.f32 %v1525, 0.0
          %v1590 = vmax.f32 %v1526, 0.0
          %v1591 = vmax.f32 %v1527, 0.0
          %v1592 = vmax.f32 %v1528, 0.0
          %v1593 = vmax.f32 %v1529, 0.0
          %v1594 = vmax.f32 %v1530, 0.0
          %v1595 = vmax.f32 %v1531, 0.0
          %v1596 = vmax.f32 %v1532, 0.0
          %v1597 = vmax.f32 %v1533, 0.0
          %v1598 = vmax.f32 %v1534, 0.0
          %v1599 = vmax.f32 %v1535, 0.0
          %v1600 = vmax.f32 %v1536, 0.0
          %v1601 = vmax.f32 %v1537, 0.0
          %v1602 = vmax.f32 %v1538, 0.0
          %v1603 = vmax.f32 %v1539, 0.0
          %v1604 = vmax.f32 %v1540, 0.0
          %v1605 = vmax.f32 %v1541, 0.0
          %v1606 = vmax.f32 %v1542, 0.0
          %v1607 = vmax.f32 %v1543, 0.0
          %v1608 = vmax.f32 %v1544, 0.0
          %v1609 = vmax.f32 %v1545, 0.0
          %v1610 = vmax.f32 %v1546, 0.0
          %v1611 = vmax.f32 %v1547, 0.0
          %v1612 = vmax.f32 %v1548, 0.0
          %v1613 = vmax.f32 %v1549, 0.0
          %v1614 = vmax.f32 %v1550, 0.0
          %v1615 = vmax.f32 %v1551, 0.0
          %v1616 = vmax.f32 %v1552, 0.0
          %v1617 = vmax.f32 %v1553, 0.0
          %v1618 = vmax.f32 %v1554, 0.0
          %v1619 = vmax.f32 %v1555, 0.0
          %v1620 = vmax.f32 %v1556, 0.0
          %v1621 = vmax.f32 %v1557, 0.0
          %v1622 = vmax.f32 %v1558, 0.0
          %v1623 = vmax.f32 %v1559, 0.0
          %v1624 = vmax.f32 %v1560, 0.0
          %v1625 = vmax.f32 %v1561, 0.0
          %v1626 = vmax.f32 %v1562, 0.0
          %v1627 = vmax.f32 %v1563, 0.0
          %v1628 = vmax.f32 %v1564, 0.0
          %v1629 = vmax.f32 %v1565, 0.0
          %v1630 = vmax.f32 %v1566, 0.0
          %v1631 = vmax.f32 %v1567, 0.0
          %v1632 = vmax.f32 %v1568, 0.0
          %v1633 = vmax.f32 %v1569, 0.0
          %v1634 = vmax.f32 %v1570, 0.0
          %v1635 = vmax.f32 %v1571, 0.0
          %v1636 = vmax.f32 %v1572, 0.0
          %v1637 = vmax.f32 %v1573, 0.0
          %v1638 = vmax.f32 %v1574, 0.0
          %v1639 = vmax.f32 %v1575, 0.0
          %v1640 = vmax.f32 %v1576, 0.0
          %v1641 = vmax.f32 %v1577, 0.0
          %v1642 = vmax.f32 %v1578, 0.0
          %v1643 = vmax.f32 %v1579, 0.0
          %v1644 = vmax.f32 %v1580, 0.0
          %1645 = vst [vmem:[%s333] sm:$0xff] %v1581
          %1646 = vst [vmem:[%s333 + $0x8] sm:$0xff] %v1582
          %1647 = vst [vmem:[%s333 + $0x10] sm:$0xff] %v1583
          %1648 = vst [vmem:[%s333 + $0x18] sm:$0xff] %v1584
          %1649 = vst [vmem:[%s333 + $0x20] sm:$0xff] %v1585
          %1650 = vst [vmem:[%s333 + $0x28] sm:$0xff] %v1586
          %1651 = vst [vmem:[%s333 + $0x30] sm:$0xff] %v1587
          %1652 = vst [vmem:[%s333 + $0x38] sm:$0xff] %v1588
          %1653 = vst [vmem:[%s333 + $0x40] sm:$0xff] %v1589
          %1654 = vst [vmem:[%s333 + $0x48] sm:$0xff] %v1590
          %1655 = vst [vmem:[%s333 + $0x50] sm:$0xff] %v1591
          %1656 = vst [vmem:[%s333 + $0x58] sm:$0xff] %v1592
          %1657 = vst [vmem:[%s333 + $0x60] sm:$0xff] %v1593
          %1658 = vst [vmem:[%s333 + $0x68] sm:$0xff] %v1594
          %1659 = vst [vmem:[%s333 + $0x70] sm:$0xff] %v1595
          %1660 = vst [vmem:[%s333 + $0x78] sm:$0xff] %v1596
          %1661 = vst [vmem:[%s333 + $0x80] sm:$0xff] %v1597
          %1662 = vst [vmem:[%s333 + $0x88] sm:$0xff] %v1598
          %1663 = vst [vmem:[%s333 + $0x90] sm:$0xff] %v1599
          %1664 = vst [vmem:[%s333 + $0x98] sm:$0xff] %v1600
          %1665 = vst [vmem:[%s333 + $0xa0] sm:$0xff] %v1601
          %1666 = vst [vmem:[%s333 + $0xa8] sm:$0xff] %v1602
          %1667 = vst [vmem:[%s333 + $0xb0] sm:$0xff] %v1603
          %1668 = vst [vmem:[%s333 + $0xb8] sm:$0xff] %v1604
          %1669 = vst [vmem:[%s333 + $0xc0] sm:$0xff] %v1605
          %1670 = vst [vmem:[%s333 + $0xc8] sm:$0xff] %v1606
          %1671 = vst [vmem:[%s333 + $0xd0] sm:$0xff] %v1607
          %1672 = vst [vmem:[%s333 + $0xd8] sm:$0xff] %v1608
          %1673 = vst [vmem:[%s333 + $0xe0] sm:$0xff] %v1609
          %1674 = vst [vmem:[%s333 + $0xe8] sm:$0xff] %v1610
          %1675 = vst [vmem:[%s333 + $0xf0] sm:$0xff] %v1611
          %1676 = vst [vmem:[%s333 + $0xf8] sm:$0xff] %v1612
          %1677 = vst [vmem:[%s333 + $0x100] sm:$0xff] %v1613
          %1678 = vst [vmem:[%s333 + $0x108] sm:$0xff] %v1614
          %1679 = vst [vmem:[%s333 + $0x110] sm:$0xff] %v1615
          %1680 = vst [vmem:[%s333 + $0x118] sm:$0xff] %v1616
          %1681 = vst [vmem:[%s333 + $0x120] sm:$0xff] %v1617
          %1682 = vst [vmem:[%s333 + $0x128] sm:$0xff] %v1618
          %1683 = vst [vmem:[%s333 + $0x130] sm:$0xff] %v1619
          %1684 = vst [vmem:[%s333 + $0x138] sm:$0xff] %v1620
          %1685 = vst [vmem:[%s333 + $0x140] sm:$0xff] %v1621
          %1686 = vst [vmem:[%s333 + $0x148] sm:$0xff] %v1622
          %1687 = vst [vmem:[%s333 + $0x150] sm:$0xff] %v1623
          %1688 = vst [vmem:[%s333 + $0x158] sm:$0xff] %v1624
          %1689 = vst [vmem:[%s333 + $0x160] sm:$0xff] %v1625
          %1690 = vst [vmem:[%s333 + $0x168] sm:$0xff] %v1626
          %1691 = vst [vmem:[%s333 + $0x170] sm:$0xff] %v1627
          %1692 = vst [vmem:[%s333 + $0x178] sm:$0xff] %v1628
          %1693 = vst [vmem:[%s333 + $0x180] sm:$0xff] %v1629
          %1694 = vst [vmem:[%s333 + $0x188] sm:$0xff] %v1630
          %1695 = vst [vmem:[%s333 + $0x190] sm:$0xff] %v1631
          %1696 = vst [vmem:[%s333 + $0x198] sm:$0xff] %v1632
          %1697 = vst [vmem:[%s333 + $0x1a0] sm:$0xff] %v1633
          %1698 = vst [vmem:[%s333 + $0x1a8] sm:$0xff] %v1634
          %1699 = vst [vmem:[%s333 + $0x1b0] sm:$0xff] %v1635
          %1700 = vst [vmem:[%s333 + $0x1b8] sm:$0xff] %v1636
          %1701 = vst [vmem:[%s333 + $0x1c0] sm:$0xff] %v1637
          %1702 = vst [vmem:[%s333 + $0x1c8] sm:$0xff] %v1638
          %1703 = vst [vmem:[%s333 + $0x1d0] sm:$0xff] %v1639
          %1704 = vst [vmem:[%s333 + $0x1d8] sm:$0xff] %v1640
          %1705 = vst [vmem:[%s333 + $0x1e0] sm:$0xff] %v1641
          %1706 = vst [vmem:[%s333 + $0x1e8] sm:$0xff] %v1642
          %1707 = vst [vmem:[%s333 + $0x1f0] sm:$0xff] %v1643
          %1708 = vst [vmem:[%s333 + $0x1f8] sm:$0xff] %v1644
        $region48: #{_lambda_.7} parent=39 // pred_fallthru
          _
        %s1709 = sand.u32 %s184, 1
        %s1710 = scalar_lea.sflag [#allocation4], %s1709
        %s1711 = sand.u32 %s184, 1
        %s1712 = smul.addr %s1711, 512
        %s1713 = scalar_lea.vmem [#allocation3], %s1712
        // Predicated region
        $region49: #{_lambda_.7} parent=39 // pred_check
          %p1714 = pneg %p194
        $region50: #{_lambda_.7} parent=39 // pred_check_branch
          %1716 = sbr.rel (%p1714) target = $region52
        $region51: #{_lambda_.7} parent=39 // pred_region
          %s1717 = smul.u32 32, %s24
          %s1718 = smul.u32 2, %s25
          %s1720 = ssub.s32 8192, 8192
          %1721 = vsyncadd %s1710, %s1720
          %s1722 = smul.addr %s1717, 2
          %s1723 = sadd.s32 %s1718, %s1722
          %s1724 = smul.addr %s1723, 128
          %s1725 = scalar_lea.hbm %s5, %s1724
          %s1726 = sshll.u32 %s1713, 4
          %s1727 = int_to_ptr.vmem [resolvable:$true] %s1726
          %1732 = dma.vmem_to_hbm [thread:$0]  %s1727, 8192, %s1725, %s1710, 256, 256, 16
        $region52: #{_lambda_.7} parent=39 // pred_fallthru
          _
      $region40: #{_lambda_.7} parent=5 // pred_fallthru
        _
      %p1733 = scmp.le.s32.totalorder 2, %s14
      // Predicated region
      $region53: #{_lambda_.7} parent=5 // pred_check
        %p1734 = pneg %p1733
      $region54: #{_lambda_.7} parent=5 // pred_check_branch
        %1736 = sbr.rel (%p1734) target = $region56
      $region55: #{_lambda_.7} parent=5 // pred_region
        %s1737 = ssub.s32 %s14, 2
        // Predicated region
        $region57: #{_lambda_.7} parent=55 // pred_check
          %p1738 = pneg %p200
        $region58: #{_lambda_.7} parent=55 // pred_check_branch
          %1740 = sbr.rel (%p1738) target = $region60
        $region59: #{_lambda_.7} parent=55 // pred_region
          %s1741 = sand.u32 %s185, 1
          %s1742 = scalar_lea.sflag [#allocation4], %s1741
          %s1743 = sand.u32 %s185, 1
          %s1744 = smul.addr %s1743, 512
          %s1745 = scalar_lea.vmem [#allocation3], %s1744
          %1746 = dma.done %s1742, 8192
        $region60: #{_lambda_.7} parent=55 // pred_fallthru
          _
      $region56: #{_lambda_.7} parent=5 // pred_fallthru
        _
    $region6: #{_lambda_.7} parent=1 // loop_footer
      %s18 = sadd.s32 1, %s14
    $region7: #{_lambda_.7} parent=1 // loop_footer_branch
      %13 = sbr.rel target = $region3
    $region8: #{_lambda_.7} parent=1 // loop_exit
      _
    %1747 = vsyncpa [#allocation4], 1
    %s1748 = scalar_lea.sflag [#allocation4], 1
    %1749 = vsyncpa %s1748, 1

</llo_original>
